<compile_context>
chip_gen: v7x
topology: tpu7x:2x2x1
jax: 0.10.0
libtpu: 0.0.40
codegen_flags: <defaults>
</compile_context>

<pallas_src>
import jax
import jax.numpy as jnp
from jax.experimental import pallas as pl
from jax.experimental.pallas import tpu as pltpu

EPS = 1e-5


# ----------------------------------------------------------------------------------
# Fused kernel: 5 pointwise convs (BN folded) + leaky-relu + global max pool + FC head.
# Grid = (B, N // TN). Scratch acc (1, 1024) f32 holds the running max across N tiles;
# the (1, 1, 256) output block for batch b is resident across the N axis and only
# written on the last N tile.
# ----------------------------------------------------------------------------------
def encoder_kernel(x_ref,                       # (1, TN, 8)  bf16  (xyz zero-padded to 8)
                   w1, w2, w3, w4, w5,          # BN-folded conv weights (in, out), bf16
                   t1, t2, t3, t4,              # per-channel BN shifts (1, out), f32
                   l1, t6, l2,                  # FC: (1024,512) bf16, (1,512) f32, (512,256) bf16
                   out_ref,                     # (1, 1, 256) f32
                   acc_ref):                    # (1, 1024) f32 running max (VMEM scratch)
    x = x_ref[0]                                # (TN, 8) bf16

    def lrelu(h):
        return jnp.where(h > 0, h, 0.2 * h)

    h = lrelu(jnp.dot(x, w1[...], preferred_element_type=jnp.float32) + t1[...])
    h = lrelu(jnp.dot(h.astype(jnp.bfloat16), w2[...],
                      preferred_element_type=jnp.float32) + t2[...])
    h = lrelu(jnp.dot(h.astype(jnp.bfloat16), w3[...],
                      preferred_element_type=jnp.float32) + t3[...])
    h = lrelu(jnp.dot(h.astype(jnp.bfloat16), w4[...],
                      preferred_element_type=jnp.float32) + t4[...])
    # layer-5 BN shift is folded into t6 at pack time (max commutes with +const per channel)
    h = jnp.dot(h.astype(jnp.bfloat16), w5[...],
                preferred_element_type=jnp.float32)                    # (TN, 1024) f32

    tile_max = jnp.max(h, axis=0, keepdims=True)                       # (1, 1024)

    @pl.when(pl.program_id(1) == 0)
    def _():
        acc_ref[...] = jnp.full(acc_ref.shape, -jnp.inf, dtype=acc_ref.dtype)

    acc_ref[...] = jnp.maximum(acc_ref[...], tile_max)

    @pl.when(pl.program_id(1) == pl.num_programs(1) - 1)
    def _():
        g = acc_ref[...].astype(jnp.bfloat16)                          # (1, 1024)
        u = jnp.maximum(jnp.dot(g, l1[...],
                                preferred_element_type=jnp.float32) + t6[...], 0.0)
        out_ref[0] = jnp.dot(u.astype(jnp.bfloat16), l2[...],
                             preferred_element_type=jnp.float32)       # (1, 256)


# ----------------------------------------------------------------------------------
# Wrapper
# ----------------------------------------------------------------------------------
def _pick_tile_n(N):
    # Prefer larger tiles (amortize MXU weight-tile fill + per-step pipeline overhead);
    # intermediates at TN=1024 are only ~8 MiB, well inside the 32 MiB VMEM limit.
    for tn in (512, 1024, 256, 128, 64, 32, 16, 8):
        if N % tn == 0:
            return tn
    return N  # full-extent block is always legal


def pointnet_encoder(x_bnc, kparams, tile_n=None):
    """x_bnc: (B, N, 3) float32. Returns the module output (torch.squeeze semantics)."""
    conv_ws, conv_ts, l1, t6, l2 = kparams
    B, N, C = x_bnc.shape
    assert C == 3
    if tile_n is None:
        tile_n = _pick_tile_n(N)
    assert N % tile_n == 0
    n_tiles = N // tile_n

    # zero-pad xyz to 8 channels (matches zero-padded rows of w1) and cast to bf16.
    x_pad = jnp.pad(x_bnc, ((0, 0), (0, 0), (0, 8 - C))).astype(jnp.bfloat16)

    # Grid-invariant params: constant index_map, single-buffered (no re-fetch, less VMEM).
    def const_spec(p):
        return pl.BlockSpec(p.shape, lambda b, n: (0, 0), pipeline_mode=pl.Buffered(1))

    params = list(conv_ws) + list(conv_ts) + [l1, t6, l2]

    out = pl.pallas_call(
        encoder_kernel,
        out_shape=jax.ShapeDtypeStruct((B, 1, 256), jnp.float32),
        grid=(B, n_tiles),
        in_specs=[pl.BlockSpec((1, tile_n, 8), lambda b, n: (b, n, 0))]
                 + [const_spec(p) for p in params],
        out_specs=pl.BlockSpec((1, 1, 256), lambda b, n: (b, 0, 0)),
        scratch_shapes=[pltpu.VMEM((1, 1024), jnp.float32)],
        compiler_params=pltpu.CompilerParams(
            dimension_semantics=("parallel", "arbitrary"),
            vmem_limit_bytes=32 << 20,
        ),
    )(x_pad, *params)

    out = out[:, 0, :]                                                  # (B, 256)
    return jnp.squeeze(out)   # matches torch.squeeze (drops batch dim only if B == 1)


# ----------------------------------------------------------------------------------
# Deterministic synthetic parameters + BN folding
# ----------------------------------------------------------------------------------
def make_params(key):
    conv_shapes = [(64, 3), (64, 64), (128, 64), (256, 128), (1024, 256)]   # (out, in)
    lin_shapes = [(512, 1024), (256, 512)]
    bn_channels = [64, 64, 128, 256, 1024, 512]

    keys = jax.random.split(key, 32)
    ki = iter(range(32))

    convs = [0.05 * jax.random.normal(keys[next(ki)], s, jnp.float32) for s in conv_shapes]
    lins = [0.05 * jax.random.normal(keys[next(ki)], s, jnp.float32) for s in lin_shapes]

    bns = []
    for c in bn_channels:
        gamma = 1.0 + 0.1 * jax.random.normal(keys[next(ki)], (c,), jnp.float32)
        beta = 0.1 * jax.random.normal(keys[next(ki)], (c,), jnp.float32)
        mean = 0.1 * jax.random.normal(keys[next(ki)], (c,), jnp.float32)
        var = jax.random.uniform(keys[next(ki)], (c,), jnp.float32, 0.5, 1.5)
        bns.append((gamma, beta, mean, var))
    return convs, lins, bns


def fold_bn(W, bn):
    """W: (out, in). Returns (W.T * scale, shift[None,:]) so x @ Wt + shift == bn(x @ W.T)."""
    gamma, beta, mean, var = bn
    scale = gamma / jnp.sqrt(var + EPS)
    Wt = W.T * scale[None, :]
    shift = beta - mean * scale
    return Wt.astype(jnp.float32), shift[None, :].astype(jnp.float32)


def pack_kernel_params(convs, lins, bns):
    conv_ws, conv_ts = [], []
    for W, bn in zip(convs, bns[:5]):
        Wt, t = fold_bn(W, bn)
        conv_ws.append(Wt)
        conv_ts.append(t)
    # pad layer-1 contraction from K=3 to K=8 with zero rows (input is zero-padded too)
    conv_ws[0] = jnp.pad(conv_ws[0], ((0, 5), (0, 0)))
    conv_ws = [w.astype(jnp.bfloat16) for w in conv_ws]                  # bf16 MXU operands

    l1_f32, t6 = fold_bn(lins[0], bns[5])                                # (1024,512), (1,512) f32
    # Fold the layer-5 BN shift through the FC layer (in f32, before casting l1 to bf16):
    #   relu((pool + t5) @ l1 + t6) == relu(pool @ l1 + (t5 @ l1 + t6))
    t5 = conv_ts[4]                                                      # (1, 1024) f32
    t6_fused = t6 + t5 @ l1_f32                                          # (1, 512) f32

    l1 = l1_f32.astype(jnp.bfloat16)
    l2 = lins[1].T.astype(jnp.bfloat16)
    return conv_ws, conv_ts[:4], l1, t6_fused, l2


# ----------------------------------------------------------------------------------
# References
# ----------------------------------------------------------------------------------
def reference_forward(x_bnc, convs, lins, bns):
    """Module-faithful eval-mode f32 forward (mirrors the PyTorch graph)."""
    def bn_apply(h, bn):
        gamma, beta, mean, var = bn
        return (h - mean) / jnp.sqrt(var + EPS) * gamma + beta

    def lrelu(h):
        return jnp.where(h > 0, h, 0.2 * h)

    h = x_bnc
    for i in range(4):
        h = lrelu(bn_apply(h @ convs[i].T, bns[i]))
    h = bn_apply(h @ convs[4].T, bns[4])                  # (B, N, 1024)
    g = jnp.max(h, axis=1)                                # adaptive_max_pool1d(., 1).squeeze()
    u = jnp.maximum(bn_apply(g @ lins[0].T, bns[5]), 0.0)
    return u @ lins[1].T                                  # (B, 256)


def reference_forward_packed(x_bnc, kparams):
    """Pure-XLA replica of exactly the bf16/folded math the kernel performs."""
    conv_ws, conv_ts, l1, t6, l2 = kparams
    B, N, C = x_bnc.shape

    def lrelu(h):
        return jnp.where(h > 0, h, 0.2 * h)

    h = jnp.pad(x_bnc, ((0, 0), (0, 0), (0, 8 - C))).astype(jnp.bfloat16)
    for i, w in enumerate(conv_ws):
        y = jnp.einsum('bnk,kc->bnc', h, w, preferred_element_type=jnp.float32)
        if i < 4:
            h = lrelu(y + conv_ts[i]).astype(jnp.bfloat16)
        else:
            h = y                                                        # t5 folded into t6
    g = jnp.max(h, axis=1)                                               # (B, 1024) f32
    u = jnp.maximum(jnp.dot(g.astype(jnp.bfloat16), l1,
                            preferred_element_type=jnp.float32) + t6, 0.0)
    out = jnp.dot(u.astype(jnp.bfloat16), l2, preferred_element_type=jnp.float32)
    return jnp.squeeze(out)


if __name__ == "__main__":
    B, N = 2, 512
    key = jax.random.PRNGKey(0)
    k_x, k_p = jax.random.split(key)

    x = jax.random.normal(k_x, (B, N, 3), jnp.float32)    # (B, points, xyz)
    convs, lins, bns = make_params(k_p)
    kparams = pack_kernel_params(convs, lins, bns)

    out = jax.block_until_ready(pointnet_encoder(x, kparams))

    ref_exact = reference_forward_packed(x, kparams)      # same bf16/folded math
    ref_f32 = reference_forward(x, convs, lins, bns)      # module-faithful f32 math

    assert out.shape == (B, 256), out.shape
    assert jnp.allclose(out, ref_exact, rtol=2e-3, atol=2e-3), (
        float(jnp.max(jnp.abs(out - ref_exact))))
    assert jnp.allclose(out, ref_f32, rtol=5e-2, atol=5e-2), (
        float(jnp.max(jnp.abs(out - ref_f32))))

    print("KERNEL_OK")
</pallas_src>

<mosaic_0001>
module attributes {stable_mosaic.version = 11 : i64} {
  func.func @encoder_kernel(%arg0: i32, %arg1: i32, %arg2: memref<1x512x8xbf16, #tpu.memory_space<vmem>>, %arg3: memref<8x64xbf16, #tpu.memory_space<vmem>>, %arg4: memref<64x64xbf16, #tpu.memory_space<vmem>>, %arg5: memref<64x128xbf16, #tpu.memory_space<vmem>>, %arg6: memref<128x256xbf16, #tpu.memory_space<vmem>>, %arg7: memref<256x1024xbf16, #tpu.memory_space<vmem>>, %arg8: memref<1x64xf32, #tpu.memory_space<vmem>>, %arg9: memref<1x64xf32, #tpu.memory_space<vmem>>, %arg10: memref<1x128xf32, #tpu.memory_space<vmem>>, %arg11: memref<1x256xf32, #tpu.memory_space<vmem>>, %arg12: memref<1024x512xbf16, #tpu.memory_space<vmem>>, %arg13: memref<1x512xf32, #tpu.memory_space<vmem>>, %arg14: memref<512x256xbf16, #tpu.memory_space<vmem>>, %arg15: memref<1x1x256xf32, #tpu.memory_space<vmem>>, %arg16: memref<1x1024xf32, #tpu.memory_space<vmem>>) attributes {dimension_semantics = [#tpu.dimension_semantics<parallel>, #tpu.dimension_semantics<arbitrary>], iteration_bounds = array<i64: 2, 1>, scalar_prefetch = 0 : i64, scratch_operands = 1 : i64, tpu.core_type = #tpu.core_type<tc>, window_params = [{transform_indices = @transform_0, window_bounds = array<i64: 1, 512, 8>}, {pipeline_mode = #tpu.pipeline_mode<synchronous>, transform_indices = @transform_1, window_bounds = array<i64: 8, 64>}, {pipeline_mode = #tpu.pipeline_mode<synchronous>, transform_indices = @transform_2, window_bounds = array<i64: 64, 64>}, {pipeline_mode = #tpu.pipeline_mode<synchronous>, transform_indices = @transform_3, window_bounds = array<i64: 64, 128>}, {pipeline_mode = #tpu.pipeline_mode<synchronous>, transform_indices = @transform_4, window_bounds = array<i64: 128, 256>}, {pipeline_mode = #tpu.pipeline_mode<synchronous>, transform_indices = @transform_5, window_bounds = array<i64: 256, 1024>}, {pipeline_mode = #tpu.pipeline_mode<synchronous>, transform_indices = @transform_6, window_bounds = array<i64: 1, 64>}, {pipeline_mode = #tpu.pipeline_mode<synchronous>, transform_indices = @transform_7, window_bounds = array<i64: 1, 64>}, {pipeline_mode = #tpu.pipeline_mode<synchronous>, transform_indices = @transform_8, window_bounds = array<i64: 1, 128>}, {pipeline_mode = #tpu.pipeline_mode<synchronous>, transform_indices = @transform_9, window_bounds = array<i64: 1, 256>}, {pipeline_mode = #tpu.pipeline_mode<synchronous>, transform_indices = @transform_10, window_bounds = array<i64: 1024, 512>}, {pipeline_mode = #tpu.pipeline_mode<synchronous>, transform_indices = @transform_11, window_bounds = array<i64: 1, 512>}, {pipeline_mode = #tpu.pipeline_mode<synchronous>, transform_indices = @transform_12, window_bounds = array<i64: 512, 256>}, {transform_indices = @transform_13, window_bounds = array<i64: 1, 1, 256>}]} {
    %c0 = arith.constant 0 : index
    %c0_0 = arith.constant 0 : index
    %c0_1 = arith.constant 0 : index
    %0 = vector.load %arg2[%c0, %c0_0, %c0_1] : memref<1x512x8xbf16, #tpu.memory_space<vmem>>, vector<1x512x8xbf16>
    %1 = vector.shape_cast %0 : vector<1x512x8xbf16> to vector<512x8xbf16>
    %c0_2 = arith.constant 0 : index
    %c0_3 = arith.constant 0 : index
    %2 = vector.load %arg3[%c0_2, %c0_3] : memref<8x64xbf16, #tpu.memory_space<vmem>>, vector<8x64xbf16>
    %cst = arith.constant dense<0.000000e+00> : vector<512x64xf32>
    %3 = tpu.matmul %1, %2, %cst {dimension_numbers = #tpu.dot_dimension_numbers<[1], [0], [0], [1], [0, 0, 1, 1], [], []>} : vector<512x8xbf16>, vector<8x64xbf16>, vector<512x64xf32> -> vector<512x64xf32>
    %c0_4 = arith.constant 0 : index
    %c0_5 = arith.constant 0 : index
    %4 = vector.load %arg8[%c0_4, %c0_5] : memref<1x64xf32, #tpu.memory_space<vmem>>, vector<1x64xf32>
    %5 = vector.broadcast %4 : vector<1x64xf32> to vector<512x64xf32>
    %6 = arith.addf %3, %5 : vector<512x64xf32>
    %cst_6 = arith.constant 0.000000e+00 : f32
    %7 = vector.broadcast %cst_6 : f32 to vector<512x64xf32>
    %8 = arith.cmpf ogt, %6, %7 : vector<512x64xf32>
    %cst_7 = arith.constant 2.000000e-01 : f32
    %9 = vector.broadcast %cst_7 : f32 to vector<512x64xf32>
    %10 = arith.mulf %9, %6 : vector<512x64xf32>
    %11 = arith.select %8, %6, %10 : vector<512x64xi1>, vector<512x64xf32>
    %12 = arith.truncf %11 : vector<512x64xf32> to vector<512x64xbf16>
    %c0_8 = arith.constant 0 : index
    %c0_9 = arith.constant 0 : index
    %13 = vector.load %arg4[%c0_8, %c0_9] : memref<64x64xbf16, #tpu.memory_space<vmem>>, vector<64x64xbf16>
    %cst_10 = arith.constant dense<0.000000e+00> : vector<512x64xf32>
    %14 = tpu.matmul %12, %13, %cst_10 {dimension_numbers = #tpu.dot_dimension_numbers<[1], [0], [0], [1], [0, 0, 1, 1], [], []>} : vector<512x64xbf16>, vector<64x64xbf16>, vector<512x64xf32> -> vector<512x64xf32>
    %c0_11 = arith.constant 0 : index
    %c0_12 = arith.constant 0 : index
    %15 = vector.load %arg9[%c0_11, %c0_12] : memref<1x64xf32, #tpu.memory_space<vmem>>, vector<1x64xf32>
    %16 = vector.broadcast %15 : vector<1x64xf32> to vector<512x64xf32>
    %17 = arith.addf %14, %16 : vector<512x64xf32>
    %cst_13 = arith.constant 0.000000e+00 : f32
    %18 = vector.broadcast %cst_13 : f32 to vector<512x64xf32>
    %19 = arith.cmpf ogt, %17, %18 : vector<512x64xf32>
    %cst_14 = arith.constant 2.000000e-01 : f32
    %20 = vector.broadcast %cst_14 : f32 to vector<512x64xf32>
    %21 = arith.mulf %20, %17 : vector<512x64xf32>
    %22 = arith.select %19, %17, %21 : vector<512x64xi1>, vector<512x64xf32>
    %23 = arith.truncf %22 : vector<512x64xf32> to vector<512x64xbf16>
    %c0_15 = arith.constant 0 : index
    %c0_16 = arith.constant 0 : index
    %24 = vector.load %arg5[%c0_15, %c0_16] : memref<64x128xbf16, #tpu.memory_space<vmem>>, vector<64x128xbf16>
    %cst_17 = arith.constant dense<0.000000e+00> : vector<512x128xf32>
    %25 = tpu.matmul %23, %24, %cst_17 {dimension_numbers = #tpu.dot_dimension_numbers<[1], [0], [0], [1], [0, 0, 1, 1], [], []>} : vector<512x64xbf16>, vector<64x128xbf16>, vector<512x128xf32> -> vector<512x128xf32>
    %c0_18 = arith.constant 0 : index
    %c0_19 = arith.constant 0 : index
    %26 = vector.load %arg10[%c0_18, %c0_19] : memref<1x128xf32, #tpu.memory_space<vmem>>, vector<1x128xf32>
    %27 = vector.broadcast %26 : vector<1x128xf32> to vector<512x128xf32>
    %28 = arith.addf %25, %27 : vector<512x128xf32>
    %cst_20 = arith.constant 0.000000e+00 : f32
    %29 = vector.broadcast %cst_20 : f32 to vector<512x128xf32>
    %30 = arith.cmpf ogt, %28, %29 : vector<512x128xf32>
    %cst_21 = arith.constant 2.000000e-01 : f32
    %31 = vector.broadcast %cst_21 : f32 to vector<512x128xf32>
    %32 = arith.mulf %31, %28 : vector<512x128xf32>
    %33 = arith.select %30, %28, %32 : vector<512x128xi1>, vector<512x128xf32>
    %34 = arith.truncf %33 : vector<512x128xf32> to vector<512x128xbf16>
    %c0_22 = arith.constant 0 : index
    %c0_23 = arith.constant 0 : index
    %35 = vector.load %arg6[%c0_22, %c0_23] : memref<128x256xbf16, #tpu.memory_space<vmem>>, vector<128x256xbf16>
    %cst_24 = arith.constant dense<0.000000e+00> : vector<512x256xf32>
    %36 = tpu.matmul %34, %35, %cst_24 {dimension_numbers = #tpu.dot_dimension_numbers<[1], [0], [0], [1], [0, 0, 1, 1], [], []>} : vector<512x128xbf16>, vector<128x256xbf16>, vector<512x256xf32> -> vector<512x256xf32>
    %c0_25 = arith.constant 0 : index
    %c0_26 = arith.constant 0 : index
    %37 = vector.load %arg11[%c0_25, %c0_26] : memref<1x256xf32, #tpu.memory_space<vmem>>, vector<1x256xf32>
    %38 = vector.broadcast %37 : vector<1x256xf32> to vector<512x256xf32>
    %39 = arith.addf %36, %38 : vector<512x256xf32>
    %cst_27 = arith.constant 0.000000e+00 : f32
    %40 = vector.broadcast %cst_27 : f32 to vector<512x256xf32>
    %41 = arith.cmpf ogt, %39, %40 : vector<512x256xf32>
    %cst_28 = arith.constant 2.000000e-01 : f32
    %42 = vector.broadcast %cst_28 : f32 to vector<512x256xf32>
    %43 = arith.mulf %42, %39 : vector<512x256xf32>
    %44 = arith.select %41, %39, %43 : vector<512x256xi1>, vector<512x256xf32>
    %45 = arith.truncf %44 : vector<512x256xf32> to vector<512x256xbf16>
    %c0_29 = arith.constant 0 : index
    %c0_30 = arith.constant 0 : index
    %46 = vector.load %arg7[%c0_29, %c0_30] : memref<256x1024xbf16, #tpu.memory_space<vmem>>, vector<256x1024xbf16>
    %cst_31 = arith.constant dense<0.000000e+00> : vector<512x1024xf32>
    %47 = tpu.matmul %45, %46, %cst_31 {dimension_numbers = #tpu.dot_dimension_numbers<[1], [0], [0], [1], [0, 0, 1, 1], [], []>} : vector<512x256xbf16>, vector<256x1024xbf16>, vector<512x1024xf32> -> vector<512x1024xf32>
    %cst_32 = arith.constant dense<0xFF800000> : vector<1024xf32>
    %48 = vector.multi_reduction <maximumf>, %47, %cst_32 [0] : vector<512x1024xf32> to vector<1024xf32>
    %49 = vector.shape_cast %48 : vector<1024xf32> to vector<1x1024xf32>
    %c0_i32 = arith.constant 0 : i32
    %50 = arith.cmpi eq, %arg1, %c0_i32 : i32
    %51 = arith.extui %50 : i1 to i32
    %c0_i32_33 = arith.constant 0 : i32
    %52 = arith.cmpi ne, %51, %c0_i32_33 : i32
    scf.if %52 {
      %cst_40 = arith.constant 0xFF800000 : f32
      %59 = vector.broadcast %cst_40 : f32 to vector<1x1024xf32>
      %c0_41 = arith.constant 0 : index
      %c0_42 = arith.constant 0 : index
      %60 = vector.load %arg16[%c0_41, %c0_42] : memref<1x1024xf32, #tpu.memory_space<vmem>>, vector<1x1024xf32>
      tpu.vector_store %arg16[%c0_41, %c0_42], %59 {strides = array<i32>} : memref<1x1024xf32, #tpu.memory_space<vmem>>, vector<1x1024xf32>,
    } else {
    }
    %c0_34 = arith.constant 0 : index
    %c0_35 = arith.constant 0 : index
    %53 = vector.load %arg16[%c0_34, %c0_35] : memref<1x1024xf32, #tpu.memory_space<vmem>>, vector<1x1024xf32>
    %54 = arith.maximumf %53, %49 : vector<1x1024xf32>
    %c0_36 = arith.constant 0 : index
    %c0_37 = arith.constant 0 : index
    %55 = vector.load %arg16[%c0_36, %c0_37] : memref<1x1024xf32, #tpu.memory_space<vmem>>, vector<1x1024xf32>
    tpu.vector_store %arg16[%c0_36, %c0_37], %54 {strides = array<i32>} : memref<1x1024xf32, #tpu.memory_space<vmem>>, vector<1x1024xf32>,
    %c0_i32_38 = arith.constant 0 : i32
    %56 = arith.cmpi eq, %arg1, %c0_i32_38 : i32
    %57 = arith.extui %56 : i1 to i32
    %c0_i32_39 = arith.constant 0 : i32
    %58 = arith.cmpi ne, %57, %c0_i32_39 : i32
    scf.if %58 {
      %c0_40 = arith.constant 0 : index
      %c0_41 = arith.constant 0 : index
      %59 = vector.load %arg16[%c0_40, %c0_41] : memref<1x1024xf32, #tpu.memory_space<vmem>>, vector<1x1024xf32>
      %60 = arith.truncf %59 : vector<1x1024xf32> to vector<1x1024xbf16>
      %c0_42 = arith.constant 0 : index
      %c0_43 = arith.constant 0 : index
      %61 = vector.load %arg12[%c0_42, %c0_43] : memref<1024x512xbf16, #tpu.memory_space<vmem>>, vector<1024x512xbf16>
      %cst_44 = arith.constant dense<0.000000e+00> : vector<1x512xf32>
      %62 = tpu.matmul %60, %61, %cst_44 {dimension_numbers = #tpu.dot_dimension_numbers<[1], [0], [0], [1], [0, 0, 1, 1], [], []>} : vector<1x1024xbf16>, vector<1024x512xbf16>, vector<1x512xf32> -> vector<1x512xf32>
      %c0_45 = arith.constant 0 : index
      %c0_46 = arith.constant 0 : index
      %63 = vector.load %arg13[%c0_45, %c0_46] : memref<1x512xf32, #tpu.memory_space<vmem>>, vector<1x512xf32>
      %64 = arith.addf %62, %63 : vector<1x512xf32>
      %cst_47 = arith.constant 0.000000e+00 : f32
      %65 = vector.broadcast %cst_47 : f32 to vector<1x512xf32>
      %66 = arith.maximumf %64, %65 : vector<1x512xf32>
      %67 = arith.truncf %66 : vector<1x512xf32> to vector<1x512xbf16>
      %c0_48 = arith.constant 0 : index
      %c0_49 = arith.constant 0 : index
      %68 = vector.load %arg14[%c0_48, %c0_49] : memref<512x256xbf16, #tpu.memory_space<vmem>>, vector<512x256xbf16>
      %cst_50 = arith.constant dense<0.000000e+00> : vector<1x256xf32>
      %69 = tpu.matmul %67, %68, %cst_50 {dimension_numbers = #tpu.dot_dimension_numbers<[1], [0], [0], [1], [0, 0, 1, 1], [], []>} : vector<1x512xbf16>, vector<512x256xbf16>, vector<1x256xf32> -> vector<1x256xf32>
      %c0_51 = arith.constant 0 : index
      %c0_52 = arith.constant 0 : index
      %c0_53 = arith.constant 0 : index
      %70 = vector.load %arg15[%c0_51, %c0_52, %c0_53] : memref<1x1x256xf32, #tpu.memory_space<vmem>>, vector<1x1x256xf32>
      %71 = vector.shape_cast %70 : vector<1x1x256xf32> to vector<1x256xf32>
      %72 = vector.shape_cast %69 : vector<1x256xf32> to vector<1x1x256xf32>
      tpu.vector_store %arg15[%c0_51, %c0_52, %c0_53], %72 {strides = array<i32>} : memref<1x1x256xf32, #tpu.memory_space<vmem>>, vector<1x1x256xf32>,
    } else {
    }
    return
  }
  func.func @transform_0(%arg0: i32, %arg1: i32) -> (i32, i32, i32) {
    %c0_i32 = arith.constant 0 : i32
    %c0_i32_0 = arith.constant 0 : i32
    return %arg0, %arg1, %c0_i32 : i32, i32, i32
  }
  func.func @transform_1(%arg0: i32, %arg1: i32) -> (i32, i32) {
    %c0_i32 = arith.constant 0 : i32
    %c0_i32_0 = arith.constant 0 : i32
    %c0_i32_1 = arith.constant 0 : i32
    return %c0_i32, %c0_i32_0 : i32, i32
  }
  func.func @transform_2(%arg0: i32, %arg1: i32) -> (i32, i32) {
    %c0_i32 = arith.constant 0 : i32
    %c0_i32_0 = arith.constant 0 : i32
    %c0_i32_1 = arith.constant 0 : i32
    return %c0_i32, %c0_i32_0 : i32, i32
  }
  func.func @transform_3(%arg0: i32, %arg1: i32) -> (i32, i32) {
    %c0_i32 = arith.constant 0 : i32
    %c0_i32_0 = arith.constant 0 : i32
    %c0_i32_1 = arith.constant 0 : i32
    return %c0_i32, %c0_i32_0 : i32, i32
  }
  func.func @transform_4(%arg0: i32, %arg1: i32) -> (i32, i32) {
    %c0_i32 = arith.constant 0 : i32
    %c0_i32_0 = arith.constant 0 : i32
    %c0_i32_1 = arith.constant 0 : i32
    return %c0_i32, %c0_i32_0 : i32, i32
  }
  func.func @transform_5(%arg0: i32, %arg1: i32) -> (i32, i32) {
    %c0_i32 = arith.constant 0 : i32
    %c0_i32_0 = arith.constant 0 : i32
    %c0_i32_1 = arith.constant 0 : i32
    return %c0_i32, %c0_i32_0 : i32, i32
  }
  func.func @transform_6(%arg0: i32, %arg1: i32) -> (i32, i32) {
    %c0_i32 = arith.constant 0 : i32
    %c0_i32_0 = arith.constant 0 : i32
    %c0_i32_1 = arith.constant 0 : i32
    return %c0_i32, %c0_i32_0 : i32, i32
  }
  func.func @transform_7(%arg0: i32, %arg1: i32) -> (i32, i32) {
    %c0_i32 = arith.constant 0 : i32
    %c0_i32_0 = arith.constant 0 : i32
    %c0_i32_1 = arith.constant 0 : i32
    return %c0_i32, %c0_i32_0 : i32, i32
  }
  func.func @transform_8(%arg0: i32, %arg1: i32) -> (i32, i32) {
    %c0_i32 = arith.constant 0 : i32
    %c0_i32_0 = arith.constant 0 : i32
    %c0_i32_1 = arith.constant 0 : i32
    return %c0_i32, %c0_i32_0 : i32, i32
  }
  func.func @transform_9(%arg0: i32, %arg1: i32) -> (i32, i32) {
    %c0_i32 = arith.constant 0 : i32
    %c0_i32_0 = arith.constant 0 : i32
    %c0_i32_1 = arith.constant 0 : i32
    return %c0_i32, %c0_i32_0 : i32, i32
  }
  func.func @transform_10(%arg0: i32, %arg1: i32) -> (i32, i32) {
    %c0_i32 = arith.constant 0 : i32
    %c0_i32_0 = arith.constant 0 : i32
    %c0_i32_1 = arith.constant 0 : i32
    return %c0_i32, %c0_i32_0 : i32, i32
  }
  func.func @transform_11(%arg0: i32, %arg1: i32) -> (i32, i32) {
    %c0_i32 = arith.constant 0 : i32
    %c0_i32_0 = arith.constant 0 : i32
    %c0_i32_1 = arith.constant 0 : i32
    return %c0_i32, %c0_i32_0 : i32, i32
  }
  func.func @transform_12(%arg0: i32, %arg1: i32) -> (i32, i32) {
    %c0_i32 = arith.constant 0 : i32
    %c0_i32_0 = arith.constant 0 : i32
    %c0_i32_1 = arith.constant 0 : i32
    return %c0_i32, %c0_i32_0 : i32, i32
  }
  func.func @transform_13(%arg0: i32, %arg1: i32) -> (i32, i32, i32) {
    %c0_i32 = arith.constant 0 : i32
    %c0_i32_0 = arith.constant 0 : i32
    %c0_i32_1 = arith.constant 0 : i32
    return %arg0, %c0_i32, %c0_i32_0 : i32, i32, i32
  }
}

</mosaic_0001>

<llo_original>
// kernel: tpu_custom_call.1
$region0: #{tpu_custom_call.1}
  #allocation0 [shape = 'u32[]', space=smem, size = 0x4, offset = 0x4, fixed_abs, tag = 'smem constant byte address 0x4 - core index']
  #allocation1 [shape = 'u32[144,128]{1,0:T(1,128)}', space=vmem, size = 0x12000, scoped, tag = 'internal scratch']
  #allocation2 [shape = 'f32[1,1024]{1,0:T(1,128)}', space=vmem, size = 0x1000, scoped, tag = 'scratch operand']
  %s0 = inlined_call_operand.vmem [shape: bf16[2,512,8], index: 0, kind: input, shape index: {}]
  %s1 = inlined_call_operand.vmem [shape: bf16[8,64], index: 1, kind: input, shape index: {}]
  %s2 = inlined_call_operand.vmem [shape: bf16[64,64], index: 2, kind: input, shape index: {}]
  %s3 = inlined_call_operand.vmem [shape: bf16[64,128], index: 3, kind: input, shape index: {}]
  %s4 = inlined_call_operand.hbm [shape: bf16[128,256], index: 4, kind: input, shape index: {}]
  %s5 = inlined_call_operand.hbm [shape: bf16[256,1024], index: 5, kind: input, shape index: {}]
  %s6 = inlined_call_operand.vmem [shape: f32[1,64], index: 6, kind: input, shape index: {}]
  %s7 = inlined_call_operand.vmem [shape: f32[1,64], index: 7, kind: input, shape index: {}]
  %s8 = inlined_call_operand.vmem [shape: f32[1,128], index: 8, kind: input, shape index: {}]
  %s9 = inlined_call_operand.vmem [shape: f32[1,256], index: 9, kind: input, shape index: {}]
  %s10 = inlined_call_operand.hbm [shape: bf16[1024,512], index: 10, kind: input, shape index: {}]
  %s11 = inlined_call_operand.vmem [shape: f32[1,512], index: 11, kind: input, shape index: {}]
  %s12 = inlined_call_operand.vmem [shape: bf16[512,256], index: 12, kind: input, shape index: {}]
  %s13 = inlined_call_operand.hbm [shape: f32[2,1,256], index: 13, kind: output, shape index: {}]
  %s14 = sld [smem:[#allocation0]]
  $region105: #{tpu_custom_call.1} parent=0
    _
  %s16 = ssub.s32 1, %s14
  %s17 = scalar_select 0, %s16, %s14
  $region1: #{tpu_custom_call.1} parent=0
    #allocation3 [shape = 'u8[65536]{0}', space=vmem, size = 0x10000, scoped, tag = 'input window, operand 4, single buffered']
    #allocation4 [shape = 's32[2]{0}', space=sflag, size = 0x8, scoped, tag = 'scoped memory for tpu_custom_call.1']
    #allocation5 [shape = 's32[2]{0}', space=sflag, size = 0x8, scoped, tag = 'scoped memory for tpu_custom_call.1']
    #allocation6 [shape = 'u8[524288]{0}', space=vmem, size = 0x80000, scoped, tag = 'input window, operand 5, single buffered']
    #allocation7 [shape = 's32[1]{0}', space=sflag, size = 0x4, scoped, tag = 'scoped memory for tpu_custom_call.1']
    #allocation8 [shape = 'u8[1048576]{0}', space=vmem, size = 0x100000, scoped, tag = 'input window, operand 10, single buffered']
    #allocation9 [shape = 'u8[2048]{0}', space=vmem, size = 0x800, scoped, tag = 'output window, operand 0']
    %18 = vsyncpa [#allocation4], 0
    %19 = vsyncpa [#allocation7], 0
    %20 = vsyncpa [#allocation5], 0
    %s21 = scalar_lea.sflag [#allocation5], 1
    %22 = vsyncpa %s21, 0
    loop: start=0, step=1, limit=4
    $region2: #{tpu_custom_call.1} parent=1 // loop_pre_header
      _
    $region3: #{tpu_custom_call.1} parent=1 // loop_header
      %s24 = sphi 0, %s28
      %p25 = scmp.ge.s32.totalorder %s24, 4
      %s31 = sphi 0, %s43
      %s32 = sphi 0, %s39
      %s33 = sphi 0, %s31
      %s34 = sphi 0, %s32
      %s35 = sphi 0, %s33
      %s36 = sphi 0, %s34
      %s48 = sphi 0, %s50
      %s51 = sphi 0, %s48
      %s52 = sphi 0, %s51
      %s68 = sphi 0, %s52
      %s72 = sphi 0, %s72
      %s74 = sphi 0, %s72
      %s75 = sphi 0, %s74
      %s89 = sphi 0, %s75
      %s93 = sphi 0, %s93
      %s95 = sphi 0, %s93
      %s96 = sphi 0, %s95
      %s110 = sphi 0, %s96
      %s114 = sphi 0, %s114
      %s116 = sphi 0, %s114
      %s117 = sphi 0, %s116
      %s131 = sphi 0, %s117
      %s135 = sphi 0, %s135
      %s137 = sphi 0, %s135
      %s138 = sphi 0, %s137
      %s152 = sphi 0, %s138
      %s156 = sphi 0, %s156
      %s158 = sphi 0, %s156
      %s159 = sphi 0, %s158
      %s173 = sphi 0, %s159
      %s177 = sphi 0, %s177
      %s179 = sphi 0, %s177
      %s180 = sphi 0, %s179
      %s194 = sphi 0, %s180
      %s198 = sphi 0, %s198
      %s200 = sphi 0, %s198
      %s201 = sphi 0, %s200
      %s215 = sphi 0, %s201
      %s219 = sphi 0, %s219
      %s221 = sphi 0, %s219
      %s222 = sphi 0, %s221
      %s236 = sphi 0, %s222
      %s240 = sphi 0, %s240
      %s242 = sphi 0, %s240
      %s243 = sphi 0, %s242
      %s257 = sphi 0, %s243
      %s261 = sphi 0, %s261
      %s263 = sphi 0, %s261
      %s264 = sphi 0, %s263
      %s278 = sphi 0, %s264
      %s282 = sphi 0, %s282
      %s284 = sphi 0, %s282
      %s285 = sphi 0, %s284
      %s299 = sphi 0, %s285
      %s303 = sphi 0, %s303
      %s305 = sphi 0, %s303
      %s306 = sphi 0, %s305
      %s320 = sphi 0, %s306
      %s326 = sphi 0, %s328
      %s329 = sphi 0, %s326
      %s330 = sphi 0, %s329
      %s346 = sphi 0, %s330
    $region4: #{tpu_custom_call.1} parent=1 // loop_header_branch
      %27 = sbr.rel (%p25) target = $region8
    $region5: #{tpu_custom_call.1} parent=1 // loop_body
      %s29 = ssub.s32 %s24, 1
      %s30 = ssub.s32 %s24, 2
      %s37 = sadd.s32 1, %s32
      %p38 = scmp.ge.s32.totalorder %s37, 1
      %s39 = scalar_select %p38, 0, %s37
      %s40 = sadd.s32 1, %s31
      %s41 = scalar_select %p38, %s40, %s31
      %p42 = scmp.ge.s32.totalorder %s41, 2
      %s43 = scalar_select %p42, 0, %s41
      %s44 = ssub.s32 %s31, %s43
      %s45 = ssub.s32 %s32, %s39
      %s46 = sor.u32 %s44, %s45
      %p47 = scmp.eq.s32.totalorder %s46, 0
      %s49 = sadd.s32 %s48, 1
      %s50 = scalar_select %p47, %s48, %s49
      %p53 = pneg %p47
      %p54 = scmp.eq.s32.totalorder %s24, 1
      %p55 = por %p53, %p54
      %p56 = scmp.ne.s32.totalorder %s48, %s51
      %p57 = scmp.eq.s32.totalorder %s24, 0
      %p58 = por %p56, %p57
      %p59 = scmp.ne.s32.totalorder %s48, %s51
      %p60 = scmp.eq.s32.totalorder %s29, 1
      %p61 = por %p59, %p60
      %p62 = scmp.ne.s32.totalorder %s51, %s52
      %p63 = scmp.eq.s32.totalorder %s29, 0
      %p64 = por %p62, %p63
      %p65 = scmp.ne.s32.totalorder %s51, %s52
      %p66 = scmp.eq.s32.totalorder %s30, 1
      %p67 = por %p65, %p66
      %p69 = scmp.ne.s32.totalorder %s52, %s68
      %p70 = scmp.eq.s32.totalorder %s30, 0
      %p71 = por %p69, %p70
      %s73 = sadd.s32 %s72, 1
      %p76 = scmp.eq.s32.totalorder %s24, 1
      %p77 = scmp.ne.s32.totalorder %s72, %s74
      %p78 = scmp.eq.s32.totalorder %s24, 0
      %p79 = por %p77, %p78
      %p80 = scmp.ne.s32.totalorder %s72, %s74
      %p81 = scmp.eq.s32.totalorder %s29, 1
      %p82 = por %p80, %p81
      %p83 = scmp.ne.s32.totalorder %s74, %s75
      %p84 = scmp.eq.s32.totalorder %s29, 0
      %p85 = por %p83, %p84
      %p86 = scmp.ne.s32.totalorder %s74, %s75
      %p87 = scmp.eq.s32.totalorder %s30, 1
      %p88 = por %p86, %p87
      %p90 = scmp.ne.s32.totalorder %s75, %s89
      %p91 = scmp.eq.s32.totalorder %s30, 0
      %p92 = por %p90, %p91
      %s94 = sadd.s32 %s93, 1
      %p97 = scmp.eq.s32.totalorder %s24, 1
      %p98 = scmp.ne.s32.totalorder %s93, %s95
      %p99 = scmp.eq.s32.totalorder %s24, 0
      %p100 = por %p98, %p99
      %p101 = scmp.ne.s32.totalorder %s93, %s95
      %p102 = scmp.eq.s32.totalorder %s29, 1
      %p103 = por %p101, %p102
      %p104 = scmp.ne.s32.totalorder %s95, %s96
      %p105 = scmp.eq.s32.totalorder %s29, 0
      %p106 = por %p104, %p105
      %p107 = scmp.ne.s32.totalorder %s95, %s96
      %p108 = scmp.eq.s32.totalorder %s30, 1
      %p109 = por %p107, %p108
      %p111 = scmp.ne.s32.totalorder %s96, %s110
      %p112 = scmp.eq.s32.totalorder %s30, 0
      %p113 = por %p111, %p112
      %s115 = sadd.s32 %s114, 1
      %p118 = scmp.eq.s32.totalorder %s24, 1
      %p119 = scmp.ne.s32.totalorder %s114, %s116
      %p120 = scmp.eq.s32.totalorder %s24, 0
      %p121 = por %p119, %p120
      %p122 = scmp.ne.s32.totalorder %s114, %s116
      %p123 = scmp.eq.s32.totalorder %s29, 1
      %p124 = por %p122, %p123
      %p125 = scmp.ne.s32.totalorder %s116, %s117
      %p126 = scmp.eq.s32.totalorder %s29, 0
      %p127 = por %p125, %p126
      %p128 = scmp.ne.s32.totalorder %s116, %s117
      %p129 = scmp.eq.s32.totalorder %s30, 1
      %p130 = por %p128, %p129
      %p132 = scmp.ne.s32.totalorder %s117, %s131
      %p133 = scmp.eq.s32.totalorder %s30, 0
      %p134 = por %p132, %p133
      %s136 = sadd.s32 %s135, 1
      %p139 = scmp.eq.s32.totalorder %s24, 1
      %p140 = scmp.ne.s32.totalorder %s135, %s137
      %p141 = scmp.eq.s32.totalorder %s24, 0
      %p142 = por %p140, %p141
      %p143 = scmp.ne.s32.totalorder %s135, %s137
      %p144 = scmp.eq.s32.totalorder %s29, 1
      %p145 = por %p143, %p144
      %p146 = scmp.ne.s32.totalorder %s137, %s138
      %p147 = scmp.eq.s32.totalorder %s29, 0
      %p148 = por %p146, %p147
      %p149 = scmp.ne.s32.totalorder %s137, %s138
      %p150 = scmp.eq.s32.totalorder %s30, 1
      %p151 = por %p149, %p150
      %p153 = scmp.ne.s32.totalorder %s138, %s152
      %p154 = scmp.eq.s32.totalorder %s30, 0
      %p155 = por %p153, %p154
      %s157 = sadd.s32 %s156, 1
      %p160 = scmp.eq.s32.totalorder %s24, 1
      %p161 = scmp.ne.s32.totalorder %s156, %s158
      %p162 = scmp.eq.s32.totalorder %s24, 0
      %p163 = por %p161, %p162
      %p164 = scmp.ne.s32.totalorder %s156, %s158
      %p165 = scmp.eq.s32.totalorder %s29, 1
      %p166 = por %p164, %p165
      %p167 = scmp.ne.s32.totalorder %s158, %s159
      %p168 = scmp.eq.s32.totalorder %s29, 0
      %p169 = por %p167, %p168
      %p170 = scmp.ne.s32.totalorder %s158, %s159
      %p171 = scmp.eq.s32.totalorder %s30, 1
      %p172 = por %p170, %p171
      %p174 = scmp.ne.s32.totalorder %s159, %s173
      %p175 = scmp.eq.s32.totalorder %s30, 0
      %p176 = por %p174, %p175
      %s178 = sadd.s32 %s177, 1
      %p181 = scmp.eq.s32.totalorder %s24, 1
      %p182 = scmp.ne.s32.totalorder %s177, %s179
      %p183 = scmp.eq.s32.totalorder %s24, 0
      %p184 = por %p182, %p183
      %p185 = scmp.ne.s32.totalorder %s177, %s179
      %p186 = scmp.eq.s32.totalorder %s29, 1
      %p187 = por %p185, %p186
      %p188 = scmp.ne.s32.totalorder %s179, %s180
      %p189 = scmp.eq.s32.totalorder %s29, 0
      %p190 = por %p188, %p189
      %p191 = scmp.ne.s32.totalorder %s179, %s180
      %p192 = scmp.eq.s32.totalorder %s30, 1
      %p193 = por %p191, %p192
      %p195 = scmp.ne.s32.totalorder %s180, %s194
      %p196 = scmp.eq.s32.totalorder %s30, 0
      %p197 = por %p195, %p196
      %s199 = sadd.s32 %s198, 1
      %p202 = scmp.eq.s32.totalorder %s24, 1
      %p203 = scmp.ne.s32.totalorder %s198, %s200
      %p204 = scmp.eq.s32.totalorder %s24, 0
      %p205 = por %p203, %p204
      %p206 = scmp.ne.s32.totalorder %s198, %s200
      %p207 = scmp.eq.s32.totalorder %s29, 1
      %p208 = por %p206, %p207
      %p209 = scmp.ne.s32.totalorder %s200, %s201
      %p210 = scmp.eq.s32.totalorder %s29, 0
      %p211 = por %p209, %p210
      %p212 = scmp.ne.s32.totalorder %s200, %s201
      %p213 = scmp.eq.s32.totalorder %s30, 1
      %p214 = por %p212, %p213
      %p216 = scmp.ne.s32.totalorder %s201, %s215
      %p217 = scmp.eq.s32.totalorder %s30, 0
      %p218 = por %p216, %p217
      %s220 = sadd.s32 %s219, 1
      %p223 = scmp.eq.s32.totalorder %s24, 1
      %p224 = scmp.ne.s32.totalorder %s219, %s221
      %p225 = scmp.eq.s32.totalorder %s24, 0
      %p226 = por %p224, %p225
      %p227 = scmp.ne.s32.totalorder %s219, %s221
      %p228 = scmp.eq.s32.totalorder %s29, 1
      %p229 = por %p227, %p228
      %p230 = scmp.ne.s32.totalorder %s221, %s222
      %p231 = scmp.eq.s32.totalorder %s29, 0
      %p232 = por %p230, %p231
      %p233 = scmp.ne.s32.totalorder %s221, %s222
      %p234 = scmp.eq.s32.totalorder %s30, 1
      %p235 = por %p233, %p234
      %p237 = scmp.ne.s32.totalorder %s222, %s236
      %p238 = scmp.eq.s32.totalorder %s30, 0
      %p239 = por %p237, %p238
      %s241 = sadd.s32 %s240, 1
      %p244 = scmp.eq.s32.totalorder %s24, 1
      %p245 = scmp.ne.s32.totalorder %s240, %s242
      %p246 = scmp.eq.s32.totalorder %s24, 0
      %p247 = por %p245, %p246
      %p248 = scmp.ne.s32.totalorder %s240, %s242
      %p249 = scmp.eq.s32.totalorder %s29, 1
      %p250 = por %p248, %p249
      %p251 = scmp.ne.s32.totalorder %s242, %s243
      %p252 = scmp.eq.s32.totalorder %s29, 0
      %p253 = por %p251, %p252
      %p254 = scmp.ne.s32.totalorder %s242, %s243
      %p255 = scmp.eq.s32.totalorder %s30, 1
      %p256 = por %p254, %p255
      %p258 = scmp.ne.s32.totalorder %s243, %s257
      %p259 = scmp.eq.s32.totalorder %s30, 0
      %p260 = por %p258, %p259
      %s262 = sadd.s32 %s261, 1
      %p265 = scmp.eq.s32.totalorder %s24, 1
      %p266 = scmp.ne.s32.totalorder %s261, %s263
      %p267 = scmp.eq.s32.totalorder %s24, 0
      %p268 = por %p266, %p267
      %p269 = scmp.ne.s32.totalorder %s261, %s263
      %p270 = scmp.eq.s32.totalorder %s29, 1
      %p271 = por %p269, %p270
      %p272 = scmp.ne.s32.totalorder %s263, %s264
      %p273 = scmp.eq.s32.totalorder %s29, 0
      %p274 = por %p272, %p273
      %p275 = scmp.ne.s32.totalorder %s263, %s264
      %p276 = scmp.eq.s32.totalorder %s30, 1
      %p277 = por %p275, %p276
      %p279 = scmp.ne.s32.totalorder %s264, %s278
      %p280 = scmp.eq.s32.totalorder %s30, 0
      %p281 = por %p279, %p280
      %s283 = sadd.s32 %s282, 1
      %p286 = scmp.eq.s32.totalorder %s24, 1
      %p287 = scmp.ne.s32.totalorder %s282, %s284
      %p288 = scmp.eq.s32.totalorder %s24, 0
      %p289 = por %p287, %p288
      %p290 = scmp.ne.s32.totalorder %s282, %s284
      %p291 = scmp.eq.s32.totalorder %s29, 1
      %p292 = por %p290, %p291
      %p293 = scmp.ne.s32.totalorder %s284, %s285
      %p294 = scmp.eq.s32.totalorder %s29, 0
      %p295 = por %p293, %p294
      %p296 = scmp.ne.s32.totalorder %s284, %s285
      %p297 = scmp.eq.s32.totalorder %s30, 1
      %p298 = por %p296, %p297
      %p300 = scmp.ne.s32.totalorder %s285, %s299
      %p301 = scmp.eq.s32.totalorder %s30, 0
      %p302 = por %p300, %p301
      %s304 = sadd.s32 %s303, 1
      %p307 = scmp.eq.s32.totalorder %s24, 1
      %p308 = scmp.ne.s32.totalorder %s303, %s305
      %p309 = scmp.eq.s32.totalorder %s24, 0
      %p310 = por %p308, %p309
      %p311 = scmp.ne.s32.totalorder %s303, %s305
      %p312 = scmp.eq.s32.totalorder %s29, 1
      %p313 = por %p311, %p312
      %p314 = scmp.ne.s32.totalorder %s305, %s306
      %p315 = scmp.eq.s32.totalorder %s29, 0
      %p316 = por %p314, %p315
      %p317 = scmp.ne.s32.totalorder %s305, %s306
      %p318 = scmp.eq.s32.totalorder %s30, 1
      %p319 = por %p317, %p318
      %p321 = scmp.ne.s32.totalorder %s306, %s320
      %p322 = scmp.eq.s32.totalorder %s30, 0
      %p323 = por %p321, %p322
      %s324 = ssub.s32 %s31, %s43
      %p325 = scmp.eq.s32.totalorder %s324, 0
      %s327 = sadd.s32 %s326, 1
      %s328 = scalar_select %p325, %s326, %s327
      %p331 = pneg %p325
      %p332 = scmp.eq.s32.totalorder %s24, 1
      %p333 = por %p331, %p332
      %p334 = scmp.ne.s32.totalorder %s326, %s329
      %p335 = scmp.eq.s32.totalorder %s24, 0
      %p336 = por %p334, %p335
      %p337 = scmp.ne.s32.totalorder %s326, %s329
      %p338 = scmp.eq.s32.totalorder %s29, 1
      %p339 = por %p337, %p338
      %p340 = scmp.ne.s32.totalorder %s329, %s330
      %p341 = scmp.eq.s32.totalorder %s29, 0
      %p342 = por %p340, %p341
      %p343 = scmp.ne.s32.totalorder %s329, %s330
      %p344 = scmp.eq.s32.totalorder %s30, 1
      %p345 = por %p343, %p344
      %p347 = scmp.ne.s32.totalorder %s330, %s346
      %p348 = scmp.eq.s32.totalorder %s30, 0
      %p349 = por %p347, %p348
      %p350 = scmp.le.s32.totalorder 1, %s24
      %p351 = scmp.lt.s32.totalorder %s24, 3
      %p352 = pnand %p350, %p351
      %p353 = pneg %p352
      // Predicated region
      $region9: #{tpu_custom_call.1} parent=5 // pred_check
        _
      $region10: #{tpu_custom_call.1} parent=5 // pred_check_branch
        %355 = sbr.rel (%p352) target = $region12
      $region11: #{tpu_custom_call.1} parent=5 // pred_region
        %s356 = ssub.s32 %s24, 1
        // Predicated region
        $region13: #{tpu_custom_call.1} parent=11 // pred_check
          %p357 = pneg %p85
        $region14: #{tpu_custom_call.1} parent=11 // pred_check_branch
          %359 = sbr.rel (%p357) target = $region16
        $region15: #{tpu_custom_call.1} parent=11 // pred_region
          _
        $region16: #{tpu_custom_call.1} parent=11 // pred_fallthru
          _
        // Predicated region
        $region17: #{tpu_custom_call.1} parent=11 // pred_check
          %p360 = pneg %p106
        $region18: #{tpu_custom_call.1} parent=11 // pred_check_branch
          %362 = sbr.rel (%p360) target = $region20
        $region19: #{tpu_custom_call.1} parent=11 // pred_region
          _
        $region20: #{tpu_custom_call.1} parent=11 // pred_fallthru
          _
        // Predicated region
        $region21: #{tpu_custom_call.1} parent=11 // pred_check
          %p363 = pneg %p127
        $region22: #{tpu_custom_call.1} parent=11 // pred_check_branch
          %365 = sbr.rel (%p363) target = $region24
        $region23: #{tpu_custom_call.1} parent=11 // pred_region
          _
        $region24: #{tpu_custom_call.1} parent=11 // pred_fallthru
          _
        // Predicated region
        $region25: #{tpu_custom_call.1} parent=11 // pred_check
          %p366 = pneg %p148
        $region26: #{tpu_custom_call.1} parent=11 // pred_check_branch
          %368 = sbr.rel (%p366) target = $region28
        $region27: #{tpu_custom_call.1} parent=11 // pred_region
          %s370 = ssub.s32 2048, 2048
          %371 = vsyncadd [#allocation4], %s370
          %s372 = sshll.u32 [#allocation3], 4
          %s373 = int_to_ptr.vmem [resolvable:$true] %s372
          %378 = dma.hbm_to_vmem [thread:$0]  %s4, 2048, %s373, [#allocation4], 128, 128, 8
        $region28: #{tpu_custom_call.1} parent=11 // pred_fallthru
          _
        // Predicated region
        $region29: #{tpu_custom_call.1} parent=11 // pred_check
          %p379 = pneg %p169
        $region30: #{tpu_custom_call.1} parent=11 // pred_check_branch
          %381 = sbr.rel (%p379) target = $region32
        $region31: #{tpu_custom_call.1} parent=11 // pred_region
          %s383 = ssub.s32 16384, 16384
          %384 = vsyncadd [#allocation7], %s383
          %s385 = sshll.u32 [#allocation6], 4
          %s386 = int_to_ptr.vmem [resolvable:$true] %s385
          %391 = dma.hbm_to_vmem [thread:$0]  %s5, 16384, %s386, [#allocation7], 512, 512, 32
        $region32: #{tpu_custom_call.1} parent=11 // pred_fallthru
          _
        // Predicated region
        $region33: #{tpu_custom_call.1} parent=11 // pred_check
          %p392 = pneg %p190
        $region34: #{tpu_custom_call.1} parent=11 // pred_check_branch
          %394 = sbr.rel (%p392) target = $region36
        $region35: #{tpu_custom_call.1} parent=11 // pred_region
          _
        $region36: #{tpu_custom_call.1} parent=11 // pred_fallthru
          _
        // Predicated region
        $region37: #{tpu_custom_call.1} parent=11 // pred_check
          %p395 = pneg %p211
        $region38: #{tpu_custom_call.1} parent=11 // pred_check_branch
          %397 = sbr.rel (%p395) target = $region40
        $region39: #{tpu_custom_call.1} parent=11 // pred_region
          _
        $region40: #{tpu_custom_call.1} parent=11 // pred_fallthru
          _
        // Predicated region
        $region41: #{tpu_custom_call.1} parent=11 // pred_check
          %p398 = pneg %p232
        $region42: #{tpu_custom_call.1} parent=11 // pred_check_branch
          %400 = sbr.rel (%p398) target = $region44
        $region43: #{tpu_custom_call.1} parent=11 // pred_region
          _
        $region44: #{tpu_custom_call.1} parent=11 // pred_fallthru
          _
        // Predicated region
        $region45: #{tpu_custom_call.1} parent=11 // pred_check
          %p401 = pneg %p253
        $region46: #{tpu_custom_call.1} parent=11 // pred_check_branch
          %403 = sbr.rel (%p401) target = $region48
        $region47: #{tpu_custom_call.1} parent=11 // pred_region
          _
        $region48: #{tpu_custom_call.1} parent=11 // pred_fallthru
          _
        // Predicated region
        $region49: #{tpu_custom_call.1} parent=11 // pred_check
          %p404 = pneg %p274
        $region50: #{tpu_custom_call.1} parent=11 // pred_check_branch
          %406 = sbr.rel (%p404) target = $region52
        $region51: #{tpu_custom_call.1} parent=11 // pred_region
          %s408 = ssub.s32 32768, 32768
          %409 = vsyncadd [#allocation7], %s408
          %s410 = sshll.u32 [#allocation8], 4
          %s411 = int_to_ptr.vmem [resolvable:$true] %s410
          %416 = dma.hbm_to_vmem [thread:$0]  %s10, 32768, %s411, [#allocation7], 256, 256, 16
        $region52: #{tpu_custom_call.1} parent=11 // pred_fallthru
          _
        // Predicated region
        $region53: #{tpu_custom_call.1} parent=11 // pred_check
          %p417 = pneg %p295
        $region54: #{tpu_custom_call.1} parent=11 // pred_check_branch
          %419 = sbr.rel (%p417) target = $region56
        $region55: #{tpu_custom_call.1} parent=11 // pred_region
          _
        $region56: #{tpu_custom_call.1} parent=11 // pred_fallthru
          _
        // Predicated region
        $region57: #{tpu_custom_call.1} parent=11 // pred_check
          %p420 = pneg %p316
        $region58: #{tpu_custom_call.1} parent=11 // pred_check_branch
          %422 = sbr.rel (%p420) target = $region60
        $region59: #{tpu_custom_call.1} parent=11 // pred_region
          _
        $region60: #{tpu_custom_call.1} parent=11 // pred_fallthru
          _
      $region12: #{tpu_custom_call.1} parent=5 // pred_fallthru
        _
      %p423 = scmp.lt.s32.totalorder %s24, 2
      // Predicated region
      $region61: #{tpu_custom_call.1} parent=5 // pred_check
        %p424 = pneg %p423
      $region62: #{tpu_custom_call.1} parent=5 // pred_check_branch
        %426 = sbr.rel (%p424) target = $region64
      $region63: #{tpu_custom_call.1} parent=5 // pred_region
        // Predicated region
        $region65: #{tpu_custom_call.1} parent=63 // pred_check
          %p427 = pneg %p58
        $region66: #{tpu_custom_call.1} parent=63 // pred_check_branch
          %429 = sbr.rel (%p427) target = $region68
        $region67: #{tpu_custom_call.1} parent=63 // pred_region
          %s430 = smul.u32 64, %s32
          %p431 = scmp.lt.s32.totalorder %s31, 1
          %s432 = scalar_select %p431, %s31, 1
          %p433 = scmp.lt.s32.totalorder %s430, 63
          %s434 = scalar_select %p433, %s430, 63
          %s435 = smul.addr %s432, 64
          %s436 = sadd.s32 %s434, %s435
          %s437 = smul.addr %s436, 4
          %s438 = scalar_lea.vmem %s0, %s437
          %s439 = smul.u32 64, %s32
        $region68: #{tpu_custom_call.1} parent=63 // pred_fallthru
          _
      $region64: #{tpu_custom_call.1} parent=5 // pred_fallthru
        _
      %p440 = scmp.le.s32.totalorder 1, %s24
      %p441 = scmp.lt.s32.totalorder %s24, 3
      %p442 = pnand %p440, %p441
      %p443 = pneg %p442
      // Predicated region
      $region69: #{tpu_custom_call.1} parent=5 // pred_check
        _
      $region70: #{tpu_custom_call.1} parent=5 // pred_check_branch
        %445 = sbr.rel (%p442) target = $region72
      $region71: #{tpu_custom_call.1} parent=5 // pred_region
        %s446 = ssub.s32 %s24, 1
        // Predicated region
        $region73: #{tpu_custom_call.1} parent=71 // pred_check
          %p447 = pneg %p148
        $region74: #{tpu_custom_call.1} parent=71 // pred_check_branch
          %449 = sbr.rel (%p447) target = $region76
        $region75: #{tpu_custom_call.1} parent=71 // pred_region
          %450 = dma.done [#allocation4], 2048
        $region76: #{tpu_custom_call.1} parent=71 // pred_fallthru
          _
        // Predicated region
        $region77: #{tpu_custom_call.1} parent=71 // pred_check
          %p451 = pneg %p169
        $region78: #{tpu_custom_call.1} parent=71 // pred_check_branch
          %453 = sbr.rel (%p451) target = $region80
        $region79: #{tpu_custom_call.1} parent=71 // pred_region
          %454 = dma.done [#allocation7], 16384
        $region80: #{tpu_custom_call.1} parent=71 // pred_fallthru
          _
        // Predicated region
        $region81: #{tpu_custom_call.1} parent=71 // pred_check
          %p455 = pneg %p274
        $region82: #{tpu_custom_call.1} parent=71 // pred_check_branch
          %457 = sbr.rel (%p455) target = $region84
        $region83: #{tpu_custom_call.1} parent=71 // pred_region
          %458 = dma.done [#allocation7], 32768
        $region84: #{tpu_custom_call.1} parent=71 // pred_fallthru
          _
        %s459 = smul.u32 64, %s34
        %p460 = scmp.lt.s32.totalorder %s33, 1
        %s461 = scalar_select %p460, %s33, 1
        %p462 = scmp.lt.s32.totalorder %s459, 63
        %s463 = scalar_select %p462, %s459, 63
        %s464 = smul.addr %s461, 64
        %s465 = sadd.s32 %s463, %s464
        %s466 = smul.addr %s465, 4
        %s467 = scalar_lea.vmem %s0, %s466
        %p468 = pneg %p64
        %p469 = pneg %p61
        %p470 = pneg %p85
        %p471 = pneg %p82
        %p472 = pneg %p106
        %p473 = pneg %p103
        %p474 = pneg %p127
        %p475 = pneg %p124
        %p476 = pneg %p148
        %p477 = pneg %p145
        %p478 = pneg %p169
        %p479 = pneg %p166
        %p480 = pneg %p190
        %p481 = pneg %p187
        %p482 = pneg %p211
        %p483 = pneg %p208
        %p484 = pneg %p232
        %p485 = pneg %p229
        %p486 = pneg %p253
        %p487 = pneg %p250
        %p488 = pneg %p274
        %p489 = pneg %p271
        %p490 = pneg %p295
        %p491 = pneg %p292
        %p492 = pneg %p316
        %p493 = pneg %p313
        %p494 = pneg %p342
        %p495 = pneg %p339
        %s496 = sand.u32 %s329, 1
        %s497 = scalar_lea.sflag [#allocation5], %s496
        %s498 = sand.u32 %s329, 1
        %s499 = smul.addr %s498, 2
        %s500 = scalar_lea.vmem [#allocation9], %s499
        %s501 = smul.u32 64, %s34
        %p502 = scmp.lt.s32.totalorder %s33, 1
        %s503 = scalar_select %p502, %s33, 1
        %p504 = scmp.lt.s32.totalorder %s501, 63
        %s505 = scalar_select %p504, %s501, 63
        %s506 = smul.addr %s503, 64
        %s507 = sadd.s32 %s505, %s506
        %s508 = smul.addr %s507, 4
        %s509 = scalar_lea.vmem %s0, %s508
        %s510 = smul.u32 64, %s34
        %v512 = vld [vmem:[%s509] sm:$0xf]
        %v513 = vld [vmem:[%s509 + $0x4] sm:$0xf]
        %v514 = vld [vmem:[%s509 + $0x8] sm:$0xf]
        %v515 = vld [vmem:[%s509 + $0xc] sm:$0xf]
        %v516 = vld [vmem:[%s509 + $0x10] sm:$0xf]
        %v517 = vld [vmem:[%s509 + $0x14] sm:$0xf]
        %v518 = vld [vmem:[%s509 + $0x18] sm:$0xf]
        %v519 = vld [vmem:[%s509 + $0x1c] sm:$0xf]
        %v520 = vld [vmem:[%s509 + $0x20] sm:$0xf]
        %v521 = vld [vmem:[%s509 + $0x24] sm:$0xf]
        %v522 = vld [vmem:[%s509 + $0x28] sm:$0xf]
        %v523 = vld [vmem:[%s509 + $0x2c] sm:$0xf]
        %v524 = vld [vmem:[%s509 + $0x30] sm:$0xf]
        %v525 = vld [vmem:[%s509 + $0x34] sm:$0xf]
        %v526 = vld [vmem:[%s509 + $0x38] sm:$0xf]
        %v527 = vld [vmem:[%s509 + $0x3c] sm:$0xf]
        %v528 = vld [vmem:[%s509 + $0x40] sm:$0xf]
        %v529 = vld [vmem:[%s509 + $0x44] sm:$0xf]
        %v530 = vld [vmem:[%s509 + $0x48] sm:$0xf]
        %v531 = vld [vmem:[%s509 + $0x4c] sm:$0xf]
        %v532 = vld [vmem:[%s509 + $0x50] sm:$0xf]
        %v533 = vld [vmem:[%s509 + $0x54] sm:$0xf]
        %v534 = vld [vmem:[%s509 + $0x58] sm:$0xf]
        %v535 = vld [vmem:[%s509 + $0x5c] sm:$0xf]
        %v536 = vld [vmem:[%s509 + $0x60] sm:$0xf]
        %v537 = vld [vmem:[%s509 + $0x64] sm:$0xf]
        %v538 = vld [vmem:[%s509 + $0x68] sm:$0xf]
        %v539 = vld [vmem:[%s509 + $0x6c] sm:$0xf]
        %v540 = vld [vmem:[%s509 + $0x70] sm:$0xf]
        %v541 = vld [vmem:[%s509 + $0x74] sm:$0xf]
        %v542 = vld [vmem:[%s509 + $0x78] sm:$0xf]
        %v543 = vld [vmem:[%s509 + $0x7c] sm:$0xf]
        %v544 = vld [vmem:[%s509 + $0x80] sm:$0xf]
        %v545 = vld [vmem:[%s509 + $0x84] sm:$0xf]
        %v546 = vld [vmem:[%s509 + $0x88] sm:$0xf]
        %v547 = vld [vmem:[%s509 + $0x8c] sm:$0xf]
        %v548 = vld [vmem:[%s509 + $0x90] sm:$0xf]
        %v549 = vld [vmem:[%s509 + $0x94] sm:$0xf]
        %v550 = vld [vmem:[%s509 + $0x98] sm:$0xf]
        %v551 = vld [vmem:[%s509 + $0x9c] sm:$0xf]
        %v552 = vld [vmem:[%s509 + $0xa0] sm:$0xf]
        %v553 = vld [vmem:[%s509 + $0xa4] sm:$0xf]
        %v554 = vld [vmem:[%s509 + $0xa8] sm:$0xf]
        %v555 = vld [vmem:[%s509 + $0xac] sm:$0xf]
        %v556 = vld [vmem:[%s509 + $0xb0] sm:$0xf]
        %v557 = vld [vmem:[%s509 + $0xb4] sm:$0xf]
        %v558 = vld [vmem:[%s509 + $0xb8] sm:$0xf]
        %v559 = vld [vmem:[%s509 + $0xbc] sm:$0xf]
        %v560 = vld [vmem:[%s509 + $0xc0] sm:$0xf]
        %v561 = vld [vmem:[%s509 + $0xc4] sm:$0xf]
        %v562 = vld [vmem:[%s509 + $0xc8] sm:$0xf]
        %v563 = vld [vmem:[%s509 + $0xcc] sm:$0xf]
        %v564 = vld [vmem:[%s509 + $0xd0] sm:$0xf]
        %v565 = vld [vmem:[%s509 + $0xd4] sm:$0xf]
        %v566 = vld [vmem:[%s509 + $0xd8] sm:$0xf]
        %v567 = vld [vmem:[%s509 + $0xdc] sm:$0xf]
        %v568 = vld [vmem:[%s509 + $0xe0] sm:$0xf]
        %v569 = vld [vmem:[%s509 + $0xe4] sm:$0xf]
        %v570 = vld [vmem:[%s509 + $0xe8] sm:$0xf]
        %v571 = vld [vmem:[%s509 + $0xec] sm:$0xf]
        %v572 = vld [vmem:[%s509 + $0xf0] sm:$0xf]
        %v573 = vld [vmem:[%s509 + $0xf4] sm:$0xf]
        %v574 = vld [vmem:[%s509 + $0xf8] sm:$0xf]
        %v575 = vld [vmem:[%s509 + $0xfc] sm:$0xf]
        %v576 = vld [vmem:[%s1] sm:$0xf]
        %v577 = vld [vmem:[%s6] sm:$0x1]
        %v579 = vlaneseq
        %v580 = vshrl.u32 %v579, 7
        %v581 = vsub.s32 0, %v580
        %v582 = vrot.slane %v577, %v581
        %v648 = vunpack.c.l.b16 %v512
        %v649 = vunpack.c.l.b16 %v513
        %v650 = vunpack.c.l.b16 %v514
        %v651 = vunpack.c.l.b16 %v515
        %v652 = vunpack.c.l.b16 %v516
        %v653 = vunpack.c.l.b16 %v517
        %v654 = vunpack.c.l.b16 %v518
        %v655 = vunpack.c.l.b16 %v519
        %v656 = vunpack.c.l.b16 %v520
        %v657 = vunpack.c.l.b16 %v521
        %v658 = vunpack.c.l.b16 %v522
        %v659 = vunpack.c.l.b16 %v523
        %v660 = vunpack.c.l.b16 %v524
        %v661 = vunpack.c.l.b16 %v525
        %v662 = vunpack.c.l.b16 %v526
        %v663 = vunpack.c.l.b16 %v527
        %v664 = vunpack.c.l.b16 %v528
        %v665 = vunpack.c.l.b16 %v529
        %v666 = vunpack.c.l.b16 %v530
        %v667 = vunpack.c.l.b16 %v531
        %v668 = vunpack.c.l.b16 %v532
        %v669 = vunpack.c.l.b16 %v533
        %v670 = vunpack.c.l.b16 %v534
        %v671 = vunpack.c.l.b16 %v535
        %v672 = vunpack.c.l.b16 %v536
        %v673 = vunpack.c.l.b16 %v537
        %v674 = vunpack.c.l.b16 %v538
        %v675 = vunpack.c.l.b16 %v539
        %v676 = vunpack.c.l.b16 %v540
        %v677 = vunpack.c.l.b16 %v541
        %v678 = vunpack.c.l.b16 %v542
        %v679 = vunpack.c.l.b16 %v543
        %v680 = vunpack.c.l.b16 %v544
        %v681 = vunpack.c.l.b16 %v545
        %v682 = vunpack.c.l.b16 %v546
        %v683 = vunpack.c.l.b16 %v547
        %v684 = vunpack.c.l.b16 %v548
        %v685 = vunpack.c.l.b16 %v549
        %v686 = vunpack.c.l.b16 %v550
        %v687 = vunpack.c.l.b16 %v551
        %v688 = vunpack.c.l.b16 %v552
        %v689 = vunpack.c.l.b16 %v553
        %v690 = vunpack.c.l.b16 %v554
        %v691 = vunpack.c.l.b16 %v555
        %v692 = vunpack.c.l.b16 %v556
        %v693 = vunpack.c.l.b16 %v557
        %v694 = vunpack.c.l.b16 %v558
        %v695 = vunpack.c.l.b16 %v559
        %v696 = vunpack.c.l.b16 %v560
        %v697 = vunpack.c.l.b16 %v561
        %v698 = vunpack.c.l.b16 %v562
        %v699 = vunpack.c.l.b16 %v563
        %v700 = vunpack.c.l.b16 %v564
        %v701 = vunpack.c.l.b16 %v565
        %v702 = vunpack.c.l.b16 %v566
        %v703 = vunpack.c.l.b16 %v567
        %v704 = vunpack.c.l.b16 %v568
        %v705 = vunpack.c.l.b16 %v569
        %v706 = vunpack.c.l.b16 %v570
        %v707 = vunpack.c.l.b16 %v571
        %v708 = vunpack.c.l.b16 %v572
        %v709 = vunpack.c.l.b16 %v573
        %v710 = vunpack.c.l.b16 %v574
        %v711 = vunpack.c.l.b16 %v575
        %v712 = vpack.c.b16 %v649, %v648
        %v713 = vpack.c.b16 %v651, %v650
        %v714 = vpack.c.b16 %v653, %v652
        %v715 = vpack.c.b16 %v655, %v654
        %v716 = vpack.c.b16 %v657, %v656
        %v717 = vpack.c.b16 %v659, %v658
        %v718 = vpack.c.b16 %v661, %v660
        %v719 = vpack.c.b16 %v663, %v662
        %v720 = vpack.c.b16 %v665, %v664
        %v721 = vpack.c.b16 %v667, %v666
        %v722 = vpack.c.b16 %v669, %v668
        %v723 = vpack.c.b16 %v671, %v670
        %v724 = vpack.c.b16 %v673, %v672
        %v725 = vpack.c.b16 %v675, %v674
        %v726 = vpack.c.b16 %v677, %v676
        %v727 = vpack.c.b16 %v679, %v678
        %v728 = vpack.c.b16 %v681, %v680
        %v729 = vpack.c.b16 %v683, %v682
        %v730 = vpack.c.b16 %v685, %v684
        %v731 = vpack.c.b16 %v687, %v686
        %v732 = vpack.c.b16 %v689, %v688
        %v733 = vpack.c.b16 %v691, %v690
        %v734 = vpack.c.b16 %v693, %v692
        %v735 = vpack.c.b16 %v695, %v694
        %v736 = vpack.c.b16 %v697, %v696
        %v737 = vpack.c.b16 %v699, %v698
        %v738 = vpack.c.b16 %v701, %v700
        %v739 = vpack.c.b16 %v703, %v702
        %v740 = vpack.c.b16 %v705, %v704
        %v741 = vpack.c.b16 %v707, %v706
        %v742 = vpack.c.b16 %v709, %v708
        %v743 = vpack.c.b16 %v711, %v710
        %vm744 = vcmask 64512
        %v746 = vsel %vm744, %v712, 0
        %v749 = vsel %vm744, %v713, 0
        %v752 = vsel %vm744, %v714, 0
        %v755 = vsel %vm744, %v715, 0
        %v758 = vsel %vm744, %v716, 0
        %v761 = vsel %vm744, %v717, 0
        %v764 = vsel %vm744, %v718, 0
        %v767 = vsel %vm744, %v719, 0
        %v770 = vsel %vm744, %v720, 0
        %v773 = vsel %vm744, %v721, 0
        %v776 = vsel %vm744, %v722, 0
        %v779 = vsel %vm744, %v723, 0
        %v782 = vsel %vm744, %v724, 0
        %v785 = vsel %vm744, %v725, 0
        %v788 = vsel %vm744, %v726, 0
        %v791 = vsel %vm744, %v727, 0
        %v794 = vsel %vm744, %v728, 0
        %v797 = vsel %vm744, %v729, 0
        %v800 = vsel %vm744, %v730, 0
        %v803 = vsel %vm744, %v731, 0
        %v806 = vsel %vm744, %v732, 0
        %v809 = vsel %vm744, %v733, 0
        %v812 = vsel %vm744, %v734, 0
        %v815 = vsel %vm744, %v735, 0
        %v818 = vsel %vm744, %v736, 0
        %v821 = vsel %vm744, %v737, 0
        %v824 = vsel %vm744, %v738, 0
        %v827 = vsel %vm744, %v739, 0
        %v830 = vsel %vm744, %v740, 0
        %v833 = vsel %vm744, %v741, 0
        %v836 = vsel %vm744, %v742, 0
        %v839 = vsel %vm744, %v743, 0
        %vm841 = vcmask 1043456
        %v843 = vsel %vm841, %v576, 0
        %845 = vmatprep.subr.bf16.mxu0 0
        %846 = vmatpush1.bf16.msra.mxu0 %v843
        %847 = vmatprep.subr.bf16.mxu0 0
        %848 = vmatpush1.bf16.msra.mxu0 0
        %849 = vmatprep.subr.bf16.mxu0 0
        %850 = vmatpush1.bf16.msra.mxu0 0
        %851 = vmatprep.subr.bf16.mxu0 0
        %852 = vmatpush1.bf16.msra.mxu0 0
        %853 = vmatprep.subr.bf16.mxu0 0
        %854 = vmatpush1.bf16.msra.mxu0 0
        %855 = vmatprep.subr.bf16.mxu0 0
        %856 = vmatpush1.bf16.msra.mxu0 0
        %857 = vmatprep.subr.bf16.mxu0 0
        %858 = vmatpush1.bf16.msra.mxu0 0
        %859 = vmatprep.subr.bf16.mxu0 0
        %860 = vmatpush1.bf16.msra.mxu0 0
        %861 = vmatprep.subr.bf16.mxu0 0
        %862 = vmatpush1.bf16.msra.mxu0 0
        %863 = vmatprep.subr.bf16.mxu0 0
        %864 = vmatpush1.bf16.msra.mxu0 0
        %865 = vmatprep.subr.bf16.mxu0 0
        %866 = vmatpush1.bf16.msra.mxu0 0
        %867 = vmatprep.subr.bf16.mxu0 0
        %868 = vmatpush1.bf16.msra.mxu0 0
        %869 = vmatprep.subr.bf16.mxu0 0
        %870 = vmatpush1.bf16.msra.mxu0 0
        %871 = vmatprep.subr.bf16.mxu0 0
        %872 = vmatpush1.bf16.msra.mxu0 0
        %873 = vmatprep.subr.bf16.mxu0 0
        %874 = vmatpush1.bf16.msra.mxu0 0
        %875 = vmatprep.subr.bf16.mxu0 0
        %876 = vmatpush1.bf16.msra.mxu0 0
        %877 = vmatprep.mubr.bf16.mxu0 0
        %878 = vmatmul.mubr.bf16.gmra.mrb[0].mxu0 %v746
        %v879 = vpop.f32.mrb[0].mxu0
        %v880 = vadd.f32 %v582, %v879
        %v881 = vpop.f32.mrb[0].mxu0
        %v882 = vpop.f32.mrb[0].mxu0
        %v883 = vadd.f32 %v582, %v882
        %v884 = vpop.f32.mrb[0].mxu0
        %885 = vmatprep.mubr.bf16.mxu0 0
        %886 = vmatmul.mubr.bf16.gmra.mrb[0].mxu0 %v749
        %v887 = vpop.f32.mrb[0].mxu0
        %v888 = vadd.f32 %v582, %v887
        %v889 = vpop.f32.mrb[0].mxu0
        %v890 = vpop.f32.mrb[0].mxu0
        %v891 = vadd.f32 %v582, %v890
        %v892 = vpop.f32.mrb[0].mxu0
        %893 = vmatprep.mubr.bf16.mxu0 0
        %894 = vmatmul.mubr.bf16.gmra.mrb[0].mxu0 %v752
        %v895 = vpop.f32.mrb[0].mxu0
        %v896 = vadd.f32 %v582, %v895
        %v897 = vpop.f32.mrb[0].mxu0
        %v898 = vpop.f32.mrb[0].mxu0
        %v899 = vadd.f32 %v582, %v898
        %v900 = vpop.f32.mrb[0].mxu0
        %901 = vmatprep.mubr.bf16.mxu0 0
        %902 = vmatmul.mubr.bf16.gmra.mrb[0].mxu0 %v755
        %v903 = vpop.f32.mrb[0].mxu0
        %v904 = vadd.f32 %v582, %v903
        %v905 = vpop.f32.mrb[0].mxu0
        %v906 = vpop.f32.mrb[0].mxu0
        %v907 = vadd.f32 %v582, %v906
        %v908 = vpop.f32.mrb[0].mxu0
        %909 = vmatprep.mubr.bf16.mxu0 0
        %910 = vmatmul.mubr.bf16.gmra.mrb[0].mxu0 %v758
        %v911 = vpop.f32.mrb[0].mxu0
        %v912 = vadd.f32 %v582, %v911
        %v913 = vpop.f32.mrb[0].mxu0
        %v914 = vpop.f32.mrb[0].mxu0
        %v915 = vadd.f32 %v582, %v914
        %v916 = vpop.f32.mrb[0].mxu0
        %917 = vmatprep.mubr.bf16.mxu0 0
        %918 = vmatmul.mubr.bf16.gmra.mrb[0].mxu0 %v761
        %v919 = vpop.f32.mrb[0].mxu0
        %v920 = vadd.f32 %v582, %v919
        %v921 = vpop.f32.mrb[0].mxu0
        %v922 = vpop.f32.mrb[0].mxu0
        %v923 = vadd.f32 %v582, %v922
        %v924 = vpop.f32.mrb[0].mxu0
        %925 = vmatprep.mubr.bf16.mxu0 0
        %926 = vmatmul.mubr.bf16.gmra.mrb[0].mxu0 %v764
        %v927 = vpop.f32.mrb[0].mxu0
        %v928 = vadd.f32 %v582, %v927
        %v929 = vpop.f32.mrb[0].mxu0
        %v930 = vpop.f32.mrb[0].mxu0
        %v931 = vadd.f32 %v582, %v930
        %v932 = vpop.f32.mrb[0].mxu0
        %933 = vmatprep.mubr.bf16.mxu0 0
        %934 = vmatmul.mubr.bf16.gmra.mrb[0].mxu0 %v767
        %v935 = vpop.f32.mrb[0].mxu0
        %v936 = vadd.f32 %v582, %v935
        %v937 = vpop.f32.mrb[0].mxu0
        %v938 = vpop.f32.mrb[0].mxu0
        %v939 = vadd.f32 %v582, %v938
        %v940 = vpop.f32.mrb[0].mxu0
        %941 = vmatprep.mubr.bf16.mxu0 0
        %942 = vmatmul.mubr.bf16.gmra.mrb[0].mxu0 %v770
        %v943 = vpop.f32.mrb[0].mxu0
        %v944 = vadd.f32 %v582, %v943
        %v945 = vpop.f32.mrb[0].mxu0
        %v946 = vpop.f32.mrb[0].mxu0
        %v947 = vadd.f32 %v582, %v946
        %v948 = vpop.f32.mrb[0].mxu0
        %949 = vmatprep.mubr.bf16.mxu0 0
        %950 = vmatmul.mubr.bf16.gmra.mrb[0].mxu0 %v773
        %v951 = vpop.f32.mrb[0].mxu0
        %v952 = vadd.f32 %v582, %v951
        %v953 = vpop.f32.mrb[0].mxu0
        %v954 = vpop.f32.mrb[0].mxu0
        %v955 = vadd.f32 %v582, %v954
        %v956 = vpop.f32.mrb[0].mxu0
        %957 = vmatprep.mubr.bf16.mxu0 0
        %958 = vmatmul.mubr.bf16.gmra.mrb[0].mxu0 %v776
        %v959 = vpop.f32.mrb[0].mxu0
        %v960 = vadd.f32 %v582, %v959
        %v961 = vpop.f32.mrb[0].mxu0
        %v962 = vpop.f32.mrb[0].mxu0
        %v963 = vadd.f32 %v582, %v962
        %v964 = vpop.f32.mrb[0].mxu0
        %965 = vmatprep.mubr.bf16.mxu0 0
        %966 = vmatmul.mubr.bf16.gmra.mrb[0].mxu0 %v779
        %v967 = vpop.f32.mrb[0].mxu0
        %v968 = vadd.f32 %v582, %v967
        %v969 = vpop.f32.mrb[0].mxu0
        %v970 = vpop.f32.mrb[0].mxu0
        %v971 = vadd.f32 %v582, %v970
        %v972 = vpop.f32.mrb[0].mxu0
        %973 = vmatprep.mubr.bf16.mxu0 0
        %974 = vmatmul.mubr.bf16.gmra.mrb[0].mxu0 %v782
        %v975 = vpop.f32.mrb[0].mxu0
        %v976 = vadd.f32 %v582, %v975
        %v977 = vpop.f32.mrb[0].mxu0
        %v978 = vpop.f32.mrb[0].mxu0
        %v979 = vadd.f32 %v582, %v978
        %v980 = vpop.f32.mrb[0].mxu0
        %981 = vmatprep.mubr.bf16.mxu0 0
        %982 = vmatmul.mubr.bf16.gmra.mrb[0].mxu0 %v785
        %v983 = vpop.f32.mrb[0].mxu0
        %v984 = vadd.f32 %v582, %v983
        %v985 = vpop.f32.mrb[0].mxu0
        %v986 = vpop.f32.mrb[0].mxu0
        %v987 = vadd.f32 %v582, %v986
        %v988 = vpop.f32.mrb[0].mxu0
        %989 = vmatprep.mubr.bf16.mxu0 0
        %990 = vmatmul.mubr.bf16.gmra.mrb[0].mxu0 %v788
        %v991 = vpop.f32.mrb[0].mxu0
        %v992 = vadd.f32 %v582, %v991
        %v993 = vpop.f32.mrb[0].mxu0
        %v994 = vpop.f32.mrb[0].mxu0
        %v995 = vadd.f32 %v582, %v994
        %v996 = vpop.f32.mrb[0].mxu0
        %997 = vmatprep.mubr.bf16.mxu0 0
        %998 = vmatmul.mubr.bf16.gmra.mrb[0].mxu0 %v791
        %v999 = vpop.f32.mrb[0].mxu0
        %v1000 = vadd.f32 %v582, %v999
        %v1001 = vpop.f32.mrb[0].mxu0
        %v1002 = vpop.f32.mrb[0].mxu0
        %v1003 = vadd.f32 %v582, %v1002
        %v1004 = vpop.f32.mrb[0].mxu0
        %1005 = vmatprep.mubr.bf16.mxu0 0
        %1006 = vmatmul.mubr.bf16.gmra.mrb[0].mxu0 %v794
        %v1007 = vpop.f32.mrb[0].mxu0
        %v1008 = vadd.f32 %v582, %v1007
        %v1009 = vpop.f32.mrb[0].mxu0
        %v1010 = vpop.f32.mrb[0].mxu0
        %v1011 = vadd.f32 %v582, %v1010
        %v1012 = vpop.f32.mrb[0].mxu0
        %1013 = vmatprep.mubr.bf16.mxu0 0
        %1014 = vmatmul.mubr.bf16.gmra.mrb[0].mxu0 %v797
        %v1015 = vpop.f32.mrb[0].mxu0
        %v1016 = vadd.f32 %v582, %v1015
        %v1017 = vpop.f32.mrb[0].mxu0
        %v1018 = vpop.f32.mrb[0].mxu0
        %v1019 = vadd.f32 %v582, %v1018
        %v1020 = vpop.f32.mrb[0].mxu0
        %1021 = vmatprep.mubr.bf16.mxu0 0
        %1022 = vmatmul.mubr.bf16.gmra.mrb[0].mxu0 %v800
        %v1023 = vpop.f32.mrb[0].mxu0
        %v1024 = vadd.f32 %v582, %v1023
        %v1025 = vpop.f32.mrb[0].mxu0
        %v1026 = vpop.f32.mrb[0].mxu0
        %v1027 = vadd.f32 %v582, %v1026
        %v1028 = vpop.f32.mrb[0].mxu0
        %1029 = vmatprep.mubr.bf16.mxu0 0
        %1030 = vmatmul.mubr.bf16.gmra.mrb[0].mxu0 %v803
        %v1031 = vpop.f32.mrb[0].mxu0
        %v1032 = vadd.f32 %v582, %v1031
        %v1033 = vpop.f32.mrb[0].mxu0
        %v1034 = vpop.f32.mrb[0].mxu0
        %v1035 = vadd.f32 %v582, %v1034
        %v1036 = vpop.f32.mrb[0].mxu0
        %1037 = vmatprep.mubr.bf16.mxu0 0
        %1038 = vmatmul.mubr.bf16.gmra.mrb[0].mxu0 %v806
        %v1039 = vpop.f32.mrb[0].mxu0
        %v1040 = vadd.f32 %v582, %v1039
        %v1041 = vpop.f32.mrb[0].mxu0
        %v1042 = vpop.f32.mrb[0].mxu0
        %v1043 = vadd.f32 %v582, %v1042
        %v1044 = vpop.f32.mrb[0].mxu0
        %1045 = vmatprep.mubr.bf16.mxu0 0
        %1046 = vmatmul.mubr.bf16.gmra.mrb[0].mxu0 %v809
        %v1047 = vpop.f32.mrb[0].mxu0
        %v1048 = vadd.f32 %v582, %v1047
        %v1049 = vpop.f32.mrb[0].mxu0
        %v1050 = vpop.f32.mrb[0].mxu0
        %v1051 = vadd.f32 %v582, %v1050
        %v1052 = vpop.f32.mrb[0].mxu0
        %1053 = vmatprep.mubr.bf16.mxu0 0
        %1054 = vmatmul.mubr.bf16.gmra.mrb[0].mxu0 %v812
        %v1055 = vpop.f32.mrb[0].mxu0
        %v1056 = vadd.f32 %v582, %v1055
        %v1057 = vpop.f32.mrb[0].mxu0
        %v1058 = vpop.f32.mrb[0].mxu0
        %v1059 = vadd.f32 %v582, %v1058
        %v1060 = vpop.f32.mrb[0].mxu0
        %1061 = vmatprep.mubr.bf16.mxu0 0
        %1062 = vmatmul.mubr.bf16.gmra.mrb[0].mxu0 %v815
        %v1063 = vpop.f32.mrb[0].mxu0
        %v1064 = vadd.f32 %v582, %v1063
        %v1065 = vpop.f32.mrb[0].mxu0
        %v1066 = vpop.f32.mrb[0].mxu0
        %v1067 = vadd.f32 %v582, %v1066
        %v1068 = vpop.f32.mrb[0].mxu0
        %1069 = vmatprep.mubr.bf16.mxu0 0
        %1070 = vmatmul.mubr.bf16.gmra.mrb[0].mxu0 %v818
        %v1071 = vpop.f32.mrb[0].mxu0
        %v1072 = vadd.f32 %v582, %v1071
        %v1073 = vpop.f32.mrb[0].mxu0
        %v1074 = vpop.f32.mrb[0].mxu0
        %v1075 = vadd.f32 %v582, %v1074
        %v1076 = vpop.f32.mrb[0].mxu0
        %1077 = vmatprep.mubr.bf16.mxu0 0
        %1078 = vmatmul.mubr.bf16.gmra.mrb[0].mxu0 %v821
        %v1079 = vpop.f32.mrb[0].mxu0
        %v1080 = vadd.f32 %v582, %v1079
        %v1081 = vpop.f32.mrb[0].mxu0
        %v1082 = vpop.f32.mrb[0].mxu0
        %v1083 = vadd.f32 %v582, %v1082
        %v1084 = vpop.f32.mrb[0].mxu0
        %1085 = vmatprep.mubr.bf16.mxu0 0
        %1086 = vmatmul.mubr.bf16.gmra.mrb[0].mxu0 %v824
        %v1087 = vpop.f32.mrb[0].mxu0
        %v1088 = vadd.f32 %v582, %v1087
        %v1089 = vpop.f32.mrb[0].mxu0
        %v1090 = vpop.f32.mrb[0].mxu0
        %v1091 = vadd.f32 %v582, %v1090
        %v1092 = vpop.f32.mrb[0].mxu0
        %1093 = vmatprep.mubr.bf16.mxu0 0
        %1094 = vmatmul.mubr.bf16.gmra.mrb[0].mxu0 %v827
        %v1095 = vpop.f32.mrb[0].mxu0
        %v1096 = vadd.f32 %v582, %v1095
        %v1097 = vpop.f32.mrb[0].mxu0
        %v1098 = vpop.f32.mrb[0].mxu0
        %v1099 = vadd.f32 %v582, %v1098
        %v1100 = vpop.f32.mrb[0].mxu0
        %1101 = vmatprep.mubr.bf16.mxu0 0
        %1102 = vmatmul.mubr.bf16.gmra.mrb[0].mxu0 %v830
        %v1103 = vpop.f32.mrb[0].mxu0
        %v1104 = vadd.f32 %v582, %v1103
        %v1105 = vpop.f32.mrb[0].mxu0
        %v1106 = vpop.f32.mrb[0].mxu0
        %v1107 = vadd.f32 %v582, %v1106
        %v1108 = vpop.f32.mrb[0].mxu0
        %1109 = vmatprep.mubr.bf16.mxu0 0
        %1110 = vmatmul.mubr.bf16.gmra.mrb[0].mxu0 %v833
        %v1111 = vpop.f32.mrb[0].mxu0
        %v1112 = vadd.f32 %v582, %v1111
        %v1113 = vpop.f32.mrb[0].mxu0
        %v1114 = vpop.f32.mrb[0].mxu0
        %v1115 = vadd.f32 %v582, %v1114
        %v1116 = vpop.f32.mrb[0].mxu0
        %1117 = vmatprep.mubr.bf16.mxu0 0
        %1118 = vmatmul.mubr.bf16.gmra.mrb[0].mxu0 %v836
        %v1119 = vpop.f32.mrb[0].mxu0
        %v1120 = vadd.f32 %v582, %v1119
        %v1121 = vpop.f32.mrb[0].mxu0
        %v1122 = vpop.f32.mrb[0].mxu0
        %v1123 = vadd.f32 %v582, %v1122
        %v1124 = vpop.f32.mrb[0].mxu0
        %1125 = vmatprep.mubr.bf16.mxu0 0
        %1126 = vmatmul.mubr.bf16.gmra.mrb[0].mxu0 %v839
        %v1127 = vpop.f32.mrb[0].mxu0
        %v1128 = vadd.f32 %v582, %v1127
        %v1129 = vpop.f32.mrb[0].mxu0
        %v1130 = vpop.f32.mrb[0].mxu0
        %v1131 = vadd.f32 %v582, %v1130
        %v1132 = vpop.f32.mrb[0].mxu0
        %1133 = vdwg.mxu0
        %vm1134 = vcmp.gt.f32.partialorder %v880, 0.0
        %vm1135 = vcmp.gt.f32.partialorder %v883, 0.0
        %vm1136 = vcmp.gt.f32.partialorder %v888, 0.0
        %vm1137 = vcmp.gt.f32.partialorder %v891, 0.0
        %vm1138 = vcmp.gt.f32.partialorder %v896, 0.0
        %vm1139 = vcmp.gt.f32.partialorder %v899, 0.0
        %vm1140 = vcmp.gt.f32.partialorder %v904, 0.0
        %vm1141 = vcmp.gt.f32.partialorder %v907, 0.0
        %vm1142 = vcmp.gt.f32.partialorder %v912, 0.0
        %vm1143 = vcmp.gt.f32.partialorder %v915, 0.0
        %vm1144 = vcmp.gt.f32.partialorder %v920, 0.0
        %vm1145 = vcmp.gt.f32.partialorder %v923, 0.0
        %vm1146 = vcmp.gt.f32.partialorder %v928, 0.0
        %vm1147 = vcmp.gt.f32.partialorder %v931, 0.0
        %vm1148 = vcmp.gt.f32.partialorder %v936, 0.0
        %vm1149 = vcmp.gt.f32.partialorder %v939, 0.0
        %vm1150 = vcmp.gt.f32.partialorder %v944, 0.0
        %vm1151 = vcmp.gt.f32.partialorder %v947, 0.0
        %vm1152 = vcmp.gt.f32.partialorder %v952, 0.0
        %vm1153 = vcmp.gt.f32.partialorder %v955, 0.0
        %vm1154 = vcmp.gt.f32.partialorder %v960, 0.0
        %vm1155 = vcmp.gt.f32.partialorder %v963, 0.0
        %vm1156 = vcmp.gt.f32.partialorder %v968, 0.0
        %vm1157 = vcmp.gt.f32.partialorder %v971, 0.0
        %vm1158 = vcmp.gt.f32.partialorder %v976, 0.0
        %vm1159 = vcmp.gt.f32.partialorder %v979, 0.0
        %vm1160 = vcmp.gt.f32.partialorder %v984, 0.0
        %vm1161 = vcmp.gt.f32.partialorder %v987, 0.0
        %vm1162 = vcmp.gt.f32.partialorder %v992, 0.0
        %vm1163 = vcmp.gt.f32.partialorder %v995, 0.0
        %vm1164 = vcmp.gt.f32.partialorder %v1000, 0.0
        %vm1165 = vcmp.gt.f32.partialorder %v1003, 0.0
        %vm1166 = vcmp.gt.f32.partialorder %v1008, 0.0
        %vm1167 = vcmp.gt.f32.partialorder %v1011, 0.0
        %vm1168 = vcmp.gt.f32.partialorder %v1016, 0.0
        %vm1169 = vcmp.gt.f32.partialorder %v1019, 0.0
        %vm1170 = vcmp.gt.f32.partialorder %v1024, 0.0
        %vm1171 = vcmp.gt.f32.partialorder %v1027, 0.0
        %vm1172 = vcmp.gt.f32.partialorder %v1032, 0.0
        %vm1173 = vcmp.gt.f32.partialorder %v1035, 0.0
        %vm1174 = vcmp.gt.f32.partialorder %v1040, 0.0
        %vm1175 = vcmp.gt.f32.partialorder %v1043, 0.0
        %vm1176 = vcmp.gt.f32.partialorder %v1048, 0.0
        %vm1177 = vcmp.gt.f32.partialorder %v1051, 0.0
        %vm1178 = vcmp.gt.f32.partialorder %v1056, 0.0
        %vm1179 = vcmp.gt.f32.partialorder %v1059, 0.0
        %vm1180 = vcmp.gt.f32.partialorder %v1064, 0.0
        %vm1181 = vcmp.gt.f32.partialorder %v1067, 0.0
        %vm1182 = vcmp.gt.f32.partialorder %v1072, 0.0
        %vm1183 = vcmp.gt.f32.partialorder %v1075, 0.0
        %vm1184 = vcmp.gt.f32.partialorder %v1080, 0.0
        %vm1185 = vcmp.gt.f32.partialorder %v1083, 0.0
        %vm1186 = vcmp.gt.f32.partialorder %v1088, 0.0
        %vm1187 = vcmp.gt.f32.partialorder %v1091, 0.0
        %vm1188 = vcmp.gt.f32.partialorder %v1096, 0.0
        %vm1189 = vcmp.gt.f32.partialorder %v1099, 0.0
        %vm1190 = vcmp.gt.f32.partialorder %v1104, 0.0
        %vm1191 = vcmp.gt.f32.partialorder %v1107, 0.0
        %vm1192 = vcmp.gt.f32.partialorder %v1112, 0.0
        %vm1193 = vcmp.gt.f32.partialorder %v1115, 0.0
        %vm1194 = vcmp.gt.f32.partialorder %v1120, 0.0
        %vm1195 = vcmp.gt.f32.partialorder %v1123, 0.0
        %vm1196 = vcmp.gt.f32.partialorder %v1128, 0.0
        %vm1197 = vcmp.gt.f32.partialorder %v1131, 0.0
        %v1198 = vmul.f32 %v880, 0.2
        %v1199 = vmul.f32 %v883, 0.2
        %v1200 = vmul.f32 %v888, 0.2
        %v1201 = vmul.f32 %v891, 0.2
        %v1202 = vmul.f32 %v896, 0.2
        %v1203 = vmul.f32 %v899, 0.2
        %v1204 = vmul.f32 %v904, 0.2
        %v1205 = vmul.f32 %v907, 0.2
        %v1206 = vmul.f32 %v912, 0.2
        %v1207 = vmul.f32 %v915, 0.2
        %v1208 = vmul.f32 %v920, 0.2
        %v1209 = vmul.f32 %v923, 0.2
        %v1210 = vmul.f32 %v928, 0.2
        %v1211 = vmul.f32 %v931, 0.2
        %v1212 = vmul.f32 %v936, 0.2
        %v1213 = vmul.f32 %v939, 0.2
        %v1214 = vmul.f32 %v944, 0.2
        %v1215 = vmul.f32 %v947, 0.2
        %v1216 = vmul.f32 %v952, 0.2
        %v1217 = vmul.f32 %v955, 0.2
        %v1218 = vmul.f32 %v960, 0.2
        %v1219 = vmul.f32 %v963, 0.2
        %v1220 = vmul.f32 %v968, 0.2
        %v1221 = vmul.f32 %v971, 0.2
        %v1222 = vmul.f32 %v976, 0.2
        %v1223 = vmul.f32 %v979, 0.2
        %v1224 = vmul.f32 %v984, 0.2
        %v1225 = vmul.f32 %v987, 0.2
        %v1226 = vmul.f32 %v992, 0.2
        %v1227 = vmul.f32 %v995, 0.2
        %v1228 = vmul.f32 %v1000, 0.2
        %v1229 = vmul.f32 %v1003, 0.2
        %v1230 = vmul.f32 %v1008, 0.2
        %v1231 = vmul.f32 %v1011, 0.2
        %v1232 = vmul.f32 %v1016, 0.2
        %v1233 = vmul.f32 %v1019, 0.2
        %v1234 = vmul.f32 %v1024, 0.2
        %v1235 = vmul.f32 %v1027, 0.2
        %v1236 = vmul.f32 %v1032, 0.2
        %v1237 = vmul.f32 %v1035, 0.2
        %v1238 = vmul.f32 %v1040, 0.2
        %v1239 = vmul.f32 %v1043, 0.2
        %v1240 = vmul.f32 %v1048, 0.2
        %v1241 = vmul.f32 %v1051, 0.2
        %v1242 = vmul.f32 %v1056, 0.2
        %v1243 = vmul.f32 %v1059, 0.2
        %v1244 = vmul.f32 %v1064, 0.2
        %v1245 = vmul.f32 %v1067, 0.2
        %v1246 = vmul.f32 %v1072, 0.2
        %v1247 = vmul.f32 %v1075, 0.2
        %v1248 = vmul.f32 %v1080, 0.2
        %v1249 = vmul.f32 %v1083, 0.2
        %v1250 = vmul.f32 %v1088, 0.2
        %v1251 = vmul.f32 %v1091, 0.2
        %v1252 = vmul.f32 %v1096, 0.2
        %v1253 = vmul.f32 %v1099, 0.2
        %v1254 = vmul.f32 %v1104, 0.2
        %v1255 = vmul.f32 %v1107, 0.2
        %v1256 = vmul.f32 %v1112, 0.2
        %v1257 = vmul.f32 %v1115, 0.2
        %v1258 = vmul.f32 %v1120, 0.2
        %v1259 = vmul.f32 %v1123, 0.2
        %v1260 = vmul.f32 %v1128, 0.2
        %v1261 = vmul.f32 %v1131, 0.2
        %v1262 = vsel %vm1134, %v880, %v1198
        %v1263 = vsel %vm1135, %v883, %v1199
        %v1264 = vsel %vm1136, %v888, %v1200
        %v1265 = vsel %vm1137, %v891, %v1201
        %v1266 = vsel %vm1138, %v896, %v1202
        %v1267 = vsel %vm1139, %v899, %v1203
        %v1268 = vsel %vm1140, %v904, %v1204
        %v1269 = vsel %vm1141, %v907, %v1205
        %v1270 = vsel %vm1142, %v912, %v1206
        %v1271 = vsel %vm1143, %v915, %v1207
        %v1272 = vsel %vm1144, %v920, %v1208
        %v1273 = vsel %vm1145, %v923, %v1209
        %v1274 = vsel %vm1146, %v928, %v1210
        %v1275 = vsel %vm1147, %v931, %v1211
        %v1276 = vsel %vm1148, %v936, %v1212
        %v1277 = vsel %vm1149, %v939, %v1213
        %v1278 = vsel %vm1150, %v944, %v1214
        %v1279 = vsel %vm1151, %v947, %v1215
        %v1280 = vsel %vm1152, %v952, %v1216
        %v1281 = vsel %vm1153, %v955, %v1217
        %v1282 = vsel %vm1154, %v960, %v1218
        %v1283 = vsel %vm1155, %v963, %v1219
        %v1284 = vsel %vm1156, %v968, %v1220
        %v1285 = vsel %vm1157, %v971, %v1221
        %v1286 = vsel %vm1158, %v976, %v1222
        %v1287 = vsel %vm1159, %v979, %v1223
        %v1288 = vsel %vm1160, %v984, %v1224
        %v1289 = vsel %vm1161, %v987, %v1225
        %v1290 = vsel %vm1162, %v992, %v1226
        %v1291 = vsel %vm1163, %v995, %v1227
        %v1292 = vsel %vm1164, %v1000, %v1228
        %v1293 = vsel %vm1165, %v1003, %v1229
        %v1294 = vsel %vm1166, %v1008, %v1230
        %v1295 = vsel %vm1167, %v1011, %v1231
        %v1296 = vsel %vm1168, %v1016, %v1232
        %v1297 = vsel %vm1169, %v1019, %v1233
        %v1298 = vsel %vm1170, %v1024, %v1234
        %v1299 = vsel %vm1171, %v1027, %v1235
        %v1300 = vsel %vm1172, %v1032, %v1236
        %v1301 = vsel %vm1173, %v1035, %v1237
        %v1302 = vsel %vm1174, %v1040, %v1238
        %v1303 = vsel %vm1175, %v1043, %v1239
        %v1304 = vsel %vm1176, %v1048, %v1240
        %v1305 = vsel %vm1177, %v1051, %v1241
        %v1306 = vsel %vm1178, %v1056, %v1242
        %v1307 = vsel %vm1179, %v1059, %v1243
        %v1308 = vsel %vm1180, %v1064, %v1244
        %v1309 = vsel %vm1181, %v1067, %v1245
        %v1310 = vsel %vm1182, %v1072, %v1246
        %v1311 = vsel %vm1183, %v1075, %v1247
        %v1312 = vsel %vm1184, %v1080, %v1248
        %v1313 = vsel %vm1185, %v1083, %v1249
        %v1314 = vsel %vm1186, %v1088, %v1250
        %v1315 = vsel %vm1187, %v1091, %v1251
        %v1316 = vsel %vm1188, %v1096, %v1252
        %v1317 = vsel %vm1189, %v1099, %v1253
        %v1318 = vsel %vm1190, %v1104, %v1254
        %v1319 = vsel %vm1191, %v1107, %v1255
        %v1320 = vsel %vm1192, %v1112, %v1256
        %v1321 = vsel %vm1193, %v1115, %v1257
        %v1322 = vsel %vm1194, %v1120, %v1258
        %v1323 = vsel %vm1195, %v1123, %v1259
        %v1324 = vsel %vm1196, %v1128, %v1260
        %v1325 = vsel %vm1197, %v1131, %v1261
        %v1326 = vpack.c.bf16 %v1263, %v1262
        %v1327 = vpack.c.bf16 %v1265, %v1264
        %v1328 = vpack.c.bf16 %v1267, %v1266
        %v1329 = vpack.c.bf16 %v1269, %v1268
        %v1330 = vpack.c.bf16 %v1271, %v1270
        %v1331 = vpack.c.bf16 %v1273, %v1272
        %v1332 = vpack.c.bf16 %v1275, %v1274
        %v1333 = vpack.c.bf16 %v1277, %v1276
        %v1334 = vpack.c.bf16 %v1279, %v1278
        %v1335 = vpack.c.bf16 %v1281, %v1280
        %v1336 = vpack.c.bf16 %v1283, %v1282
        %v1337 = vpack.c.bf16 %v1285, %v1284
        %v1338 = vpack.c.bf16 %v1287, %v1286
        %v1339 = vpack.c.bf16 %v1289, %v1288
        %v1340 = vpack.c.bf16 %v1291, %v1290
        %v1341 = vpack.c.bf16 %v1293, %v1292
        %v1342 = vpack.c.bf16 %v1295, %v1294
        %v1343 = vpack.c.bf16 %v1297, %v1296
        %v1344 = vpack.c.bf16 %v1299, %v1298
        %v1345 = vpack.c.bf16 %v1301, %v1300
        %v1346 = vpack.c.bf16 %v1303, %v1302
        %v1347 = vpack.c.bf16 %v1305, %v1304
        %v1348 = vpack.c.bf16 %v1307, %v1306
        %v1349 = vpack.c.bf16 %v1309, %v1308
        %v1350 = vpack.c.bf16 %v1311, %v1310
        %v1351 = vpack.c.bf16 %v1313, %v1312
        %v1352 = vpack.c.bf16 %v1315, %v1314
        %v1353 = vpack.c.bf16 %v1317, %v1316
        %v1354 = vpack.c.bf16 %v1319, %v1318
        %v1355 = vpack.c.bf16 %v1321, %v1320
        %v1356 = vpack.c.bf16 %v1323, %v1322
        %v1357 = vpack.c.bf16 %v1325, %v1324
        %v1358 = vld [vmem:[%s2] sm:$0xf]
        %v1359 = vld [vmem:[%s2 + $0x4] sm:$0xf]
        %v1360 = vld [vmem:[%s2 + $0x8] sm:$0xf]
        %v1361 = vld [vmem:[%s2 + $0xc] sm:$0xf]
        %v1362 = vld [vmem:[%s2 + $0x10] sm:$0xf]
        %v1363 = vld [vmem:[%s2 + $0x14] sm:$0xf]
        %v1364 = vld [vmem:[%s2 + $0x18] sm:$0xf]
        %v1365 = vld [vmem:[%s2 + $0x1c] sm:$0xf]
        %v1366 = vld [vmem:[%s7] sm:$0x1]
        %v1368 = vlaneseq
        %v1369 = vshrl.u32 %v1368, 7
        %v1370 = vsub.s32 0, %v1369
        %v1371 = vrot.slane %v1366, %v1370
        %v1381 = vunpack.c.l.b16 %v1358
        %v1382 = vunpack.c.l.b16 %v1359
        %v1383 = vunpack.c.l.b16 %v1360
        %v1384 = vunpack.c.l.b16 %v1361
        %v1385 = vunpack.c.l.b16 %v1362
        %v1386 = vunpack.c.l.b16 %v1363
        %v1387 = vunpack.c.l.b16 %v1364
        %v1388 = vunpack.c.l.b16 %v1365
        %v1389 = vpack.c.b16 %v1382, %v1381
        %v1390 = vpack.c.b16 %v1384, %v1383
        %v1391 = vpack.c.b16 %v1386, %v1385
        %v1392 = vpack.c.b16 %v1388, %v1387
        %vm1397 = vcmask 523264
        %v1399 = vsel %vm1397, %v1326, 0
        %v1402 = vsel %vm1397, %v1327, 0
        %v1405 = vsel %vm1397, %v1328, 0
        %v1408 = vsel %vm1397, %v1329, 0
        %v1411 = vsel %vm1397, %v1330, 0
        %v1414 = vsel %vm1397, %v1331, 0
        %v1417 = vsel %vm1397, %v1332, 0
        %v1420 = vsel %vm1397, %v1333, 0
        %v1423 = vsel %vm1397, %v1334, 0
        %v1426 = vsel %vm1397, %v1335, 0
        %v1429 = vsel %vm1397, %v1336, 0
        %v1432 = vsel %vm1397, %v1337, 0
        %v1435 = vsel %vm1397, %v1338, 0
        %v1438 = vsel %vm1397, %v1339, 0
        %v1441 = vsel %vm1397, %v1340, 0
        %v1444 = vsel %vm1397, %v1341, 0
        %v1447 = vsel %vm1397, %v1342, 0
        %v1450 = vsel %vm1397, %v1343, 0
        %v1453 = vsel %vm1397, %v1344, 0
        %v1456 = vsel %vm1397, %v1345, 0
        %v1459 = vsel %vm1397, %v1346, 0
        %v1462 = vsel %vm1397, %v1347, 0
        %v1465 = vsel %vm1397, %v1348, 0
        %v1468 = vsel %vm1397, %v1349, 0
        %v1471 = vsel %vm1397, %v1350, 0
        %v1474 = vsel %vm1397, %v1351, 0
        %v1477 = vsel %vm1397, %v1352, 0
        %v1480 = vsel %vm1397, %v1353, 0
        %v1483 = vsel %vm1397, %v1354, 0
        %v1486 = vsel %vm1397, %v1355, 0
        %v1489 = vsel %vm1397, %v1356, 0
        %v1492 = vsel %vm1397, %v1357, 0
        %1494 = vmatprep.subr.bf16.mxu0 0
        %1495 = vmatpush1.bf16.msra.mxu0 %v1389
        %1496 = vmatprep.subr.bf16.mxu0 0
        %1497 = vmatpush1.bf16.msra.mxu0 %v1390
        %1498 = vmatprep.subr.bf16.mxu0 0
        %1499 = vmatpush1.bf16.msra.mxu0 %v1391
        %1500 = vmatprep.subr.bf16.mxu0 0
        %1501 = vmatpush1.bf16.msra.mxu0 %v1392
        %1502 = vmatprep.subr.bf16.mxu0 0
        %1503 = vmatpush1.bf16.msra.mxu0 0
        %1504 = vmatprep.subr.bf16.mxu0 0
        %1505 = vmatpush1.bf16.msra.mxu0 0
        %1506 = vmatprep.subr.bf16.mxu0 0
        %1507 = vmatpush1.bf16.msra.mxu0 0
        %1508 = vmatprep.subr.bf16.mxu0 0
        %1509 = vmatpush1.bf16.msra.mxu0 0
        %1510 = vmatprep.subr.bf16.mxu0 0
        %1511 = vmatpush1.bf16.msra.mxu0 0
        %1512 = vmatprep.subr.bf16.mxu0 0
        %1513 = vmatpush1.bf16.msra.mxu0 0
        %1514 = vmatprep.subr.bf16.mxu0 0
        %1515 = vmatpush1.bf16.msra.mxu0 0
        %1516 = vmatprep.subr.bf16.mxu0 0
        %1517 = vmatpush1.bf16.msra.mxu0 0
        %1518 = vmatprep.subr.bf16.mxu0 0
        %1519 = vmatpush1.bf16.msra.mxu0 0
        %1520 = vmatprep.subr.bf16.mxu0 0
        %1521 = vmatpush1.bf16.msra.mxu0 0
        %1522 = vmatprep.subr.bf16.mxu0 0
        %1523 = vmatpush1.bf16.msra.mxu0 0
        %1524 = vmatprep.subr.bf16.mxu0 0
        %1525 = vmatpush1.bf16.msra.mxu0 0
        %1526 = vmatprep.mubr.bf16.mxu0 0
        %1527 = vmatmul.mubr.bf16.gmra.mrb[0].mxu0 %v1399
        %v1528 = vpop.f32.mrb[0].mxu0
        %v1529 = vadd.f32 %v1371, %v1528
        %v1530 = vpop.f32.mrb[0].mxu0
        %v1531 = vpop.f32.mrb[0].mxu0
        %v1532 = vadd.f32 %v1371, %v1531
        %v1533 = vpop.f32.mrb[0].mxu0
        %1534 = vmatprep.mubr.bf16.mxu0 0
        %1535 = vmatmul.mubr.bf16.gmra.mrb[0].mxu0 %v1402
        %v1536 = vpop.f32.mrb[0].mxu0
        %v1537 = vadd.f32 %v1371, %v1536
        %v1538 = vpop.f32.mrb[0].mxu0
        %v1539 = vpop.f32.mrb[0].mxu0
        %v1540 = vadd.f32 %v1371, %v1539
        %v1541 = vpop.f32.mrb[0].mxu0
        %1542 = vmatprep.mubr.bf16.mxu0 0
        %1543 = vmatmul.mubr.bf16.gmra.mrb[0].mxu0 %v1405
        %v1544 = vpop.f32.mrb[0].mxu0
        %v1545 = vadd.f32 %v1371, %v1544
        %v1546 = vpop.f32.mrb[0].mxu0
        %v1547 = vpop.f32.mrb[0].mxu0
        %v1548 = vadd.f32 %v1371, %v1547
        %v1549 = vpop.f32.mrb[0].mxu0
        %1550 = vmatprep.mubr.bf16.mxu0 0
        %1551 = vmatmul.mubr.bf16.gmra.mrb[0].mxu0 %v1408
        %v1552 = vpop.f32.mrb[0].mxu0
        %v1553 = vadd.f32 %v1371, %v1552
        %v1554 = vpop.f32.mrb[0].mxu0
        %v1555 = vpop.f32.mrb[0].mxu0
        %v1556 = vadd.f32 %v1371, %v1555
        %v1557 = vpop.f32.mrb[0].mxu0
        %1558 = vmatprep.mubr.bf16.mxu0 0
        %1559 = vmatmul.mubr.bf16.gmra.mrb[0].mxu0 %v1411
        %v1560 = vpop.f32.mrb[0].mxu0
        %v1561 = vadd.f32 %v1371, %v1560
        %v1562 = vpop.f32.mrb[0].mxu0
        %v1563 = vpop.f32.mrb[0].mxu0
        %v1564 = vadd.f32 %v1371, %v1563
        %v1565 = vpop.f32.mrb[0].mxu0
        %1566 = vmatprep.mubr.bf16.mxu0 0
        %1567 = vmatmul.mubr.bf16.gmra.mrb[0].mxu0 %v1414
        %v1568 = vpop.f32.mrb[0].mxu0
        %v1569 = vadd.f32 %v1371, %v1568
        %v1570 = vpop.f32.mrb[0].mxu0
        %v1571 = vpop.f32.mrb[0].mxu0
        %v1572 = vadd.f32 %v1371, %v1571
        %v1573 = vpop.f32.mrb[0].mxu0
        %1574 = vmatprep.mubr.bf16.mxu0 0
        %1575 = vmatmul.mubr.bf16.gmra.mrb[0].mxu0 %v1417
        %v1576 = vpop.f32.mrb[0].mxu0
        %v1577 = vadd.f32 %v1371, %v1576
        %v1578 = vpop.f32.mrb[0].mxu0
        %v1579 = vpop.f32.mrb[0].mxu0
        %v1580 = vadd.f32 %v1371, %v1579
        %v1581 = vpop.f32.mrb[0].mxu0
        %1582 = vmatprep.mubr.bf16.mxu0 0
        %1583 = vmatmul.mubr.bf16.gmra.mrb[0].mxu0 %v1420
        %v1584 = vpop.f32.mrb[0].mxu0
        %v1585 = vadd.f32 %v1371, %v1584
        %v1586 = vpop.f32.mrb[0].mxu0
        %v1587 = vpop.f32.mrb[0].mxu0
        %v1588 = vadd.f32 %v1371, %v1587
        %v1589 = vpop.f32.mrb[0].mxu0
        %1590 = vmatprep.mubr.bf16.mxu0 0
        %1591 = vmatmul.mubr.bf16.gmra.mrb[0].mxu0 %v1423
        %v1592 = vpop.f32.mrb[0].mxu0
        %v1593 = vadd.f32 %v1371, %v1592
        %v1594 = vpop.f32.mrb[0].mxu0
        %v1595 = vpop.f32.mrb[0].mxu0
        %v1596 = vadd.f32 %v1371, %v1595
        %v1597 = vpop.f32.mrb[0].mxu0
        %1598 = vmatprep.mubr.bf16.mxu0 0
        %1599 = vmatmul.mubr.bf16.gmra.mrb[0].mxu0 %v1426
        %v1600 = vpop.f32.mrb[0].mxu0
        %v1601 = vadd.f32 %v1371, %v1600
        %v1602 = vpop.f32.mrb[0].mxu0
        %v1603 = vpop.f32.mrb[0].mxu0
        %v1604 = vadd.f32 %v1371, %v1603
        %v1605 = vpop.f32.mrb[0].mxu0
        %1606 = vmatprep.mubr.bf16.mxu0 0
        %1607 = vmatmul.mubr.bf16.gmra.mrb[0].mxu0 %v1429
        %v1608 = vpop.f32.mrb[0].mxu0
        %v1609 = vadd.f32 %v1371, %v1608
        %v1610 = vpop.f32.mrb[0].mxu0
        %v1611 = vpop.f32.mrb[0].mxu0
        %v1612 = vadd.f32 %v1371, %v1611
        %v1613 = vpop.f32.mrb[0].mxu0
        %1614 = vmatprep.mubr.bf16.mxu0 0
        %1615 = vmatmul.mubr.bf16.gmra.mrb[0].mxu0 %v1432
        %v1616 = vpop.f32.mrb[0].mxu0
        %v1617 = vadd.f32 %v1371, %v1616
        %v1618 = vpop.f32.mrb[0].mxu0
        %v1619 = vpop.f32.mrb[0].mxu0
        %v1620 = vadd.f32 %v1371, %v1619
        %v1621 = vpop.f32.mrb[0].mxu0
        %1622 = vmatprep.mubr.bf16.mxu0 0
        %1623 = vmatmul.mubr.bf16.gmra.mrb[0].mxu0 %v1435
        %v1624 = vpop.f32.mrb[0].mxu0
        %v1625 = vadd.f32 %v1371, %v1624
        %v1626 = vpop.f32.mrb[0].mxu0
        %v1627 = vpop.f32.mrb[0].mxu0
        %v1628 = vadd.f32 %v1371, %v1627
        %v1629 = vpop.f32.mrb[0].mxu0
        %1630 = vmatprep.mubr.bf16.mxu0 0
        %1631 = vmatmul.mubr.bf16.gmra.mrb[0].mxu0 %v1438
        %v1632 = vpop.f32.mrb[0].mxu0
        %v1633 = vadd.f32 %v1371, %v1632
        %v1634 = vpop.f32.mrb[0].mxu0
        %v1635 = vpop.f32.mrb[0].mxu0
        %v1636 = vadd.f32 %v1371, %v1635
        %v1637 = vpop.f32.mrb[0].mxu0
        %1638 = vmatprep.mubr.bf16.mxu0 0
        %1639 = vmatmul.mubr.bf16.gmra.mrb[0].mxu0 %v1441
        %v1640 = vpop.f32.mrb[0].mxu0
        %v1641 = vadd.f32 %v1371, %v1640
        %v1642 = vpop.f32.mrb[0].mxu0
        %v1643 = vpop.f32.mrb[0].mxu0
        %v1644 = vadd.f32 %v1371, %v1643
        %v1645 = vpop.f32.mrb[0].mxu0
        %1646 = vmatprep.mubr.bf16.mxu0 0
        %1647 = vmatmul.mubr.bf16.gmra.mrb[0].mxu0 %v1444
        %v1648 = vpop.f32.mrb[0].mxu0
        %v1649 = vadd.f32 %v1371, %v1648
        %v1650 = vpop.f32.mrb[0].mxu0
        %v1651 = vpop.f32.mrb[0].mxu0
        %v1652 = vadd.f32 %v1371, %v1651
        %v1653 = vpop.f32.mrb[0].mxu0
        %1654 = vmatprep.mubr.bf16.mxu0 0
        %1655 = vmatmul.mubr.bf16.gmra.mrb[0].mxu0 %v1447
        %v1656 = vpop.f32.mrb[0].mxu0
        %v1657 = vadd.f32 %v1371, %v1656
        %v1658 = vpop.f32.mrb[0].mxu0
        %v1659 = vpop.f32.mrb[0].mxu0
        %v1660 = vadd.f32 %v1371, %v1659
        %v1661 = vpop.f32.mrb[0].mxu0
        %1662 = vmatprep.mubr.bf16.mxu0 0
        %1663 = vmatmul.mubr.bf16.gmra.mrb[0].mxu0 %v1450
        %v1664 = vpop.f32.mrb[0].mxu0
        %v1665 = vadd.f32 %v1371, %v1664
        %v1666 = vpop.f32.mrb[0].mxu0
        %v1667 = vpop.f32.mrb[0].mxu0
        %v1668 = vadd.f32 %v1371, %v1667
        %v1669 = vpop.f32.mrb[0].mxu0
        %1670 = vmatprep.mubr.bf16.mxu0 0
        %1671 = vmatmul.mubr.bf16.gmra.mrb[0].mxu0 %v1453
        %v1672 = vpop.f32.mrb[0].mxu0
        %v1673 = vadd.f32 %v1371, %v1672
        %v1674 = vpop.f32.mrb[0].mxu0
        %v1675 = vpop.f32.mrb[0].mxu0
        %v1676 = vadd.f32 %v1371, %v1675
        %v1677 = vpop.f32.mrb[0].mxu0
        %1678 = vmatprep.mubr.bf16.mxu0 0
        %1679 = vmatmul.mubr.bf16.gmra.mrb[0].mxu0 %v1456
        %v1680 = vpop.f32.mrb[0].mxu0
        %v1681 = vadd.f32 %v1371, %v1680
        %v1682 = vpop.f32.mrb[0].mxu0
        %v1683 = vpop.f32.mrb[0].mxu0
        %v1684 = vadd.f32 %v1371, %v1683
        %v1685 = vpop.f32.mrb[0].mxu0
        %1686 = vmatprep.mubr.bf16.mxu0 0
        %1687 = vmatmul.mubr.bf16.gmra.mrb[0].mxu0 %v1459
        %v1688 = vpop.f32.mrb[0].mxu0
        %v1689 = vadd.f32 %v1371, %v1688
        %v1690 = vpop.f32.mrb[0].mxu0
        %v1691 = vpop.f32.mrb[0].mxu0
        %v1692 = vadd.f32 %v1371, %v1691
        %v1693 = vpop.f32.mrb[0].mxu0
        %1694 = vmatprep.mubr.bf16.mxu0 0
        %1695 = vmatmul.mubr.bf16.gmra.mrb[0].mxu0 %v1462
        %v1696 = vpop.f32.mrb[0].mxu0
        %v1697 = vadd.f32 %v1371, %v1696
        %v1698 = vpop.f32.mrb[0].mxu0
        %v1699 = vpop.f32.mrb[0].mxu0
        %v1700 = vadd.f32 %v1371, %v1699
        %v1701 = vpop.f32.mrb[0].mxu0
        %1702 = vmatprep.mubr.bf16.mxu0 0
        %1703 = vmatmul.mubr.bf16.gmra.mrb[0].mxu0 %v1465
        %v1704 = vpop.f32.mrb[0].mxu0
        %v1705 = vadd.f32 %v1371, %v1704
        %v1706 = vpop.f32.mrb[0].mxu0
        %v1707 = vpop.f32.mrb[0].mxu0
        %v1708 = vadd.f32 %v1371, %v1707
        %v1709 = vpop.f32.mrb[0].mxu0
        %1710 = vmatprep.mubr.bf16.mxu0 0
        %1711 = vmatmul.mubr.bf16.gmra.mrb[0].mxu0 %v1468
        %v1712 = vpop.f32.mrb[0].mxu0
        %v1713 = vadd.f32 %v1371, %v1712
        %v1714 = vpop.f32.mrb[0].mxu0
        %v1715 = vpop.f32.mrb[0].mxu0
        %v1716 = vadd.f32 %v1371, %v1715
        %v1717 = vpop.f32.mrb[0].mxu0
        %1718 = vmatprep.mubr.bf16.mxu0 0
        %1719 = vmatmul.mubr.bf16.gmra.mrb[0].mxu0 %v1471
        %v1720 = vpop.f32.mrb[0].mxu0
        %v1721 = vadd.f32 %v1371, %v1720
        %v1722 = vpop.f32.mrb[0].mxu0
        %v1723 = vpop.f32.mrb[0].mxu0
        %v1724 = vadd.f32 %v1371, %v1723
        %v1725 = vpop.f32.mrb[0].mxu0
        %1726 = vmatprep.mubr.bf16.mxu0 0
        %1727 = vmatmul.mubr.bf16.gmra.mrb[0].mxu0 %v1474
        %v1728 = vpop.f32.mrb[0].mxu0
        %v1729 = vadd.f32 %v1371, %v1728
        %v1730 = vpop.f32.mrb[0].mxu0
        %v1731 = vpop.f32.mrb[0].mxu0
        %v1732 = vadd.f32 %v1371, %v1731
        %v1733 = vpop.f32.mrb[0].mxu0
        %1734 = vmatprep.mubr.bf16.mxu0 0
        %1735 = vmatmul.mubr.bf16.gmra.mrb[0].mxu0 %v1477
        %v1736 = vpop.f32.mrb[0].mxu0
        %v1737 = vadd.f32 %v1371, %v1736
        %v1738 = vpop.f32.mrb[0].mxu0
        %v1739 = vpop.f32.mrb[0].mxu0
        %v1740 = vadd.f32 %v1371, %v1739
        %v1741 = vpop.f32.mrb[0].mxu0
        %1742 = vmatprep.mubr.bf16.mxu0 0
        %1743 = vmatmul.mubr.bf16.gmra.mrb[0].mxu0 %v1480
        %v1744 = vpop.f32.mrb[0].mxu0
        %v1745 = vadd.f32 %v1371, %v1744
        %v1746 = vpop.f32.mrb[0].mxu0
        %v1747 = vpop.f32.mrb[0].mxu0
        %v1748 = vadd.f32 %v1371, %v1747
        %v1749 = vpop.f32.mrb[0].mxu0
        %1750 = vmatprep.mubr.bf16.mxu0 0
        %1751 = vmatmul.mubr.bf16.gmra.mrb[0].mxu0 %v1483
        %v1752 = vpop.f32.mrb[0].mxu0
        %v1753 = vadd.f32 %v1371, %v1752
        %v1754 = vpop.f32.mrb[0].mxu0
        %v1755 = vpop.f32.mrb[0].mxu0
        %v1756 = vadd.f32 %v1371, %v1755
        %v1757 = vpop.f32.mrb[0].mxu0
        %1758 = vmatprep.mubr.bf16.mxu0 0
        %1759 = vmatmul.mubr.bf16.gmra.mrb[0].mxu0 %v1486
        %v1760 = vpop.f32.mrb[0].mxu0
        %v1761 = vadd.f32 %v1371, %v1760
        %v1762 = vpop.f32.mrb[0].mxu0
        %v1763 = vpop.f32.mrb[0].mxu0
        %v1764 = vadd.f32 %v1371, %v1763
        %v1765 = vpop.f32.mrb[0].mxu0
        %1766 = vmatprep.mubr.bf16.mxu0 0
        %1767 = vmatmul.mubr.bf16.gmra.mrb[0].mxu0 %v1489
        %v1768 = vpop.f32.mrb[0].mxu0
        %v1769 = vadd.f32 %v1371, %v1768
        %v1770 = vpop.f32.mrb[0].mxu0
        %v1771 = vpop.f32.mrb[0].mxu0
        %v1772 = vadd.f32 %v1371, %v1771
        %v1773 = vpop.f32.mrb[0].mxu0
        %1774 = vmatprep.mubr.bf16.mxu0 0
        %1775 = vmatmul.mubr.bf16.gmra.mrb[0].mxu0 %v1492
        %v1776 = vpop.f32.mrb[0].mxu0
        %v1777 = vadd.f32 %v1371, %v1776
        %v1778 = vpop.f32.mrb[0].mxu0
        %v1779 = vpop.f32.mrb[0].mxu0
        %v1780 = vadd.f32 %v1371, %v1779
        %v1781 = vpop.f32.mrb[0].mxu0
        %1782 = vdwg.mxu0
        %vm1783 = vcmp.gt.f32.partialorder %v1529, 0.0
        %vm1784 = vcmp.gt.f32.partialorder %v1532, 0.0
        %vm1785 = vcmp.gt.f32.partialorder %v1537, 0.0
        %vm1786 = vcmp.gt.f32.partialorder %v1540, 0.0
        %vm1787 = vcmp.gt.f32.partialorder %v1545, 0.0
        %vm1788 = vcmp.gt.f32.partialorder %v1548, 0.0
        %vm1789 = vcmp.gt.f32.partialorder %v1553, 0.0
        %vm1790 = vcmp.gt.f32.partialorder %v1556, 0.0
        %vm1791 = vcmp.gt.f32.partialorder %v1561, 0.0
        %vm1792 = vcmp.gt.f32.partialorder %v1564, 0.0
        %vm1793 = vcmp.gt.f32.partialorder %v1569, 0.0
        %vm1794 = vcmp.gt.f32.partialorder %v1572, 0.0
        %vm1795 = vcmp.gt.f32.partialorder %v1577, 0.0
        %vm1796 = vcmp.gt.f32.partialorder %v1580, 0.0
        %vm1797 = vcmp.gt.f32.partialorder %v1585, 0.0
        %vm1798 = vcmp.gt.f32.partialorder %v1588, 0.0
        %vm1799 = vcmp.gt.f32.partialorder %v1593, 0.0
        %vm1800 = vcmp.gt.f32.partialorder %v1596, 0.0
        %vm1801 = vcmp.gt.f32.partialorder %v1601, 0.0
        %vm1802 = vcmp.gt.f32.partialorder %v1604, 0.0
        %vm1803 = vcmp.gt.f32.partialorder %v1609, 0.0
        %vm1804 = vcmp.gt.f32.partialorder %v1612, 0.0
        %vm1805 = vcmp.gt.f32.partialorder %v1617, 0.0
        %vm1806 = vcmp.gt.f32.partialorder %v1620, 0.0
        %vm1807 = vcmp.gt.f32.partialorder %v1625, 0.0
        %vm1808 = vcmp.gt.f32.partialorder %v1628, 0.0
        %vm1809 = vcmp.gt.f32.partialorder %v1633, 0.0
        %vm1810 = vcmp.gt.f32.partialorder %v1636, 0.0
        %vm1811 = vcmp.gt.f32.partialorder %v1641, 0.0
        %vm1812 = vcmp.gt.f32.partialorder %v1644, 0.0
        %vm1813 = vcmp.gt.f32.partialorder %v1649, 0.0
        %vm1814 = vcmp.gt.f32.partialorder %v1652, 0.0
        %vm1815 = vcmp.gt.f32.partialorder %v1657, 0.0
        %vm1816 = vcmp.gt.f32.partialorder %v1660, 0.0
        %vm1817 = vcmp.gt.f32.partialorder %v1665, 0.0
        %vm1818 = vcmp.gt.f32.partialorder %v1668, 0.0
        %vm1819 = vcmp.gt.f32.partialorder %v1673, 0.0
        %vm1820 = vcmp.gt.f32.partialorder %v1676, 0.0
        %vm1821 = vcmp.gt.f32.partialorder %v1681, 0.0
        %vm1822 = vcmp.gt.f32.partialorder %v1684, 0.0
        %vm1823 = vcmp.gt.f32.partialorder %v1689, 0.0
        %vm1824 = vcmp.gt.f32.partialorder %v1692, 0.0
        %vm1825 = vcmp.gt.f32.partialorder %v1697, 0.0
        %vm1826 = vcmp.gt.f32.partialorder %v1700, 0.0
        %vm1827 = vcmp.gt.f32.partialorder %v1705, 0.0
        %vm1828 = vcmp.gt.f32.partialorder %v1708, 0.0
        %vm1829 = vcmp.gt.f32.partialorder %v1713, 0.0
        %vm1830 = vcmp.gt.f32.partialorder %v1716, 0.0
        %vm1831 = vcmp.gt.f32.partialorder %v1721, 0.0
        %vm1832 = vcmp.gt.f32.partialorder %v1724, 0.0
        %vm1833 = vcmp.gt.f32.partialorder %v1729, 0.0
        %vm1834 = vcmp.gt.f32.partialorder %v1732, 0.0
        %vm1835 = vcmp.gt.f32.partialorder %v1737, 0.0
        %vm1836 = vcmp.gt.f32.partialorder %v1740, 0.0
        %vm1837 = vcmp.gt.f32.partialorder %v1745, 0.0
        %vm1838 = vcmp.gt.f32.partialorder %v1748, 0.0
        %vm1839 = vcmp.gt.f32.partialorder %v1753, 0.0
        %vm1840 = vcmp.gt.f32.partialorder %v1756, 0.0
        %vm1841 = vcmp.gt.f32.partialorder %v1761, 0.0
        %vm1842 = vcmp.gt.f32.partialorder %v1764, 0.0
        %vm1843 = vcmp.gt.f32.partialorder %v1769, 0.0
        %vm1844 = vcmp.gt.f32.partialorder %v1772, 0.0
        %vm1845 = vcmp.gt.f32.partialorder %v1777, 0.0
        %vm1846 = vcmp.gt.f32.partialorder %v1780, 0.0
        %v1847 = vmul.f32 %v1529, 0.2
        %v1848 = vmul.f32 %v1532, 0.2
        %v1849 = vmul.f32 %v1537, 0.2
        %v1850 = vmul.f32 %v1540, 0.2
        %v1851 = vmul.f32 %v1545, 0.2
        %v1852 = vmul.f32 %v1548, 0.2
        %v1853 = vmul.f32 %v1553, 0.2
        %v1854 = vmul.f32 %v1556, 0.2
        %v1855 = vmul.f32 %v1561, 0.2
        %v1856 = vmul.f32 %v1564, 0.2
        %v1857 = vmul.f32 %v1569, 0.2
        %v1858 = vmul.f32 %v1572, 0.2
        %v1859 = vmul.f32 %v1577, 0.2
        %v1860 = vmul.f32 %v1580, 0.2
        %v1861 = vmul.f32 %v1585, 0.2
        %v1862 = vmul.f32 %v1588, 0.2
        %v1863 = vmul.f32 %v1593, 0.2
        %v1864 = vmul.f32 %v1596, 0.2
        %v1865 = vmul.f32 %v1601, 0.2
        %v1866 = vmul.f32 %v1604, 0.2
        %v1867 = vmul.f32 %v1609, 0.2
        %v1868 = vmul.f32 %v1612, 0.2
        %v1869 = vmul.f32 %v1617, 0.2
        %v1870 = vmul.f32 %v1620, 0.2
        %v1871 = vmul.f32 %v1625, 0.2
        %v1872 = vmul.f32 %v1628, 0.2
        %v1873 = vmul.f32 %v1633, 0.2
        %v1874 = vmul.f32 %v1636, 0.2
        %v1875 = vmul.f32 %v1641, 0.2
        %v1876 = vmul.f32 %v1644, 0.2
        %v1877 = vmul.f32 %v1649, 0.2
        %v1878 = vmul.f32 %v1652, 0.2
        %v1879 = vmul.f32 %v1657, 0.2
        %v1880 = vmul.f32 %v1660, 0.2
        %v1881 = vmul.f32 %v1665, 0.2
        %v1882 = vmul.f32 %v1668, 0.2
        %v1883 = vmul.f32 %v1673, 0.2
        %v1884 = vmul.f32 %v1676, 0.2
        %v1885 = vmul.f32 %v1681, 0.2
        %v1886 = vmul.f32 %v1684, 0.2
        %v1887 = vmul.f32 %v1689, 0.2
        %v1888 = vmul.f32 %v1692, 0.2
        %v1889 = vmul.f32 %v1697, 0.2
        %v1890 = vmul.f32 %v1700, 0.2
        %v1891 = vmul.f32 %v1705, 0.2
        %v1892 = vmul.f32 %v1708, 0.2
        %v1893 = vmul.f32 %v1713, 0.2
        %v1894 = vmul.f32 %v1716, 0.2
        %v1895 = vmul.f32 %v1721, 0.2
        %v1896 = vmul.f32 %v1724, 0.2
        %v1897 = vmul.f32 %v1729, 0.2
        %v1898 = vmul.f32 %v1732, 0.2
        %v1899 = vmul.f32 %v1737, 0.2
        %v1900 = vmul.f32 %v1740, 0.2
        %v1901 = vmul.f32 %v1745, 0.2
        %v1902 = vmul.f32 %v1748, 0.2
        %v1903 = vmul.f32 %v1753, 0.2
        %v1904 = vmul.f32 %v1756, 0.2
        %v1905 = vmul.f32 %v1761, 0.2
        %v1906 = vmul.f32 %v1764, 0.2
        %v1907 = vmul.f32 %v1769, 0.2
        %v1908 = vmul.f32 %v1772, 0.2
        %v1909 = vmul.f32 %v1777, 0.2
        %v1910 = vmul.f32 %v1780, 0.2
        %v1911 = vsel %vm1783, %v1529, %v1847
        %v1912 = vsel %vm1784, %v1532, %v1848
        %v1913 = vsel %vm1785, %v1537, %v1849
        %v1914 = vsel %vm1786, %v1540, %v1850
        %v1915 = vsel %vm1787, %v1545, %v1851
        %v1916 = vsel %vm1788, %v1548, %v1852
        %v1917 = vsel %vm1789, %v1553, %v1853
        %v1918 = vsel %vm1790, %v1556, %v1854
        %v1919 = vsel %vm1791, %v1561, %v1855
        %v1920 = vsel %vm1792, %v1564, %v1856
        %v1921 = vsel %vm1793, %v1569, %v1857
        %v1922 = vsel %vm1794, %v1572, %v1858
        %v1923 = vsel %vm1795, %v1577, %v1859
        %v1924 = vsel %vm1796, %v1580, %v1860
        %v1925 = vsel %vm1797, %v1585, %v1861
        %v1926 = vsel %vm1798, %v1588, %v1862
        %v1927 = vsel %vm1799, %v1593, %v1863
        %v1928 = vsel %vm1800, %v1596, %v1864
        %v1929 = vsel %vm1801, %v1601, %v1865
        %v1930 = vsel %vm1802, %v1604, %v1866
        %v1931 = vsel %vm1803, %v1609, %v1867
        %v1932 = vsel %vm1804, %v1612, %v1868
        %v1933 = vsel %vm1805, %v1617, %v1869
        %v1934 = vsel %vm1806, %v1620, %v1870
        %v1935 = vsel %vm1807, %v1625, %v1871
        %v1936 = vsel %vm1808, %v1628, %v1872
        %v1937 = vsel %vm1809, %v1633, %v1873
        %v1938 = vsel %vm1810, %v1636, %v1874
        %v1939 = vsel %vm1811, %v1641, %v1875
        %v1940 = vsel %vm1812, %v1644, %v1876
        %v1941 = vsel %vm1813, %v1649, %v1877
        %v1942 = vsel %vm1814, %v1652, %v1878
        %v1943 = vsel %vm1815, %v1657, %v1879
        %v1944 = vsel %vm1816, %v1660, %v1880
        %v1945 = vsel %vm1817, %v1665, %v1881
        %v1946 = vsel %vm1818, %v1668, %v1882
        %v1947 = vsel %vm1819, %v1673, %v1883
        %v1948 = vsel %vm1820, %v1676, %v1884
        %v1949 = vsel %vm1821, %v1681, %v1885
        %v1950 = vsel %vm1822, %v1684, %v1886
        %v1951 = vsel %vm1823, %v1689, %v1887
        %v1952 = vsel %vm1824, %v1692, %v1888
        %v1953 = vsel %vm1825, %v1697, %v1889
        %v1954 = vsel %vm1826, %v1700, %v1890
        %v1955 = vsel %vm1827, %v1705, %v1891
        %v1956 = vsel %vm1828, %v1708, %v1892
        %v1957 = vsel %vm1829, %v1713, %v1893
        %v1958 = vsel %vm1830, %v1716, %v1894
        %v1959 = vsel %vm1831, %v1721, %v1895
        %v1960 = vsel %vm1832, %v1724, %v1896
        %v1961 = vsel %vm1833, %v1729, %v1897
        %v1962 = vsel %vm1834, %v1732, %v1898
        %v1963 = vsel %vm1835, %v1737, %v1899
        %v1964 = vsel %vm1836, %v1740, %v1900
        %v1965 = vsel %vm1837, %v1745, %v1901
        %v1966 = vsel %vm1838, %v1748, %v1902
        %v1967 = vsel %vm1839, %v1753, %v1903
        %v1968 = vsel %vm1840, %v1756, %v1904
        %v1969 = vsel %vm1841, %v1761, %v1905
        %v1970 = vsel %vm1842, %v1764, %v1906
        %v1971 = vsel %vm1843, %v1769, %v1907
        %v1972 = vsel %vm1844, %v1772, %v1908
        %v1973 = vsel %vm1845, %v1777, %v1909
        %v1974 = vsel %vm1846, %v1780, %v1910
        %v1975 = vpack.c.bf16 %v1912, %v1911
        %v1976 = vpack.c.bf16 %v1914, %v1913
        %v1977 = vpack.c.bf16 %v1916, %v1915
        %v1978 = vpack.c.bf16 %v1918, %v1917
        %v1979 = vpack.c.bf16 %v1920, %v1919
        %v1980 = vpack.c.bf16 %v1922, %v1921
        %v1981 = vpack.c.bf16 %v1924, %v1923
        %v1982 = vpack.c.bf16 %v1926, %v1925
        %v1983 = vpack.c.bf16 %v1928, %v1927
        %v1984 = vpack.c.bf16 %v1930, %v1929
        %v1985 = vpack.c.bf16 %v1932, %v1931
        %v1986 = vpack.c.bf16 %v1934, %v1933
        %v1987 = vpack.c.bf16 %v1936, %v1935
        %v1988 = vpack.c.bf16 %v1938, %v1937
        %v1989 = vpack.c.bf16 %v1940, %v1939
        %v1990 = vpack.c.bf16 %v1942, %v1941
        %v1991 = vpack.c.bf16 %v1944, %v1943
        %v1992 = vpack.c.bf16 %v1946, %v1945
        %v1993 = vpack.c.bf16 %v1948, %v1947
        %v1994 = vpack.c.bf16 %v1950, %v1949
        %v1995 = vpack.c.bf16 %v1952, %v1951
        %v1996 = vpack.c.bf16 %v1954, %v1953
        %v1997 = vpack.c.bf16 %v1956, %v1955
        %v1998 = vpack.c.bf16 %v1958, %v1957
        %v1999 = vpack.c.bf16 %v1960, %v1959
        %v2000 = vpack.c.bf16 %v1962, %v1961
        %v2001 = vpack.c.bf16 %v1964, %v1963
        %v2002 = vpack.c.bf16 %v1966, %v1965
        %v2003 = vpack.c.bf16 %v1968, %v1967
        %v2004 = vpack.c.bf16 %v1970, %v1969
        %v2005 = vpack.c.bf16 %v1972, %v1971
        %v2006 = vpack.c.bf16 %v1974, %v1973
        %v2007 = vld [vmem:[%s3] sm:$0xf]
        %v2008 = vld [vmem:[%s3 + $0x4] sm:$0xf]
        %v2009 = vld [vmem:[%s3 + $0x8] sm:$0xf]
        %v2010 = vld [vmem:[%s3 + $0xc] sm:$0xf]
        %v2011 = vld [vmem:[%s3 + $0x10] sm:$0xf]
        %v2012 = vld [vmem:[%s3 + $0x14] sm:$0xf]
        %v2013 = vld [vmem:[%s3 + $0x18] sm:$0xf]
        %v2014 = vld [vmem:[%s3 + $0x1c] sm:$0xf]
        %v2015 = vld [vmem:[%s8] sm:$0x1]
        %v2017 = vlaneseq
        %v2018 = vshrl.u32 %v2017, 7
        %v2019 = vsub.s32 0, %v2018
        %v2020 = vrot.slane %v2015, %v2019
        %v2030 = vunpack.c.l.b16 %v2007
        %v2031 = vunpack.c.l.b16 %v2008
        %v2032 = vunpack.c.l.b16 %v2009
        %v2033 = vunpack.c.l.b16 %v2010
        %v2034 = vunpack.c.l.b16 %v2011
        %v2035 = vunpack.c.l.b16 %v2012
        %v2036 = vunpack.c.l.b16 %v2013
        %v2037 = vunpack.c.l.b16 %v2014
        %v2038 = vpack.c.b16 %v2031, %v2030
        %v2039 = vpack.c.b16 %v2033, %v2032
        %v2040 = vpack.c.b16 %v2035, %v2034
        %v2041 = vpack.c.b16 %v2037, %v2036
        %v2047 = vsel %vm1397, %v1975, 0
        %v2050 = vsel %vm1397, %v1976, 0
        %v2053 = vsel %vm1397, %v1977, 0
        %v2056 = vsel %vm1397, %v1978, 0
        %v2059 = vsel %vm1397, %v1979, 0
        %v2062 = vsel %vm1397, %v1980, 0
        %v2065 = vsel %vm1397, %v1981, 0
        %v2068 = vsel %vm1397, %v1982, 0
        %v2071 = vsel %vm1397, %v1983, 0
        %v2074 = vsel %vm1397, %v1984, 0
        %v2077 = vsel %vm1397, %v1985, 0
        %v2080 = vsel %vm1397, %v1986, 0
        %v2083 = vsel %vm1397, %v1987, 0
        %v2086 = vsel %vm1397, %v1988, 0
        %v2089 = vsel %vm1397, %v1989, 0
        %v2092 = vsel %vm1397, %v1990, 0
        %v2095 = vsel %vm1397, %v1991, 0
        %v2098 = vsel %vm1397, %v1992, 0
        %v2101 = vsel %vm1397, %v1993, 0
        %v2104 = vsel %vm1397, %v1994, 0
        %v2107 = vsel %vm1397, %v1995, 0
        %v2110 = vsel %vm1397, %v1996, 0
        %v2113 = vsel %vm1397, %v1997, 0
        %v2116 = vsel %vm1397, %v1998, 0
        %v2119 = vsel %vm1397, %v1999, 0
        %v2122 = vsel %vm1397, %v2000, 0
        %v2125 = vsel %vm1397, %v2001, 0
        %v2128 = vsel %vm1397, %v2002, 0
        %v2131 = vsel %vm1397, %v2003, 0
        %v2134 = vsel %vm1397, %v2004, 0
        %v2137 = vsel %vm1397, %v2005, 0
        %v2140 = vsel %vm1397, %v2006, 0
        %2142 = vmatprep.subr.bf16.mxu0 0
        %2143 = vmatpush1.bf16.msra.mxu0 %v2038
        %2144 = vmatprep.subr.bf16.mxu0 0
        %2145 = vmatpush1.bf16.msra.mxu0 %v2039
        %2146 = vmatprep.subr.bf16.mxu0 0
        %2147 = vmatpush1.bf16.msra.mxu0 %v2040
        %2148 = vmatprep.subr.bf16.mxu0 0
        %2149 = vmatpush1.bf16.msra.mxu0 %v2041
        %2150 = vmatprep.subr.bf16.mxu0 0
        %2151 = vmatpush1.bf16.msra.mxu0 0
        %2152 = vmatprep.subr.bf16.mxu0 0
        %2153 = vmatpush1.bf16.msra.mxu0 0
        %2154 = vmatprep.subr.bf16.mxu0 0
        %2155 = vmatpush1.bf16.msra.mxu0 0
        %2156 = vmatprep.subr.bf16.mxu0 0
        %2157 = vmatpush1.bf16.msra.mxu0 0
        %2158 = vmatprep.subr.bf16.mxu0 0
        %2159 = vmatpush1.bf16.msra.mxu0 0
        %2160 = vmatprep.subr.bf16.mxu0 0
        %2161 = vmatpush1.bf16.msra.mxu0 0
        %2162 = vmatprep.subr.bf16.mxu0 0
        %2163 = vmatpush1.bf16.msra.mxu0 0
        %2164 = vmatprep.subr.bf16.mxu0 0
        %2165 = vmatpush1.bf16.msra.mxu0 0
        %2166 = vmatprep.subr.bf16.mxu0 0
        %2167 = vmatpush1.bf16.msra.mxu0 0
        %2168 = vmatprep.subr.bf16.mxu0 0
        %2169 = vmatpush1.bf16.msra.mxu0 0
        %2170 = vmatprep.subr.bf16.mxu0 0
        %2171 = vmatpush1.bf16.msra.mxu0 0
        %2172 = vmatprep.subr.bf16.mxu0 0
        %2173 = vmatpush1.bf16.msra.mxu0 0
        %2174 = vmatprep.mubr.bf16.mxu0 0
        %2175 = vmatmul.mubr.bf16.gmra.mrb[0].mxu0 %v2047
        %v2176 = vpop.f32.mrb[0].mxu0
        %v2177 = vadd.f32 %v2020, %v2176
        %v2178 = vpop.f32.mrb[0].mxu0
        %v2179 = vpop.f32.mrb[0].mxu0
        %v2180 = vadd.f32 %v2020, %v2179
        %v2181 = vpop.f32.mrb[0].mxu0
        %2182 = vmatprep.mubr.bf16.mxu0 0
        %2183 = vmatmul.mubr.bf16.gmra.mrb[0].mxu0 %v2050
        %v2184 = vpop.f32.mrb[0].mxu0
        %v2185 = vadd.f32 %v2020, %v2184
        %v2186 = vpop.f32.mrb[0].mxu0
        %v2187 = vpop.f32.mrb[0].mxu0
        %v2188 = vadd.f32 %v2020, %v2187
        %v2189 = vpop.f32.mrb[0].mxu0
        %2190 = vmatprep.mubr.bf16.mxu0 0
        %2191 = vmatmul.mubr.bf16.gmra.mrb[0].mxu0 %v2053
        %v2192 = vpop.f32.mrb[0].mxu0
        %v2193 = vadd.f32 %v2020, %v2192
        %v2194 = vpop.f32.mrb[0].mxu0
        %v2195 = vpop.f32.mrb[0].mxu0
        %v2196 = vadd.f32 %v2020, %v2195
        %v2197 = vpop.f32.mrb[0].mxu0
        %2198 = vmatprep.mubr.bf16.mxu0 0
        %2199 = vmatmul.mubr.bf16.gmra.mrb[0].mxu0 %v2056
        %v2200 = vpop.f32.mrb[0].mxu0
        %v2201 = vadd.f32 %v2020, %v2200
        %v2202 = vpop.f32.mrb[0].mxu0
        %v2203 = vpop.f32.mrb[0].mxu0
        %v2204 = vadd.f32 %v2020, %v2203
        %v2205 = vpop.f32.mrb[0].mxu0
        %2206 = vmatprep.mubr.bf16.mxu0 0
        %2207 = vmatmul.mubr.bf16.gmra.mrb[0].mxu0 %v2059
        %v2208 = vpop.f32.mrb[0].mxu0
        %v2209 = vadd.f32 %v2020, %v2208
        %v2210 = vpop.f32.mrb[0].mxu0
        %v2211 = vpop.f32.mrb[0].mxu0
        %v2212 = vadd.f32 %v2020, %v2211
        %v2213 = vpop.f32.mrb[0].mxu0
        %2214 = vmatprep.mubr.bf16.mxu0 0
        %2215 = vmatmul.mubr.bf16.gmra.mrb[0].mxu0 %v2062
        %v2216 = vpop.f32.mrb[0].mxu0
        %v2217 = vadd.f32 %v2020, %v2216
        %v2218 = vpop.f32.mrb[0].mxu0
        %v2219 = vpop.f32.mrb[0].mxu0
        %v2220 = vadd.f32 %v2020, %v2219
        %v2221 = vpop.f32.mrb[0].mxu0
        %2222 = vmatprep.mubr.bf16.mxu0 0
        %2223 = vmatmul.mubr.bf16.gmra.mrb[0].mxu0 %v2065
        %v2224 = vpop.f32.mrb[0].mxu0
        %v2225 = vadd.f32 %v2020, %v2224
        %v2226 = vpop.f32.mrb[0].mxu0
        %v2227 = vpop.f32.mrb[0].mxu0
        %v2228 = vadd.f32 %v2020, %v2227
        %v2229 = vpop.f32.mrb[0].mxu0
        %2230 = vmatprep.mubr.bf16.mxu0 0
        %2231 = vmatmul.mubr.bf16.gmra.mrb[0].mxu0 %v2068
        %v2232 = vpop.f32.mrb[0].mxu0
        %v2233 = vadd.f32 %v2020, %v2232
        %v2234 = vpop.f32.mrb[0].mxu0
        %v2235 = vpop.f32.mrb[0].mxu0
        %v2236 = vadd.f32 %v2020, %v2235
        %v2237 = vpop.f32.mrb[0].mxu0
        %2238 = vmatprep.mubr.bf16.mxu0 0
        %2239 = vmatmul.mubr.bf16.gmra.mrb[0].mxu0 %v2071
        %v2240 = vpop.f32.mrb[0].mxu0
        %v2241 = vadd.f32 %v2020, %v2240
        %v2242 = vpop.f32.mrb[0].mxu0
        %v2243 = vpop.f32.mrb[0].mxu0
        %v2244 = vadd.f32 %v2020, %v2243
        %v2245 = vpop.f32.mrb[0].mxu0
        %2246 = vmatprep.mubr.bf16.mxu0 0
        %2247 = vmatmul.mubr.bf16.gmra.mrb[0].mxu0 %v2074
        %v2248 = vpop.f32.mrb[0].mxu0
        %v2249 = vadd.f32 %v2020, %v2248
        %v2250 = vpop.f32.mrb[0].mxu0
        %v2251 = vpop.f32.mrb[0].mxu0
        %v2252 = vadd.f32 %v2020, %v2251
        %v2253 = vpop.f32.mrb[0].mxu0
        %2254 = vmatprep.mubr.bf16.mxu0 0
        %2255 = vmatmul.mubr.bf16.gmra.mrb[0].mxu0 %v2077
        %v2256 = vpop.f32.mrb[0].mxu0
        %v2257 = vadd.f32 %v2020, %v2256
        %v2258 = vpop.f32.mrb[0].mxu0
        %v2259 = vpop.f32.mrb[0].mxu0
        %v2260 = vadd.f32 %v2020, %v2259
        %v2261 = vpop.f32.mrb[0].mxu0
        %2262 = vmatprep.mubr.bf16.mxu0 0
        %2263 = vmatmul.mubr.bf16.gmra.mrb[0].mxu0 %v2080
        %v2264 = vpop.f32.mrb[0].mxu0
        %v2265 = vadd.f32 %v2020, %v2264
        %v2266 = vpop.f32.mrb[0].mxu0
        %v2267 = vpop.f32.mrb[0].mxu0
        %v2268 = vadd.f32 %v2020, %v2267
        %v2269 = vpop.f32.mrb[0].mxu0
        %2270 = vmatprep.mubr.bf16.mxu0 0
        %2271 = vmatmul.mubr.bf16.gmra.mrb[0].mxu0 %v2083
        %v2272 = vpop.f32.mrb[0].mxu0
        %v2273 = vadd.f32 %v2020, %v2272
        %v2274 = vpop.f32.mrb[0].mxu0
        %v2275 = vpop.f32.mrb[0].mxu0
        %v2276 = vadd.f32 %v2020, %v2275
        %v2277 = vpop.f32.mrb[0].mxu0
        %2278 = vmatprep.mubr.bf16.mxu0 0
        %2279 = vmatmul.mubr.bf16.gmra.mrb[0].mxu0 %v2086
        %v2280 = vpop.f32.mrb[0].mxu0
        %v2281 = vadd.f32 %v2020, %v2280
        %v2282 = vpop.f32.mrb[0].mxu0
        %v2283 = vpop.f32.mrb[0].mxu0
        %v2284 = vadd.f32 %v2020, %v2283
        %v2285 = vpop.f32.mrb[0].mxu0
        %2286 = vmatprep.mubr.bf16.mxu0 0
        %2287 = vmatmul.mubr.bf16.gmra.mrb[0].mxu0 %v2089
        %v2288 = vpop.f32.mrb[0].mxu0
        %v2289 = vadd.f32 %v2020, %v2288
        %v2290 = vpop.f32.mrb[0].mxu0
        %v2291 = vpop.f32.mrb[0].mxu0
        %v2292 = vadd.f32 %v2020, %v2291
        %v2293 = vpop.f32.mrb[0].mxu0
        %2294 = vmatprep.mubr.bf16.mxu0 0
        %2295 = vmatmul.mubr.bf16.gmra.mrb[0].mxu0 %v2092
        %v2296 = vpop.f32.mrb[0].mxu0
        %v2297 = vadd.f32 %v2020, %v2296
        %v2298 = vpop.f32.mrb[0].mxu0
        %v2299 = vpop.f32.mrb[0].mxu0
        %v2300 = vadd.f32 %v2020, %v2299
        %v2301 = vpop.f32.mrb[0].mxu0
        %2302 = vmatprep.mubr.bf16.mxu0 0
        %2303 = vmatmul.mubr.bf16.gmra.mrb[0].mxu0 %v2095
        %v2304 = vpop.f32.mrb[0].mxu0
        %v2305 = vadd.f32 %v2020, %v2304
        %v2306 = vpop.f32.mrb[0].mxu0
        %v2307 = vpop.f32.mrb[0].mxu0
        %v2308 = vadd.f32 %v2020, %v2307
        %v2309 = vpop.f32.mrb[0].mxu0
        %2310 = vmatprep.mubr.bf16.mxu0 0
        %2311 = vmatmul.mubr.bf16.gmra.mrb[0].mxu0 %v2098
        %v2312 = vpop.f32.mrb[0].mxu0
        %v2313 = vadd.f32 %v2020, %v2312
        %v2314 = vpop.f32.mrb[0].mxu0
        %v2315 = vpop.f32.mrb[0].mxu0
        %v2316 = vadd.f32 %v2020, %v2315
        %v2317 = vpop.f32.mrb[0].mxu0
        %2318 = vmatprep.mubr.bf16.mxu0 0
        %2319 = vmatmul.mubr.bf16.gmra.mrb[0].mxu0 %v2101
        %v2320 = vpop.f32.mrb[0].mxu0
        %v2321 = vadd.f32 %v2020, %v2320
        %v2322 = vpop.f32.mrb[0].mxu0
        %v2323 = vpop.f32.mrb[0].mxu0
        %v2324 = vadd.f32 %v2020, %v2323
        %v2325 = vpop.f32.mrb[0].mxu0
        %2326 = vmatprep.mubr.bf16.mxu0 0
        %2327 = vmatmul.mubr.bf16.gmra.mrb[0].mxu0 %v2104
        %v2328 = vpop.f32.mrb[0].mxu0
        %v2329 = vadd.f32 %v2020, %v2328
        %v2330 = vpop.f32.mrb[0].mxu0
        %v2331 = vpop.f32.mrb[0].mxu0
        %v2332 = vadd.f32 %v2020, %v2331
        %v2333 = vpop.f32.mrb[0].mxu0
        %2334 = vmatprep.mubr.bf16.mxu0 0
        %2335 = vmatmul.mubr.bf16.gmra.mrb[0].mxu0 %v2107
        %v2336 = vpop.f32.mrb[0].mxu0
        %v2337 = vadd.f32 %v2020, %v2336
        %v2338 = vpop.f32.mrb[0].mxu0
        %v2339 = vpop.f32.mrb[0].mxu0
        %v2340 = vadd.f32 %v2020, %v2339
        %v2341 = vpop.f32.mrb[0].mxu0
        %2342 = vmatprep.mubr.bf16.mxu0 0
        %2343 = vmatmul.mubr.bf16.gmra.mrb[0].mxu0 %v2110
        %v2344 = vpop.f32.mrb[0].mxu0
        %v2345 = vadd.f32 %v2020, %v2344
        %v2346 = vpop.f32.mrb[0].mxu0
        %v2347 = vpop.f32.mrb[0].mxu0
        %v2348 = vadd.f32 %v2020, %v2347
        %v2349 = vpop.f32.mrb[0].mxu0
        %2350 = vmatprep.mubr.bf16.mxu0 0
        %2351 = vmatmul.mubr.bf16.gmra.mrb[0].mxu0 %v2113
        %v2352 = vpop.f32.mrb[0].mxu0
        %v2353 = vadd.f32 %v2020, %v2352
        %v2354 = vpop.f32.mrb[0].mxu0
        %v2355 = vpop.f32.mrb[0].mxu0
        %v2356 = vadd.f32 %v2020, %v2355
        %v2357 = vpop.f32.mrb[0].mxu0
        %2358 = vmatprep.mubr.bf16.mxu0 0
        %2359 = vmatmul.mubr.bf16.gmra.mrb[0].mxu0 %v2116
        %v2360 = vpop.f32.mrb[0].mxu0
        %v2361 = vadd.f32 %v2020, %v2360
        %v2362 = vpop.f32.mrb[0].mxu0
        %v2363 = vpop.f32.mrb[0].mxu0
        %v2364 = vadd.f32 %v2020, %v2363
        %v2365 = vpop.f32.mrb[0].mxu0
        %2366 = vmatprep.mubr.bf16.mxu0 0
        %2367 = vmatmul.mubr.bf16.gmra.mrb[0].mxu0 %v2119
        %v2368 = vpop.f32.mrb[0].mxu0
        %v2369 = vadd.f32 %v2020, %v2368
        %v2370 = vpop.f32.mrb[0].mxu0
        %v2371 = vpop.f32.mrb[0].mxu0
        %v2372 = vadd.f32 %v2020, %v2371
        %v2373 = vpop.f32.mrb[0].mxu0
        %2374 = vmatprep.mubr.bf16.mxu0 0
        %2375 = vmatmul.mubr.bf16.gmra.mrb[0].mxu0 %v2122
        %v2376 = vpop.f32.mrb[0].mxu0
        %v2377 = vadd.f32 %v2020, %v2376
        %v2378 = vpop.f32.mrb[0].mxu0
        %v2379 = vpop.f32.mrb[0].mxu0
        %v2380 = vadd.f32 %v2020, %v2379
        %v2381 = vpop.f32.mrb[0].mxu0
        %2382 = vmatprep.mubr.bf16.mxu0 0
        %2383 = vmatmul.mubr.bf16.gmra.mrb[0].mxu0 %v2125
        %v2384 = vpop.f32.mrb[0].mxu0
        %v2385 = vadd.f32 %v2020, %v2384
        %v2386 = vpop.f32.mrb[0].mxu0
        %v2387 = vpop.f32.mrb[0].mxu0
        %v2388 = vadd.f32 %v2020, %v2387
        %v2389 = vpop.f32.mrb[0].mxu0
        %2390 = vmatprep.mubr.bf16.mxu0 0
        %2391 = vmatmul.mubr.bf16.gmra.mrb[0].mxu0 %v2128
        %v2392 = vpop.f32.mrb[0].mxu0
        %v2393 = vadd.f32 %v2020, %v2392
        %v2394 = vpop.f32.mrb[0].mxu0
        %v2395 = vpop.f32.mrb[0].mxu0
        %v2396 = vadd.f32 %v2020, %v2395
        %v2397 = vpop.f32.mrb[0].mxu0
        %2398 = vmatprep.mubr.bf16.mxu0 0
        %2399 = vmatmul.mubr.bf16.gmra.mrb[0].mxu0 %v2131
        %v2400 = vpop.f32.mrb[0].mxu0
        %v2401 = vadd.f32 %v2020, %v2400
        %v2402 = vpop.f32.mrb[0].mxu0
        %v2403 = vpop.f32.mrb[0].mxu0
        %v2404 = vadd.f32 %v2020, %v2403
        %v2405 = vpop.f32.mrb[0].mxu0
        %2406 = vmatprep.mubr.bf16.mxu0 0
        %2407 = vmatmul.mubr.bf16.gmra.mrb[0].mxu0 %v2134
        %v2408 = vpop.f32.mrb[0].mxu0
        %v2409 = vadd.f32 %v2020, %v2408
        %v2410 = vpop.f32.mrb[0].mxu0
        %v2411 = vpop.f32.mrb[0].mxu0
        %v2412 = vadd.f32 %v2020, %v2411
        %v2413 = vpop.f32.mrb[0].mxu0
        %2414 = vmatprep.mubr.bf16.mxu0 0
        %2415 = vmatmul.mubr.bf16.gmra.mrb[0].mxu0 %v2137
        %v2416 = vpop.f32.mrb[0].mxu0
        %v2417 = vadd.f32 %v2020, %v2416
        %v2418 = vpop.f32.mrb[0].mxu0
        %v2419 = vpop.f32.mrb[0].mxu0
        %v2420 = vadd.f32 %v2020, %v2419
        %v2421 = vpop.f32.mrb[0].mxu0
        %2422 = vmatprep.mubr.bf16.mxu0 0
        %2423 = vmatmul.mubr.bf16.gmra.mrb[0].mxu0 %v2140
        %v2424 = vpop.f32.mrb[0].mxu0
        %v2425 = vadd.f32 %v2020, %v2424
        %v2426 = vpop.f32.mrb[0].mxu0
        %v2427 = vpop.f32.mrb[0].mxu0
        %v2428 = vadd.f32 %v2020, %v2427
        %v2429 = vpop.f32.mrb[0].mxu0
        %2430 = vdwg.mxu0
        %vm2431 = vcmp.gt.f32.partialorder %v2177, 0.0
        %vm2432 = vcmp.gt.f32.partialorder %v2180, 0.0
        %vm2433 = vcmp.gt.f32.partialorder %v2185, 0.0
        %vm2434 = vcmp.gt.f32.partialorder %v2188, 0.0
        %vm2435 = vcmp.gt.f32.partialorder %v2193, 0.0
        %vm2436 = vcmp.gt.f32.partialorder %v2196, 0.0
        %vm2437 = vcmp.gt.f32.partialorder %v2201, 0.0
        %vm2438 = vcmp.gt.f32.partialorder %v2204, 0.0
        %vm2439 = vcmp.gt.f32.partialorder %v2209, 0.0
        %vm2440 = vcmp.gt.f32.partialorder %v2212, 0.0
        %vm2441 = vcmp.gt.f32.partialorder %v2217, 0.0
        %vm2442 = vcmp.gt.f32.partialorder %v2220, 0.0
        %vm2443 = vcmp.gt.f32.partialorder %v2225, 0.0
        %vm2444 = vcmp.gt.f32.partialorder %v2228, 0.0
        %vm2445 = vcmp.gt.f32.partialorder %v2233, 0.0
        %vm2446 = vcmp.gt.f32.partialorder %v2236, 0.0
        %vm2447 = vcmp.gt.f32.partialorder %v2241, 0.0
        %vm2448 = vcmp.gt.f32.partialorder %v2244, 0.0
        %vm2449 = vcmp.gt.f32.partialorder %v2249, 0.0
        %vm2450 = vcmp.gt.f32.partialorder %v2252, 0.0
        %vm2451 = vcmp.gt.f32.partialorder %v2257, 0.0
        %vm2452 = vcmp.gt.f32.partialorder %v2260, 0.0
        %vm2453 = vcmp.gt.f32.partialorder %v2265, 0.0
        %vm2454 = vcmp.gt.f32.partialorder %v2268, 0.0
        %vm2455 = vcmp.gt.f32.partialorder %v2273, 0.0
        %vm2456 = vcmp.gt.f32.partialorder %v2276, 0.0
        %vm2457 = vcmp.gt.f32.partialorder %v2281, 0.0
        %vm2458 = vcmp.gt.f32.partialorder %v2284, 0.0
        %vm2459 = vcmp.gt.f32.partialorder %v2289, 0.0
        %vm2460 = vcmp.gt.f32.partialorder %v2292, 0.0
        %vm2461 = vcmp.gt.f32.partialorder %v2297, 0.0
        %vm2462 = vcmp.gt.f32.partialorder %v2300, 0.0
        %vm2463 = vcmp.gt.f32.partialorder %v2305, 0.0
        %vm2464 = vcmp.gt.f32.partialorder %v2308, 0.0
        %vm2465 = vcmp.gt.f32.partialorder %v2313, 0.0
        %vm2466 = vcmp.gt.f32.partialorder %v2316, 0.0
        %vm2467 = vcmp.gt.f32.partialorder %v2321, 0.0
        %vm2468 = vcmp.gt.f32.partialorder %v2324, 0.0
        %vm2469 = vcmp.gt.f32.partialorder %v2329, 0.0
        %vm2470 = vcmp.gt.f32.partialorder %v2332, 0.0
        %vm2471 = vcmp.gt.f32.partialorder %v2337, 0.0
        %vm2472 = vcmp.gt.f32.partialorder %v2340, 0.0
        %vm2473 = vcmp.gt.f32.partialorder %v2345, 0.0
        %vm2474 = vcmp.gt.f32.partialorder %v2348, 0.0
        %vm2475 = vcmp.gt.f32.partialorder %v2353, 0.0
        %vm2476 = vcmp.gt.f32.partialorder %v2356, 0.0
        %vm2477 = vcmp.gt.f32.partialorder %v2361, 0.0
        %vm2478 = vcmp.gt.f32.partialorder %v2364, 0.0
        %vm2479 = vcmp.gt.f32.partialorder %v2369, 0.0
        %vm2480 = vcmp.gt.f32.partialorder %v2372, 0.0
        %vm2481 = vcmp.gt.f32.partialorder %v2377, 0.0
        %vm2482 = vcmp.gt.f32.partialorder %v2380, 0.0
        %vm2483 = vcmp.gt.f32.partialorder %v2385, 0.0
        %vm2484 = vcmp.gt.f32.partialorder %v2388, 0.0
        %vm2485 = vcmp.gt.f32.partialorder %v2393, 0.0
        %vm2486 = vcmp.gt.f32.partialorder %v2396, 0.0
        %vm2487 = vcmp.gt.f32.partialorder %v2401, 0.0
        %vm2488 = vcmp.gt.f32.partialorder %v2404, 0.0
        %vm2489 = vcmp.gt.f32.partialorder %v2409, 0.0
        %vm2490 = vcmp.gt.f32.partialorder %v2412, 0.0
        %vm2491 = vcmp.gt.f32.partialorder %v2417, 0.0
        %vm2492 = vcmp.gt.f32.partialorder %v2420, 0.0
        %vm2493 = vcmp.gt.f32.partialorder %v2425, 0.0
        %vm2494 = vcmp.gt.f32.partialorder %v2428, 0.0
        %v2495 = vmul.f32 %v2177, 0.2
        %v2496 = vmul.f32 %v2180, 0.2
        %v2497 = vmul.f32 %v2185, 0.2
        %v2498 = vmul.f32 %v2188, 0.2
        %v2499 = vmul.f32 %v2193, 0.2
        %v2500 = vmul.f32 %v2196, 0.2
        %v2501 = vmul.f32 %v2201, 0.2
        %v2502 = vmul.f32 %v2204, 0.2
        %v2503 = vmul.f32 %v2209, 0.2
        %v2504 = vmul.f32 %v2212, 0.2
        %v2505 = vmul.f32 %v2217, 0.2
        %v2506 = vmul.f32 %v2220, 0.2
        %v2507 = vmul.f32 %v2225, 0.2
        %v2508 = vmul.f32 %v2228, 0.2
        %v2509 = vmul.f32 %v2233, 0.2
        %v2510 = vmul.f32 %v2236, 0.2
        %v2511 = vmul.f32 %v2241, 0.2
        %v2512 = vmul.f32 %v2244, 0.2
        %v2513 = vmul.f32 %v2249, 0.2
        %v2514 = vmul.f32 %v2252, 0.2
        %v2515 = vmul.f32 %v2257, 0.2
        %v2516 = vmul.f32 %v2260, 0.2
        %v2517 = vmul.f32 %v2265, 0.2
        %v2518 = vmul.f32 %v2268, 0.2
        %v2519 = vmul.f32 %v2273, 0.2
        %v2520 = vmul.f32 %v2276, 0.2
        %v2521 = vmul.f32 %v2281, 0.2
        %v2522 = vmul.f32 %v2284, 0.2
        %v2523 = vmul.f32 %v2289, 0.2
        %v2524 = vmul.f32 %v2292, 0.2
        %v2525 = vmul.f32 %v2297, 0.2
        %v2526 = vmul.f32 %v2300, 0.2
        %v2527 = vmul.f32 %v2305, 0.2
        %v2528 = vmul.f32 %v2308, 0.2
        %v2529 = vmul.f32 %v2313, 0.2
        %v2530 = vmul.f32 %v2316, 0.2
        %v2531 = vmul.f32 %v2321, 0.2
        %v2532 = vmul.f32 %v2324, 0.2
        %v2533 = vmul.f32 %v2329, 0.2
        %v2534 = vmul.f32 %v2332, 0.2
        %v2535 = vmul.f32 %v2337, 0.2
        %v2536 = vmul.f32 %v2340, 0.2
        %v2537 = vmul.f32 %v2345, 0.2
        %v2538 = vmul.f32 %v2348, 0.2
        %v2539 = vmul.f32 %v2353, 0.2
        %v2540 = vmul.f32 %v2356, 0.2
        %v2541 = vmul.f32 %v2361, 0.2
        %v2542 = vmul.f32 %v2364, 0.2
        %v2543 = vmul.f32 %v2369, 0.2
        %v2544 = vmul.f32 %v2372, 0.2
        %v2545 = vmul.f32 %v2377, 0.2
        %v2546 = vmul.f32 %v2380, 0.2
        %v2547 = vmul.f32 %v2385, 0.2
        %v2548 = vmul.f32 %v2388, 0.2
        %v2549 = vmul.f32 %v2393, 0.2
        %v2550 = vmul.f32 %v2396, 0.2
        %v2551 = vmul.f32 %v2401, 0.2
        %v2552 = vmul.f32 %v2404, 0.2
        %v2553 = vmul.f32 %v2409, 0.2
        %v2554 = vmul.f32 %v2412, 0.2
        %v2555 = vmul.f32 %v2417, 0.2
        %v2556 = vmul.f32 %v2420, 0.2
        %v2557 = vmul.f32 %v2425, 0.2
        %v2558 = vmul.f32 %v2428, 0.2
        %v2559 = vsel %vm2431, %v2177, %v2495
        %v2560 = vsel %vm2432, %v2180, %v2496
        %v2561 = vsel %vm2433, %v2185, %v2497
        %v2562 = vsel %vm2434, %v2188, %v2498
        %v2563 = vsel %vm2435, %v2193, %v2499
        %v2564 = vsel %vm2436, %v2196, %v2500
        %v2565 = vsel %vm2437, %v2201, %v2501
        %v2566 = vsel %vm2438, %v2204, %v2502
        %v2567 = vsel %vm2439, %v2209, %v2503
        %v2568 = vsel %vm2440, %v2212, %v2504
        %v2569 = vsel %vm2441, %v2217, %v2505
        %v2570 = vsel %vm2442, %v2220, %v2506
        %v2571 = vsel %vm2443, %v2225, %v2507
        %v2572 = vsel %vm2444, %v2228, %v2508
        %v2573 = vsel %vm2445, %v2233, %v2509
        %v2574 = vsel %vm2446, %v2236, %v2510
        %v2575 = vsel %vm2447, %v2241, %v2511
        %v2576 = vsel %vm2448, %v2244, %v2512
        %v2577 = vsel %vm2449, %v2249, %v2513
        %v2578 = vsel %vm2450, %v2252, %v2514
        %v2579 = vsel %vm2451, %v2257, %v2515
        %v2580 = vsel %vm2452, %v2260, %v2516
        %v2581 = vsel %vm2453, %v2265, %v2517
        %v2582 = vsel %vm2454, %v2268, %v2518
        %v2583 = vsel %vm2455, %v2273, %v2519
        %v2584 = vsel %vm2456, %v2276, %v2520
        %v2585 = vsel %vm2457, %v2281, %v2521
        %v2586 = vsel %vm2458, %v2284, %v2522
        %v2587 = vsel %vm2459, %v2289, %v2523
        %v2588 = vsel %vm2460, %v2292, %v2524
        %v2589 = vsel %vm2461, %v2297, %v2525
        %v2590 = vsel %vm2462, %v2300, %v2526
        %v2591 = vsel %vm2463, %v2305, %v2527
        %v2592 = vsel %vm2464, %v2308, %v2528
        %v2593 = vsel %vm2465, %v2313, %v2529
        %v2594 = vsel %vm2466, %v2316, %v2530
        %v2595 = vsel %vm2467, %v2321, %v2531
        %v2596 = vsel %vm2468, %v2324, %v2532
        %v2597 = vsel %vm2469, %v2329, %v2533
        %v2598 = vsel %vm2470, %v2332, %v2534
        %v2599 = vsel %vm2471, %v2337, %v2535
        %v2600 = vsel %vm2472, %v2340, %v2536
        %v2601 = vsel %vm2473, %v2345, %v2537
        %v2602 = vsel %vm2474, %v2348, %v2538
        %v2603 = vsel %vm2475, %v2353, %v2539
        %v2604 = vsel %vm2476, %v2356, %v2540
        %v2605 = vsel %vm2477, %v2361, %v2541
        %v2606 = vsel %vm2478, %v2364, %v2542
        %v2607 = vsel %vm2479, %v2369, %v2543
        %v2608 = vsel %vm2480, %v2372, %v2544
        %v2609 = vsel %vm2481, %v2377, %v2545
        %v2610 = vsel %vm2482, %v2380, %v2546
        %v2611 = vsel %vm2483, %v2385, %v2547
        %v2612 = vsel %vm2484, %v2388, %v2548
        %v2613 = vsel %vm2485, %v2393, %v2549
        %v2614 = vsel %vm2486, %v2396, %v2550
        %v2615 = vsel %vm2487, %v2401, %v2551
        %v2616 = vsel %vm2488, %v2404, %v2552
        %v2617 = vsel %vm2489, %v2409, %v2553
        %v2618 = vsel %vm2490, %v2412, %v2554
        %v2619 = vsel %vm2491, %v2417, %v2555
        %v2620 = vsel %vm2492, %v2420, %v2556
        %v2621 = vsel %vm2493, %v2425, %v2557
        %v2622 = vsel %vm2494, %v2428, %v2558
        %v2623 = vpack.c.bf16 %v2560, %v2559
        %v2624 = vpack.c.bf16 %v2562, %v2561
        %v2625 = vpack.c.bf16 %v2564, %v2563
        %v2626 = vpack.c.bf16 %v2566, %v2565
        %v2627 = vpack.c.bf16 %v2568, %v2567
        %v2628 = vpack.c.bf16 %v2570, %v2569
        %v2629 = vpack.c.bf16 %v2572, %v2571
        %v2630 = vpack.c.bf16 %v2574, %v2573
        %v2631 = vpack.c.bf16 %v2576, %v2575
        %v2632 = vpack.c.bf16 %v2578, %v2577
        %v2633 = vpack.c.bf16 %v2580, %v2579
        %v2634 = vpack.c.bf16 %v2582, %v2581
        %v2635 = vpack.c.bf16 %v2584, %v2583
        %v2636 = vpack.c.bf16 %v2586, %v2585
        %v2637 = vpack.c.bf16 %v2588, %v2587
        %v2638 = vpack.c.bf16 %v2590, %v2589
        %v2639 = vpack.c.bf16 %v2592, %v2591
        %v2640 = vpack.c.bf16 %v2594, %v2593
        %v2641 = vpack.c.bf16 %v2596, %v2595
        %v2642 = vpack.c.bf16 %v2598, %v2597
        %v2643 = vpack.c.bf16 %v2600, %v2599
        %v2644 = vpack.c.bf16 %v2602, %v2601
        %v2645 = vpack.c.bf16 %v2604, %v2603
        %v2646 = vpack.c.bf16 %v2606, %v2605
        %v2647 = vpack.c.bf16 %v2608, %v2607
        %v2648 = vpack.c.bf16 %v2610, %v2609
        %v2649 = vpack.c.bf16 %v2612, %v2611
        %v2650 = vpack.c.bf16 %v2614, %v2613
        %v2651 = vpack.c.bf16 %v2616, %v2615
        %v2652 = vpack.c.bf16 %v2618, %v2617
        %v2653 = vpack.c.bf16 %v2620, %v2619
        %v2654 = vpack.c.bf16 %v2622, %v2621
        %v2655 = vld [vmem:[#allocation3] sm:$0xff]
        %v2656 = vld [vmem:[#allocation3 + $0x8] sm:$0xff]
        %v2657 = vld [vmem:[#allocation3 + $0x10] sm:$0xff]
        %v2658 = vld [vmem:[#allocation3 + $0x18] sm:$0xff]
        %v2659 = vld [vmem:[#allocation3 + $0x20] sm:$0xff]
        %v2660 = vld [vmem:[#allocation3 + $0x28] sm:$0xff]
        %v2661 = vld [vmem:[#allocation3 + $0x30] sm:$0xff]
        %v2662 = vld [vmem:[#allocation3 + $0x38] sm:$0xff]
        %v2663 = vld [vmem:[#allocation3 + $0x40] sm:$0xff]
        %v2664 = vld [vmem:[#allocation3 + $0x48] sm:$0xff]
        %v2665 = vld [vmem:[#allocation3 + $0x50] sm:$0xff]
        %v2666 = vld [vmem:[#allocation3 + $0x58] sm:$0xff]
        %v2667 = vld [vmem:[#allocation3 + $0x60] sm:$0xff]
        %v2668 = vld [vmem:[#allocation3 + $0x68] sm:$0xff]
        %v2669 = vld [vmem:[#allocation3 + $0x70] sm:$0xff]
        %v2670 = vld [vmem:[#allocation3 + $0x78] sm:$0xff]
        %v2671 = vld [vmem:[%s9] sm:$0x3]
        %v2673 = vlaneseq
        %v2674 = vshrl.u32 %v2673, 7
        %v2675 = vsub.s32 0, %v2674
        %v2676 = vrot.slane %v2671, %v2675
        %v2677 = vlaneseq
        %v2678 = vshrl.u32 %v2677, 7
        %v2679 = vsub.s32 1, %v2678
        %v2680 = vrot.slane %v2671, %v2679
        %v2699 = vunpack.c.l.b16 %v2655
        %v2700 = vunpack.c.h.b16 %v2655
        %v2701 = vunpack.c.l.b16 %v2656
        %v2702 = vunpack.c.h.b16 %v2656
        %v2703 = vunpack.c.l.b16 %v2657
        %v2704 = vunpack.c.h.b16 %v2657
        %v2705 = vunpack.c.l.b16 %v2658
        %v2706 = vunpack.c.h.b16 %v2658
        %v2707 = vunpack.c.l.b16 %v2659
        %v2708 = vunpack.c.h.b16 %v2659
        %v2709 = vunpack.c.l.b16 %v2660
        %v2710 = vunpack.c.h.b16 %v2660
        %v2711 = vunpack.c.l.b16 %v2661
        %v2712 = vunpack.c.h.b16 %v2661
        %v2713 = vunpack.c.l.b16 %v2662
        %v2714 = vunpack.c.h.b16 %v2662
        %v2715 = vunpack.c.l.b16 %v2663
        %v2716 = vunpack.c.h.b16 %v2663
        %v2717 = vunpack.c.l.b16 %v2664
        %v2718 = vunpack.c.h.b16 %v2664
        %v2719 = vunpack.c.l.b16 %v2665
        %v2720 = vunpack.c.h.b16 %v2665
        %v2721 = vunpack.c.l.b16 %v2666
        %v2722 = vunpack.c.h.b16 %v2666
        %v2723 = vunpack.c.l.b16 %v2667
        %v2724 = vunpack.c.h.b16 %v2667
        %v2725 = vunpack.c.l.b16 %v2668
        %v2726 = vunpack.c.h.b16 %v2668
        %v2727 = vunpack.c.l.b16 %v2669
        %v2728 = vunpack.c.h.b16 %v2669
        %v2729 = vunpack.c.l.b16 %v2670
        %v2730 = vunpack.c.h.b16 %v2670
        %v2731 = vpack.c.b16 %v2701, %v2699
        %v2732 = vpack.c.b16 %v2702, %v2700
        %v2733 = vpack.c.b16 %v2705, %v2703
        %v2734 = vpack.c.b16 %v2706, %v2704
        %v2735 = vpack.c.b16 %v2709, %v2707
        %v2736 = vpack.c.b16 %v2710, %v2708
        %v2737 = vpack.c.b16 %v2713, %v2711
        %v2738 = vpack.c.b16 %v2714, %v2712
        %v2739 = vpack.c.b16 %v2717, %v2715
        %v2740 = vpack.c.b16 %v2718, %v2716
        %v2741 = vpack.c.b16 %v2721, %v2719
        %v2742 = vpack.c.b16 %v2722, %v2720
        %v2743 = vpack.c.b16 %v2725, %v2723
        %v2744 = vpack.c.b16 %v2726, %v2724
        %v2745 = vpack.c.b16 %v2729, %v2727
        %v2746 = vpack.c.b16 %v2730, %v2728
        %2763 = vmatprep.subr.bf16.mxu0 %v2732
        %2764 = vmatpush1.bf16.msra.mxu0 %v2731
        %2765 = vmatprep.subr.bf16.mxu0 %v2734
        %2766 = vmatpush1.bf16.msra.mxu0 %v2733
        %2767 = vmatprep.subr.bf16.mxu0 %v2736
        %2768 = vmatpush1.bf16.msra.mxu0 %v2735
        %2769 = vmatprep.subr.bf16.mxu0 %v2738
        %2770 = vmatpush1.bf16.msra.mxu0 %v2737
        %2771 = vmatprep.subr.bf16.mxu0 %v2740
        %2772 = vmatpush1.bf16.msra.mxu0 %v2739
        %2773 = vmatprep.subr.bf16.mxu0 %v2742
        %2774 = vmatpush1.bf16.msra.mxu0 %v2741
        %2775 = vmatprep.subr.bf16.mxu0 %v2744
        %2776 = vmatpush1.bf16.msra.mxu0 %v2743
        %2777 = vmatprep.subr.bf16.mxu0 %v2746
        %2778 = vmatpush1.bf16.msra.mxu0 %v2745
        %2779 = vmatprep.subr.bf16.mxu0 0
        %2780 = vmatpush1.bf16.msra.mxu0 0
        %2781 = vmatprep.subr.bf16.mxu0 0
        %2782 = vmatpush1.bf16.msra.mxu0 0
        %2783 = vmatprep.subr.bf16.mxu0 0
        %2784 = vmatpush1.bf16.msra.mxu0 0
        %2785 = vmatprep.subr.bf16.mxu0 0
        %2786 = vmatpush1.bf16.msra.mxu0 0
        %2787 = vmatprep.subr.bf16.mxu0 0
        %2788 = vmatpush1.bf16.msra.mxu0 0
        %2789 = vmatprep.subr.bf16.mxu0 0
        %2790 = vmatpush1.bf16.msra.mxu0 0
        %2791 = vmatprep.subr.bf16.mxu0 0
        %2792 = vmatpush1.bf16.msra.mxu0 0
        %2793 = vmatprep.subr.bf16.mxu0 0
        %2794 = vmatpush1.bf16.msra.mxu0 0
        %2795 = vmatprep.mubr.bf16.mxu0 0
        %2796 = vmatmul.mubr.bf16.gmra.mrb[0].mxu0 %v2623
        %v2797 = vpop.f32.mrb[0].mxu0
        %v2798 = vadd.f32 %v2676, %v2797
        %v2799 = vpop.f32.mrb[0].mxu0
        %v2800 = vadd.f32 %v2680, %v2799
        %v2801 = vpop.f32.mrb[0].mxu0
        %v2802 = vadd.f32 %v2676, %v2801
        %v2803 = vpop.f32.mrb[0].mxu0
        %v2804 = vadd.f32 %v2680, %v2803
        %2805 = vmatprep.mubr.bf16.mxu0 0
        %2806 = vmatmul.mubr.bf16.gmra.mrb[0].mxu0 %v2624
        %v2807 = vpop.f32.mrb[0].mxu0
        %v2808 = vadd.f32 %v2676, %v2807
        %v2809 = vpop.f32.mrb[0].mxu0
        %v2810 = vadd.f32 %v2680, %v2809
        %v2811 = vpop.f32.mrb[0].mxu0
        %v2812 = vadd.f32 %v2676, %v2811
        %v2813 = vpop.f32.mrb[0].mxu0
        %v2814 = vadd.f32 %v2680, %v2813
        %2815 = vmatprep.mubr.bf16.mxu0 0
        %2816 = vmatmul.mubr.bf16.gmra.mrb[0].mxu0 %v2625
        %v2817 = vpop.f32.mrb[0].mxu0
        %v2818 = vadd.f32 %v2676, %v2817
        %v2819 = vpop.f32.mrb[0].mxu0
        %v2820 = vadd.f32 %v2680, %v2819
        %v2821 = vpop.f32.mrb[0].mxu0
        %v2822 = vadd.f32 %v2676, %v2821
        %v2823 = vpop.f32.mrb[0].mxu0
        %v2824 = vadd.f32 %v2680, %v2823
        %2825 = vmatprep.mubr.bf16.mxu0 0
        %2826 = vmatmul.mubr.bf16.gmra.mrb[0].mxu0 %v2626
        %v2827 = vpop.f32.mrb[0].mxu0
        %v2828 = vadd.f32 %v2676, %v2827
        %v2829 = vpop.f32.mrb[0].mxu0
        %v2830 = vadd.f32 %v2680, %v2829
        %v2831 = vpop.f32.mrb[0].mxu0
        %v2832 = vadd.f32 %v2676, %v2831
        %v2833 = vpop.f32.mrb[0].mxu0
        %v2834 = vadd.f32 %v2680, %v2833
        %2835 = vmatprep.mubr.bf16.mxu0 0
        %2836 = vmatmul.mubr.bf16.gmra.mrb[0].mxu0 %v2627
        %v2837 = vpop.f32.mrb[0].mxu0
        %v2838 = vadd.f32 %v2676, %v2837
        %v2839 = vpop.f32.mrb[0].mxu0
        %v2840 = vadd.f32 %v2680, %v2839
        %v2841 = vpop.f32.mrb[0].mxu0
        %v2842 = vadd.f32 %v2676, %v2841
        %v2843 = vpop.f32.mrb[0].mxu0
        %v2844 = vadd.f32 %v2680, %v2843
        %2845 = vmatprep.mubr.bf16.mxu0 0
        %2846 = vmatmul.mubr.bf16.gmra.mrb[0].mxu0 %v2628
        %v2847 = vpop.f32.mrb[0].mxu0
        %v2848 = vadd.f32 %v2676, %v2847
        %v2849 = vpop.f32.mrb[0].mxu0
        %v2850 = vadd.f32 %v2680, %v2849
        %v2851 = vpop.f32.mrb[0].mxu0
        %v2852 = vadd.f32 %v2676, %v2851
        %v2853 = vpop.f32.mrb[0].mxu0
        %v2854 = vadd.f32 %v2680, %v2853
        %2855 = vmatprep.mubr.bf16.mxu0 0
        %2856 = vmatmul.mubr.bf16.gmra.mrb[0].mxu0 %v2629
        %v2857 = vpop.f32.mrb[0].mxu0
        %v2858 = vadd.f32 %v2676, %v2857
        %v2859 = vpop.f32.mrb[0].mxu0
        %v2860 = vadd.f32 %v2680, %v2859
        %v2861 = vpop.f32.mrb[0].mxu0
        %v2862 = vadd.f32 %v2676, %v2861
        %v2863 = vpop.f32.mrb[0].mxu0
        %v2864 = vadd.f32 %v2680, %v2863
        %2865 = vmatprep.mubr.bf16.mxu0 0
        %2866 = vmatmul.mubr.bf16.gmra.mrb[0].mxu0 %v2630
        %v2867 = vpop.f32.mrb[0].mxu0
        %v2868 = vadd.f32 %v2676, %v2867
        %v2869 = vpop.f32.mrb[0].mxu0
        %v2870 = vadd.f32 %v2680, %v2869
        %v2871 = vpop.f32.mrb[0].mxu0
        %v2872 = vadd.f32 %v2676, %v2871
        %v2873 = vpop.f32.mrb[0].mxu0
        %v2874 = vadd.f32 %v2680, %v2873
        %2875 = vmatprep.mubr.bf16.mxu0 0
        %2876 = vmatmul.mubr.bf16.gmra.mrb[0].mxu0 %v2631
        %v2877 = vpop.f32.mrb[0].mxu0
        %v2878 = vadd.f32 %v2676, %v2877
        %v2879 = vpop.f32.mrb[0].mxu0
        %v2880 = vadd.f32 %v2680, %v2879
        %v2881 = vpop.f32.mrb[0].mxu0
        %v2882 = vadd.f32 %v2676, %v2881
        %v2883 = vpop.f32.mrb[0].mxu0
        %v2884 = vadd.f32 %v2680, %v2883
        %2885 = vmatprep.mubr.bf16.mxu0 0
        %2886 = vmatmul.mubr.bf16.gmra.mrb[0].mxu0 %v2632
        %v2887 = vpop.f32.mrb[0].mxu0
        %v2888 = vadd.f32 %v2676, %v2887
        %v2889 = vpop.f32.mrb[0].mxu0
        %v2890 = vadd.f32 %v2680, %v2889
        %v2891 = vpop.f32.mrb[0].mxu0
        %v2892 = vadd.f32 %v2676, %v2891
        %v2893 = vpop.f32.mrb[0].mxu0
        %v2894 = vadd.f32 %v2680, %v2893
        %2895 = vmatprep.mubr.bf16.mxu0 0
        %2896 = vmatmul.mubr.bf16.gmra.mrb[0].mxu0 %v2633
        %v2897 = vpop.f32.mrb[0].mxu0
        %v2898 = vadd.f32 %v2676, %v2897
        %v2899 = vpop.f32.mrb[0].mxu0
        %v2900 = vadd.f32 %v2680, %v2899
        %v2901 = vpop.f32.mrb[0].mxu0
        %v2902 = vadd.f32 %v2676, %v2901
        %v2903 = vpop.f32.mrb[0].mxu0
        %v2904 = vadd.f32 %v2680, %v2903
        %2905 = vmatprep.mubr.bf16.mxu0 0
        %2906 = vmatmul.mubr.bf16.gmra.mrb[0].mxu0 %v2634
        %v2907 = vpop.f32.mrb[0].mxu0
        %v2908 = vadd.f32 %v2676, %v2907
        %v2909 = vpop.f32.mrb[0].mxu0
        %v2910 = vadd.f32 %v2680, %v2909
        %v2911 = vpop.f32.mrb[0].mxu0
        %v2912 = vadd.f32 %v2676, %v2911
        %v2913 = vpop.f32.mrb[0].mxu0
        %v2914 = vadd.f32 %v2680, %v2913
        %2915 = vmatprep.mubr.bf16.mxu0 0
        %2916 = vmatmul.mubr.bf16.gmra.mrb[0].mxu0 %v2635
        %v2917 = vpop.f32.mrb[0].mxu0
        %v2918 = vadd.f32 %v2676, %v2917
        %v2919 = vpop.f32.mrb[0].mxu0
        %v2920 = vadd.f32 %v2680, %v2919
        %v2921 = vpop.f32.mrb[0].mxu0
        %v2922 = vadd.f32 %v2676, %v2921
        %v2923 = vpop.f32.mrb[0].mxu0
        %v2924 = vadd.f32 %v2680, %v2923
        %2925 = vmatprep.mubr.bf16.mxu0 0
        %2926 = vmatmul.mubr.bf16.gmra.mrb[0].mxu0 %v2636
        %v2927 = vpop.f32.mrb[0].mxu0
        %v2928 = vadd.f32 %v2676, %v2927
        %v2929 = vpop.f32.mrb[0].mxu0
        %v2930 = vadd.f32 %v2680, %v2929
        %v2931 = vpop.f32.mrb[0].mxu0
        %v2932 = vadd.f32 %v2676, %v2931
        %v2933 = vpop.f32.mrb[0].mxu0
        %v2934 = vadd.f32 %v2680, %v2933
        %2935 = vmatprep.mubr.bf16.mxu0 0
        %2936 = vmatmul.mubr.bf16.gmra.mrb[0].mxu0 %v2637
        %v2937 = vpop.f32.mrb[0].mxu0
        %v2938 = vadd.f32 %v2676, %v2937
        %v2939 = vpop.f32.mrb[0].mxu0
        %v2940 = vadd.f32 %v2680, %v2939
        %v2941 = vpop.f32.mrb[0].mxu0
        %v2942 = vadd.f32 %v2676, %v2941
        %v2943 = vpop.f32.mrb[0].mxu0
        %v2944 = vadd.f32 %v2680, %v2943
        %2945 = vmatprep.mubr.bf16.mxu0 0
        %2946 = vmatmul.mubr.bf16.gmra.mrb[0].mxu0 %v2638
        %v2947 = vpop.f32.mrb[0].mxu0
        %v2948 = vadd.f32 %v2676, %v2947
        %v2949 = vpop.f32.mrb[0].mxu0
        %v2950 = vadd.f32 %v2680, %v2949
        %v2951 = vpop.f32.mrb[0].mxu0
        %v2952 = vadd.f32 %v2676, %v2951
        %v2953 = vpop.f32.mrb[0].mxu0
        %v2954 = vadd.f32 %v2680, %v2953
        %2955 = vmatprep.mubr.bf16.mxu0 0
        %2956 = vmatmul.mubr.bf16.gmra.mrb[0].mxu0 %v2639
        %v2957 = vpop.f32.mrb[0].mxu0
        %v2958 = vadd.f32 %v2676, %v2957
        %v2959 = vpop.f32.mrb[0].mxu0
        %v2960 = vadd.f32 %v2680, %v2959
        %v2961 = vpop.f32.mrb[0].mxu0
        %v2962 = vadd.f32 %v2676, %v2961
        %v2963 = vpop.f32.mrb[0].mxu0
        %v2964 = vadd.f32 %v2680, %v2963
        %2965 = vmatprep.mubr.bf16.mxu0 0
        %2966 = vmatmul.mubr.bf16.gmra.mrb[0].mxu0 %v2640
        %v2967 = vpop.f32.mrb[0].mxu0
        %v2968 = vadd.f32 %v2676, %v2967
        %v2969 = vpop.f32.mrb[0].mxu0
        %v2970 = vadd.f32 %v2680, %v2969
        %v2971 = vpop.f32.mrb[0].mxu0
        %v2972 = vadd.f32 %v2676, %v2971
        %v2973 = vpop.f32.mrb[0].mxu0
        %v2974 = vadd.f32 %v2680, %v2973
        %2975 = vmatprep.mubr.bf16.mxu0 0
        %2976 = vmatmul.mubr.bf16.gmra.mrb[0].mxu0 %v2641
        %v2977 = vpop.f32.mrb[0].mxu0
        %v2978 = vadd.f32 %v2676, %v2977
        %v2979 = vpop.f32.mrb[0].mxu0
        %v2980 = vadd.f32 %v2680, %v2979
        %v2981 = vpop.f32.mrb[0].mxu0
        %v2982 = vadd.f32 %v2676, %v2981
        %v2983 = vpop.f32.mrb[0].mxu0
        %v2984 = vadd.f32 %v2680, %v2983
        %2985 = vmatprep.mubr.bf16.mxu0 0
        %2986 = vmatmul.mubr.bf16.gmra.mrb[0].mxu0 %v2642
        %v2987 = vpop.f32.mrb[0].mxu0
        %v2988 = vadd.f32 %v2676, %v2987
        %v2989 = vpop.f32.mrb[0].mxu0
        %v2990 = vadd.f32 %v2680, %v2989
        %v2991 = vpop.f32.mrb[0].mxu0
        %v2992 = vadd.f32 %v2676, %v2991
        %v2993 = vpop.f32.mrb[0].mxu0
        %v2994 = vadd.f32 %v2680, %v2993
        %2995 = vmatprep.mubr.bf16.mxu0 0
        %2996 = vmatmul.mubr.bf16.gmra.mrb[0].mxu0 %v2643
        %v2997 = vpop.f32.mrb[0].mxu0
        %v2998 = vadd.f32 %v2676, %v2997
        %v2999 = vpop.f32.mrb[0].mxu0
        %v3000 = vadd.f32 %v2680, %v2999
        %v3001 = vpop.f32.mrb[0].mxu0
        %v3002 = vadd.f32 %v2676, %v3001
        %v3003 = vpop.f32.mrb[0].mxu0
        %v3004 = vadd.f32 %v2680, %v3003
        %3005 = vmatprep.mubr.bf16.mxu0 0
        %3006 = vmatmul.mubr.bf16.gmra.mrb[0].mxu0 %v2644
        %v3007 = vpop.f32.mrb[0].mxu0
        %v3008 = vadd.f32 %v2676, %v3007
        %v3009 = vpop.f32.mrb[0].mxu0
        %v3010 = vadd.f32 %v2680, %v3009
        %v3011 = vpop.f32.mrb[0].mxu0
        %v3012 = vadd.f32 %v2676, %v3011
        %v3013 = vpop.f32.mrb[0].mxu0
        %v3014 = vadd.f32 %v2680, %v3013
        %3015 = vmatprep.mubr.bf16.mxu0 0
        %3016 = vmatmul.mubr.bf16.gmra.mrb[0].mxu0 %v2645
        %v3017 = vpop.f32.mrb[0].mxu0
        %v3018 = vadd.f32 %v2676, %v3017
        %v3019 = vpop.f32.mrb[0].mxu0
        %v3020 = vadd.f32 %v2680, %v3019
        %v3021 = vpop.f32.mrb[0].mxu0
        %v3022 = vadd.f32 %v2676, %v3021
        %v3023 = vpop.f32.mrb[0].mxu0
        %v3024 = vadd.f32 %v2680, %v3023
        %3025 = vmatprep.mubr.bf16.mxu0 0
        %3026 = vmatmul.mubr.bf16.gmra.mrb[0].mxu0 %v2646
        %v3027 = vpop.f32.mrb[0].mxu0
        %v3028 = vadd.f32 %v2676, %v3027
        %v3029 = vpop.f32.mrb[0].mxu0
        %v3030 = vadd.f32 %v2680, %v3029
        %v3031 = vpop.f32.mrb[0].mxu0
        %v3032 = vadd.f32 %v2676, %v3031
        %v3033 = vpop.f32.mrb[0].mxu0
        %v3034 = vadd.f32 %v2680, %v3033
        %3035 = vmatprep.mubr.bf16.mxu0 0
        %3036 = vmatmul.mubr.bf16.gmra.mrb[0].mxu0 %v2647
        %v3037 = vpop.f32.mrb[0].mxu0
        %v3038 = vadd.f32 %v2676, %v3037
        %v3039 = vpop.f32.mrb[0].mxu0
        %v3040 = vadd.f32 %v2680, %v3039
        %v3041 = vpop.f32.mrb[0].mxu0
        %v3042 = vadd.f32 %v2676, %v3041
        %v3043 = vpop.f32.mrb[0].mxu0
        %v3044 = vadd.f32 %v2680, %v3043
        %3045 = vmatprep.mubr.bf16.mxu0 0
        %3046 = vmatmul.mubr.bf16.gmra.mrb[0].mxu0 %v2648
        %v3047 = vpop.f32.mrb[0].mxu0
        %v3048 = vadd.f32 %v2676, %v3047
        %v3049 = vpop.f32.mrb[0].mxu0
        %v3050 = vadd.f32 %v2680, %v3049
        %v3051 = vpop.f32.mrb[0].mxu0
        %v3052 = vadd.f32 %v2676, %v3051
        %v3053 = vpop.f32.mrb[0].mxu0
        %v3054 = vadd.f32 %v2680, %v3053
        %3055 = vmatprep.mubr.bf16.mxu0 0
        %3056 = vmatmul.mubr.bf16.gmra.mrb[0].mxu0 %v2649
        %v3057 = vpop.f32.mrb[0].mxu0
        %v3058 = vadd.f32 %v2676, %v3057
        %v3059 = vpop.f32.mrb[0].mxu0
        %v3060 = vadd.f32 %v2680, %v3059
        %v3061 = vpop.f32.mrb[0].mxu0
        %v3062 = vadd.f32 %v2676, %v3061
        %v3063 = vpop.f32.mrb[0].mxu0
        %v3064 = vadd.f32 %v2680, %v3063
        %3065 = vmatprep.mubr.bf16.mxu0 0
        %3066 = vmatmul.mubr.bf16.gmra.mrb[0].mxu0 %v2650
        %v3067 = vpop.f32.mrb[0].mxu0
        %v3068 = vadd.f32 %v2676, %v3067
        %v3069 = vpop.f32.mrb[0].mxu0
        %v3070 = vadd.f32 %v2680, %v3069
        %v3071 = vpop.f32.mrb[0].mxu0
        %v3072 = vadd.f32 %v2676, %v3071
        %v3073 = vpop.f32.mrb[0].mxu0
        %v3074 = vadd.f32 %v2680, %v3073
        %3075 = vmatprep.mubr.bf16.mxu0 0
        %3076 = vmatmul.mubr.bf16.gmra.mrb[0].mxu0 %v2651
        %v3077 = vpop.f32.mrb[0].mxu0
        %v3078 = vadd.f32 %v2676, %v3077
        %v3079 = vpop.f32.mrb[0].mxu0
        %v3080 = vadd.f32 %v2680, %v3079
        %v3081 = vpop.f32.mrb[0].mxu0
        %v3082 = vadd.f32 %v2676, %v3081
        %v3083 = vpop.f32.mrb[0].mxu0
        %v3084 = vadd.f32 %v2680, %v3083
        %3085 = vmatprep.mubr.bf16.mxu0 0
        %3086 = vmatmul.mubr.bf16.gmra.mrb[0].mxu0 %v2652
        %v3087 = vpop.f32.mrb[0].mxu0
        %v3088 = vadd.f32 %v2676, %v3087
        %v3089 = vpop.f32.mrb[0].mxu0
        %v3090 = vadd.f32 %v2680, %v3089
        %v3091 = vpop.f32.mrb[0].mxu0
        %v3092 = vadd.f32 %v2676, %v3091
        %v3093 = vpop.f32.mrb[0].mxu0
        %v3094 = vadd.f32 %v2680, %v3093
        %3095 = vmatprep.mubr.bf16.mxu0 0
        %3096 = vmatmul.mubr.bf16.gmra.mrb[0].mxu0 %v2653
        %v3097 = vpop.f32.mrb[0].mxu0
        %v3098 = vadd.f32 %v2676, %v3097
        %v3099 = vpop.f32.mrb[0].mxu0
        %v3100 = vadd.f32 %v2680, %v3099
        %v3101 = vpop.f32.mrb[0].mxu0
        %v3102 = vadd.f32 %v2676, %v3101
        %v3103 = vpop.f32.mrb[0].mxu0
        %v3104 = vadd.f32 %v2680, %v3103
        %3105 = vmatprep.mubr.bf16.mxu0 0
        %3106 = vmatmul.mubr.bf16.gmra.mrb[0].mxu0 %v2654
        %v3107 = vpop.f32.mrb[0].mxu0
        %v3108 = vadd.f32 %v2676, %v3107
        %v3109 = vpop.f32.mrb[0].mxu0
        %v3110 = vadd.f32 %v2680, %v3109
        %v3111 = vpop.f32.mrb[0].mxu0
        %v3112 = vadd.f32 %v2676, %v3111
        %v3113 = vpop.f32.mrb[0].mxu0
        %v3114 = vadd.f32 %v2680, %v3113
        %3115 = vdwg.mxu0
        %vm3116 = vcmp.gt.f32.partialorder %v2798, 0.0
        %vm3117 = vcmp.gt.f32.partialorder %v2800, 0.0
        %vm3118 = vcmp.gt.f32.partialorder %v2802, 0.0
        %vm3119 = vcmp.gt.f32.partialorder %v2804, 0.0
        %vm3120 = vcmp.gt.f32.partialorder %v2808, 0.0
        %vm3121 = vcmp.gt.f32.partialorder %v2810, 0.0
        %vm3122 = vcmp.gt.f32.partialorder %v2812, 0.0
        %vm3123 = vcmp.gt.f32.partialorder %v2814, 0.0
        %vm3124 = vcmp.gt.f32.partialorder %v2818, 0.0
        %vm3125 = vcmp.gt.f32.partialorder %v2820, 0.0
        %vm3126 = vcmp.gt.f32.partialorder %v2822, 0.0
        %vm3127 = vcmp.gt.f32.partialorder %v2824, 0.0
        %vm3128 = vcmp.gt.f32.partialorder %v2828, 0.0
        %vm3129 = vcmp.gt.f32.partialorder %v2830, 0.0
        %vm3130 = vcmp.gt.f32.partialorder %v2832, 0.0
        %vm3131 = vcmp.gt.f32.partialorder %v2834, 0.0
        %vm3132 = vcmp.gt.f32.partialorder %v2838, 0.0
        %vm3133 = vcmp.gt.f32.partialorder %v2840, 0.0
        %vm3134 = vcmp.gt.f32.partialorder %v2842, 0.0
        %vm3135 = vcmp.gt.f32.partialorder %v2844, 0.0
        %vm3136 = vcmp.gt.f32.partialorder %v2848, 0.0
        %vm3137 = vcmp.gt.f32.partialorder %v2850, 0.0
        %vm3138 = vcmp.gt.f32.partialorder %v2852, 0.0
        %vm3139 = vcmp.gt.f32.partialorder %v2854, 0.0
        %vm3140 = vcmp.gt.f32.partialorder %v2858, 0.0
        %vm3141 = vcmp.gt.f32.partialorder %v2860, 0.0
        %vm3142 = vcmp.gt.f32.partialorder %v2862, 0.0
        %vm3143 = vcmp.gt.f32.partialorder %v2864, 0.0
        %vm3144 = vcmp.gt.f32.partialorder %v2868, 0.0
        %vm3145 = vcmp.gt.f32.partialorder %v2870, 0.0
        %vm3146 = vcmp.gt.f32.partialorder %v2872, 0.0
        %vm3147 = vcmp.gt.f32.partialorder %v2874, 0.0
        %vm3148 = vcmp.gt.f32.partialorder %v2878, 0.0
        %vm3149 = vcmp.gt.f32.partialorder %v2880, 0.0
        %vm3150 = vcmp.gt.f32.partialorder %v2882, 0.0
        %vm3151 = vcmp.gt.f32.partialorder %v2884, 0.0
        %vm3152 = vcmp.gt.f32.partialorder %v2888, 0.0
        %vm3153 = vcmp.gt.f32.partialorder %v2890, 0.0
        %vm3154 = vcmp.gt.f32.partialorder %v2892, 0.0
        %vm3155 = vcmp.gt.f32.partialorder %v2894, 0.0
        %vm3156 = vcmp.gt.f32.partialorder %v2898, 0.0
        %vm3157 = vcmp.gt.f32.partialorder %v2900, 0.0
        %vm3158 = vcmp.gt.f32.partialorder %v2902, 0.0
        %vm3159 = vcmp.gt.f32.partialorder %v2904, 0.0
        %vm3160 = vcmp.gt.f32.partialorder %v2908, 0.0
        %vm3161 = vcmp.gt.f32.partialorder %v2910, 0.0
        %vm3162 = vcmp.gt.f32.partialorder %v2912, 0.0
        %vm3163 = vcmp.gt.f32.partialorder %v2914, 0.0
        %vm3164 = vcmp.gt.f32.partialorder %v2918, 0.0
        %vm3165 = vcmp.gt.f32.partialorder %v2920, 0.0
        %vm3166 = vcmp.gt.f32.partialorder %v2922, 0.0
        %vm3167 = vcmp.gt.f32.partialorder %v2924, 0.0
        %vm3168 = vcmp.gt.f32.partialorder %v2928, 0.0
        %vm3169 = vcmp.gt.f32.partialorder %v2930, 0.0
        %vm3170 = vcmp.gt.f32.partialorder %v2932, 0.0
        %vm3171 = vcmp.gt.f32.partialorder %v2934, 0.0
        %vm3172 = vcmp.gt.f32.partialorder %v2938, 0.0
        %vm3173 = vcmp.gt.f32.partialorder %v2940, 0.0
        %vm3174 = vcmp.gt.f32.partialorder %v2942, 0.0
        %vm3175 = vcmp.gt.f32.partialorder %v2944, 0.0
        %vm3176 = vcmp.gt.f32.partialorder %v2948, 0.0
        %vm3177 = vcmp.gt.f32.partialorder %v2950, 0.0
        %vm3178 = vcmp.gt.f32.partialorder %v2952, 0.0
        %vm3179 = vcmp.gt.f32.partialorder %v2954, 0.0
        %vm3180 = vcmp.gt.f32.partialorder %v2958, 0.0
        %vm3181 = vcmp.gt.f32.partialorder %v2960, 0.0
        %vm3182 = vcmp.gt.f32.partialorder %v2962, 0.0
        %vm3183 = vcmp.gt.f32.partialorder %v2964, 0.0
        %vm3184 = vcmp.gt.f32.partialorder %v2968, 0.0
        %vm3185 = vcmp.gt.f32.partialorder %v2970, 0.0
        %vm3186 = vcmp.gt.f32.partialorder %v2972, 0.0
        %vm3187 = vcmp.gt.f32.partialorder %v2974, 0.0
        %vm3188 = vcmp.gt.f32.partialorder %v2978, 0.0
        %vm3189 = vcmp.gt.f32.partialorder %v2980, 0.0
        %vm3190 = vcmp.gt.f32.partialorder %v2982, 0.0
        %vm3191 = vcmp.gt.f32.partialorder %v2984, 0.0
        %vm3192 = vcmp.gt.f32.partialorder %v2988, 0.0
        %vm3193 = vcmp.gt.f32.partialorder %v2990, 0.0
        %vm3194 = vcmp.gt.f32.partialorder %v2992, 0.0
        %vm3195 = vcmp.gt.f32.partialorder %v2994, 0.0
        %vm3196 = vcmp.gt.f32.partialorder %v2998, 0.0
        %vm3197 = vcmp.gt.f32.partialorder %v3000, 0.0
        %vm3198 = vcmp.gt.f32.partialorder %v3002, 0.0
        %vm3199 = vcmp.gt.f32.partialorder %v3004, 0.0
        %vm3200 = vcmp.gt.f32.partialorder %v3008, 0.0
        %vm3201 = vcmp.gt.f32.partialorder %v3010, 0.0
        %vm3202 = vcmp.gt.f32.partialorder %v3012, 0.0
        %vm3203 = vcmp.gt.f32.partialorder %v3014, 0.0
        %vm3204 = vcmp.gt.f32.partialorder %v3018, 0.0
        %vm3205 = vcmp.gt.f32.partialorder %v3020, 0.0
        %vm3206 = vcmp.gt.f32.partialorder %v3022, 0.0
        %vm3207 = vcmp.gt.f32.partialorder %v3024, 0.0
        %vm3208 = vcmp.gt.f32.partialorder %v3028, 0.0
        %vm3209 = vcmp.gt.f32.partialorder %v3030, 0.0
        %vm3210 = vcmp.gt.f32.partialorder %v3032, 0.0
        %vm3211 = vcmp.gt.f32.partialorder %v3034, 0.0
        %vm3212 = vcmp.gt.f32.partialorder %v3038, 0.0
        %vm3213 = vcmp.gt.f32.partialorder %v3040, 0.0
        %vm3214 = vcmp.gt.f32.partialorder %v3042, 0.0
        %vm3215 = vcmp.gt.f32.partialorder %v3044, 0.0
        %vm3216 = vcmp.gt.f32.partialorder %v3048, 0.0
        %vm3217 = vcmp.gt.f32.partialorder %v3050, 0.0
        %vm3218 = vcmp.gt.f32.partialorder %v3052, 0.0
        %vm3219 = vcmp.gt.f32.partialorder %v3054, 0.0
        %vm3220 = vcmp.gt.f32.partialorder %v3058, 0.0
        %vm3221 = vcmp.gt.f32.partialorder %v3060, 0.0
        %vm3222 = vcmp.gt.f32.partialorder %v3062, 0.0
        %vm3223 = vcmp.gt.f32.partialorder %v3064, 0.0
        %vm3224 = vcmp.gt.f32.partialorder %v3068, 0.0
        %vm3225 = vcmp.gt.f32.partialorder %v3070, 0.0
        %vm3226 = vcmp.gt.f32.partialorder %v3072, 0.0
        %vm3227 = vcmp.gt.f32.partialorder %v3074, 0.0
        %vm3228 = vcmp.gt.f32.partialorder %v3078, 0.0
        %vm3229 = vcmp.gt.f32.partialorder %v3080, 0.0
        %vm3230 = vcmp.gt.f32.partialorder %v3082, 0.0
        %vm3231 = vcmp.gt.f32.partialorder %v3084, 0.0
        %vm3232 = vcmp.gt.f32.partialorder %v3088, 0.0
        %vm3233 = vcmp.gt.f32.partialorder %v3090, 0.0
        %vm3234 = vcmp.gt.f32.partialorder %v3092, 0.0
        %vm3235 = vcmp.gt.f32.partialorder %v3094, 0.0
        %vm3236 = vcmp.gt.f32.partialorder %v3098, 0.0
        %vm3237 = vcmp.gt.f32.partialorder %v3100, 0.0
        %vm3238 = vcmp.gt.f32.partialorder %v3102, 0.0
        %vm3239 = vcmp.gt.f32.partialorder %v3104, 0.0
        %vm3240 = vcmp.gt.f32.partialorder %v3108, 0.0
        %vm3241 = vcmp.gt.f32.partialorder %v3110, 0.0
        %vm3242 = vcmp.gt.f32.partialorder %v3112, 0.0
        %vm3243 = vcmp.gt.f32.partialorder %v3114, 0.0
        %v3244 = vmul.f32 %v2798, 0.2
        %v3245 = vmul.f32 %v2800, 0.2
        %v3246 = vmul.f32 %v2802, 0.2
        %v3247 = vmul.f32 %v2804, 0.2
        %v3248 = vmul.f32 %v2808, 0.2
        %v3249 = vmul.f32 %v2810, 0.2
        %v3250 = vmul.f32 %v2812, 0.2
        %v3251 = vmul.f32 %v2814, 0.2
        %v3252 = vmul.f32 %v2818, 0.2
        %v3253 = vmul.f32 %v2820, 0.2
        %v3254 = vmul.f32 %v2822, 0.2
        %v3255 = vmul.f32 %v2824, 0.2
        %v3256 = vmul.f32 %v2828, 0.2
        %v3257 = vmul.f32 %v2830, 0.2
        %v3258 = vmul.f32 %v2832, 0.2
        %v3259 = vmul.f32 %v2834, 0.2
        %v3260 = vmul.f32 %v2838, 0.2
        %v3261 = vmul.f32 %v2840, 0.2
        %v3262 = vmul.f32 %v2842, 0.2
        %v3263 = vmul.f32 %v2844, 0.2
        %v3264 = vmul.f32 %v2848, 0.2
        %v3265 = vmul.f32 %v2850, 0.2
        %v3266 = vmul.f32 %v2852, 0.2
        %v3267 = vmul.f32 %v2854, 0.2
        %v3268 = vmul.f32 %v2858, 0.2
        %v3269 = vmul.f32 %v2860, 0.2
        %v3270 = vmul.f32 %v2862, 0.2
        %v3271 = vmul.f32 %v2864, 0.2
        %v3272 = vmul.f32 %v2868, 0.2
        %v3273 = vmul.f32 %v2870, 0.2
        %v3274 = vmul.f32 %v2872, 0.2
        %v3275 = vmul.f32 %v2874, 0.2
        %v3276 = vmul.f32 %v2878, 0.2
        %v3277 = vmul.f32 %v2880, 0.2
        %v3278 = vmul.f32 %v2882, 0.2
        %v3279 = vmul.f32 %v2884, 0.2
        %v3280 = vmul.f32 %v2888, 0.2
        %v3281 = vmul.f32 %v2890, 0.2
        %v3282 = vmul.f32 %v2892, 0.2
        %v3283 = vmul.f32 %v2894, 0.2
        %v3284 = vmul.f32 %v2898, 0.2
        %v3285 = vmul.f32 %v2900, 0.2
        %v3286 = vmul.f32 %v2902, 0.2
        %v3287 = vmul.f32 %v2904, 0.2
        %v3288 = vmul.f32 %v2908, 0.2
        %v3289 = vmul.f32 %v2910, 0.2
        %v3290 = vmul.f32 %v2912, 0.2
        %v3291 = vmul.f32 %v2914, 0.2
        %v3292 = vmul.f32 %v2918, 0.2
        %v3293 = vmul.f32 %v2920, 0.2
        %v3294 = vmul.f32 %v2922, 0.2
        %v3295 = vmul.f32 %v2924, 0.2
        %v3296 = vmul.f32 %v2928, 0.2
        %v3297 = vmul.f32 %v2930, 0.2
        %v3298 = vmul.f32 %v2932, 0.2
        %v3299 = vmul.f32 %v2934, 0.2
        %v3300 = vmul.f32 %v2938, 0.2
        %v3301 = vmul.f32 %v2940, 0.2
        %v3302 = vmul.f32 %v2942, 0.2
        %v3303 = vmul.f32 %v2944, 0.2
        %v3304 = vmul.f32 %v2948, 0.2
        %v3305 = vmul.f32 %v2950, 0.2
        %v3306 = vmul.f32 %v2952, 0.2
        %v3307 = vmul.f32 %v2954, 0.2
        %v3308 = vmul.f32 %v2958, 0.2
        %v3309 = vmul.f32 %v2960, 0.2
        %v3310 = vmul.f32 %v2962, 0.2
        %v3311 = vmul.f32 %v2964, 0.2
        %v3312 = vmul.f32 %v2968, 0.2
        %v3313 = vmul.f32 %v2970, 0.2
        %v3314 = vmul.f32 %v2972, 0.2
        %v3315 = vmul.f32 %v2974, 0.2
        %v3316 = vmul.f32 %v2978, 0.2
        %v3317 = vmul.f32 %v2980, 0.2
        %v3318 = vmul.f32 %v2982, 0.2
        %v3319 = vmul.f32 %v2984, 0.2
        %v3320 = vmul.f32 %v2988, 0.2
        %v3321 = vmul.f32 %v2990, 0.2
        %v3322 = vmul.f32 %v2992, 0.2
        %v3323 = vmul.f32 %v2994, 0.2
        %v3324 = vmul.f32 %v2998, 0.2
        %v3325 = vmul.f32 %v3000, 0.2
        %v3326 = vmul.f32 %v3002, 0.2
        %v3327 = vmul.f32 %v3004, 0.2
        %v3328 = vmul.f32 %v3008, 0.2
        %v3329 = vmul.f32 %v3010, 0.2
        %v3330 = vmul.f32 %v3012, 0.2
        %v3331 = vmul.f32 %v3014, 0.2
        %v3332 = vmul.f32 %v3018, 0.2
        %v3333 = vmul.f32 %v3020, 0.2
        %v3334 = vmul.f32 %v3022, 0.2
        %v3335 = vmul.f32 %v3024, 0.2
        %v3336 = vmul.f32 %v3028, 0.2
        %v3337 = vmul.f32 %v3030, 0.2
        %v3338 = vmul.f32 %v3032, 0.2
        %v3339 = vmul.f32 %v3034, 0.2
        %v3340 = vmul.f32 %v3038, 0.2
        %v3341 = vmul.f32 %v3040, 0.2
        %v3342 = vmul.f32 %v3042, 0.2
        %v3343 = vmul.f32 %v3044, 0.2
        %v3344 = vmul.f32 %v3048, 0.2
        %v3345 = vmul.f32 %v3050, 0.2
        %v3346 = vmul.f32 %v3052, 0.2
        %v3347 = vmul.f32 %v3054, 0.2
        %v3348 = vmul.f32 %v3058, 0.2
        %v3349 = vmul.f32 %v3060, 0.2
        %v3350 = vmul.f32 %v3062, 0.2
        %v3351 = vmul.f32 %v3064, 0.2
        %v3352 = vmul.f32 %v3068, 0.2
        %v3353 = vmul.f32 %v3070, 0.2
        %v3354 = vmul.f32 %v3072, 0.2
        %v3355 = vmul.f32 %v3074, 0.2
        %v3356 = vmul.f32 %v3078, 0.2
        %v3357 = vmul.f32 %v3080, 0.2
        %v3358 = vmul.f32 %v3082, 0.2
        %v3359 = vmul.f32 %v3084, 0.2
        %v3360 = vmul.f32 %v3088, 0.2
        %v3361 = vmul.f32 %v3090, 0.2
        %v3362 = vmul.f32 %v3092, 0.2
        %v3363 = vmul.f32 %v3094, 0.2
        %v3364 = vmul.f32 %v3098, 0.2
        %v3365 = vmul.f32 %v3100, 0.2
        %v3366 = vmul.f32 %v3102, 0.2
        %v3367 = vmul.f32 %v3104, 0.2
        %v3368 = vmul.f32 %v3108, 0.2
        %v3369 = vmul.f32 %v3110, 0.2
        %v3370 = vmul.f32 %v3112, 0.2
        %v3371 = vmul.f32 %v3114, 0.2
        %v3372 = vsel %vm3116, %v2798, %v3244
        %v3373 = vsel %vm3117, %v2800, %v3245
        %v3374 = vsel %vm3118, %v2802, %v3246
        %v3375 = vsel %vm3119, %v2804, %v3247
        %v3376 = vsel %vm3120, %v2808, %v3248
        %v3377 = vsel %vm3121, %v2810, %v3249
        %v3378 = vsel %vm3122, %v2812, %v3250
        %v3379 = vsel %vm3123, %v2814, %v3251
        %v3380 = vsel %vm3124, %v2818, %v3252
        %v3381 = vsel %vm3125, %v2820, %v3253
        %v3382 = vsel %vm3126, %v2822, %v3254
        %v3383 = vsel %vm3127, %v2824, %v3255
        %v3384 = vsel %vm3128, %v2828, %v3256
        %v3385 = vsel %vm3129, %v2830, %v3257
        %v3386 = vsel %vm3130, %v2832, %v3258
        %v3387 = vsel %vm3131, %v2834, %v3259
        %v3388 = vsel %vm3132, %v2838, %v3260
        %v3389 = vsel %vm3133, %v2840, %v3261
        %v3390 = vsel %vm3134, %v2842, %v3262
        %v3391 = vsel %vm3135, %v2844, %v3263
        %v3392 = vsel %vm3136, %v2848, %v3264
        %v3393 = vsel %vm3137, %v2850, %v3265
        %v3394 = vsel %vm3138, %v2852, %v3266
        %v3395 = vsel %vm3139, %v2854, %v3267
        %v3396 = vsel %vm3140, %v2858, %v3268
        %v3397 = vsel %vm3141, %v2860, %v3269
        %v3398 = vsel %vm3142, %v2862, %v3270
        %v3399 = vsel %vm3143, %v2864, %v3271
        %v3400 = vsel %vm3144, %v2868, %v3272
        %v3401 = vsel %vm3145, %v2870, %v3273
        %v3402 = vsel %vm3146, %v2872, %v3274
        %v3403 = vsel %vm3147, %v2874, %v3275
        %v3404 = vsel %vm3148, %v2878, %v3276
        %v3405 = vsel %vm3149, %v2880, %v3277
        %v3406 = vsel %vm3150, %v2882, %v3278
        %v3407 = vsel %vm3151, %v2884, %v3279
        %v3408 = vsel %vm3152, %v2888, %v3280
        %v3409 = vsel %vm3153, %v2890, %v3281
        %v3410 = vsel %vm3154, %v2892, %v3282
        %v3411 = vsel %vm3155, %v2894, %v3283
        %v3412 = vsel %vm3156, %v2898, %v3284
        %v3413 = vsel %vm3157, %v2900, %v3285
        %v3414 = vsel %vm3158, %v2902, %v3286
        %v3415 = vsel %vm3159, %v2904, %v3287
        %v3416 = vsel %vm3160, %v2908, %v3288
        %v3417 = vsel %vm3161, %v2910, %v3289
        %v3418 = vsel %vm3162, %v2912, %v3290
        %v3419 = vsel %vm3163, %v2914, %v3291
        %v3420 = vsel %vm3164, %v2918, %v3292
        %v3421 = vsel %vm3165, %v2920, %v3293
        %v3422 = vsel %vm3166, %v2922, %v3294
        %v3423 = vsel %vm3167, %v2924, %v3295
        %v3424 = vsel %vm3168, %v2928, %v3296
        %v3425 = vsel %vm3169, %v2930, %v3297
        %v3426 = vsel %vm3170, %v2932, %v3298
        %v3427 = vsel %vm3171, %v2934, %v3299
        %v3428 = vsel %vm3172, %v2938, %v3300
        %v3429 = vsel %vm3173, %v2940, %v3301
        %v3430 = vsel %vm3174, %v2942, %v3302
        %v3431 = vsel %vm3175, %v2944, %v3303
        %v3432 = vsel %vm3176, %v2948, %v3304
        %v3433 = vsel %vm3177, %v2950, %v3305
        %v3434 = vsel %vm3178, %v2952, %v3306
        %v3435 = vsel %vm3179, %v2954, %v3307
        %v3436 = vsel %vm3180, %v2958, %v3308
        %v3437 = vsel %vm3181, %v2960, %v3309
        %v3438 = vsel %vm3182, %v2962, %v3310
        %v3439 = vsel %vm3183, %v2964, %v3311
        %v3440 = vsel %vm3184, %v2968, %v3312
        %v3441 = vsel %vm3185, %v2970, %v3313
        %v3442 = vsel %vm3186, %v2972, %v3314
        %v3443 = vsel %vm3187, %v2974, %v3315
        %v3444 = vsel %vm3188, %v2978, %v3316
        %v3445 = vsel %vm3189, %v2980, %v3317
        %v3446 = vsel %vm3190, %v2982, %v3318
        %v3447 = vsel %vm3191, %v2984, %v3319
        %v3448 = vsel %vm3192, %v2988, %v3320
        %v3449 = vsel %vm3193, %v2990, %v3321
        %v3450 = vsel %vm3194, %v2992, %v3322
        %v3451 = vsel %vm3195, %v2994, %v3323
        %v3452 = vsel %vm3196, %v2998, %v3324
        %v3453 = vsel %vm3197, %v3000, %v3325
        %v3454 = vsel %vm3198, %v3002, %v3326
        %v3455 = vsel %vm3199, %v3004, %v3327
        %v3456 = vsel %vm3200, %v3008, %v3328
        %v3457 = vsel %vm3201, %v3010, %v3329
        %v3458 = vsel %vm3202, %v3012, %v3330
        %v3459 = vsel %vm3203, %v3014, %v3331
        %v3460 = vsel %vm3204, %v3018, %v3332
        %v3461 = vsel %vm3205, %v3020, %v3333
        %v3462 = vsel %vm3206, %v3022, %v3334
        %v3463 = vsel %vm3207, %v3024, %v3335
        %v3464 = vsel %vm3208, %v3028, %v3336
        %v3465 = vsel %vm3209, %v3030, %v3337
        %v3466 = vsel %vm3210, %v3032, %v3338
        %v3467 = vsel %vm3211, %v3034, %v3339
        %v3468 = vsel %vm3212, %v3038, %v3340
        %v3469 = vsel %vm3213, %v3040, %v3341
        %v3470 = vsel %vm3214, %v3042, %v3342
        %v3471 = vsel %vm3215, %v3044, %v3343
        %v3472 = vsel %vm3216, %v3048, %v3344
        %v3473 = vsel %vm3217, %v3050, %v3345
        %v3474 = vsel %vm3218, %v3052, %v3346
        %v3475 = vsel %vm3219, %v3054, %v3347
        %v3476 = vsel %vm3220, %v3058, %v3348
        %v3477 = vsel %vm3221, %v3060, %v3349
        %v3478 = vsel %vm3222, %v3062, %v3350
        %v3479 = vsel %vm3223, %v3064, %v3351
        %v3480 = vsel %vm3224, %v3068, %v3352
        %v3481 = vsel %vm3225, %v3070, %v3353
        %v3482 = vsel %vm3226, %v3072, %v3354
        %v3483 = vsel %vm3227, %v3074, %v3355
        %v3484 = vsel %vm3228, %v3078, %v3356
        %v3485 = vsel %vm3229, %v3080, %v3357
        %v3486 = vsel %vm3230, %v3082, %v3358
        %v3487 = vsel %vm3231, %v3084, %v3359
        %v3488 = vsel %vm3232, %v3088, %v3360
        %v3489 = vsel %vm3233, %v3090, %v3361
        %v3490 = vsel %vm3234, %v3092, %v3362
        %v3491 = vsel %vm3235, %v3094, %v3363
        %v3492 = vsel %vm3236, %v3098, %v3364
        %v3493 = vsel %vm3237, %v3100, %v3365
        %v3494 = vsel %vm3238, %v3102, %v3366
        %v3495 = vsel %vm3239, %v3104, %v3367
        %v3496 = vsel %vm3240, %v3108, %v3368
        %v3497 = vsel %vm3241, %v3110, %v3369
        %v3498 = vsel %vm3242, %v3112, %v3370
        %v3499 = vsel %vm3243, %v3114, %v3371
        %v3500 = vpack.c.bf16 %v3374, %v3372
        %v3501 = vpack.c.bf16 %v3375, %v3373
        %v3502 = vpack.c.bf16 %v3378, %v3376
        %v3503 = vpack.c.bf16 %v3379, %v3377
        %v3504 = vpack.c.bf16 %v3382, %v3380
        %v3505 = vpack.c.bf16 %v3383, %v3381
        %v3506 = vpack.c.bf16 %v3386, %v3384
        %v3507 = vpack.c.bf16 %v3387, %v3385
        %v3508 = vpack.c.bf16 %v3390, %v3388
        %v3509 = vpack.c.bf16 %v3391, %v3389
        %v3510 = vpack.c.bf16 %v3394, %v3392
        %v3511 = vpack.c.bf16 %v3395, %v3393
        %v3512 = vpack.c.bf16 %v3398, %v3396
        %v3513 = vpack.c.bf16 %v3399, %v3397
        %v3514 = vpack.c.bf16 %v3402, %v3400
        %v3515 = vpack.c.bf16 %v3403, %v3401
        %v3516 = vpack.c.bf16 %v3406, %v3404
        %v3517 = vpack.c.bf16 %v3407, %v3405
        %v3518 = vpack.c.bf16 %v3410, %v3408
        %v3519 = vpack.c.bf16 %v3411, %v3409
        %v3520 = vpack.c.bf16 %v3414, %v3412
        %v3521 = vpack.c.bf16 %v3415, %v3413
        %v3522 = vpack.c.bf16 %v3418, %v3416
        %v3523 = vpack.c.bf16 %v3419, %v3417
        %v3524 = vpack.c.bf16 %v3422, %v3420
        %v3525 = vpack.c.bf16 %v3423, %v3421
        %v3526 = vpack.c.bf16 %v3426, %v3424
        %v3527 = vpack.c.bf16 %v3427, %v3425
        %v3528 = vpack.c.bf16 %v3430, %v3428
        %v3529 = vpack.c.bf16 %v3431, %v3429
        %v3530 = vpack.c.bf16 %v3434, %v3432
        %v3531 = vpack.c.bf16 %v3435, %v3433
        %v3532 = vpack.c.bf16 %v3438, %v3436
        %v3533 = vpack.c.bf16 %v3439, %v3437
        %v3534 = vpack.c.bf16 %v3442, %v3440
        %v3535 = vpack.c.bf16 %v3443, %v3441
        %v3536 = vpack.c.bf16 %v3446, %v3444
        %v3537 = vpack.c.bf16 %v3447, %v3445
        %v3538 = vpack.c.bf16 %v3450, %v3448
        %v3539 = vpack.c.bf16 %v3451, %v3449
        %v3540 = vpack.c.bf16 %v3454, %v3452
        %v3541 = vpack.c.bf16 %v3455, %v3453
        %v3542 = vpack.c.bf16 %v3458, %v3456
        %v3543 = vpack.c.bf16 %v3459, %v3457
        %v3544 = vpack.c.bf16 %v3462, %v3460
        %v3545 = vpack.c.bf16 %v3463, %v3461
        %v3546 = vpack.c.bf16 %v3466, %v3464
        %v3547 = vpack.c.bf16 %v3467, %v3465
        %v3548 = vpack.c.bf16 %v3470, %v3468
        %v3549 = vpack.c.bf16 %v3471, %v3469
        %v3550 = vpack.c.bf16 %v3474, %v3472
        %v3551 = vpack.c.bf16 %v3475, %v3473
        %v3552 = vpack.c.bf16 %v3478, %v3476
        %v3553 = vpack.c.bf16 %v3479, %v3477
        %v3554 = vpack.c.bf16 %v3482, %v3480
        %v3555 = vpack.c.bf16 %v3483, %v3481
        %v3556 = vpack.c.bf16 %v3486, %v3484
        %v3557 = vpack.c.bf16 %v3487, %v3485
        %v3558 = vpack.c.bf16 %v3490, %v3488
        %v3559 = vpack.c.bf16 %v3491, %v3489
        %v3560 = vpack.c.bf16 %v3494, %v3492
        %v3561 = vpack.c.bf16 %v3495, %v3493
        %v3562 = vpack.c.bf16 %v3498, %v3496
        %v3563 = vpack.c.bf16 %v3499, %v3497
        %v3564 = vld [vmem:[#allocation6] sm:$0xff]
        %v3565 = vld [vmem:[#allocation6 + $0x8] sm:$0xff]
        %v3566 = vld [vmem:[#allocation6 + $0x10] sm:$0xff]
        %v3567 = vld [vmem:[#allocation6 + $0x18] sm:$0xff]
        %v3568 = vld [vmem:[#allocation6 + $0x20] sm:$0xff]
        %v3569 = vld [vmem:[#allocation6 + $0x28] sm:$0xff]
        %v3570 = vld [vmem:[#allocation6 + $0x30] sm:$0xff]
        %v3571 = vld [vmem:[#allocation6 + $0x38] sm:$0xff]
        %v3572 = vld [vmem:[#allocation6 + $0x40] sm:$0xff]
        %v3573 = vld [vmem:[#allocation6 + $0x48] sm:$0xff]
        %v3574 = vld [vmem:[#allocation6 + $0x50] sm:$0xff]
        %v3575 = vld [vmem:[#allocation6 + $0x58] sm:$0xff]
        %v3576 = vld [vmem:[#allocation6 + $0x60] sm:$0xff]
        %v3577 = vld [vmem:[#allocation6 + $0x68] sm:$0xff]
        %v3578 = vld [vmem:[#allocation6 + $0x70] sm:$0xff]
        %v3579 = vld [vmem:[#allocation6 + $0x78] sm:$0xff]
        %v3580 = vld [vmem:[#allocation6 + $0x80] sm:$0xff]
        %v3581 = vld [vmem:[#allocation6 + $0x88] sm:$0xff]
        %v3582 = vld [vmem:[#allocation6 + $0x90] sm:$0xff]
        %v3583 = vld [vmem:[#allocation6 + $0x98] sm:$0xff]
        %v3584 = vld [vmem:[#allocation6 + $0xa0] sm:$0xff]
        %v3585 = vld [vmem:[#allocation6 + $0xa8] sm:$0xff]
        %v3586 = vld [vmem:[#allocation6 + $0xb0] sm:$0xff]
        %v3587 = vld [vmem:[#allocation6 + $0xb8] sm:$0xff]
        %v3588 = vld [vmem:[#allocation6 + $0xc0] sm:$0xff]
        %v3589 = vld [vmem:[#allocation6 + $0xc8] sm:$0xff]
        %v3590 = vld [vmem:[#allocation6 + $0xd0] sm:$0xff]
        %v3591 = vld [vmem:[#allocation6 + $0xd8] sm:$0xff]
        %v3592 = vld [vmem:[#allocation6 + $0xe0] sm:$0xff]
        %v3593 = vld [vmem:[#allocation6 + $0xe8] sm:$0xff]
        %v3594 = vld [vmem:[#allocation6 + $0xf0] sm:$0xff]
        %v3595 = vld [vmem:[#allocation6 + $0xf8] sm:$0xff]
        %v3596 = vld [vmem:[#allocation6 + $0x100] sm:$0xff]
        %v3597 = vld [vmem:[#allocation6 + $0x108] sm:$0xff]
        %v3598 = vld [vmem:[#allocation6 + $0x110] sm:$0xff]
        %v3599 = vld [vmem:[#allocation6 + $0x118] sm:$0xff]
        %v3600 = vld [vmem:[#allocation6 + $0x120] sm:$0xff]
        %v3601 = vld [vmem:[#allocation6 + $0x128] sm:$0xff]
        %v3602 = vld [vmem:[#allocation6 + $0x130] sm:$0xff]
        %v3603 = vld [vmem:[#allocation6 + $0x138] sm:$0xff]
        %v3604 = vld [vmem:[#allocation6 + $0x140] sm:$0xff]
        %v3605 = vld [vmem:[#allocation6 + $0x148] sm:$0xff]
        %v3606 = vld [vmem:[#allocation6 + $0x150] sm:$0xff]
        %v3607 = vld [vmem:[#allocation6 + $0x158] sm:$0xff]
        %v3608 = vld [vmem:[#allocation6 + $0x160] sm:$0xff]
        %v3609 = vld [vmem:[#allocation6 + $0x168] sm:$0xff]
        %v3610 = vld [vmem:[#allocation6 + $0x170] sm:$0xff]
        %v3611 = vld [vmem:[#allocation6 + $0x178] sm:$0xff]
        %v3612 = vld [vmem:[#allocation6 + $0x180] sm:$0xff]
        %v3613 = vld [vmem:[#allocation6 + $0x188] sm:$0xff]
        %v3614 = vld [vmem:[#allocation6 + $0x190] sm:$0xff]
        %v3615 = vld [vmem:[#allocation6 + $0x198] sm:$0xff]
        %v3616 = vld [vmem:[#allocation6 + $0x1a0] sm:$0xff]
        %v3617 = vld [vmem:[#allocation6 + $0x1a8] sm:$0xff]
        %v3618 = vld [vmem:[#allocation6 + $0x1b0] sm:$0xff]
        %v3619 = vld [vmem:[#allocation6 + $0x1b8] sm:$0xff]
        %v3620 = vld [vmem:[#allocation6 + $0x1c0] sm:$0xff]
        %v3621 = vld [vmem:[#allocation6 + $0x1c8] sm:$0xff]
        %v3622 = vld [vmem:[#allocation6 + $0x1d0] sm:$0xff]
        %v3623 = vld [vmem:[#allocation6 + $0x1d8] sm:$0xff]
        %v3624 = vld [vmem:[#allocation6 + $0x1e0] sm:$0xff]
        %v3625 = vld [vmem:[#allocation6 + $0x1e8] sm:$0xff]
        %v3626 = vld [vmem:[#allocation6 + $0x1f0] sm:$0xff]
        %v3627 = vld [vmem:[#allocation6 + $0x1f8] sm:$0xff]
        %v3628 = vld [vmem:[#allocation6 + $0x200] sm:$0xff]
        %v3629 = vld [vmem:[#allocation6 + $0x208] sm:$0xff]
        %v3630 = vld [vmem:[#allocation6 + $0x210] sm:$0xff]
        %v3631 = vld [vmem:[#allocation6 + $0x218] sm:$0xff]
        %v3632 = vld [vmem:[#allocation6 + $0x220] sm:$0xff]
        %v3633 = vld [vmem:[#allocation6 + $0x228] sm:$0xff]
        %v3634 = vld [vmem:[#allocation6 + $0x230] sm:$0xff]
        %v3635 = vld [vmem:[#allocation6 + $0x238] sm:$0xff]
        %v3636 = vld [vmem:[#allocation6 + $0x240] sm:$0xff]
        %v3637 = vld [vmem:[#allocation6 + $0x248] sm:$0xff]
        %v3638 = vld [vmem:[#allocation6 + $0x250] sm:$0xff]
        %v3639 = vld [vmem:[#allocation6 + $0x258] sm:$0xff]
        %v3640 = vld [vmem:[#allocation6 + $0x260] sm:$0xff]
        %v3641 = vld [vmem:[#allocation6 + $0x268] sm:$0xff]
        %v3642 = vld [vmem:[#allocation6 + $0x270] sm:$0xff]
        %v3643 = vld [vmem:[#allocation6 + $0x278] sm:$0xff]
        %v3644 = vld [vmem:[#allocation6 + $0x280] sm:$0xff]
        %v3645 = vld [vmem:[#allocation6 + $0x288] sm:$0xff]
        %v3646 = vld [vmem:[#allocation6 + $0x290] sm:$0xff]
        %v3647 = vld [vmem:[#allocation6 + $0x298] sm:$0xff]
        %v3648 = vld [vmem:[#allocation6 + $0x2a0] sm:$0xff]
        %v3649 = vld [vmem:[#allocation6 + $0x2a8] sm:$0xff]
        %v3650 = vld [vmem:[#allocation6 + $0x2b0] sm:$0xff]
        %v3651 = vld [vmem:[#allocation6 + $0x2b8] sm:$0xff]
        %v3652 = vld [vmem:[#allocation6 + $0x2c0] sm:$0xff]
        %v3653 = vld [vmem:[#allocation6 + $0x2c8] sm:$0xff]
        %v3654 = vld [vmem:[#allocation6 + $0x2d0] sm:$0xff]
        %v3655 = vld [vmem:[#allocation6 + $0x2d8] sm:$0xff]
        %v3656 = vld [vmem:[#allocation6 + $0x2e0] sm:$0xff]
        %v3657 = vld [vmem:[#allocation6 + $0x2e8] sm:$0xff]
        %v3658 = vld [vmem:[#allocation6 + $0x2f0] sm:$0xff]
        %v3659 = vld [vmem:[#allocation6 + $0x2f8] sm:$0xff]
        %v3660 = vld [vmem:[#allocation6 + $0x300] sm:$0xff]
        %v3661 = vld [vmem:[#allocation6 + $0x308] sm:$0xff]
        %v3662 = vld [vmem:[#allocation6 + $0x310] sm:$0xff]
        %v3663 = vld [vmem:[#allocation6 + $0x318] sm:$0xff]
        %v3664 = vld [vmem:[#allocation6 + $0x320] sm:$0xff]
        %v3665 = vld [vmem:[#allocation6 + $0x328] sm:$0xff]
        %v3666 = vld [vmem:[#allocation6 + $0x330] sm:$0xff]
        %v3667 = vld [vmem:[#allocation6 + $0x338] sm:$0xff]
        %v3668 = vld [vmem:[#allocation6 + $0x340] sm:$0xff]
        %v3669 = vld [vmem:[#allocation6 + $0x348] sm:$0xff]
        %v3670 = vld [vmem:[#allocation6 + $0x350] sm:$0xff]
        %v3671 = vld [vmem:[#allocation6 + $0x358] sm:$0xff]
        %v3672 = vld [vmem:[#allocation6 + $0x360] sm:$0xff]
        %v3673 = vld [vmem:[#allocation6 + $0x368] sm:$0xff]
        %v3674 = vld [vmem:[#allocation6 + $0x370] sm:$0xff]
        %v3675 = vld [vmem:[#allocation6 + $0x378] sm:$0xff]
        %v3676 = vld [vmem:[#allocation6 + $0x380] sm:$0xff]
        %v3677 = vld [vmem:[#allocation6 + $0x388] sm:$0xff]
        %v3678 = vld [vmem:[#allocation6 + $0x390] sm:$0xff]
        %v3679 = vld [vmem:[#allocation6 + $0x398] sm:$0xff]
        %v3680 = vld [vmem:[#allocation6 + $0x3a0] sm:$0xff]
        %v3681 = vld [vmem:[#allocation6 + $0x3a8] sm:$0xff]
        %v3682 = vld [vmem:[#allocation6 + $0x3b0] sm:$0xff]
        %v3683 = vld [vmem:[#allocation6 + $0x3b8] sm:$0xff]
        %v3684 = vld [vmem:[#allocation6 + $0x3c0] sm:$0xff]
        %v3685 = vld [vmem:[#allocation6 + $0x3c8] sm:$0xff]
        %v3686 = vld [vmem:[#allocation6 + $0x3d0] sm:$0xff]
        %v3687 = vld [vmem:[#allocation6 + $0x3d8] sm:$0xff]
        %v3688 = vld [vmem:[#allocation6 + $0x3e0] sm:$0xff]
        %v3689 = vld [vmem:[#allocation6 + $0x3e8] sm:$0xff]
        %v3690 = vld [vmem:[#allocation6 + $0x3f0] sm:$0xff]
        %v3691 = vld [vmem:[#allocation6 + $0x3f8] sm:$0xff]
        %v3820 = vunpack.c.l.b16 %v3564
        %v3821 = vunpack.c.h.b16 %v3564
        %v3822 = vunpack.c.l.b16 %v3565
        %v3823 = vunpack.c.h.b16 %v3565
        %v3824 = vunpack.c.l.b16 %v3566
        %v3825 = vunpack.c.h.b16 %v3566
        %v3826 = vunpack.c.l.b16 %v3567
        %v3827 = vunpack.c.h.b16 %v3567
        %v3828 = vunpack.c.l.b16 %v3568
        %v3829 = vunpack.c.h.b16 %v3568
        %v3830 = vunpack.c.l.b16 %v3569
        %v3831 = vunpack.c.h.b16 %v3569
        %v3832 = vunpack.c.l.b16 %v3570
        %v3833 = vunpack.c.h.b16 %v3570
        %v3834 = vunpack.c.l.b16 %v3571
        %v3835 = vunpack.c.h.b16 %v3571
        %v3836 = vunpack.c.l.b16 %v3572
        %v3837 = vunpack.c.h.b16 %v3572
        %v3838 = vunpack.c.l.b16 %v3573
        %v3839 = vunpack.c.h.b16 %v3573
        %v3840 = vunpack.c.l.b16 %v3574
        %v3841 = vunpack.c.h.b16 %v3574
        %v3842 = vunpack.c.l.b16 %v3575
        %v3843 = vunpack.c.h.b16 %v3575
        %v3844 = vunpack.c.l.b16 %v3576
        %v3845 = vunpack.c.h.b16 %v3576
        %v3846 = vunpack.c.l.b16 %v3577
        %v3847 = vunpack.c.h.b16 %v3577
        %v3848 = vunpack.c.l.b16 %v3578
        %v3849 = vunpack.c.h.b16 %v3578
        %v3850 = vunpack.c.l.b16 %v3579
        %v3851 = vunpack.c.h.b16 %v3579
        %v3852 = vunpack.c.l.b16 %v3580
        %v3853 = vunpack.c.h.b16 %v3580
        %v3854 = vunpack.c.l.b16 %v3581
        %v3855 = vunpack.c.h.b16 %v3581
        %v3856 = vunpack.c.l.b16 %v3582
        %v3857 = vunpack.c.h.b16 %v3582
        %v3858 = vunpack.c.l.b16 %v3583
        %v3859 = vunpack.c.h.b16 %v3583
        %v3860 = vunpack.c.l.b16 %v3584
        %v3861 = vunpack.c.h.b16 %v3584
        %v3862 = vunpack.c.l.b16 %v3585
        %v3863 = vunpack.c.h.b16 %v3585
        %v3864 = vunpack.c.l.b16 %v3586
        %v3865 = vunpack.c.h.b16 %v3586
        %v3866 = vunpack.c.l.b16 %v3587
        %v3867 = vunpack.c.h.b16 %v3587
        %v3868 = vunpack.c.l.b16 %v3588
        %v3869 = vunpack.c.h.b16 %v3588
        %v3870 = vunpack.c.l.b16 %v3589
        %v3871 = vunpack.c.h.b16 %v3589
        %v3872 = vunpack.c.l.b16 %v3590
        %v3873 = vunpack.c.h.b16 %v3590
        %v3874 = vunpack.c.l.b16 %v3591
        %v3875 = vunpack.c.h.b16 %v3591
        %v3876 = vunpack.c.l.b16 %v3592
        %v3877 = vunpack.c.h.b16 %v3592
        %v3878 = vunpack.c.l.b16 %v3593
        %v3879 = vunpack.c.h.b16 %v3593
        %v3880 = vunpack.c.l.b16 %v3594
        %v3881 = vunpack.c.h.b16 %v3594
        %v3882 = vunpack.c.l.b16 %v3595
        %v3883 = vunpack.c.h.b16 %v3595
        %v3884 = vunpack.c.l.b16 %v3596
        %v3885 = vunpack.c.h.b16 %v3596
        %v3886 = vunpack.c.l.b16 %v3597
        %v3887 = vunpack.c.h.b16 %v3597
        %v3888 = vunpack.c.l.b16 %v3598
        %v3889 = vunpack.c.h.b16 %v3598
        %v3890 = vunpack.c.l.b16 %v3599
        %v3891 = vunpack.c.h.b16 %v3599
        %v3892 = vunpack.c.l.b16 %v3600
        %v3893 = vunpack.c.h.b16 %v3600
        %v3894 = vunpack.c.l.b16 %v3601
        %v3895 = vunpack.c.h.b16 %v3601
        %v3896 = vunpack.c.l.b16 %v3602
        %v3897 = vunpack.c.h.b16 %v3602
        %v3898 = vunpack.c.l.b16 %v3603
        %v3899 = vunpack.c.h.b16 %v3603
        %v3900 = vunpack.c.l.b16 %v3604
        %v3901 = vunpack.c.h.b16 %v3604
        %v3902 = vunpack.c.l.b16 %v3605
        %v3903 = vunpack.c.h.b16 %v3605
        %v3904 = vunpack.c.l.b16 %v3606
        %v3905 = vunpack.c.h.b16 %v3606
        %v3906 = vunpack.c.l.b16 %v3607
        %v3907 = vunpack.c.h.b16 %v3607
        %v3908 = vunpack.c.l.b16 %v3608
        %v3909 = vunpack.c.h.b16 %v3608
        %v3910 = vunpack.c.l.b16 %v3609
        %v3911 = vunpack.c.h.b16 %v3609
        %v3912 = vunpack.c.l.b16 %v3610
        %v3913 = vunpack.c.h.b16 %v3610
        %v3914 = vunpack.c.l.b16 %v3611
        %v3915 = vunpack.c.h.b16 %v3611
        %v3916 = vunpack.c.l.b16 %v3612
        %v3917 = vunpack.c.h.b16 %v3612
        %v3918 = vunpack.c.l.b16 %v3613
        %v3919 = vunpack.c.h.b16 %v3613
        %v3920 = vunpack.c.l.b16 %v3614
        %v3921 = vunpack.c.h.b16 %v3614
        %v3922 = vunpack.c.l.b16 %v3615
        %v3923 = vunpack.c.h.b16 %v3615
        %v3924 = vunpack.c.l.b16 %v3616
        %v3925 = vunpack.c.h.b16 %v3616
        %v3926 = vunpack.c.l.b16 %v3617
        %v3927 = vunpack.c.h.b16 %v3617
        %v3928 = vunpack.c.l.b16 %v3618
        %v3929 = vunpack.c.h.b16 %v3618
        %v3930 = vunpack.c.l.b16 %v3619
        %v3931 = vunpack.c.h.b16 %v3619
        %v3932 = vunpack.c.l.b16 %v3620
        %v3933 = vunpack.c.h.b16 %v3620
        %v3934 = vunpack.c.l.b16 %v3621
        %v3935 = vunpack.c.h.b16 %v3621
        %v3936 = vunpack.c.l.b16 %v3622
        %v3937 = vunpack.c.h.b16 %v3622
        %v3938 = vunpack.c.l.b16 %v3623
        %v3939 = vunpack.c.h.b16 %v3623
        %v3940 = vunpack.c.l.b16 %v3624
        %v3941 = vunpack.c.h.b16 %v3624
        %v3942 = vunpack.c.l.b16 %v3625
        %v3943 = vunpack.c.h.b16 %v3625
        %v3944 = vunpack.c.l.b16 %v3626
        %v3945 = vunpack.c.h.b16 %v3626
        %v3946 = vunpack.c.l.b16 %v3627
        %v3947 = vunpack.c.h.b16 %v3627
        %v3948 = vunpack.c.l.b16 %v3628
        %v3949 = vunpack.c.h.b16 %v3628
        %v3950 = vunpack.c.l.b16 %v3629
        %v3951 = vunpack.c.h.b16 %v3629
        %v3952 = vunpack.c.l.b16 %v3630
        %v3953 = vunpack.c.h.b16 %v3630
        %v3954 = vunpack.c.l.b16 %v3631
        %v3955 = vunpack.c.h.b16 %v3631
        %v3956 = vunpack.c.l.b16 %v3632
        %v3957 = vunpack.c.h.b16 %v3632
        %v3958 = vunpack.c.l.b16 %v3633
        %v3959 = vunpack.c.h.b16 %v3633
        %v3960 = vunpack.c.l.b16 %v3634
        %v3961 = vunpack.c.h.b16 %v3634
        %v3962 = vunpack.c.l.b16 %v3635
        %v3963 = vunpack.c.h.b16 %v3635
        %v3964 = vunpack.c.l.b16 %v3636
        %v3965 = vunpack.c.h.b16 %v3636
        %v3966 = vunpack.c.l.b16 %v3637
        %v3967 = vunpack.c.h.b16 %v3637
        %v3968 = vunpack.c.l.b16 %v3638
        %v3969 = vunpack.c.h.b16 %v3638
        %v3970 = vunpack.c.l.b16 %v3639
        %v3971 = vunpack.c.h.b16 %v3639
        %v3972 = vunpack.c.l.b16 %v3640
        %v3973 = vunpack.c.h.b16 %v3640
        %v3974 = vunpack.c.l.b16 %v3641
        %v3975 = vunpack.c.h.b16 %v3641
        %v3976 = vunpack.c.l.b16 %v3642
        %v3977 = vunpack.c.h.b16 %v3642
        %v3978 = vunpack.c.l.b16 %v3643
        %v3979 = vunpack.c.h.b16 %v3643
        %v3980 = vunpack.c.l.b16 %v3644
        %v3981 = vunpack.c.h.b16 %v3644
        %v3982 = vunpack.c.l.b16 %v3645
        %v3983 = vunpack.c.h.b16 %v3645
        %v3984 = vunpack.c.l.b16 %v3646
        %v3985 = vunpack.c.h.b16 %v3646
        %v3986 = vunpack.c.l.b16 %v3647
        %v3987 = vunpack.c.h.b16 %v3647
        %v3988 = vunpack.c.l.b16 %v3648
        %v3989 = vunpack.c.h.b16 %v3648
        %v3990 = vunpack.c.l.b16 %v3649
        %v3991 = vunpack.c.h.b16 %v3649
        %v3992 = vunpack.c.l.b16 %v3650
        %v3993 = vunpack.c.h.b16 %v3650
        %v3994 = vunpack.c.l.b16 %v3651
        %v3995 = vunpack.c.h.b16 %v3651
        %v3996 = vunpack.c.l.b16 %v3652
        %v3997 = vunpack.c.h.b16 %v3652
        %v3998 = vunpack.c.l.b16 %v3653
        %v3999 = vunpack.c.h.b16 %v3653
        %v4000 = vunpack.c.l.b16 %v3654
        %v4001 = vunpack.c.h.b16 %v3654
        %v4002 = vunpack.c.l.b16 %v3655
        %v4003 = vunpack.c.h.b16 %v3655
        %v4004 = vunpack.c.l.b16 %v3656
        %v4005 = vunpack.c.h.b16 %v3656
        %v4006 = vunpack.c.l.b16 %v3657
        %v4007 = vunpack.c.h.b16 %v3657
        %v4008 = vunpack.c.l.b16 %v3658
        %v4009 = vunpack.c.h.b16 %v3658
        %v4010 = vunpack.c.l.b16 %v3659
        %v4011 = vunpack.c.h.b16 %v3659
        %v4012 = vunpack.c.l.b16 %v3660
        %v4013 = vunpack.c.h.b16 %v3660
        %v4014 = vunpack.c.l.b16 %v3661
        %v4015 = vunpack.c.h.b16 %v3661
        %v4016 = vunpack.c.l.b16 %v3662
        %v4017 = vunpack.c.h.b16 %v3662
        %v4018 = vunpack.c.l.b16 %v3663
        %v4019 = vunpack.c.h.b16 %v3663
        %v4020 = vunpack.c.l.b16 %v3664
        %v4021 = vunpack.c.h.b16 %v3664
        %v4022 = vunpack.c.l.b16 %v3665
        %v4023 = vunpack.c.h.b16 %v3665
        %v4024 = vunpack.c.l.b16 %v3666
        %v4025 = vunpack.c.h.b16 %v3666
        %v4026 = vunpack.c.l.b16 %v3667
        %v4027 = vunpack.c.h.b16 %v3667
        %v4028 = vunpack.c.l.b16 %v3668
        %v4029 = vunpack.c.h.b16 %v3668
        %v4030 = vunpack.c.l.b16 %v3669
        %v4031 = vunpack.c.h.b16 %v3669
        %v4032 = vunpack.c.l.b16 %v3670
        %v4033 = vunpack.c.h.b16 %v3670
        %v4034 = vunpack.c.l.b16 %v3671
        %v4035 = vunpack.c.h.b16 %v3671
        %v4036 = vunpack.c.l.b16 %v3672
        %v4037 = vunpack.c.h.b16 %v3672
        %v4038 = vunpack.c.l.b16 %v3673
        %v4039 = vunpack.c.h.b16 %v3673
        %v4040 = vunpack.c.l.b16 %v3674
        %v4041 = vunpack.c.h.b16 %v3674
        %v4042 = vunpack.c.l.b16 %v3675
        %v4043 = vunpack.c.h.b16 %v3675
        %v4044 = vunpack.c.l.b16 %v3676
        %v4045 = vunpack.c.h.b16 %v3676
        %v4046 = vunpack.c.l.b16 %v3677
        %v4047 = vunpack.c.h.b16 %v3677
        %v4048 = vunpack.c.l.b16 %v3678
        %v4049 = vunpack.c.h.b16 %v3678
        %v4050 = vunpack.c.l.b16 %v3679
        %v4051 = vunpack.c.h.b16 %v3679
        %v4052 = vunpack.c.l.b16 %v3680
        %v4053 = vunpack.c.h.b16 %v3680
        %v4054 = vunpack.c.l.b16 %v3681
        %v4055 = vunpack.c.h.b16 %v3681
        %v4056 = vunpack.c.l.b16 %v3682
        %v4057 = vunpack.c.h.b16 %v3682
        %v4058 = vunpack.c.l.b16 %v3683
        %v4059 = vunpack.c.h.b16 %v3683
        %v4060 = vunpack.c.l.b16 %v3684
        %v4061 = vunpack.c.h.b16 %v3684
        %v4062 = vunpack.c.l.b16 %v3685
        %v4063 = vunpack.c.h.b16 %v3685
        %v4064 = vunpack.c.l.b16 %v3686
        %v4065 = vunpack.c.h.b16 %v3686
        %v4066 = vunpack.c.l.b16 %v3687
        %v4067 = vunpack.c.h.b16 %v3687
        %v4068 = vunpack.c.l.b16 %v3688
        %v4069 = vunpack.c.h.b16 %v3688
        %v4070 = vunpack.c.l.b16 %v3689
        %v4071 = vunpack.c.h.b16 %v3689
        %v4072 = vunpack.c.l.b16 %v3690
        %v4073 = vunpack.c.h.b16 %v3690
        %v4074 = vunpack.c.l.b16 %v3691
        %v4075 = vunpack.c.h.b16 %v3691
        %v4076 = vpack.c.b16 %v3828, %v3820
        %v4077 = vpack.c.b16 %v3829, %v3821
        %v4078 = vpack.c.b16 %v3830, %v3822
        %v4079 = vpack.c.b16 %v3831, %v3823
        %v4080 = vpack.c.b16 %v3832, %v3824
        %v4081 = vpack.c.b16 %v3833, %v3825
        %v4082 = vpack.c.b16 %v3834, %v3826
        %v4083 = vpack.c.b16 %v3835, %v3827
        %v4084 = vpack.c.b16 %v3844, %v3836
        %v4085 = vpack.c.b16 %v3845, %v3837
        %v4086 = vpack.c.b16 %v3846, %v3838
        %v4087 = vpack.c.b16 %v3847, %v3839
        %v4088 = vpack.c.b16 %v3848, %v3840
        %v4089 = vpack.c.b16 %v3849, %v3841
        %v4090 = vpack.c.b16 %v3850, %v3842
        %v4091 = vpack.c.b16 %v3851, %v3843
        %v4092 = vpack.c.b16 %v3860, %v3852
        %v4093 = vpack.c.b16 %v3861, %v3853
        %v4094 = vpack.c.b16 %v3862, %v3854
        %v4095 = vpack.c.b16 %v3863, %v3855
        %v4096 = vpack.c.b16 %v3864, %v3856
        %v4097 = vpack.c.b16 %v3865, %v3857
        %v4098 = vpack.c.b16 %v3866, %v3858
        %v4099 = vpack.c.b16 %v3867, %v3859
        %v4100 = vpack.c.b16 %v3876, %v3868
        %v4101 = vpack.c.b16 %v3877, %v3869
        %v4102 = vpack.c.b16 %v3878, %v3870
        %v4103 = vpack.c.b16 %v3879, %v3871
        %v4104 = vpack.c.b16 %v3880, %v3872
        %v4105 = vpack.c.b16 %v3881, %v3873
        %v4106 = vpack.c.b16 %v3882, %v3874
        %v4107 = vpack.c.b16 %v3883, %v3875
        %v4108 = vpack.c.b16 %v3892, %v3884
        %v4109 = vpack.c.b16 %v3893, %v3885
        %v4110 = vpack.c.b16 %v3894, %v3886
        %v4111 = vpack.c.b16 %v3895, %v3887
        %v4112 = vpack.c.b16 %v3896, %v3888
        %v4113 = vpack.c.b16 %v3897, %v3889
        %v4114 = vpack.c.b16 %v3898, %v3890
        %v4115 = vpack.c.b16 %v3899, %v3891
        %v4116 = vpack.c.b16 %v3908, %v3900
        %v4117 = vpack.c.b16 %v3909, %v3901
        %v4118 = vpack.c.b16 %v3910, %v3902
        %v4119 = vpack.c.b16 %v3911, %v3903
        %v4120 = vpack.c.b16 %v3912, %v3904
        %v4121 = vpack.c.b16 %v3913, %v3905
        %v4122 = vpack.c.b16 %v3914, %v3906
        %v4123 = vpack.c.b16 %v3915, %v3907
        %v4124 = vpack.c.b16 %v3924, %v3916
        %v4125 = vpack.c.b16 %v3925, %v3917
        %v4126 = vpack.c.b16 %v3926, %v3918
        %v4127 = vpack.c.b16 %v3927, %v3919
        %v4128 = vpack.c.b16 %v3928, %v3920
        %v4129 = vpack.c.b16 %v3929, %v3921
        %v4130 = vpack.c.b16 %v3930, %v3922
        %v4131 = vpack.c.b16 %v3931, %v3923
        %v4132 = vpack.c.b16 %v3940, %v3932
        %v4133 = vpack.c.b16 %v3941, %v3933
        %v4134 = vpack.c.b16 %v3942, %v3934
        %v4135 = vpack.c.b16 %v3943, %v3935
        %v4136 = vpack.c.b16 %v3944, %v3936
        %v4137 = vpack.c.b16 %v3945, %v3937
        %v4138 = vpack.c.b16 %v3946, %v3938
        %v4139 = vpack.c.b16 %v3947, %v3939
        %v4140 = vpack.c.b16 %v3956, %v3948
        %v4141 = vpack.c.b16 %v3957, %v3949
        %v4142 = vpack.c.b16 %v3958, %v3950
        %v4143 = vpack.c.b16 %v3959, %v3951
        %v4144 = vpack.c.b16 %v3960, %v3952
        %v4145 = vpack.c.b16 %v3961, %v3953
        %v4146 = vpack.c.b16 %v3962, %v3954
        %v4147 = vpack.c.b16 %v3963, %v3955
        %v4148 = vpack.c.b16 %v3972, %v3964
        %v4149 = vpack.c.b16 %v3973, %v3965
        %v4150 = vpack.c.b16 %v3974, %v3966
        %v4151 = vpack.c.b16 %v3975, %v3967
        %v4152 = vpack.c.b16 %v3976, %v3968
        %v4153 = vpack.c.b16 %v3977, %v3969
        %v4154 = vpack.c.b16 %v3978, %v3970
        %v4155 = vpack.c.b16 %v3979, %v3971
        %v4156 = vpack.c.b16 %v3988, %v3980
        %v4157 = vpack.c.b16 %v3989, %v3981
        %v4158 = vpack.c.b16 %v3990, %v3982
        %v4159 = vpack.c.b16 %v3991, %v3983
        %v4160 = vpack.c.b16 %v3992, %v3984
        %v4161 = vpack.c.b16 %v3993, %v3985
        %v4162 = vpack.c.b16 %v3994, %v3986
        %v4163 = vpack.c.b16 %v3995, %v3987
        %v4164 = vpack.c.b16 %v4004, %v3996
        %v4165 = vpack.c.b16 %v4005, %v3997
        %v4166 = vpack.c.b16 %v4006, %v3998
        %v4167 = vpack.c.b16 %v4007, %v3999
        %v4168 = vpack.c.b16 %v4008, %v4000
        %v4169 = vpack.c.b16 %v4009, %v4001
        %v4170 = vpack.c.b16 %v4010, %v4002
        %v4171 = vpack.c.b16 %v4011, %v4003
        %v4172 = vpack.c.b16 %v4020, %v4012
        %v4173 = vpack.c.b16 %v4021, %v4013
        %v4174 = vpack.c.b16 %v4022, %v4014
        %v4175 = vpack.c.b16 %v4023, %v4015
        %v4176 = vpack.c.b16 %v4024, %v4016
        %v4177 = vpack.c.b16 %v4025, %v4017
        %v4178 = vpack.c.b16 %v4026, %v4018
        %v4179 = vpack.c.b16 %v4027, %v4019
        %v4180 = vpack.c.b16 %v4036, %v4028
        %v4181 = vpack.c.b16 %v4037, %v4029
        %v4182 = vpack.c.b16 %v4038, %v4030
        %v4183 = vpack.c.b16 %v4039, %v4031
        %v4184 = vpack.c.b16 %v4040, %v4032
        %v4185 = vpack.c.b16 %v4041, %v4033
        %v4186 = vpack.c.b16 %v4042, %v4034
        %v4187 = vpack.c.b16 %v4043, %v4035
        %v4188 = vpack.c.b16 %v4052, %v4044
        %v4189 = vpack.c.b16 %v4053, %v4045
        %v4190 = vpack.c.b16 %v4054, %v4046
        %v4191 = vpack.c.b16 %v4055, %v4047
        %v4192 = vpack.c.b16 %v4056, %v4048
        %v4193 = vpack.c.b16 %v4057, %v4049
        %v4194 = vpack.c.b16 %v4058, %v4050
        %v4195 = vpack.c.b16 %v4059, %v4051
        %v4196 = vpack.c.b16 %v4068, %v4060
        %v4197 = vpack.c.b16 %v4069, %v4061
        %v4198 = vpack.c.b16 %v4070, %v4062
        %v4199 = vpack.c.b16 %v4071, %v4063
        %v4200 = vpack.c.b16 %v4072, %v4064
        %v4201 = vpack.c.b16 %v4073, %v4065
        %v4202 = vpack.c.b16 %v4074, %v4066
        %v4203 = vpack.c.b16 %v4075, %v4067
        %4332 = vmatprep.subr.bf16.mxu0 %v4077
        %4333 = vmatpush1.bf16.msra.mxu0 %v4076
        %4334 = vmatprep.subr.bf16.mxu0 %v4085
        %4335 = vmatpush1.bf16.msra.mxu0 %v4084
        %4336 = vmatprep.subr.bf16.mxu0 %v4093
        %4337 = vmatpush1.bf16.msra.mxu0 %v4092
        %4338 = vmatprep.subr.bf16.mxu0 %v4101
        %4339 = vmatpush1.bf16.msra.mxu0 %v4100
        %4340 = vmatprep.subr.bf16.mxu0 %v4109
        %4341 = vmatpush1.bf16.msra.mxu0 %v4108
        %4342 = vmatprep.subr.bf16.mxu0 %v4117
        %4343 = vmatpush1.bf16.msra.mxu0 %v4116
        %4344 = vmatprep.subr.bf16.mxu0 %v4125
        %4345 = vmatpush1.bf16.msra.mxu0 %v4124
        %4346 = vmatprep.subr.bf16.mxu0 %v4133
        %4347 = vmatpush1.bf16.msra.mxu0 %v4132
        %4348 = vmatprep.subr.bf16.mxu0 %v4141
        %4349 = vmatpush1.bf16.msra.mxu0 %v4140
        %4350 = vmatprep.subr.bf16.mxu0 %v4149
        %4351 = vmatpush1.bf16.msra.mxu0 %v4148
        %4352 = vmatprep.subr.bf16.mxu0 %v4157
        %4353 = vmatpush1.bf16.msra.mxu0 %v4156
        %4354 = vmatprep.subr.bf16.mxu0 %v4165
        %4355 = vmatpush1.bf16.msra.mxu0 %v4164
        %4356 = vmatprep.subr.bf16.mxu0 %v4173
        %4357 = vmatpush1.bf16.msra.mxu0 %v4172
        %4358 = vmatprep.subr.bf16.mxu0 %v4181
        %4359 = vmatpush1.bf16.msra.mxu0 %v4180
        %4360 = vmatprep.subr.bf16.mxu0 %v4189
        %4361 = vmatpush1.bf16.msra.mxu0 %v4188
        %4362 = vmatprep.subr.bf16.mxu0 %v4197
        %4363 = vmatpush1.bf16.msra.mxu0 %v4196
        %4364 = vmatprep.mubr.bf16.mxu0 %v3501
        %4365 = vmatmul.mubr.bf16.gmra.mrb[0].mxu0 %v3500
        %v4366 = vpop.f32.mrb[0].mxu0
        %v4367 = vadd.f32 0.0, %v4366
        %v4368 = vpop.f32.mrb[0].mxu0
        %v4369 = vadd.f32 0.0, %v4368
        %v4370 = vpop.f32.mrb[0].mxu0
        %v4371 = vadd.f32 0.0, %v4370
        %v4372 = vpop.f32.mrb[0].mxu0
        %v4373 = vadd.f32 0.0, %v4372
        %4374 = vmatprep.mubr.bf16.mxu0 %v3503
        %4375 = vmatmul.mubr.bf16.gmra.mrb[0].mxu0 %v3502
        %v4376 = vpop.f32.mrb[0].mxu0
        %v4377 = vadd.f32 0.0, %v4376
        %v4378 = vpop.f32.mrb[0].mxu0
        %v4379 = vadd.f32 0.0, %v4378
        %v4380 = vpop.f32.mrb[0].mxu0
        %v4381 = vadd.f32 0.0, %v4380
        %v4382 = vpop.f32.mrb[0].mxu0
        %v4383 = vadd.f32 0.0, %v4382
        %4384 = vmatprep.mubr.bf16.mxu0 %v3505
        %4385 = vmatmul.mubr.bf16.gmra.mrb[0].mxu0 %v3504
        %v4386 = vpop.f32.mrb[0].mxu0
        %v4387 = vadd.f32 0.0, %v4386
        %v4388 = vpop.f32.mrb[0].mxu0
        %v4389 = vadd.f32 0.0, %v4388
        %v4390 = vpop.f32.mrb[0].mxu0
        %v4391 = vadd.f32 0.0, %v4390
        %v4392 = vpop.f32.mrb[0].mxu0
        %v4393 = vadd.f32 0.0, %v4392
        %4394 = vmatprep.mubr.bf16.mxu0 %v3507
        %4395 = vmatmul.mubr.bf16.gmra.mrb[0].mxu0 %v3506
        %v4396 = vpop.f32.mrb[0].mxu0
        %v4397 = vadd.f32 0.0, %v4396
        %v4398 = vpop.f32.mrb[0].mxu0
        %v4399 = vadd.f32 0.0, %v4398
        %v4400 = vpop.f32.mrb[0].mxu0
        %v4401 = vadd.f32 0.0, %v4400
        %v4402 = vpop.f32.mrb[0].mxu0
        %v4403 = vadd.f32 0.0, %v4402
        %4404 = vmatprep.mubr.bf16.mxu0 %v3509
        %4405 = vmatmul.mubr.bf16.gmra.mrb[0].mxu0 %v3508
        %v4406 = vpop.f32.mrb[0].mxu0
        %v4407 = vadd.f32 0.0, %v4406
        %v4408 = vpop.f32.mrb[0].mxu0
        %v4409 = vadd.f32 0.0, %v4408
        %v4410 = vpop.f32.mrb[0].mxu0
        %v4411 = vadd.f32 0.0, %v4410
        %v4412 = vpop.f32.mrb[0].mxu0
        %v4413 = vadd.f32 0.0, %v4412
        %4414 = vmatprep.mubr.bf16.mxu0 %v3511
        %4415 = vmatmul.mubr.bf16.gmra.mrb[0].mxu0 %v3510
        %v4416 = vpop.f32.mrb[0].mxu0
        %v4417 = vadd.f32 0.0, %v4416
        %v4418 = vpop.f32.mrb[0].mxu0
        %v4419 = vadd.f32 0.0, %v4418
        %v4420 = vpop.f32.mrb[0].mxu0
        %v4421 = vadd.f32 0.0, %v4420
        %v4422 = vpop.f32.mrb[0].mxu0
        %v4423 = vadd.f32 0.0, %v4422
        %4424 = vmatprep.mubr.bf16.mxu0 %v3513
        %4425 = vmatmul.mubr.bf16.gmra.mrb[0].mxu0 %v3512
        %v4426 = vpop.f32.mrb[0].mxu0
        %v4427 = vadd.f32 0.0, %v4426
        %v4428 = vpop.f32.mrb[0].mxu0
        %v4429 = vadd.f32 0.0, %v4428
        %v4430 = vpop.f32.mrb[0].mxu0
        %v4431 = vadd.f32 0.0, %v4430
        %v4432 = vpop.f32.mrb[0].mxu0
        %v4433 = vadd.f32 0.0, %v4432
        %4434 = vmatprep.mubr.bf16.mxu0 %v3515
        %4435 = vmatmul.mubr.bf16.gmra.mrb[0].mxu0 %v3514
        %v4436 = vpop.f32.mrb[0].mxu0
        %v4437 = vadd.f32 0.0, %v4436
        %v4438 = vpop.f32.mrb[0].mxu0
        %v4439 = vadd.f32 0.0, %v4438
        %v4440 = vpop.f32.mrb[0].mxu0
        %v4441 = vadd.f32 0.0, %v4440
        %v4442 = vpop.f32.mrb[0].mxu0
        %v4443 = vadd.f32 0.0, %v4442
        %4444 = vmatprep.mubr.bf16.mxu0 %v3517
        %4445 = vmatmul.mubr.bf16.gmra.mrb[0].mxu0 %v3516
        %v4446 = vpop.f32.mrb[0].mxu0
        %v4447 = vadd.f32 0.0, %v4446
        %v4448 = vpop.f32.mrb[0].mxu0
        %v4449 = vadd.f32 0.0, %v4448
        %v4450 = vpop.f32.mrb[0].mxu0
        %v4451 = vadd.f32 0.0, %v4450
        %v4452 = vpop.f32.mrb[0].mxu0
        %v4453 = vadd.f32 0.0, %v4452
        %4454 = vmatprep.mubr.bf16.mxu0 %v3519
        %4455 = vmatmul.mubr.bf16.gmra.mrb[0].mxu0 %v3518
        %v4456 = vpop.f32.mrb[0].mxu0
        %v4457 = vadd.f32 0.0, %v4456
        %v4458 = vpop.f32.mrb[0].mxu0
        %v4459 = vadd.f32 0.0, %v4458
        %v4460 = vpop.f32.mrb[0].mxu0
        %v4461 = vadd.f32 0.0, %v4460
        %v4462 = vpop.f32.mrb[0].mxu0
        %v4463 = vadd.f32 0.0, %v4462
        %4464 = vmatprep.mubr.bf16.mxu0 %v3521
        %4465 = vmatmul.mubr.bf16.gmra.mrb[0].mxu0 %v3520
        %v4466 = vpop.f32.mrb[0].mxu0
        %v4467 = vadd.f32 0.0, %v4466
        %v4468 = vpop.f32.mrb[0].mxu0
        %v4469 = vadd.f32 0.0, %v4468
        %v4470 = vpop.f32.mrb[0].mxu0
        %v4471 = vadd.f32 0.0, %v4470
        %v4472 = vpop.f32.mrb[0].mxu0
        %v4473 = vadd.f32 0.0, %v4472
        %4474 = vmatprep.mubr.bf16.mxu0 %v3523
        %4475 = vmatmul.mubr.bf16.gmra.mrb[0].mxu0 %v3522
        %v4476 = vpop.f32.mrb[0].mxu0
        %v4477 = vadd.f32 0.0, %v4476
        %v4478 = vpop.f32.mrb[0].mxu0
        %v4479 = vadd.f32 0.0, %v4478
        %v4480 = vpop.f32.mrb[0].mxu0
        %v4481 = vadd.f32 0.0, %v4480
        %v4482 = vpop.f32.mrb[0].mxu0
        %v4483 = vadd.f32 0.0, %v4482
        %4484 = vmatprep.mubr.bf16.mxu0 %v3525
        %4485 = vmatmul.mubr.bf16.gmra.mrb[0].mxu0 %v3524
        %v4486 = vpop.f32.mrb[0].mxu0
        %v4487 = vadd.f32 0.0, %v4486
        %v4488 = vpop.f32.mrb[0].mxu0
        %v4489 = vadd.f32 0.0, %v4488
        %v4490 = vpop.f32.mrb[0].mxu0
        %v4491 = vadd.f32 0.0, %v4490
        %v4492 = vpop.f32.mrb[0].mxu0
        %v4493 = vadd.f32 0.0, %v4492
        %4494 = vmatprep.mubr.bf16.mxu0 %v3527
        %4495 = vmatmul.mubr.bf16.gmra.mrb[0].mxu0 %v3526
        %v4496 = vpop.f32.mrb[0].mxu0
        %v4497 = vadd.f32 0.0, %v4496
        %v4498 = vpop.f32.mrb[0].mxu0
        %v4499 = vadd.f32 0.0, %v4498
        %v4500 = vpop.f32.mrb[0].mxu0
        %v4501 = vadd.f32 0.0, %v4500
        %v4502 = vpop.f32.mrb[0].mxu0
        %v4503 = vadd.f32 0.0, %v4502
        %4504 = vmatprep.mubr.bf16.mxu0 %v3529
        %4505 = vmatmul.mubr.bf16.gmra.mrb[0].mxu0 %v3528
        %v4506 = vpop.f32.mrb[0].mxu0
        %v4507 = vadd.f32 0.0, %v4506
        %v4508 = vpop.f32.mrb[0].mxu0
        %v4509 = vadd.f32 0.0, %v4508
        %v4510 = vpop.f32.mrb[0].mxu0
        %v4511 = vadd.f32 0.0, %v4510
        %v4512 = vpop.f32.mrb[0].mxu0
        %v4513 = vadd.f32 0.0, %v4512
        %4514 = vmatprep.mubr.bf16.mxu0 %v3531
        %4515 = vmatmul.mubr.bf16.gmra.mrb[0].mxu0 %v3530
        %v4516 = vpop.f32.mrb[0].mxu0
        %v4517 = vadd.f32 0.0, %v4516
        %v4518 = vpop.f32.mrb[0].mxu0
        %v4519 = vadd.f32 0.0, %v4518
        %v4520 = vpop.f32.mrb[0].mxu0
        %v4521 = vadd.f32 0.0, %v4520
        %v4522 = vpop.f32.mrb[0].mxu0
        %v4523 = vadd.f32 0.0, %v4522
        %4524 = vmatprep.mubr.bf16.mxu0 %v3533
        %4525 = vmatmul.mubr.bf16.gmra.mrb[0].mxu0 %v3532
        %v4526 = vpop.f32.mrb[0].mxu0
        %v4527 = vadd.f32 0.0, %v4526
        %v4528 = vpop.f32.mrb[0].mxu0
        %v4529 = vadd.f32 0.0, %v4528
        %v4530 = vpop.f32.mrb[0].mxu0
        %v4531 = vadd.f32 0.0, %v4530
        %v4532 = vpop.f32.mrb[0].mxu0
        %v4533 = vadd.f32 0.0, %v4532
        %4534 = vmatprep.mubr.bf16.mxu0 %v3535
        %4535 = vmatmul.mubr.bf16.gmra.mrb[0].mxu0 %v3534
        %v4536 = vpop.f32.mrb[0].mxu0
        %v4537 = vadd.f32 0.0, %v4536
        %v4538 = vpop.f32.mrb[0].mxu0
        %v4539 = vadd.f32 0.0, %v4538
        %v4540 = vpop.f32.mrb[0].mxu0
        %v4541 = vadd.f32 0.0, %v4540
        %v4542 = vpop.f32.mrb[0].mxu0
        %v4543 = vadd.f32 0.0, %v4542
        %4544 = vmatprep.mubr.bf16.mxu0 %v3537
        %4545 = vmatmul.mubr.bf16.gmra.mrb[0].mxu0 %v3536
        %v4546 = vpop.f32.mrb[0].mxu0
        %v4547 = vadd.f32 0.0, %v4546
        %v4548 = vpop.f32.mrb[0].mxu0
        %v4549 = vadd.f32 0.0, %v4548
        %v4550 = vpop.f32.mrb[0].mxu0
        %v4551 = vadd.f32 0.0, %v4550
        %v4552 = vpop.f32.mrb[0].mxu0
        %v4553 = vadd.f32 0.0, %v4552
        %4554 = vmatprep.mubr.bf16.mxu0 %v3539
        %4555 = vmatmul.mubr.bf16.gmra.mrb[0].mxu0 %v3538
        %v4556 = vpop.f32.mrb[0].mxu0
        %v4557 = vadd.f32 0.0, %v4556
        %v4558 = vpop.f32.mrb[0].mxu0
        %v4559 = vadd.f32 0.0, %v4558
        %v4560 = vpop.f32.mrb[0].mxu0
        %v4561 = vadd.f32 0.0, %v4560
        %v4562 = vpop.f32.mrb[0].mxu0
        %v4563 = vadd.f32 0.0, %v4562
        %4564 = vmatprep.mubr.bf16.mxu0 %v3541
        %4565 = vmatmul.mubr.bf16.gmra.mrb[0].mxu0 %v3540
        %v4566 = vpop.f32.mrb[0].mxu0
        %v4567 = vadd.f32 0.0, %v4566
        %v4568 = vpop.f32.mrb[0].mxu0
        %v4569 = vadd.f32 0.0, %v4568
        %v4570 = vpop.f32.mrb[0].mxu0
        %v4571 = vadd.f32 0.0, %v4570
        %v4572 = vpop.f32.mrb[0].mxu0
        %v4573 = vadd.f32 0.0, %v4572
        %4574 = vmatprep.mubr.bf16.mxu0 %v3543
        %4575 = vmatmul.mubr.bf16.gmra.mrb[0].mxu0 %v3542
        %v4576 = vpop.f32.mrb[0].mxu0
        %v4577 = vadd.f32 0.0, %v4576
        %v4578 = vpop.f32.mrb[0].mxu0
        %v4579 = vadd.f32 0.0, %v4578
        %v4580 = vpop.f32.mrb[0].mxu0
        %v4581 = vadd.f32 0.0, %v4580
        %v4582 = vpop.f32.mrb[0].mxu0
        %v4583 = vadd.f32 0.0, %v4582
        %4584 = vmatprep.mubr.bf16.mxu0 %v3545
        %4585 = vmatmul.mubr.bf16.gmra.mrb[0].mxu0 %v3544
        %v4586 = vpop.f32.mrb[0].mxu0
        %v4587 = vadd.f32 0.0, %v4586
        %v4588 = vpop.f32.mrb[0].mxu0
        %v4589 = vadd.f32 0.0, %v4588
        %v4590 = vpop.f32.mrb[0].mxu0
        %v4591 = vadd.f32 0.0, %v4590
        %v4592 = vpop.f32.mrb[0].mxu0
        %v4593 = vadd.f32 0.0, %v4592
        %4594 = vmatprep.mubr.bf16.mxu0 %v3547
        %4595 = vmatmul.mubr.bf16.gmra.mrb[0].mxu0 %v3546
        %v4596 = vpop.f32.mrb[0].mxu0
        %v4597 = vadd.f32 0.0, %v4596
        %v4598 = vpop.f32.mrb[0].mxu0
        %v4599 = vadd.f32 0.0, %v4598
        %v4600 = vpop.f32.mrb[0].mxu0
        %v4601 = vadd.f32 0.0, %v4600
        %v4602 = vpop.f32.mrb[0].mxu0
        %v4603 = vadd.f32 0.0, %v4602
        %4604 = vmatprep.mubr.bf16.mxu0 %v3549
        %4605 = vmatmul.mubr.bf16.gmra.mrb[0].mxu0 %v3548
        %v4606 = vpop.f32.mrb[0].mxu0
        %v4607 = vadd.f32 0.0, %v4606
        %v4608 = vpop.f32.mrb[0].mxu0
        %v4609 = vadd.f32 0.0, %v4608
        %v4610 = vpop.f32.mrb[0].mxu0
        %v4611 = vadd.f32 0.0, %v4610
        %v4612 = vpop.f32.mrb[0].mxu0
        %v4613 = vadd.f32 0.0, %v4612
        %4614 = vmatprep.mubr.bf16.mxu0 %v3551
        %4615 = vmatmul.mubr.bf16.gmra.mrb[0].mxu0 %v3550
        %v4616 = vpop.f32.mrb[0].mxu0
        %v4617 = vadd.f32 0.0, %v4616
        %v4618 = vpop.f32.mrb[0].mxu0
        %v4619 = vadd.f32 0.0, %v4618
        %v4620 = vpop.f32.mrb[0].mxu0
        %v4621 = vadd.f32 0.0, %v4620
        %v4622 = vpop.f32.mrb[0].mxu0
        %v4623 = vadd.f32 0.0, %v4622
        %4624 = vmatprep.mubr.bf16.mxu0 %v3553
        %4625 = vmatmul.mubr.bf16.gmra.mrb[0].mxu0 %v3552
        %v4626 = vpop.f32.mrb[0].mxu0
        %v4627 = vadd.f32 0.0, %v4626
        %v4628 = vpop.f32.mrb[0].mxu0
        %v4629 = vadd.f32 0.0, %v4628
        %v4630 = vpop.f32.mrb[0].mxu0
        %v4631 = vadd.f32 0.0, %v4630
        %v4632 = vpop.f32.mrb[0].mxu0
        %v4633 = vadd.f32 0.0, %v4632
        %4634 = vmatprep.mubr.bf16.mxu0 %v3555
        %4635 = vmatmul.mubr.bf16.gmra.mrb[0].mxu0 %v3554
        %v4636 = vpop.f32.mrb[0].mxu0
        %v4637 = vadd.f32 0.0, %v4636
        %v4638 = vpop.f32.mrb[0].mxu0
        %v4639 = vadd.f32 0.0, %v4638
        %v4640 = vpop.f32.mrb[0].mxu0
        %v4641 = vadd.f32 0.0, %v4640
        %v4642 = vpop.f32.mrb[0].mxu0
        %v4643 = vadd.f32 0.0, %v4642
        %4644 = vmatprep.mubr.bf16.mxu0 %v3557
        %4645 = vmatmul.mubr.bf16.gmra.mrb[0].mxu0 %v3556
        %v4646 = vpop.f32.mrb[0].mxu0
        %v4647 = vadd.f32 0.0, %v4646
        %v4648 = vpop.f32.mrb[0].mxu0
        %v4649 = vadd.f32 0.0, %v4648
        %v4650 = vpop.f32.mrb[0].mxu0
        %v4651 = vadd.f32 0.0, %v4650
        %v4652 = vpop.f32.mrb[0].mxu0
        %v4653 = vadd.f32 0.0, %v4652
        %4654 = vmatprep.mubr.bf16.mxu0 %v3559
        %4655 = vmatmul.mubr.bf16.gmra.mrb[0].mxu0 %v3558
        %v4656 = vpop.f32.mrb[0].mxu0
        %v4657 = vadd.f32 0.0, %v4656
        %v4658 = vpop.f32.mrb[0].mxu0
        %v4659 = vadd.f32 0.0, %v4658
        %v4660 = vpop.f32.mrb[0].mxu0
        %v4661 = vadd.f32 0.0, %v4660
        %v4662 = vpop.f32.mrb[0].mxu0
        %v4663 = vadd.f32 0.0, %v4662
        %4664 = vmatprep.mubr.bf16.mxu0 %v3561
        %4665 = vmatmul.mubr.bf16.gmra.mrb[0].mxu0 %v3560
        %v4666 = vpop.f32.mrb[0].mxu0
        %v4667 = vadd.f32 0.0, %v4666
        %v4668 = vpop.f32.mrb[0].mxu0
        %v4669 = vadd.f32 0.0, %v4668
        %v4670 = vpop.f32.mrb[0].mxu0
        %v4671 = vadd.f32 0.0, %v4670
        %v4672 = vpop.f32.mrb[0].mxu0
        %v4673 = vadd.f32 0.0, %v4672
        %4674 = vmatprep.mubr.bf16.mxu0 %v3563
        %4675 = vmatmul.mubr.bf16.gmra.mrb[0].mxu0 %v3562
        %v4676 = vpop.f32.mrb[0].mxu0
        %v4677 = vadd.f32 0.0, %v4676
        %v4678 = vpop.f32.mrb[0].mxu0
        %v4679 = vadd.f32 0.0, %v4678
        %v4680 = vpop.f32.mrb[0].mxu0
        %v4681 = vadd.f32 0.0, %v4680
        %v4682 = vpop.f32.mrb[0].mxu0
        %v4683 = vadd.f32 0.0, %v4682
        %4684 = vdwg.mxu0
        %4685 = vmatprep.subr.bf16.mxu0 %v4079
        %4686 = vmatpush1.bf16.msra.mxu0 %v4078
        %4687 = vmatprep.subr.bf16.mxu0 %v4087
        %4688 = vmatpush1.bf16.msra.mxu0 %v4086
        %4689 = vmatprep.subr.bf16.mxu0 %v4095
        %4690 = vmatpush1.bf16.msra.mxu0 %v4094
        %4691 = vmatprep.subr.bf16.mxu0 %v4103
        %4692 = vmatpush1.bf16.msra.mxu0 %v4102
        %4693 = vmatprep.subr.bf16.mxu0 %v4111
        %4694 = vmatpush1.bf16.msra.mxu0 %v4110
        %4695 = vmatprep.subr.bf16.mxu0 %v4119
        %4696 = vmatpush1.bf16.msra.mxu0 %v4118
        %4697 = vmatprep.subr.bf16.mxu0 %v4127
        %4698 = vmatpush1.bf16.msra.mxu0 %v4126
        %4699 = vmatprep.subr.bf16.mxu0 %v4135
        %4700 = vmatpush1.bf16.msra.mxu0 %v4134
        %4701 = vmatprep.subr.bf16.mxu0 %v4143
        %4702 = vmatpush1.bf16.msra.mxu0 %v4142
        %4703 = vmatprep.subr.bf16.mxu0 %v4151
        %4704 = vmatpush1.bf16.msra.mxu0 %v4150
        %4705 = vmatprep.subr.bf16.mxu0 %v4159
        %4706 = vmatpush1.bf16.msra.mxu0 %v4158
        %4707 = vmatprep.subr.bf16.mxu0 %v4167
        %4708 = vmatpush1.bf16.msra.mxu0 %v4166
        %4709 = vmatprep.subr.bf16.mxu0 %v4175
        %4710 = vmatpush1.bf16.msra.mxu0 %v4174
        %4711 = vmatprep.subr.bf16.mxu0 %v4183
        %4712 = vmatpush1.bf16.msra.mxu0 %v4182
        %4713 = vmatprep.subr.bf16.mxu0 %v4191
        %4714 = vmatpush1.bf16.msra.mxu0 %v4190
        %4715 = vmatprep.subr.bf16.mxu0 %v4199
        %4716 = vmatpush1.bf16.msra.mxu0 %v4198
        %4717 = vmatprep.mubr.bf16.mxu0 %v3501
        %4718 = vmatmul.mubr.bf16.gmra.mrb[0].mxu0 %v3500
        %v4719 = vpop.f32.mrb[0].mxu0
        %v4720 = vadd.f32 0.0, %v4719
        %v4721 = vpop.f32.mrb[0].mxu0
        %v4722 = vadd.f32 0.0, %v4721
        %v4723 = vpop.f32.mrb[0].mxu0
        %v4724 = vadd.f32 0.0, %v4723
        %v4725 = vpop.f32.mrb[0].mxu0
        %v4726 = vadd.f32 0.0, %v4725
        %4727 = vmatprep.mubr.bf16.mxu0 %v3503
        %4728 = vmatmul.mubr.bf16.gmra.mrb[0].mxu0 %v3502
        %v4729 = vpop.f32.mrb[0].mxu0
        %v4730 = vadd.f32 0.0, %v4729
        %v4731 = vpop.f32.mrb[0].mxu0
        %v4732 = vadd.f32 0.0, %v4731
        %v4733 = vpop.f32.mrb[0].mxu0
        %v4734 = vadd.f32 0.0, %v4733
        %v4735 = vpop.f32.mrb[0].mxu0
        %v4736 = vadd.f32 0.0, %v4735
        %4737 = vmatprep.mubr.bf16.mxu0 %v3505
        %4738 = vmatmul.mubr.bf16.gmra.mrb[0].mxu0 %v3504
        %v4739 = vpop.f32.mrb[0].mxu0
        %v4740 = vadd.f32 0.0, %v4739
        %v4741 = vpop.f32.mrb[0].mxu0
        %v4742 = vadd.f32 0.0, %v4741
        %v4743 = vpop.f32.mrb[0].mxu0
        %v4744 = vadd.f32 0.0, %v4743
        %v4745 = vpop.f32.mrb[0].mxu0
        %v4746 = vadd.f32 0.0, %v4745
        %4747 = vmatprep.mubr.bf16.mxu0 %v3507
        %4748 = vmatmul.mubr.bf16.gmra.mrb[0].mxu0 %v3506
        %v4749 = vpop.f32.mrb[0].mxu0
        %v4750 = vadd.f32 0.0, %v4749
        %v4751 = vpop.f32.mrb[0].mxu0
        %v4752 = vadd.f32 0.0, %v4751
        %v4753 = vpop.f32.mrb[0].mxu0
        %v4754 = vadd.f32 0.0, %v4753
        %v4755 = vpop.f32.mrb[0].mxu0
        %v4756 = vadd.f32 0.0, %v4755
        %4757 = vmatprep.mubr.bf16.mxu0 %v3509
        %4758 = vmatmul.mubr.bf16.gmra.mrb[0].mxu0 %v3508
        %v4759 = vpop.f32.mrb[0].mxu0
        %v4760 = vadd.f32 0.0, %v4759
        %v4761 = vpop.f32.mrb[0].mxu0
        %v4762 = vadd.f32 0.0, %v4761
        %v4763 = vpop.f32.mrb[0].mxu0
        %v4764 = vadd.f32 0.0, %v4763
        %v4765 = vpop.f32.mrb[0].mxu0
        %v4766 = vadd.f32 0.0, %v4765
        %4767 = vmatprep.mubr.bf16.mxu0 %v3511
        %4768 = vmatmul.mubr.bf16.gmra.mrb[0].mxu0 %v3510
        %v4769 = vpop.f32.mrb[0].mxu0
        %v4770 = vadd.f32 0.0, %v4769
        %v4771 = vpop.f32.mrb[0].mxu0
        %v4772 = vadd.f32 0.0, %v4771
        %v4773 = vpop.f32.mrb[0].mxu0
        %v4774 = vadd.f32 0.0, %v4773
        %v4775 = vpop.f32.mrb[0].mxu0
        %v4776 = vadd.f32 0.0, %v4775
        %4777 = vmatprep.mubr.bf16.mxu0 %v3513
        %4778 = vmatmul.mubr.bf16.gmra.mrb[0].mxu0 %v3512
        %v4779 = vpop.f32.mrb[0].mxu0
        %v4780 = vadd.f32 0.0, %v4779
        %v4781 = vpop.f32.mrb[0].mxu0
        %v4782 = vadd.f32 0.0, %v4781
        %v4783 = vpop.f32.mrb[0].mxu0
        %v4784 = vadd.f32 0.0, %v4783
        %v4785 = vpop.f32.mrb[0].mxu0
        %v4786 = vadd.f32 0.0, %v4785
        %4787 = vmatprep.mubr.bf16.mxu0 %v3515
        %4788 = vmatmul.mubr.bf16.gmra.mrb[0].mxu0 %v3514
        %v4789 = vpop.f32.mrb[0].mxu0
        %v4790 = vadd.f32 0.0, %v4789
        %v4791 = vpop.f32.mrb[0].mxu0
        %v4792 = vadd.f32 0.0, %v4791
        %v4793 = vpop.f32.mrb[0].mxu0
        %v4794 = vadd.f32 0.0, %v4793
        %v4795 = vpop.f32.mrb[0].mxu0
        %v4796 = vadd.f32 0.0, %v4795
        %4797 = vmatprep.mubr.bf16.mxu0 %v3517
        %4798 = vmatmul.mubr.bf16.gmra.mrb[0].mxu0 %v3516
        %v4799 = vpop.f32.mrb[0].mxu0
        %v4800 = vadd.f32 0.0, %v4799
        %v4801 = vpop.f32.mrb[0].mxu0
        %v4802 = vadd.f32 0.0, %v4801
        %v4803 = vpop.f32.mrb[0].mxu0
        %v4804 = vadd.f32 0.0, %v4803
        %v4805 = vpop.f32.mrb[0].mxu0
        %v4806 = vadd.f32 0.0, %v4805
        %4807 = vmatprep.mubr.bf16.mxu0 %v3519
        %4808 = vmatmul.mubr.bf16.gmra.mrb[0].mxu0 %v3518
        %v4809 = vpop.f32.mrb[0].mxu0
        %v4810 = vadd.f32 0.0, %v4809
        %v4811 = vpop.f32.mrb[0].mxu0
        %v4812 = vadd.f32 0.0, %v4811
        %v4813 = vpop.f32.mrb[0].mxu0
        %v4814 = vadd.f32 0.0, %v4813
        %v4815 = vpop.f32.mrb[0].mxu0
        %v4816 = vadd.f32 0.0, %v4815
        %4817 = vmatprep.mubr.bf16.mxu0 %v3521
        %4818 = vmatmul.mubr.bf16.gmra.mrb[0].mxu0 %v3520
        %v4819 = vpop.f32.mrb[0].mxu0
        %v4820 = vadd.f32 0.0, %v4819
        %v4821 = vpop.f32.mrb[0].mxu0
        %v4822 = vadd.f32 0.0, %v4821
        %v4823 = vpop.f32.mrb[0].mxu0
        %v4824 = vadd.f32 0.0, %v4823
        %v4825 = vpop.f32.mrb[0].mxu0
        %v4826 = vadd.f32 0.0, %v4825
        %4827 = vmatprep.mubr.bf16.mxu0 %v3523
        %4828 = vmatmul.mubr.bf16.gmra.mrb[0].mxu0 %v3522
        %v4829 = vpop.f32.mrb[0].mxu0
        %v4830 = vadd.f32 0.0, %v4829
        %v4831 = vpop.f32.mrb[0].mxu0
        %v4832 = vadd.f32 0.0, %v4831
        %v4833 = vpop.f32.mrb[0].mxu0
        %v4834 = vadd.f32 0.0, %v4833
        %v4835 = vpop.f32.mrb[0].mxu0
        %v4836 = vadd.f32 0.0, %v4835
        %4837 = vmatprep.mubr.bf16.mxu0 %v3525
        %4838 = vmatmul.mubr.bf16.gmra.mrb[0].mxu0 %v3524
        %v4839 = vpop.f32.mrb[0].mxu0
        %v4840 = vadd.f32 0.0, %v4839
        %v4841 = vpop.f32.mrb[0].mxu0
        %v4842 = vadd.f32 0.0, %v4841
        %v4843 = vpop.f32.mrb[0].mxu0
        %v4844 = vadd.f32 0.0, %v4843
        %v4845 = vpop.f32.mrb[0].mxu0
        %v4846 = vadd.f32 0.0, %v4845
        %4847 = vmatprep.mubr.bf16.mxu0 %v3527
        %4848 = vmatmul.mubr.bf16.gmra.mrb[0].mxu0 %v3526
        %v4849 = vpop.f32.mrb[0].mxu0
        %v4850 = vadd.f32 0.0, %v4849
        %v4851 = vpop.f32.mrb[0].mxu0
        %v4852 = vadd.f32 0.0, %v4851
        %v4853 = vpop.f32.mrb[0].mxu0
        %v4854 = vadd.f32 0.0, %v4853
        %v4855 = vpop.f32.mrb[0].mxu0
        %v4856 = vadd.f32 0.0, %v4855
        %4857 = vmatprep.mubr.bf16.mxu0 %v3529
        %4858 = vmatmul.mubr.bf16.gmra.mrb[0].mxu0 %v3528
        %v4859 = vpop.f32.mrb[0].mxu0
        %v4860 = vadd.f32 0.0, %v4859
        %v4861 = vpop.f32.mrb[0].mxu0
        %v4862 = vadd.f32 0.0, %v4861
        %v4863 = vpop.f32.mrb[0].mxu0
        %v4864 = vadd.f32 0.0, %v4863
        %v4865 = vpop.f32.mrb[0].mxu0
        %v4866 = vadd.f32 0.0, %v4865
        %4867 = vmatprep.mubr.bf16.mxu0 %v3531
        %4868 = vmatmul.mubr.bf16.gmra.mrb[0].mxu0 %v3530
        %v4869 = vpop.f32.mrb[0].mxu0
        %v4870 = vadd.f32 0.0, %v4869
        %v4871 = vpop.f32.mrb[0].mxu0
        %v4872 = vadd.f32 0.0, %v4871
        %v4873 = vpop.f32.mrb[0].mxu0
        %v4874 = vadd.f32 0.0, %v4873
        %v4875 = vpop.f32.mrb[0].mxu0
        %v4876 = vadd.f32 0.0, %v4875
        %4877 = vmatprep.mubr.bf16.mxu0 %v3533
        %4878 = vmatmul.mubr.bf16.gmra.mrb[0].mxu0 %v3532
        %v4879 = vpop.f32.mrb[0].mxu0
        %v4880 = vadd.f32 0.0, %v4879
        %v4881 = vpop.f32.mrb[0].mxu0
        %v4882 = vadd.f32 0.0, %v4881
        %v4883 = vpop.f32.mrb[0].mxu0
        %v4884 = vadd.f32 0.0, %v4883
        %v4885 = vpop.f32.mrb[0].mxu0
        %v4886 = vadd.f32 0.0, %v4885
        %4887 = vmatprep.mubr.bf16.mxu0 %v3535
        %4888 = vmatmul.mubr.bf16.gmra.mrb[0].mxu0 %v3534
        %v4889 = vpop.f32.mrb[0].mxu0
        %v4890 = vadd.f32 0.0, %v4889
        %v4891 = vpop.f32.mrb[0].mxu0
        %v4892 = vadd.f32 0.0, %v4891
        %v4893 = vpop.f32.mrb[0].mxu0
        %v4894 = vadd.f32 0.0, %v4893
        %v4895 = vpop.f32.mrb[0].mxu0
        %v4896 = vadd.f32 0.0, %v4895
        %4897 = vmatprep.mubr.bf16.mxu0 %v3537
        %4898 = vmatmul.mubr.bf16.gmra.mrb[0].mxu0 %v3536
        %v4899 = vpop.f32.mrb[0].mxu0
        %v4900 = vadd.f32 0.0, %v4899
        %v4901 = vpop.f32.mrb[0].mxu0
        %v4902 = vadd.f32 0.0, %v4901
        %v4903 = vpop.f32.mrb[0].mxu0
        %v4904 = vadd.f32 0.0, %v4903
        %v4905 = vpop.f32.mrb[0].mxu0
        %v4906 = vadd.f32 0.0, %v4905
        %4907 = vmatprep.mubr.bf16.mxu0 %v3539
        %4908 = vmatmul.mubr.bf16.gmra.mrb[0].mxu0 %v3538
        %v4909 = vpop.f32.mrb[0].mxu0
        %v4910 = vadd.f32 0.0, %v4909
        %v4911 = vpop.f32.mrb[0].mxu0
        %v4912 = vadd.f32 0.0, %v4911
        %v4913 = vpop.f32.mrb[0].mxu0
        %v4914 = vadd.f32 0.0, %v4913
        %v4915 = vpop.f32.mrb[0].mxu0
        %v4916 = vadd.f32 0.0, %v4915
        %4917 = vmatprep.mubr.bf16.mxu0 %v3541
        %4918 = vmatmul.mubr.bf16.gmra.mrb[0].mxu0 %v3540
        %v4919 = vpop.f32.mrb[0].mxu0
        %v4920 = vadd.f32 0.0, %v4919
        %v4921 = vpop.f32.mrb[0].mxu0
        %v4922 = vadd.f32 0.0, %v4921
        %v4923 = vpop.f32.mrb[0].mxu0
        %v4924 = vadd.f32 0.0, %v4923
        %v4925 = vpop.f32.mrb[0].mxu0
        %v4926 = vadd.f32 0.0, %v4925
        %4927 = vmatprep.mubr.bf16.mxu0 %v3543
        %4928 = vmatmul.mubr.bf16.gmra.mrb[0].mxu0 %v3542
        %v4929 = vpop.f32.mrb[0].mxu0
        %v4930 = vadd.f32 0.0, %v4929
        %v4931 = vpop.f32.mrb[0].mxu0
        %v4932 = vadd.f32 0.0, %v4931
        %v4933 = vpop.f32.mrb[0].mxu0
        %v4934 = vadd.f32 0.0, %v4933
        %v4935 = vpop.f32.mrb[0].mxu0
        %v4936 = vadd.f32 0.0, %v4935
        %4937 = vmatprep.mubr.bf16.mxu0 %v3545
        %4938 = vmatmul.mubr.bf16.gmra.mrb[0].mxu0 %v3544
        %v4939 = vpop.f32.mrb[0].mxu0
        %v4940 = vadd.f32 0.0, %v4939
        %v4941 = vpop.f32.mrb[0].mxu0
        %v4942 = vadd.f32 0.0, %v4941
        %v4943 = vpop.f32.mrb[0].mxu0
        %v4944 = vadd.f32 0.0, %v4943
        %v4945 = vpop.f32.mrb[0].mxu0
        %v4946 = vadd.f32 0.0, %v4945
        %4947 = vmatprep.mubr.bf16.mxu0 %v3547
        %4948 = vmatmul.mubr.bf16.gmra.mrb[0].mxu0 %v3546
        %v4949 = vpop.f32.mrb[0].mxu0
        %v4950 = vadd.f32 0.0, %v4949
        %v4951 = vpop.f32.mrb[0].mxu0
        %v4952 = vadd.f32 0.0, %v4951
        %v4953 = vpop.f32.mrb[0].mxu0
        %v4954 = vadd.f32 0.0, %v4953
        %v4955 = vpop.f32.mrb[0].mxu0
        %v4956 = vadd.f32 0.0, %v4955
        %4957 = vmatprep.mubr.bf16.mxu0 %v3549
        %4958 = vmatmul.mubr.bf16.gmra.mrb[0].mxu0 %v3548
        %v4959 = vpop.f32.mrb[0].mxu0
        %v4960 = vadd.f32 0.0, %v4959
        %v4961 = vpop.f32.mrb[0].mxu0
        %v4962 = vadd.f32 0.0, %v4961
        %v4963 = vpop.f32.mrb[0].mxu0
        %v4964 = vadd.f32 0.0, %v4963
        %v4965 = vpop.f32.mrb[0].mxu0
        %v4966 = vadd.f32 0.0, %v4965
        %4967 = vmatprep.mubr.bf16.mxu0 %v3551
        %4968 = vmatmul.mubr.bf16.gmra.mrb[0].mxu0 %v3550
        %v4969 = vpop.f32.mrb[0].mxu0
        %v4970 = vadd.f32 0.0, %v4969
        %v4971 = vpop.f32.mrb[0].mxu0
        %v4972 = vadd.f32 0.0, %v4971
        %v4973 = vpop.f32.mrb[0].mxu0
        %v4974 = vadd.f32 0.0, %v4973
        %v4975 = vpop.f32.mrb[0].mxu0
        %v4976 = vadd.f32 0.0, %v4975
        %4977 = vmatprep.mubr.bf16.mxu0 %v3553
        %4978 = vmatmul.mubr.bf16.gmra.mrb[0].mxu0 %v3552
        %v4979 = vpop.f32.mrb[0].mxu0
        %v4980 = vadd.f32 0.0, %v4979
        %v4981 = vpop.f32.mrb[0].mxu0
        %v4982 = vadd.f32 0.0, %v4981
        %v4983 = vpop.f32.mrb[0].mxu0
        %v4984 = vadd.f32 0.0, %v4983
        %v4985 = vpop.f32.mrb[0].mxu0
        %v4986 = vadd.f32 0.0, %v4985
        %4987 = vmatprep.mubr.bf16.mxu0 %v3555
        %4988 = vmatmul.mubr.bf16.gmra.mrb[0].mxu0 %v3554
        %v4989 = vpop.f32.mrb[0].mxu0
        %v4990 = vadd.f32 0.0, %v4989
        %v4991 = vpop.f32.mrb[0].mxu0
        %v4992 = vadd.f32 0.0, %v4991
        %v4993 = vpop.f32.mrb[0].mxu0
        %v4994 = vadd.f32 0.0, %v4993
        %v4995 = vpop.f32.mrb[0].mxu0
        %v4996 = vadd.f32 0.0, %v4995
        %4997 = vmatprep.mubr.bf16.mxu0 %v3557
        %4998 = vmatmul.mubr.bf16.gmra.mrb[0].mxu0 %v3556
        %v4999 = vpop.f32.mrb[0].mxu0
        %v5000 = vadd.f32 0.0, %v4999
        %v5001 = vpop.f32.mrb[0].mxu0
        %v5002 = vadd.f32 0.0, %v5001
        %v5003 = vpop.f32.mrb[0].mxu0
        %v5004 = vadd.f32 0.0, %v5003
        %v5005 = vpop.f32.mrb[0].mxu0
        %v5006 = vadd.f32 0.0, %v5005
        %5007 = vmatprep.mubr.bf16.mxu0 %v3559
        %5008 = vmatmul.mubr.bf16.gmra.mrb[0].mxu0 %v3558
        %v5009 = vpop.f32.mrb[0].mxu0
        %v5010 = vadd.f32 0.0, %v5009
        %v5011 = vpop.f32.mrb[0].mxu0
        %v5012 = vadd.f32 0.0, %v5011
        %v5013 = vpop.f32.mrb[0].mxu0
        %v5014 = vadd.f32 0.0, %v5013
        %v5015 = vpop.f32.mrb[0].mxu0
        %v5016 = vadd.f32 0.0, %v5015
        %5017 = vmatprep.mubr.bf16.mxu0 %v3561
        %5018 = vmatmul.mubr.bf16.gmra.mrb[0].mxu0 %v3560
        %v5019 = vpop.f32.mrb[0].mxu0
        %v5020 = vadd.f32 0.0, %v5019
        %v5021 = vpop.f32.mrb[0].mxu0
        %v5022 = vadd.f32 0.0, %v5021
        %v5023 = vpop.f32.mrb[0].mxu0
        %v5024 = vadd.f32 0.0, %v5023
        %v5025 = vpop.f32.mrb[0].mxu0
        %v5026 = vadd.f32 0.0, %v5025
        %5027 = vmatprep.mubr.bf16.mxu0 %v3563
        %5028 = vmatmul.mubr.bf16.gmra.mrb[0].mxu0 %v3562
        %v5029 = vpop.f32.mrb[0].mxu0
        %v5030 = vadd.f32 0.0, %v5029
        %v5031 = vpop.f32.mrb[0].mxu0
        %v5032 = vadd.f32 0.0, %v5031
        %v5033 = vpop.f32.mrb[0].mxu0
        %v5034 = vadd.f32 0.0, %v5033
        %v5035 = vpop.f32.mrb[0].mxu0
        %v5036 = vadd.f32 0.0, %v5035
        %5037 = vdwg.mxu0
        %5038 = vmatprep.subr.bf16.mxu0 %v4081
        %5039 = vmatpush1.bf16.msra.mxu0 %v4080
        %5040 = vmatprep.subr.bf16.mxu0 %v4089
        %5041 = vmatpush1.bf16.msra.mxu0 %v4088
        %5042 = vmatprep.subr.bf16.mxu0 %v4097
        %5043 = vmatpush1.bf16.msra.mxu0 %v4096
        %5044 = vmatprep.subr.bf16.mxu0 %v4105
        %5045 = vmatpush1.bf16.msra.mxu0 %v4104
        %5046 = vmatprep.subr.bf16.mxu0 %v4113
        %5047 = vmatpush1.bf16.msra.mxu0 %v4112
        %5048 = vmatprep.subr.bf16.mxu0 %v4121
        %5049 = vmatpush1.bf16.msra.mxu0 %v4120
        %5050 = vmatprep.subr.bf16.mxu0 %v4129
        %5051 = vmatpush1.bf16.msra.mxu0 %v4128
        %5052 = vmatprep.subr.bf16.mxu0 %v4137
        %5053 = vmatpush1.bf16.msra.mxu0 %v4136
        %5054 = vmatprep.subr.bf16.mxu0 %v4145
        %5055 = vmatpush1.bf16.msra.mxu0 %v4144
        %5056 = vmatprep.subr.bf16.mxu0 %v4153
        %5057 = vmatpush1.bf16.msra.mxu0 %v4152
        %5058 = vmatprep.subr.bf16.mxu0 %v4161
        %5059 = vmatpush1.bf16.msra.mxu0 %v4160
        %5060 = vmatprep.subr.bf16.mxu0 %v4169
        %5061 = vmatpush1.bf16.msra.mxu0 %v4168
        %5062 = vmatprep.subr.bf16.mxu0 %v4177
        %5063 = vmatpush1.bf16.msra.mxu0 %v4176
        %5064 = vmatprep.subr.bf16.mxu0 %v4185
        %5065 = vmatpush1.bf16.msra.mxu0 %v4184
        %5066 = vmatprep.subr.bf16.mxu0 %v4193
        %5067 = vmatpush1.bf16.msra.mxu0 %v4192
        %5068 = vmatprep.subr.bf16.mxu0 %v4201
        %5069 = vmatpush1.bf16.msra.mxu0 %v4200
        %5070 = vmatprep.mubr.bf16.mxu0 %v3501
        %5071 = vmatmul.mubr.bf16.gmra.mrb[0].mxu0 %v3500
        %v5072 = vpop.f32.mrb[0].mxu0
        %v5073 = vadd.f32 0.0, %v5072
        %v5074 = vpop.f32.mrb[0].mxu0
        %v5075 = vadd.f32 0.0, %v5074
        %v5076 = vpop.f32.mrb[0].mxu0
        %v5077 = vadd.f32 0.0, %v5076
        %v5078 = vpop.f32.mrb[0].mxu0
        %v5079 = vadd.f32 0.0, %v5078
        %5080 = vmatprep.mubr.bf16.mxu0 %v3503
        %5081 = vmatmul.mubr.bf16.gmra.mrb[0].mxu0 %v3502
        %v5082 = vpop.f32.mrb[0].mxu0
        %v5083 = vadd.f32 0.0, %v5082
        %v5084 = vpop.f32.mrb[0].mxu0
        %v5085 = vadd.f32 0.0, %v5084
        %v5086 = vpop.f32.mrb[0].mxu0
        %v5087 = vadd.f32 0.0, %v5086
        %v5088 = vpop.f32.mrb[0].mxu0
        %v5089 = vadd.f32 0.0, %v5088
        %5090 = vmatprep.mubr.bf16.mxu0 %v3505
        %5091 = vmatmul.mubr.bf16.gmra.mrb[0].mxu0 %v3504
        %v5092 = vpop.f32.mrb[0].mxu0
        %v5093 = vadd.f32 0.0, %v5092
        %v5094 = vpop.f32.mrb[0].mxu0
        %v5095 = vadd.f32 0.0, %v5094
        %v5096 = vpop.f32.mrb[0].mxu0
        %v5097 = vadd.f32 0.0, %v5096
        %v5098 = vpop.f32.mrb[0].mxu0
        %v5099 = vadd.f32 0.0, %v5098
        %5100 = vmatprep.mubr.bf16.mxu0 %v3507
        %5101 = vmatmul.mubr.bf16.gmra.mrb[0].mxu0 %v3506
        %v5102 = vpop.f32.mrb[0].mxu0
        %v5103 = vadd.f32 0.0, %v5102
        %v5104 = vpop.f32.mrb[0].mxu0
        %v5105 = vadd.f32 0.0, %v5104
        %v5106 = vpop.f32.mrb[0].mxu0
        %v5107 = vadd.f32 0.0, %v5106
        %v5108 = vpop.f32.mrb[0].mxu0
        %v5109 = vadd.f32 0.0, %v5108
        %5110 = vmatprep.mubr.bf16.mxu0 %v3509
        %5111 = vmatmul.mubr.bf16.gmra.mrb[0].mxu0 %v3508
        %v5112 = vpop.f32.mrb[0].mxu0
        %v5113 = vadd.f32 0.0, %v5112
        %v5114 = vpop.f32.mrb[0].mxu0
        %v5115 = vadd.f32 0.0, %v5114
        %v5116 = vpop.f32.mrb[0].mxu0
        %v5117 = vadd.f32 0.0, %v5116
        %v5118 = vpop.f32.mrb[0].mxu0
        %v5119 = vadd.f32 0.0, %v5118
        %5120 = vmatprep.mubr.bf16.mxu0 %v3511
        %5121 = vmatmul.mubr.bf16.gmra.mrb[0].mxu0 %v3510
        %v5122 = vpop.f32.mrb[0].mxu0
        %v5123 = vadd.f32 0.0, %v5122
        %v5124 = vpop.f32.mrb[0].mxu0
        %v5125 = vadd.f32 0.0, %v5124
        %v5126 = vpop.f32.mrb[0].mxu0
        %v5127 = vadd.f32 0.0, %v5126
        %v5128 = vpop.f32.mrb[0].mxu0
        %v5129 = vadd.f32 0.0, %v5128
        %5130 = vmatprep.mubr.bf16.mxu0 %v3513
        %5131 = vmatmul.mubr.bf16.gmra.mrb[0].mxu0 %v3512
        %v5132 = vpop.f32.mrb[0].mxu0
        %v5133 = vadd.f32 0.0, %v5132
        %v5134 = vpop.f32.mrb[0].mxu0
        %v5135 = vadd.f32 0.0, %v5134
        %v5136 = vpop.f32.mrb[0].mxu0
        %v5137 = vadd.f32 0.0, %v5136
        %v5138 = vpop.f32.mrb[0].mxu0
        %v5139 = vadd.f32 0.0, %v5138
        %5140 = vmatprep.mubr.bf16.mxu0 %v3515
        %5141 = vmatmul.mubr.bf16.gmra.mrb[0].mxu0 %v3514
        %v5142 = vpop.f32.mrb[0].mxu0
        %v5143 = vadd.f32 0.0, %v5142
        %v5144 = vpop.f32.mrb[0].mxu0
        %v5145 = vadd.f32 0.0, %v5144
        %v5146 = vpop.f32.mrb[0].mxu0
        %v5147 = vadd.f32 0.0, %v5146
        %v5148 = vpop.f32.mrb[0].mxu0
        %v5149 = vadd.f32 0.0, %v5148
        %5150 = vmatprep.mubr.bf16.mxu0 %v3517
        %5151 = vmatmul.mubr.bf16.gmra.mrb[0].mxu0 %v3516
        %v5152 = vpop.f32.mrb[0].mxu0
        %v5153 = vadd.f32 0.0, %v5152
        %v5154 = vpop.f32.mrb[0].mxu0
        %v5155 = vadd.f32 0.0, %v5154
        %v5156 = vpop.f32.mrb[0].mxu0
        %v5157 = vadd.f32 0.0, %v5156
        %v5158 = vpop.f32.mrb[0].mxu0
        %v5159 = vadd.f32 0.0, %v5158
        %5160 = vmatprep.mubr.bf16.mxu0 %v3519
        %5161 = vmatmul.mubr.bf16.gmra.mrb[0].mxu0 %v3518
        %v5162 = vpop.f32.mrb[0].mxu0
        %v5163 = vadd.f32 0.0, %v5162
        %v5164 = vpop.f32.mrb[0].mxu0
        %v5165 = vadd.f32 0.0, %v5164
        %v5166 = vpop.f32.mrb[0].mxu0
        %v5167 = vadd.f32 0.0, %v5166
        %v5168 = vpop.f32.mrb[0].mxu0
        %v5169 = vadd.f32 0.0, %v5168
        %5170 = vmatprep.mubr.bf16.mxu0 %v3521
        %5171 = vmatmul.mubr.bf16.gmra.mrb[0].mxu0 %v3520
        %v5172 = vpop.f32.mrb[0].mxu0
        %v5173 = vadd.f32 0.0, %v5172
        %v5174 = vpop.f32.mrb[0].mxu0
        %v5175 = vadd.f32 0.0, %v5174
        %v5176 = vpop.f32.mrb[0].mxu0
        %v5177 = vadd.f32 0.0, %v5176
        %v5178 = vpop.f32.mrb[0].mxu0
        %v5179 = vadd.f32 0.0, %v5178
        %5180 = vmatprep.mubr.bf16.mxu0 %v3523
        %5181 = vmatmul.mubr.bf16.gmra.mrb[0].mxu0 %v3522
        %v5182 = vpop.f32.mrb[0].mxu0
        %v5183 = vadd.f32 0.0, %v5182
        %v5184 = vpop.f32.mrb[0].mxu0
        %v5185 = vadd.f32 0.0, %v5184
        %v5186 = vpop.f32.mrb[0].mxu0
        %v5187 = vadd.f32 0.0, %v5186
        %v5188 = vpop.f32.mrb[0].mxu0
        %v5189 = vadd.f32 0.0, %v5188
        %5190 = vmatprep.mubr.bf16.mxu0 %v3525
        %5191 = vmatmul.mubr.bf16.gmra.mrb[0].mxu0 %v3524
        %v5192 = vpop.f32.mrb[0].mxu0
        %v5193 = vadd.f32 0.0, %v5192
        %v5194 = vpop.f32.mrb[0].mxu0
        %v5195 = vadd.f32 0.0, %v5194
        %v5196 = vpop.f32.mrb[0].mxu0
        %v5197 = vadd.f32 0.0, %v5196
        %v5198 = vpop.f32.mrb[0].mxu0
        %v5199 = vadd.f32 0.0, %v5198
        %5200 = vmatprep.mubr.bf16.mxu0 %v3527
        %5201 = vmatmul.mubr.bf16.gmra.mrb[0].mxu0 %v3526
        %v5202 = vpop.f32.mrb[0].mxu0
        %v5203 = vadd.f32 0.0, %v5202
        %v5204 = vpop.f32.mrb[0].mxu0
        %v5205 = vadd.f32 0.0, %v5204
        %v5206 = vpop.f32.mrb[0].mxu0
        %v5207 = vadd.f32 0.0, %v5206
        %v5208 = vpop.f32.mrb[0].mxu0
        %v5209 = vadd.f32 0.0, %v5208
        %5210 = vmatprep.mubr.bf16.mxu0 %v3529
        %5211 = vmatmul.mubr.bf16.gmra.mrb[0].mxu0 %v3528
        %v5212 = vpop.f32.mrb[0].mxu0
        %v5213 = vadd.f32 0.0, %v5212
        %v5214 = vpop.f32.mrb[0].mxu0
        %v5215 = vadd.f32 0.0, %v5214
        %v5216 = vpop.f32.mrb[0].mxu0
        %v5217 = vadd.f32 0.0, %v5216
        %v5218 = vpop.f32.mrb[0].mxu0
        %v5219 = vadd.f32 0.0, %v5218
        %5220 = vmatprep.mubr.bf16.mxu0 %v3531
        %5221 = vmatmul.mubr.bf16.gmra.mrb[0].mxu0 %v3530
        %v5222 = vpop.f32.mrb[0].mxu0
        %v5223 = vadd.f32 0.0, %v5222
        %v5224 = vpop.f32.mrb[0].mxu0
        %v5225 = vadd.f32 0.0, %v5224
        %v5226 = vpop.f32.mrb[0].mxu0
        %v5227 = vadd.f32 0.0, %v5226
        %v5228 = vpop.f32.mrb[0].mxu0
        %v5229 = vadd.f32 0.0, %v5228
        %5230 = vmatprep.mubr.bf16.mxu0 %v3533
        %5231 = vmatmul.mubr.bf16.gmra.mrb[0].mxu0 %v3532
        %v5232 = vpop.f32.mrb[0].mxu0
        %v5233 = vadd.f32 0.0, %v5232
        %v5234 = vpop.f32.mrb[0].mxu0
        %v5235 = vadd.f32 0.0, %v5234
        %v5236 = vpop.f32.mrb[0].mxu0
        %v5237 = vadd.f32 0.0, %v5236
        %v5238 = vpop.f32.mrb[0].mxu0
        %v5239 = vadd.f32 0.0, %v5238
        %5240 = vmatprep.mubr.bf16.mxu0 %v3535
        %5241 = vmatmul.mubr.bf16.gmra.mrb[0].mxu0 %v3534
        %v5242 = vpop.f32.mrb[0].mxu0
        %v5243 = vadd.f32 0.0, %v5242
        %v5244 = vpop.f32.mrb[0].mxu0
        %v5245 = vadd.f32 0.0, %v5244
        %v5246 = vpop.f32.mrb[0].mxu0
        %v5247 = vadd.f32 0.0, %v5246
        %v5248 = vpop.f32.mrb[0].mxu0
        %v5249 = vadd.f32 0.0, %v5248
        %5250 = vmatprep.mubr.bf16.mxu0 %v3537
        %5251 = vmatmul.mubr.bf16.gmra.mrb[0].mxu0 %v3536
        %v5252 = vpop.f32.mrb[0].mxu0
        %v5253 = vadd.f32 0.0, %v5252
        %v5254 = vpop.f32.mrb[0].mxu0
        %v5255 = vadd.f32 0.0, %v5254
        %v5256 = vpop.f32.mrb[0].mxu0
        %v5257 = vadd.f32 0.0, %v5256
        %v5258 = vpop.f32.mrb[0].mxu0
        %v5259 = vadd.f32 0.0, %v5258
        %5260 = vmatprep.mubr.bf16.mxu0 %v3539
        %5261 = vmatmul.mubr.bf16.gmra.mrb[0].mxu0 %v3538
        %v5262 = vpop.f32.mrb[0].mxu0
        %v5263 = vadd.f32 0.0, %v5262
        %v5264 = vpop.f32.mrb[0].mxu0
        %v5265 = vadd.f32 0.0, %v5264
        %v5266 = vpop.f32.mrb[0].mxu0
        %v5267 = vadd.f32 0.0, %v5266
        %v5268 = vpop.f32.mrb[0].mxu0
        %v5269 = vadd.f32 0.0, %v5268
        %5270 = vmatprep.mubr.bf16.mxu0 %v3541
        %5271 = vmatmul.mubr.bf16.gmra.mrb[0].mxu0 %v3540
        %v5272 = vpop.f32.mrb[0].mxu0
        %v5273 = vadd.f32 0.0, %v5272
        %v5274 = vpop.f32.mrb[0].mxu0
        %v5275 = vadd.f32 0.0, %v5274
        %v5276 = vpop.f32.mrb[0].mxu0
        %v5277 = vadd.f32 0.0, %v5276
        %v5278 = vpop.f32.mrb[0].mxu0
        %v5279 = vadd.f32 0.0, %v5278
        %5280 = vmatprep.mubr.bf16.mxu0 %v3543
        %5281 = vmatmul.mubr.bf16.gmra.mrb[0].mxu0 %v3542
        %v5282 = vpop.f32.mrb[0].mxu0
        %v5283 = vadd.f32 0.0, %v5282
        %v5284 = vpop.f32.mrb[0].mxu0
        %v5285 = vadd.f32 0.0, %v5284
        %v5286 = vpop.f32.mrb[0].mxu0
        %v5287 = vadd.f32 0.0, %v5286
        %v5288 = vpop.f32.mrb[0].mxu0
        %v5289 = vadd.f32 0.0, %v5288
        %5290 = vmatprep.mubr.bf16.mxu0 %v3545
        %5291 = vmatmul.mubr.bf16.gmra.mrb[0].mxu0 %v3544
        %v5292 = vpop.f32.mrb[0].mxu0
        %v5293 = vadd.f32 0.0, %v5292
        %v5294 = vpop.f32.mrb[0].mxu0
        %v5295 = vadd.f32 0.0, %v5294
        %v5296 = vpop.f32.mrb[0].mxu0
        %v5297 = vadd.f32 0.0, %v5296
        %v5298 = vpop.f32.mrb[0].mxu0
        %v5299 = vadd.f32 0.0, %v5298
        %5300 = vmatprep.mubr.bf16.mxu0 %v3547
        %5301 = vmatmul.mubr.bf16.gmra.mrb[0].mxu0 %v3546
        %v5302 = vpop.f32.mrb[0].mxu0
        %v5303 = vadd.f32 0.0, %v5302
        %v5304 = vpop.f32.mrb[0].mxu0
        %v5305 = vadd.f32 0.0, %v5304
        %v5306 = vpop.f32.mrb[0].mxu0
        %v5307 = vadd.f32 0.0, %v5306
        %v5308 = vpop.f32.mrb[0].mxu0
        %v5309 = vadd.f32 0.0, %v5308
        %5310 = vmatprep.mubr.bf16.mxu0 %v3549
        %5311 = vmatmul.mubr.bf16.gmra.mrb[0].mxu0 %v3548
        %v5312 = vpop.f32.mrb[0].mxu0
        %v5313 = vadd.f32 0.0, %v5312
        %v5314 = vpop.f32.mrb[0].mxu0
        %v5315 = vadd.f32 0.0, %v5314
        %v5316 = vpop.f32.mrb[0].mxu0
        %v5317 = vadd.f32 0.0, %v5316
        %v5318 = vpop.f32.mrb[0].mxu0
        %v5319 = vadd.f32 0.0, %v5318
        %5320 = vmatprep.mubr.bf16.mxu0 %v3551
        %5321 = vmatmul.mubr.bf16.gmra.mrb[0].mxu0 %v3550
        %v5322 = vpop.f32.mrb[0].mxu0
        %v5323 = vadd.f32 0.0, %v5322
        %v5324 = vpop.f32.mrb[0].mxu0
        %v5325 = vadd.f32 0.0, %v5324
        %v5326 = vpop.f32.mrb[0].mxu0
        %v5327 = vadd.f32 0.0, %v5326
        %v5328 = vpop.f32.mrb[0].mxu0
        %v5329 = vadd.f32 0.0, %v5328
        %5330 = vmatprep.mubr.bf16.mxu0 %v3553
        %5331 = vmatmul.mubr.bf16.gmra.mrb[0].mxu0 %v3552
        %v5332 = vpop.f32.mrb[0].mxu0
        %v5333 = vadd.f32 0.0, %v5332
        %v5334 = vpop.f32.mrb[0].mxu0
        %v5335 = vadd.f32 0.0, %v5334
        %v5336 = vpop.f32.mrb[0].mxu0
        %v5337 = vadd.f32 0.0, %v5336
        %v5338 = vpop.f32.mrb[0].mxu0
        %v5339 = vadd.f32 0.0, %v5338
        %5340 = vmatprep.mubr.bf16.mxu0 %v3555
        %5341 = vmatmul.mubr.bf16.gmra.mrb[0].mxu0 %v3554
        %v5342 = vpop.f32.mrb[0].mxu0
        %v5343 = vadd.f32 0.0, %v5342
        %v5344 = vpop.f32.mrb[0].mxu0
        %v5345 = vadd.f32 0.0, %v5344
        %v5346 = vpop.f32.mrb[0].mxu0
        %v5347 = vadd.f32 0.0, %v5346
        %v5348 = vpop.f32.mrb[0].mxu0
        %v5349 = vadd.f32 0.0, %v5348
        %5350 = vmatprep.mubr.bf16.mxu0 %v3557
        %5351 = vmatmul.mubr.bf16.gmra.mrb[0].mxu0 %v3556
        %v5352 = vpop.f32.mrb[0].mxu0
        %v5353 = vadd.f32 0.0, %v5352
        %v5354 = vpop.f32.mrb[0].mxu0
        %v5355 = vadd.f32 0.0, %v5354
        %v5356 = vpop.f32.mrb[0].mxu0
        %v5357 = vadd.f32 0.0, %v5356
        %v5358 = vpop.f32.mrb[0].mxu0
        %v5359 = vadd.f32 0.0, %v5358
        %5360 = vmatprep.mubr.bf16.mxu0 %v3559
        %5361 = vmatmul.mubr.bf16.gmra.mrb[0].mxu0 %v3558
        %v5362 = vpop.f32.mrb[0].mxu0
        %v5363 = vadd.f32 0.0, %v5362
        %v5364 = vpop.f32.mrb[0].mxu0
        %v5365 = vadd.f32 0.0, %v5364
        %v5366 = vpop.f32.mrb[0].mxu0
        %v5367 = vadd.f32 0.0, %v5366
        %v5368 = vpop.f32.mrb[0].mxu0
        %v5369 = vadd.f32 0.0, %v5368
        %5370 = vmatprep.mubr.bf16.mxu0 %v3561
        %5371 = vmatmul.mubr.bf16.gmra.mrb[0].mxu0 %v3560
        %v5372 = vpop.f32.mrb[0].mxu0
        %v5373 = vadd.f32 0.0, %v5372
        %v5374 = vpop.f32.mrb[0].mxu0
        %v5375 = vadd.f32 0.0, %v5374
        %v5376 = vpop.f32.mrb[0].mxu0
        %v5377 = vadd.f32 0.0, %v5376
        %v5378 = vpop.f32.mrb[0].mxu0
        %v5379 = vadd.f32 0.0, %v5378
        %5380 = vmatprep.mubr.bf16.mxu0 %v3563
        %5381 = vmatmul.mubr.bf16.gmra.mrb[0].mxu0 %v3562
        %v5382 = vpop.f32.mrb[0].mxu0
        %v5383 = vadd.f32 0.0, %v5382
        %v5384 = vpop.f32.mrb[0].mxu0
        %v5385 = vadd.f32 0.0, %v5384
        %v5386 = vpop.f32.mrb[0].mxu0
        %v5387 = vadd.f32 0.0, %v5386
        %v5388 = vpop.f32.mrb[0].mxu0
        %v5389 = vadd.f32 0.0, %v5388
        %5390 = vdwg.mxu0
        %5391 = vmatprep.subr.bf16.mxu0 %v4083
        %5392 = vmatpush1.bf16.msra.mxu0 %v4082
        %5393 = vmatprep.subr.bf16.mxu0 %v4091
        %5394 = vmatpush1.bf16.msra.mxu0 %v4090
        %5395 = vmatprep.subr.bf16.mxu0 %v4099
        %5396 = vmatpush1.bf16.msra.mxu0 %v4098
        %5397 = vmatprep.subr.bf16.mxu0 %v4107
        %5398 = vmatpush1.bf16.msra.mxu0 %v4106
        %5399 = vmatprep.subr.bf16.mxu0 %v4115
        %5400 = vmatpush1.bf16.msra.mxu0 %v4114
        %5401 = vmatprep.subr.bf16.mxu0 %v4123
        %5402 = vmatpush1.bf16.msra.mxu0 %v4122
        %5403 = vmatprep.subr.bf16.mxu0 %v4131
        %5404 = vmatpush1.bf16.msra.mxu0 %v4130
        %5405 = vmatprep.subr.bf16.mxu0 %v4139
        %5406 = vmatpush1.bf16.msra.mxu0 %v4138
        %5407 = vmatprep.subr.bf16.mxu0 %v4147
        %5408 = vmatpush1.bf16.msra.mxu0 %v4146
        %5409 = vmatprep.subr.bf16.mxu0 %v4155
        %5410 = vmatpush1.bf16.msra.mxu0 %v4154
        %5411 = vmatprep.subr.bf16.mxu0 %v4163
        %5412 = vmatpush1.bf16.msra.mxu0 %v4162
        %5413 = vmatprep.subr.bf16.mxu0 %v4171
        %5414 = vmatpush1.bf16.msra.mxu0 %v4170
        %5415 = vmatprep.subr.bf16.mxu0 %v4179
        %5416 = vmatpush1.bf16.msra.mxu0 %v4178
        %5417 = vmatprep.subr.bf16.mxu0 %v4187
        %5418 = vmatpush1.bf16.msra.mxu0 %v4186
        %5419 = vmatprep.subr.bf16.mxu0 %v4195
        %5420 = vmatpush1.bf16.msra.mxu0 %v4194
        %5421 = vmatprep.subr.bf16.mxu0 %v4203
        %5422 = vmatpush1.bf16.msra.mxu0 %v4202
        %5423 = vmatprep.mubr.bf16.mxu0 %v3501
        %5424 = vmatmul.mubr.bf16.gmra.mrb[0].mxu0 %v3500
        %v5425 = vpop.f32.mrb[0].mxu0
        %v5426 = vadd.f32 0.0, %v5425
        %v5427 = vpop.f32.mrb[0].mxu0
        %v5428 = vadd.f32 0.0, %v5427
        %v5429 = vpop.f32.mrb[0].mxu0
        %v5430 = vadd.f32 0.0, %v5429
        %v5431 = vpop.f32.mrb[0].mxu0
        %v5432 = vadd.f32 0.0, %v5431
        %5433 = vmatprep.mubr.bf16.mxu0 %v3503
        %5434 = vmatmul.mubr.bf16.gmra.mrb[0].mxu0 %v3502
        %v5435 = vpop.f32.mrb[0].mxu0
        %v5436 = vadd.f32 0.0, %v5435
        %v5437 = vpop.f32.mrb[0].mxu0
        %v5438 = vadd.f32 0.0, %v5437
        %v5439 = vpop.f32.mrb[0].mxu0
        %v5440 = vadd.f32 0.0, %v5439
        %v5441 = vpop.f32.mrb[0].mxu0
        %v5442 = vadd.f32 0.0, %v5441
        %5443 = vmatprep.mubr.bf16.mxu0 %v3505
        %5444 = vmatmul.mubr.bf16.gmra.mrb[0].mxu0 %v3504
        %v5445 = vpop.f32.mrb[0].mxu0
        %v5446 = vadd.f32 0.0, %v5445
        %v5447 = vpop.f32.mrb[0].mxu0
        %v5448 = vadd.f32 0.0, %v5447
        %v5449 = vpop.f32.mrb[0].mxu0
        %v5450 = vadd.f32 0.0, %v5449
        %v5451 = vpop.f32.mrb[0].mxu0
        %v5452 = vadd.f32 0.0, %v5451
        %5453 = vmatprep.mubr.bf16.mxu0 %v3507
        %5454 = vmatmul.mubr.bf16.gmra.mrb[0].mxu0 %v3506
        %v5455 = vpop.f32.mrb[0].mxu0
        %v5456 = vadd.f32 0.0, %v5455
        %v5457 = vpop.f32.mrb[0].mxu0
        %v5458 = vadd.f32 0.0, %v5457
        %v5459 = vpop.f32.mrb[0].mxu0
        %v5460 = vadd.f32 0.0, %v5459
        %v5461 = vpop.f32.mrb[0].mxu0
        %v5462 = vadd.f32 0.0, %v5461
        %5463 = vmatprep.mubr.bf16.mxu0 %v3509
        %5464 = vmatmul.mubr.bf16.gmra.mrb[0].mxu0 %v3508
        %v5465 = vpop.f32.mrb[0].mxu0
        %v5466 = vadd.f32 0.0, %v5465
        %v5467 = vpop.f32.mrb[0].mxu0
        %v5468 = vadd.f32 0.0, %v5467
        %v5469 = vpop.f32.mrb[0].mxu0
        %v5470 = vadd.f32 0.0, %v5469
        %v5471 = vpop.f32.mrb[0].mxu0
        %v5472 = vadd.f32 0.0, %v5471
        %5473 = vmatprep.mubr.bf16.mxu0 %v3511
        %5474 = vmatmul.mubr.bf16.gmra.mrb[0].mxu0 %v3510
        %v5475 = vpop.f32.mrb[0].mxu0
        %v5476 = vadd.f32 0.0, %v5475
        %v5477 = vpop.f32.mrb[0].mxu0
        %v5478 = vadd.f32 0.0, %v5477
        %v5479 = vpop.f32.mrb[0].mxu0
        %v5480 = vadd.f32 0.0, %v5479
        %v5481 = vpop.f32.mrb[0].mxu0
        %v5482 = vadd.f32 0.0, %v5481
        %5483 = vmatprep.mubr.bf16.mxu0 %v3513
        %5484 = vmatmul.mubr.bf16.gmra.mrb[0].mxu0 %v3512
        %v5485 = vpop.f32.mrb[0].mxu0
        %v5486 = vadd.f32 0.0, %v5485
        %v5487 = vpop.f32.mrb[0].mxu0
        %v5488 = vadd.f32 0.0, %v5487
        %v5489 = vpop.f32.mrb[0].mxu0
        %v5490 = vadd.f32 0.0, %v5489
        %v5491 = vpop.f32.mrb[0].mxu0
        %v5492 = vadd.f32 0.0, %v5491
        %5493 = vmatprep.mubr.bf16.mxu0 %v3515
        %5494 = vmatmul.mubr.bf16.gmra.mrb[0].mxu0 %v3514
        %v5495 = vpop.f32.mrb[0].mxu0
        %v5496 = vadd.f32 0.0, %v5495
        %v5497 = vpop.f32.mrb[0].mxu0
        %v5498 = vadd.f32 0.0, %v5497
        %v5499 = vpop.f32.mrb[0].mxu0
        %v5500 = vadd.f32 0.0, %v5499
        %v5501 = vpop.f32.mrb[0].mxu0
        %v5502 = vadd.f32 0.0, %v5501
        %5503 = vmatprep.mubr.bf16.mxu0 %v3517
        %5504 = vmatmul.mubr.bf16.gmra.mrb[0].mxu0 %v3516
        %v5505 = vpop.f32.mrb[0].mxu0
        %v5506 = vadd.f32 0.0, %v5505
        %v5507 = vpop.f32.mrb[0].mxu0
        %v5508 = vadd.f32 0.0, %v5507
        %v5509 = vpop.f32.mrb[0].mxu0
        %v5510 = vadd.f32 0.0, %v5509
        %v5511 = vpop.f32.mrb[0].mxu0
        %v5512 = vadd.f32 0.0, %v5511
        %5513 = vmatprep.mubr.bf16.mxu0 %v3519
        %5514 = vmatmul.mubr.bf16.gmra.mrb[0].mxu0 %v3518
        %v5515 = vpop.f32.mrb[0].mxu0
        %v5516 = vadd.f32 0.0, %v5515
        %v5517 = vpop.f32.mrb[0].mxu0
        %v5518 = vadd.f32 0.0, %v5517
        %v5519 = vpop.f32.mrb[0].mxu0
        %v5520 = vadd.f32 0.0, %v5519
        %v5521 = vpop.f32.mrb[0].mxu0
        %v5522 = vadd.f32 0.0, %v5521
        %5523 = vmatprep.mubr.bf16.mxu0 %v3521
        %5524 = vmatmul.mubr.bf16.gmra.mrb[0].mxu0 %v3520
        %v5525 = vpop.f32.mrb[0].mxu0
        %v5526 = vadd.f32 0.0, %v5525
        %v5527 = vpop.f32.mrb[0].mxu0
        %v5528 = vadd.f32 0.0, %v5527
        %v5529 = vpop.f32.mrb[0].mxu0
        %v5530 = vadd.f32 0.0, %v5529
        %v5531 = vpop.f32.mrb[0].mxu0
        %v5532 = vadd.f32 0.0, %v5531
        %5533 = vmatprep.mubr.bf16.mxu0 %v3523
        %5534 = vmatmul.mubr.bf16.gmra.mrb[0].mxu0 %v3522
        %v5535 = vpop.f32.mrb[0].mxu0
        %v5536 = vadd.f32 0.0, %v5535
        %v5537 = vpop.f32.mrb[0].mxu0
        %v5538 = vadd.f32 0.0, %v5537
        %v5539 = vpop.f32.mrb[0].mxu0
        %v5540 = vadd.f32 0.0, %v5539
        %v5541 = vpop.f32.mrb[0].mxu0
        %v5542 = vadd.f32 0.0, %v5541
        %5543 = vmatprep.mubr.bf16.mxu0 %v3525
        %5544 = vmatmul.mubr.bf16.gmra.mrb[0].mxu0 %v3524
        %v5545 = vpop.f32.mrb[0].mxu0
        %v5546 = vadd.f32 0.0, %v5545
        %v5547 = vpop.f32.mrb[0].mxu0
        %v5548 = vadd.f32 0.0, %v5547
        %v5549 = vpop.f32.mrb[0].mxu0
        %v5550 = vadd.f32 0.0, %v5549
        %v5551 = vpop.f32.mrb[0].mxu0
        %v5552 = vadd.f32 0.0, %v5551
        %5553 = vmatprep.mubr.bf16.mxu0 %v3527
        %5554 = vmatmul.mubr.bf16.gmra.mrb[0].mxu0 %v3526
        %v5555 = vpop.f32.mrb[0].mxu0
        %v5556 = vadd.f32 0.0, %v5555
        %v5557 = vpop.f32.mrb[0].mxu0
        %v5558 = vadd.f32 0.0, %v5557
        %v5559 = vpop.f32.mrb[0].mxu0
        %v5560 = vadd.f32 0.0, %v5559
        %v5561 = vpop.f32.mrb[0].mxu0
        %v5562 = vadd.f32 0.0, %v5561
        %5563 = vmatprep.mubr.bf16.mxu0 %v3529
        %5564 = vmatmul.mubr.bf16.gmra.mrb[0].mxu0 %v3528
        %v5565 = vpop.f32.mrb[0].mxu0
        %v5566 = vadd.f32 0.0, %v5565
        %v5567 = vpop.f32.mrb[0].mxu0
        %v5568 = vadd.f32 0.0, %v5567
        %v5569 = vpop.f32.mrb[0].mxu0
        %v5570 = vadd.f32 0.0, %v5569
        %v5571 = vpop.f32.mrb[0].mxu0
        %v5572 = vadd.f32 0.0, %v5571
        %5573 = vmatprep.mubr.bf16.mxu0 %v3531
        %5574 = vmatmul.mubr.bf16.gmra.mrb[0].mxu0 %v3530
        %v5575 = vpop.f32.mrb[0].mxu0
        %v5576 = vadd.f32 0.0, %v5575
        %v5577 = vpop.f32.mrb[0].mxu0
        %v5578 = vadd.f32 0.0, %v5577
        %v5579 = vpop.f32.mrb[0].mxu0
        %v5580 = vadd.f32 0.0, %v5579
        %v5581 = vpop.f32.mrb[0].mxu0
        %v5582 = vadd.f32 0.0, %v5581
        %5583 = vmatprep.mubr.bf16.mxu0 %v3533
        %5584 = vmatmul.mubr.bf16.gmra.mrb[0].mxu0 %v3532
        %v5585 = vpop.f32.mrb[0].mxu0
        %v5586 = vadd.f32 0.0, %v5585
        %v5587 = vpop.f32.mrb[0].mxu0
        %v5588 = vadd.f32 0.0, %v5587
        %v5589 = vpop.f32.mrb[0].mxu0
        %v5590 = vadd.f32 0.0, %v5589
        %v5591 = vpop.f32.mrb[0].mxu0
        %v5592 = vadd.f32 0.0, %v5591
        %5593 = vmatprep.mubr.bf16.mxu0 %v3535
        %5594 = vmatmul.mubr.bf16.gmra.mrb[0].mxu0 %v3534
        %v5595 = vpop.f32.mrb[0].mxu0
        %v5596 = vadd.f32 0.0, %v5595
        %v5597 = vpop.f32.mrb[0].mxu0
        %v5598 = vadd.f32 0.0, %v5597
        %v5599 = vpop.f32.mrb[0].mxu0
        %v5600 = vadd.f32 0.0, %v5599
        %v5601 = vpop.f32.mrb[0].mxu0
        %v5602 = vadd.f32 0.0, %v5601
        %5603 = vmatprep.mubr.bf16.mxu0 %v3537
        %5604 = vmatmul.mubr.bf16.gmra.mrb[0].mxu0 %v3536
        %v5605 = vpop.f32.mrb[0].mxu0
        %v5606 = vadd.f32 0.0, %v5605
        %v5607 = vpop.f32.mrb[0].mxu0
        %v5608 = vadd.f32 0.0, %v5607
        %v5609 = vpop.f32.mrb[0].mxu0
        %v5610 = vadd.f32 0.0, %v5609
        %v5611 = vpop.f32.mrb[0].mxu0
        %v5612 = vadd.f32 0.0, %v5611
        %5613 = vmatprep.mubr.bf16.mxu0 %v3539
        %5614 = vmatmul.mubr.bf16.gmra.mrb[0].mxu0 %v3538
        %v5615 = vpop.f32.mrb[0].mxu0
        %v5616 = vadd.f32 0.0, %v5615
        %v5617 = vpop.f32.mrb[0].mxu0
        %v5618 = vadd.f32 0.0, %v5617
        %v5619 = vpop.f32.mrb[0].mxu0
        %v5620 = vadd.f32 0.0, %v5619
        %v5621 = vpop.f32.mrb[0].mxu0
        %v5622 = vadd.f32 0.0, %v5621
        %5623 = vmatprep.mubr.bf16.mxu0 %v3541
        %5624 = vmatmul.mubr.bf16.gmra.mrb[0].mxu0 %v3540
        %v5625 = vpop.f32.mrb[0].mxu0
        %v5626 = vadd.f32 0.0, %v5625
        %v5627 = vpop.f32.mrb[0].mxu0
        %v5628 = vadd.f32 0.0, %v5627
        %v5629 = vpop.f32.mrb[0].mxu0
        %v5630 = vadd.f32 0.0, %v5629
        %v5631 = vpop.f32.mrb[0].mxu0
        %v5632 = vadd.f32 0.0, %v5631
        %5633 = vmatprep.mubr.bf16.mxu0 %v3543
        %5634 = vmatmul.mubr.bf16.gmra.mrb[0].mxu0 %v3542
        %v5635 = vpop.f32.mrb[0].mxu0
        %v5636 = vadd.f32 0.0, %v5635
        %v5637 = vpop.f32.mrb[0].mxu0
        %v5638 = vadd.f32 0.0, %v5637
        %v5639 = vpop.f32.mrb[0].mxu0
        %v5640 = vadd.f32 0.0, %v5639
        %v5641 = vpop.f32.mrb[0].mxu0
        %v5642 = vadd.f32 0.0, %v5641
        %5643 = vmatprep.mubr.bf16.mxu0 %v3545
        %5644 = vmatmul.mubr.bf16.gmra.mrb[0].mxu0 %v3544
        %v5645 = vpop.f32.mrb[0].mxu0
        %v5646 = vadd.f32 0.0, %v5645
        %v5647 = vpop.f32.mrb[0].mxu0
        %v5648 = vadd.f32 0.0, %v5647
        %v5649 = vpop.f32.mrb[0].mxu0
        %v5650 = vadd.f32 0.0, %v5649
        %v5651 = vpop.f32.mrb[0].mxu0
        %v5652 = vadd.f32 0.0, %v5651
        %5653 = vmatprep.mubr.bf16.mxu0 %v3547
        %5654 = vmatmul.mubr.bf16.gmra.mrb[0].mxu0 %v3546
        %v5655 = vpop.f32.mrb[0].mxu0
        %v5656 = vadd.f32 0.0, %v5655
        %v5657 = vpop.f32.mrb[0].mxu0
        %v5658 = vadd.f32 0.0, %v5657
        %v5659 = vpop.f32.mrb[0].mxu0
        %v5660 = vadd.f32 0.0, %v5659
        %v5661 = vpop.f32.mrb[0].mxu0
        %v5662 = vadd.f32 0.0, %v5661
        %5663 = vmatprep.mubr.bf16.mxu0 %v3549
        %5664 = vmatmul.mubr.bf16.gmra.mrb[0].mxu0 %v3548
        %v5665 = vpop.f32.mrb[0].mxu0
        %v5666 = vadd.f32 0.0, %v5665
        %v5667 = vpop.f32.mrb[0].mxu0
        %v5668 = vadd.f32 0.0, %v5667
        %v5669 = vpop.f32.mrb[0].mxu0
        %v5670 = vadd.f32 0.0, %v5669
        %v5671 = vpop.f32.mrb[0].mxu0
        %v5672 = vadd.f32 0.0, %v5671
        %5673 = vmatprep.mubr.bf16.mxu0 %v3551
        %5674 = vmatmul.mubr.bf16.gmra.mrb[0].mxu0 %v3550
        %v5675 = vpop.f32.mrb[0].mxu0
        %v5676 = vadd.f32 0.0, %v5675
        %v5677 = vpop.f32.mrb[0].mxu0
        %v5678 = vadd.f32 0.0, %v5677
        %v5679 = vpop.f32.mrb[0].mxu0
        %v5680 = vadd.f32 0.0, %v5679
        %v5681 = vpop.f32.mrb[0].mxu0
        %v5682 = vadd.f32 0.0, %v5681
        %5683 = vmatprep.mubr.bf16.mxu0 %v3553
        %5684 = vmatmul.mubr.bf16.gmra.mrb[0].mxu0 %v3552
        %v5685 = vpop.f32.mrb[0].mxu0
        %v5686 = vadd.f32 0.0, %v5685
        %v5687 = vpop.f32.mrb[0].mxu0
        %v5688 = vadd.f32 0.0, %v5687
        %v5689 = vpop.f32.mrb[0].mxu0
        %v5690 = vadd.f32 0.0, %v5689
        %v5691 = vpop.f32.mrb[0].mxu0
        %v5692 = vadd.f32 0.0, %v5691
        %5693 = vmatprep.mubr.bf16.mxu0 %v3555
        %5694 = vmatmul.mubr.bf16.gmra.mrb[0].mxu0 %v3554
        %v5695 = vpop.f32.mrb[0].mxu0
        %v5696 = vadd.f32 0.0, %v5695
        %v5697 = vpop.f32.mrb[0].mxu0
        %v5698 = vadd.f32 0.0, %v5697
        %v5699 = vpop.f32.mrb[0].mxu0
        %v5700 = vadd.f32 0.0, %v5699
        %v5701 = vpop.f32.mrb[0].mxu0
        %v5702 = vadd.f32 0.0, %v5701
        %5703 = vmatprep.mubr.bf16.mxu0 %v3557
        %5704 = vmatmul.mubr.bf16.gmra.mrb[0].mxu0 %v3556
        %v5705 = vpop.f32.mrb[0].mxu0
        %v5706 = vadd.f32 0.0, %v5705
        %v5707 = vpop.f32.mrb[0].mxu0
        %v5708 = vadd.f32 0.0, %v5707
        %v5709 = vpop.f32.mrb[0].mxu0
        %v5710 = vadd.f32 0.0, %v5709
        %v5711 = vpop.f32.mrb[0].mxu0
        %v5712 = vadd.f32 0.0, %v5711
        %5713 = vmatprep.mubr.bf16.mxu0 %v3559
        %5714 = vmatmul.mubr.bf16.gmra.mrb[0].mxu0 %v3558
        %v5715 = vpop.f32.mrb[0].mxu0
        %v5716 = vadd.f32 0.0, %v5715
        %v5717 = vpop.f32.mrb[0].mxu0
        %v5718 = vadd.f32 0.0, %v5717
        %v5719 = vpop.f32.mrb[0].mxu0
        %v5720 = vadd.f32 0.0, %v5719
        %v5721 = vpop.f32.mrb[0].mxu0
        %v5722 = vadd.f32 0.0, %v5721
        %5723 = vmatprep.mubr.bf16.mxu0 %v3561
        %5724 = vmatmul.mubr.bf16.gmra.mrb[0].mxu0 %v3560
        %v5725 = vpop.f32.mrb[0].mxu0
        %v5726 = vadd.f32 0.0, %v5725
        %v5727 = vpop.f32.mrb[0].mxu0
        %v5728 = vadd.f32 0.0, %v5727
        %v5729 = vpop.f32.mrb[0].mxu0
        %v5730 = vadd.f32 0.0, %v5729
        %v5731 = vpop.f32.mrb[0].mxu0
        %v5732 = vadd.f32 0.0, %v5731
        %5733 = vmatprep.mubr.bf16.mxu0 %v3563
        %5734 = vmatmul.mubr.bf16.gmra.mrb[0].mxu0 %v3562
        %v5735 = vpop.f32.mrb[0].mxu0
        %v5736 = vadd.f32 0.0, %v5735
        %v5737 = vpop.f32.mrb[0].mxu0
        %v5738 = vadd.f32 0.0, %v5737
        %v5739 = vpop.f32.mrb[0].mxu0
        %v5740 = vadd.f32 0.0, %v5739
        %v5741 = vpop.f32.mrb[0].mxu0
        %v5742 = vadd.f32 0.0, %v5741
        %5743 = vdwg.mxu0
        %v5744 = vmax.f32 %v4367, %v4371
        %v5745 = vmax.f32 %v5744, %v4377
        %v5746 = vmax.f32 %v5745, %v4381
        %v5747 = vmax.f32 %v5746, %v4387
        %v5748 = vmax.f32 %v5747, %v4391
        %v5749 = vmax.f32 %v5748, %v4397
        %v5750 = vmax.f32 %v5749, %v4401
        %v5751 = vmax.f32 %v5750, %v4407
        %v5752 = vmax.f32 %v5751, %v4411
        %v5753 = vmax.f32 %v5752, %v4417
        %v5754 = vmax.f32 %v5753, %v4421
        %v5755 = vmax.f32 %v5754, %v4427
        %v5756 = vmax.f32 %v5755, %v4431
        %v5757 = vmax.f32 %v5756, %v4437
        %v5758 = vmax.f32 %v5757, %v4441
        %v5759 = vmax.f32 %v5758, %v4447
        %v5760 = vmax.f32 %v5759, %v4451
        %v5761 = vmax.f32 %v5760, %v4457
        %v5762 = vmax.f32 %v5761, %v4461
        %v5763 = vmax.f32 %v5762, %v4467
        %v5764 = vmax.f32 %v5763, %v4471
        %v5765 = vmax.f32 %v5764, %v4477
        %v5766 = vmax.f32 %v5765, %v4481
        %v5767 = vmax.f32 %v5766, %v4487
        %v5768 = vmax.f32 %v5767, %v4491
        %v5769 = vmax.f32 %v5768, %v4497
        %v5770 = vmax.f32 %v5769, %v4501
        %v5771 = vmax.f32 %v5770, %v4507
        %v5772 = vmax.f32 %v5771, %v4511
        %v5773 = vmax.f32 %v5772, %v4517
        %v5774 = vmax.f32 %v5773, %v4521
        %v5775 = vmax.f32 %v5774, %v4527
        %v5776 = vmax.f32 %v5775, %v4531
        %v5777 = vmax.f32 %v5776, %v4537
        %v5778 = vmax.f32 %v5777, %v4541
        %v5779 = vmax.f32 %v5778, %v4547
        %v5780 = vmax.f32 %v5779, %v4551
        %v5781 = vmax.f32 %v5780, %v4557
        %v5782 = vmax.f32 %v5781, %v4561
        %v5783 = vmax.f32 %v5782, %v4567
        %v5784 = vmax.f32 %v5783, %v4571
        %v5785 = vmax.f32 %v5784, %v4577
        %v5786 = vmax.f32 %v5785, %v4581
        %v5787 = vmax.f32 %v5786, %v4587
        %v5788 = vmax.f32 %v5787, %v4591
        %v5789 = vmax.f32 %v5788, %v4597
        %v5790 = vmax.f32 %v5789, %v4601
        %v5791 = vmax.f32 %v5790, %v4607
        %v5792 = vmax.f32 %v5791, %v4611
        %v5793 = vmax.f32 %v5792, %v4617
        %v5794 = vmax.f32 %v5793, %v4621
        %v5795 = vmax.f32 %v5794, %v4627
        %v5796 = vmax.f32 %v5795, %v4631
        %v5797 = vmax.f32 %v5796, %v4637
        %v5798 = vmax.f32 %v5797, %v4641
        %v5799 = vmax.f32 %v5798, %v4647
        %v5800 = vmax.f32 %v5799, %v4651
        %v5801 = vmax.f32 %v5800, %v4657
        %v5802 = vmax.f32 %v5801, %v4661
        %v5803 = vmax.f32 %v5802, %v4667
        %v5804 = vmax.f32 %v5803, %v4671
        %v5805 = vmax.f32 %v5804, %v4677
        %v5806 = vmax.f32 %v5805, %v4681
        %v5807 = vrot.slane %v5806, 4
        %v5808 = vmax.f32 %v5806, %v5807
        %v5809 = vrot.slane %v5808, 2
        %v5810 = vmax.f32 %v5808, %v5809
        %v5811 = vrot.slane %v5810, 1
        %v5812 = vmax.f32 %v5810, %v5811
        %v5813 = vmax.f32 %v4369, %v4373
        %v5814 = vmax.f32 %v5813, %v4379
        %v5815 = vmax.f32 %v5814, %v4383
        %v5816 = vmax.f32 %v5815, %v4389
        %v5817 = vmax.f32 %v5816, %v4393
        %v5818 = vmax.f32 %v5817, %v4399
        %v5819 = vmax.f32 %v5818, %v4403
        %v5820 = vmax.f32 %v5819, %v4409
        %v5821 = vmax.f32 %v5820, %v4413
        %v5822 = vmax.f32 %v5821, %v4419
        %v5823 = vmax.f32 %v5822, %v4423
        %v5824 = vmax.f32 %v5823, %v4429
        %v5825 = vmax.f32 %v5824, %v4433
        %v5826 = vmax.f32 %v5825, %v4439
        %v5827 = vmax.f32 %v5826, %v4443
        %v5828 = vmax.f32 %v5827, %v4449
        %v5829 = vmax.f32 %v5828, %v4453
        %v5830 = vmax.f32 %v5829, %v4459
        %v5831 = vmax.f32 %v5830, %v4463
        %v5832 = vmax.f32 %v5831, %v4469
        %v5833 = vmax.f32 %v5832, %v4473
        %v5834 = vmax.f32 %v5833, %v4479
        %v5835 = vmax.f32 %v5834, %v4483
        %v5836 = vmax.f32 %v5835, %v4489
        %v5837 = vmax.f32 %v5836, %v4493
        %v5838 = vmax.f32 %v5837, %v4499
        %v5839 = vmax.f32 %v5838, %v4503
        %v5840 = vmax.f32 %v5839, %v4509
        %v5841 = vmax.f32 %v5840, %v4513
        %v5842 = vmax.f32 %v5841, %v4519
        %v5843 = vmax.f32 %v5842, %v4523
        %v5844 = vmax.f32 %v5843, %v4529
        %v5845 = vmax.f32 %v5844, %v4533
        %v5846 = vmax.f32 %v5845, %v4539
        %v5847 = vmax.f32 %v5846, %v4543
        %v5848 = vmax.f32 %v5847, %v4549
        %v5849 = vmax.f32 %v5848, %v4553
        %v5850 = vmax.f32 %v5849, %v4559
        %v5851 = vmax.f32 %v5850, %v4563
        %v5852 = vmax.f32 %v5851, %v4569
        %v5853 = vmax.f32 %v5852, %v4573
        %v5854 = vmax.f32 %v5853, %v4579
        %v5855 = vmax.f32 %v5854, %v4583
        %v5856 = vmax.f32 %v5855, %v4589
        %v5857 = vmax.f32 %v5856, %v4593
        %v5858 = vmax.f32 %v5857, %v4599
        %v5859 = vmax.f32 %v5858, %v4603
        %v5860 = vmax.f32 %v5859, %v4609
        %v5861 = vmax.f32 %v5860, %v4613
        %v5862 = vmax.f32 %v5861, %v4619
        %v5863 = vmax.f32 %v5862, %v4623
        %v5864 = vmax.f32 %v5863, %v4629
        %v5865 = vmax.f32 %v5864, %v4633
        %v5866 = vmax.f32 %v5865, %v4639
        %v5867 = vmax.f32 %v5866, %v4643
        %v5868 = vmax.f32 %v5867, %v4649
        %v5869 = vmax.f32 %v5868, %v4653
        %v5870 = vmax.f32 %v5869, %v4659
        %v5871 = vmax.f32 %v5870, %v4663
        %v5872 = vmax.f32 %v5871, %v4669
        %v5873 = vmax.f32 %v5872, %v4673
        %v5874 = vmax.f32 %v5873, %v4679
        %v5875 = vmax.f32 %v5874, %v4683
        %v5876 = vrot.slane %v5875, 4
        %v5877 = vmax.f32 %v5875, %v5876
        %v5878 = vrot.slane %v5877, 2
        %v5879 = vmax.f32 %v5877, %v5878
        %v5880 = vrot.slane %v5879, 1
        %v5881 = vmax.f32 %v5879, %v5880
        %v5882 = vmax.f32 %v4720, %v4724
        %v5883 = vmax.f32 %v5882, %v4730
        %v5884 = vmax.f32 %v5883, %v4734
        %v5885 = vmax.f32 %v5884, %v4740
        %v5886 = vmax.f32 %v5885, %v4744
        %v5887 = vmax.f32 %v5886, %v4750
        %v5888 = vmax.f32 %v5887, %v4754
        %v5889 = vmax.f32 %v5888, %v4760
        %v5890 = vmax.f32 %v5889, %v4764
        %v5891 = vmax.f32 %v5890, %v4770
        %v5892 = vmax.f32 %v5891, %v4774
        %v5893 = vmax.f32 %v5892, %v4780
        %v5894 = vmax.f32 %v5893, %v4784
        %v5895 = vmax.f32 %v5894, %v4790
        %v5896 = vmax.f32 %v5895, %v4794
        %v5897 = vmax.f32 %v5896, %v4800
        %v5898 = vmax.f32 %v5897, %v4804
        %v5899 = vmax.f32 %v5898, %v4810
        %v5900 = vmax.f32 %v5899, %v4814
        %v5901 = vmax.f32 %v5900, %v4820
        %v5902 = vmax.f32 %v5901, %v4824
        %v5903 = vmax.f32 %v5902, %v4830
        %v5904 = vmax.f32 %v5903, %v4834
        %v5905 = vmax.f32 %v5904, %v4840
        %v5906 = vmax.f32 %v5905, %v4844
        %v5907 = vmax.f32 %v5906, %v4850
        %v5908 = vmax.f32 %v5907, %v4854
        %v5909 = vmax.f32 %v5908, %v4860
        %v5910 = vmax.f32 %v5909, %v4864
        %v5911 = vmax.f32 %v5910, %v4870
        %v5912 = vmax.f32 %v5911, %v4874
        %v5913 = vmax.f32 %v5912, %v4880
        %v5914 = vmax.f32 %v5913, %v4884
        %v5915 = vmax.f32 %v5914, %v4890
        %v5916 = vmax.f32 %v5915, %v4894
        %v5917 = vmax.f32 %v5916, %v4900
        %v5918 = vmax.f32 %v5917, %v4904
        %v5919 = vmax.f32 %v5918, %v4910
        %v5920 = vmax.f32 %v5919, %v4914
        %v5921 = vmax.f32 %v5920, %v4920
        %v5922 = vmax.f32 %v5921, %v4924
        %v5923 = vmax.f32 %v5922, %v4930
        %v5924 = vmax.f32 %v5923, %v4934
        %v5925 = vmax.f32 %v5924, %v4940
        %v5926 = vmax.f32 %v5925, %v4944
        %v5927 = vmax.f32 %v5926, %v4950
        %v5928 = vmax.f32 %v5927, %v4954
        %v5929 = vmax.f32 %v5928, %v4960
        %v5930 = vmax.f32 %v5929, %v4964
        %v5931 = vmax.f32 %v5930, %v4970
        %v5932 = vmax.f32 %v5931, %v4974
        %v5933 = vmax.f32 %v5932, %v4980
        %v5934 = vmax.f32 %v5933, %v4984
        %v5935 = vmax.f32 %v5934, %v4990
        %v5936 = vmax.f32 %v5935, %v4994
        %v5937 = vmax.f32 %v5936, %v5000
        %v5938 = vmax.f32 %v5937, %v5004
        %v5939 = vmax.f32 %v5938, %v5010
        %v5940 = vmax.f32 %v5939, %v5014
        %v5941 = vmax.f32 %v5940, %v5020
        %v5942 = vmax.f32 %v5941, %v5024
        %v5943 = vmax.f32 %v5942, %v5030
        %v5944 = vmax.f32 %v5943, %v5034
        %v5945 = vrot.slane %v5944, 4
        %v5946 = vmax.f32 %v5944, %v5945
        %v5947 = vrot.slane %v5946, 2
        %v5948 = vmax.f32 %v5946, %v5947
        %v5949 = vrot.slane %v5948, 1
        %v5950 = vmax.f32 %v5948, %v5949
        %v5951 = vmax.f32 %v4722, %v4726
        %v5952 = vmax.f32 %v5951, %v4732
        %v5953 = vmax.f32 %v5952, %v4736
        %v5954 = vmax.f32 %v5953, %v4742
        %v5955 = vmax.f32 %v5954, %v4746
        %v5956 = vmax.f32 %v5955, %v4752
        %v5957 = vmax.f32 %v5956, %v4756
        %v5958 = vmax.f32 %v5957, %v4762
        %v5959 = vmax.f32 %v5958, %v4766
        %v5960 = vmax.f32 %v5959, %v4772
        %v5961 = vmax.f32 %v5960, %v4776
        %v5962 = vmax.f32 %v5961, %v4782
        %v5963 = vmax.f32 %v5962, %v4786
        %v5964 = vmax.f32 %v5963, %v4792
        %v5965 = vmax.f32 %v5964, %v4796
        %v5966 = vmax.f32 %v5965, %v4802
        %v5967 = vmax.f32 %v5966, %v4806
        %v5968 = vmax.f32 %v5967, %v4812
        %v5969 = vmax.f32 %v5968, %v4816
        %v5970 = vmax.f32 %v5969, %v4822
        %v5971 = vmax.f32 %v5970, %v4826
        %v5972 = vmax.f32 %v5971, %v4832
        %v5973 = vmax.f32 %v5972, %v4836
        %v5974 = vmax.f32 %v5973, %v4842
        %v5975 = vmax.f32 %v5974, %v4846
        %v5976 = vmax.f32 %v5975, %v4852
        %v5977 = vmax.f32 %v5976, %v4856
        %v5978 = vmax.f32 %v5977, %v4862
        %v5979 = vmax.f32 %v5978, %v4866
        %v5980 = vmax.f32 %v5979, %v4872
        %v5981 = vmax.f32 %v5980, %v4876
        %v5982 = vmax.f32 %v5981, %v4882
        %v5983 = vmax.f32 %v5982, %v4886
        %v5984 = vmax.f32 %v5983, %v4892
        %v5985 = vmax.f32 %v5984, %v4896
        %v5986 = vmax.f32 %v5985, %v4902
        %v5987 = vmax.f32 %v5986, %v4906
        %v5988 = vmax.f32 %v5987, %v4912
        %v5989 = vmax.f32 %v5988, %v4916
        %v5990 = vmax.f32 %v5989, %v4922
        %v5991 = vmax.f32 %v5990, %v4926
        %v5992 = vmax.f32 %v5991, %v4932
        %v5993 = vmax.f32 %v5992, %v4936
        %v5994 = vmax.f32 %v5993, %v4942
        %v5995 = vmax.f32 %v5994, %v4946
        %v5996 = vmax.f32 %v5995, %v4952
        %v5997 = vmax.f32 %v5996, %v4956
        %v5998 = vmax.f32 %v5997, %v4962
        %v5999 = vmax.f32 %v5998, %v4966
        %v6000 = vmax.f32 %v5999, %v4972
        %v6001 = vmax.f32 %v6000, %v4976
        %v6002 = vmax.f32 %v6001, %v4982
        %v6003 = vmax.f32 %v6002, %v4986
        %v6004 = vmax.f32 %v6003, %v4992
        %v6005 = vmax.f32 %v6004, %v4996
        %v6006 = vmax.f32 %v6005, %v5002
        %v6007 = vmax.f32 %v6006, %v5006
        %v6008 = vmax.f32 %v6007, %v5012
        %v6009 = vmax.f32 %v6008, %v5016
        %v6010 = vmax.f32 %v6009, %v5022
        %v6011 = vmax.f32 %v6010, %v5026
        %v6012 = vmax.f32 %v6011, %v5032
        %v6013 = vmax.f32 %v6012, %v5036
        %v6014 = vrot.slane %v6013, 4
        %v6015 = vmax.f32 %v6013, %v6014
        %v6016 = vrot.slane %v6015, 2
        %v6017 = vmax.f32 %v6015, %v6016
        %v6018 = vrot.slane %v6017, 1
        %v6019 = vmax.f32 %v6017, %v6018
        %v6020 = vmax.f32 %v5073, %v5077
        %v6021 = vmax.f32 %v6020, %v5083
        %v6022 = vmax.f32 %v6021, %v5087
        %v6023 = vmax.f32 %v6022, %v5093
        %v6024 = vmax.f32 %v6023, %v5097
        %v6025 = vmax.f32 %v6024, %v5103
        %v6026 = vmax.f32 %v6025, %v5107
        %v6027 = vmax.f32 %v6026, %v5113
        %v6028 = vmax.f32 %v6027, %v5117
        %v6029 = vmax.f32 %v6028, %v5123
        %v6030 = vmax.f32 %v6029, %v5127
        %v6031 = vmax.f32 %v6030, %v5133
        %v6032 = vmax.f32 %v6031, %v5137
        %v6033 = vmax.f32 %v6032, %v5143
        %v6034 = vmax.f32 %v6033, %v5147
        %v6035 = vmax.f32 %v6034, %v5153
        %v6036 = vmax.f32 %v6035, %v5157
        %v6037 = vmax.f32 %v6036, %v5163
        %v6038 = vmax.f32 %v6037, %v5167
        %v6039 = vmax.f32 %v6038, %v5173
        %v6040 = vmax.f32 %v6039, %v5177
        %v6041 = vmax.f32 %v6040, %v5183
        %v6042 = vmax.f32 %v6041, %v5187
        %v6043 = vmax.f32 %v6042, %v5193
        %v6044 = vmax.f32 %v6043, %v5197
        %v6045 = vmax.f32 %v6044, %v5203
        %v6046 = vmax.f32 %v6045, %v5207
        %v6047 = vmax.f32 %v6046, %v5213
        %v6048 = vmax.f32 %v6047, %v5217
        %v6049 = vmax.f32 %v6048, %v5223
        %v6050 = vmax.f32 %v6049, %v5227
        %v6051 = vmax.f32 %v6050, %v5233
        %v6052 = vmax.f32 %v6051, %v5237
        %v6053 = vmax.f32 %v6052, %v5243
        %v6054 = vmax.f32 %v6053, %v5247
        %v6055 = vmax.f32 %v6054, %v5253
        %v6056 = vmax.f32 %v6055, %v5257
        %v6057 = vmax.f32 %v6056, %v5263
        %v6058 = vmax.f32 %v6057, %v5267
        %v6059 = vmax.f32 %v6058, %v5273
        %v6060 = vmax.f32 %v6059, %v5277
        %v6061 = vmax.f32 %v6060, %v5283
        %v6062 = vmax.f32 %v6061, %v5287
        %v6063 = vmax.f32 %v6062, %v5293
        %v6064 = vmax.f32 %v6063, %v5297
        %v6065 = vmax.f32 %v6064, %v5303
        %v6066 = vmax.f32 %v6065, %v5307
        %v6067 = vmax.f32 %v6066, %v5313
        %v6068 = vmax.f32 %v6067, %v5317
        %v6069 = vmax.f32 %v6068, %v5323
        %v6070 = vmax.f32 %v6069, %v5327
        %v6071 = vmax.f32 %v6070, %v5333
        %v6072 = vmax.f32 %v6071, %v5337
        %v6073 = vmax.f32 %v6072, %v5343
        %v6074 = vmax.f32 %v6073, %v5347
        %v6075 = vmax.f32 %v6074, %v5353
        %v6076 = vmax.f32 %v6075, %v5357
        %v6077 = vmax.f32 %v6076, %v5363
        %v6078 = vmax.f32 %v6077, %v5367
        %v6079 = vmax.f32 %v6078, %v5373
        %v6080 = vmax.f32 %v6079, %v5377
        %v6081 = vmax.f32 %v6080, %v5383
        %v6082 = vmax.f32 %v6081, %v5387
        %v6083 = vrot.slane %v6082, 4
        %v6084 = vmax.f32 %v6082, %v6083
        %v6085 = vrot.slane %v6084, 2
        %v6086 = vmax.f32 %v6084, %v6085
        %v6087 = vrot.slane %v6086, 1
        %v6088 = vmax.f32 %v6086, %v6087
        %v6089 = vmax.f32 %v5075, %v5079
        %v6090 = vmax.f32 %v6089, %v5085
        %v6091 = vmax.f32 %v6090, %v5089
        %v6092 = vmax.f32 %v6091, %v5095
        %v6093 = vmax.f32 %v6092, %v5099
        %v6094 = vmax.f32 %v6093, %v5105
        %v6095 = vmax.f32 %v6094, %v5109
        %v6096 = vmax.f32 %v6095, %v5115
        %v6097 = vmax.f32 %v6096, %v5119
        %v6098 = vmax.f32 %v6097, %v5125
        %v6099 = vmax.f32 %v6098, %v5129
        %v6100 = vmax.f32 %v6099, %v5135
        %v6101 = vmax.f32 %v6100, %v5139
        %v6102 = vmax.f32 %v6101, %v5145
        %v6103 = vmax.f32 %v6102, %v5149
        %v6104 = vmax.f32 %v6103, %v5155
        %v6105 = vmax.f32 %v6104, %v5159
        %v6106 = vmax.f32 %v6105, %v5165
        %v6107 = vmax.f32 %v6106, %v5169
        %v6108 = vmax.f32 %v6107, %v5175
        %v6109 = vmax.f32 %v6108, %v5179
        %v6110 = vmax.f32 %v6109, %v5185
        %v6111 = vmax.f32 %v6110, %v5189
        %v6112 = vmax.f32 %v6111, %v5195
        %v6113 = vmax.f32 %v6112, %v5199
        %v6114 = vmax.f32 %v6113, %v5205
        %v6115 = vmax.f32 %v6114, %v5209
        %v6116 = vmax.f32 %v6115, %v5215
        %v6117 = vmax.f32 %v6116, %v5219
        %v6118 = vmax.f32 %v6117, %v5225
        %v6119 = vmax.f32 %v6118, %v5229
        %v6120 = vmax.f32 %v6119, %v5235
        %v6121 = vmax.f32 %v6120, %v5239
        %v6122 = vmax.f32 %v6121, %v5245
        %v6123 = vmax.f32 %v6122, %v5249
        %v6124 = vmax.f32 %v6123, %v5255
        %v6125 = vmax.f32 %v6124, %v5259
        %v6126 = vmax.f32 %v6125, %v5265
        %v6127 = vmax.f32 %v6126, %v5269
        %v6128 = vmax.f32 %v6127, %v5275
        %v6129 = vmax.f32 %v6128, %v5279
        %v6130 = vmax.f32 %v6129, %v5285
        %v6131 = vmax.f32 %v6130, %v5289
        %v6132 = vmax.f32 %v6131, %v5295
        %v6133 = vmax.f32 %v6132, %v5299
        %v6134 = vmax.f32 %v6133, %v5305
        %v6135 = vmax.f32 %v6134, %v5309
        %v6136 = vmax.f32 %v6135, %v5315
        %v6137 = vmax.f32 %v6136, %v5319
        %v6138 = vmax.f32 %v6137, %v5325
        %v6139 = vmax.f32 %v6138, %v5329
        %v6140 = vmax.f32 %v6139, %v5335
        %v6141 = vmax.f32 %v6140, %v5339
        %v6142 = vmax.f32 %v6141, %v5345
        %v6143 = vmax.f32 %v6142, %v5349
        %v6144 = vmax.f32 %v6143, %v5355
        %v6145 = vmax.f32 %v6144, %v5359
        %v6146 = vmax.f32 %v6145, %v5365
        %v6147 = vmax.f32 %v6146, %v5369
        %v6148 = vmax.f32 %v6147, %v5375
        %v6149 = vmax.f32 %v6148, %v5379
        %v6150 = vmax.f32 %v6149, %v5385
        %v6151 = vmax.f32 %v6150, %v5389
        %v6152 = vrot.slane %v6151, 4
        %v6153 = vmax.f32 %v6151, %v6152
        %v6154 = vrot.slane %v6153, 2
        %v6155 = vmax.f32 %v6153, %v6154
        %v6156 = vrot.slane %v6155, 1
        %v6157 = vmax.f32 %v6155, %v6156
        %v6158 = vmax.f32 %v5426, %v5430
        %v6159 = vmax.f32 %v6158, %v5436
        %v6160 = vmax.f32 %v6159, %v5440
        %v6161 = vmax.f32 %v6160, %v5446
        %v6162 = vmax.f32 %v6161, %v5450
        %v6163 = vmax.f32 %v6162, %v5456
        %v6164 = vmax.f32 %v6163, %v5460
        %v6165 = vmax.f32 %v6164, %v5466
        %v6166 = vmax.f32 %v6165, %v5470
        %v6167 = vmax.f32 %v6166, %v5476
        %v6168 = vmax.f32 %v6167, %v5480
        %v6169 = vmax.f32 %v6168, %v5486
        %v6170 = vmax.f32 %v6169, %v5490
        %v6171 = vmax.f32 %v6170, %v5496
        %v6172 = vmax.f32 %v6171, %v5500
        %v6173 = vmax.f32 %v6172, %v5506
        %v6174 = vmax.f32 %v6173, %v5510
        %v6175 = vmax.f32 %v6174, %v5516
        %v6176 = vmax.f32 %v6175, %v5520
        %v6177 = vmax.f32 %v6176, %v5526
        %v6178 = vmax.f32 %v6177, %v5530
        %v6179 = vmax.f32 %v6178, %v5536
        %v6180 = vmax.f32 %v6179, %v5540
        %v6181 = vmax.f32 %v6180, %v5546
        %v6182 = vmax.f32 %v6181, %v5550
        %v6183 = vmax.f32 %v6182, %v5556
        %v6184 = vmax.f32 %v6183, %v5560
        %v6185 = vmax.f32 %v6184, %v5566
        %v6186 = vmax.f32 %v6185, %v5570
        %v6187 = vmax.f32 %v6186, %v5576
        %v6188 = vmax.f32 %v6187, %v5580
        %v6189 = vmax.f32 %v6188, %v5586
        %v6190 = vmax.f32 %v6189, %v5590
        %v6191 = vmax.f32 %v6190, %v5596
        %v6192 = vmax.f32 %v6191, %v5600
        %v6193 = vmax.f32 %v6192, %v5606
        %v6194 = vmax.f32 %v6193, %v5610
        %v6195 = vmax.f32 %v6194, %v5616
        %v6196 = vmax.f32 %v6195, %v5620
        %v6197 = vmax.f32 %v6196, %v5626
        %v6198 = vmax.f32 %v6197, %v5630
        %v6199 = vmax.f32 %v6198, %v5636
        %v6200 = vmax.f32 %v6199, %v5640
        %v6201 = vmax.f32 %v6200, %v5646
        %v6202 = vmax.f32 %v6201, %v5650
        %v6203 = vmax.f32 %v6202, %v5656
        %v6204 = vmax.f32 %v6203, %v5660
        %v6205 = vmax.f32 %v6204, %v5666
        %v6206 = vmax.f32 %v6205, %v5670
        %v6207 = vmax.f32 %v6206, %v5676
        %v6208 = vmax.f32 %v6207, %v5680
        %v6209 = vmax.f32 %v6208, %v5686
        %v6210 = vmax.f32 %v6209, %v5690
        %v6211 = vmax.f32 %v6210, %v5696
        %v6212 = vmax.f32 %v6211, %v5700
        %v6213 = vmax.f32 %v6212, %v5706
        %v6214 = vmax.f32 %v6213, %v5710
        %v6215 = vmax.f32 %v6214, %v5716
        %v6216 = vmax.f32 %v6215, %v5720
        %v6217 = vmax.f32 %v6216, %v5726
        %v6218 = vmax.f32 %v6217, %v5730
        %v6219 = vmax.f32 %v6218, %v5736
        %v6220 = vmax.f32 %v6219, %v5740
        %v6221 = vrot.slane %v6220, 4
        %v6222 = vmax.f32 %v6220, %v6221
        %v6223 = vrot.slane %v6222, 2
        %v6224 = vmax.f32 %v6222, %v6223
        %v6225 = vrot.slane %v6224, 1
        %v6226 = vmax.f32 %v6224, %v6225
        %v6227 = vmax.f32 %v5428, %v5432
        %v6228 = vmax.f32 %v6227, %v5438
        %v6229 = vmax.f32 %v6228, %v5442
        %v6230 = vmax.f32 %v6229, %v5448
        %v6231 = vmax.f32 %v6230, %v5452
        %v6232 = vmax.f32 %v6231, %v5458
        %v6233 = vmax.f32 %v6232, %v5462
        %v6234 = vmax.f32 %v6233, %v5468
        %v6235 = vmax.f32 %v6234, %v5472
        %v6236 = vmax.f32 %v6235, %v5478
        %v6237 = vmax.f32 %v6236, %v5482
        %v6238 = vmax.f32 %v6237, %v5488
        %v6239 = vmax.f32 %v6238, %v5492
        %v6240 = vmax.f32 %v6239, %v5498
        %v6241 = vmax.f32 %v6240, %v5502
        %v6242 = vmax.f32 %v6241, %v5508
        %v6243 = vmax.f32 %v6242, %v5512
        %v6244 = vmax.f32 %v6243, %v5518
        %v6245 = vmax.f32 %v6244, %v5522
        %v6246 = vmax.f32 %v6245, %v5528
        %v6247 = vmax.f32 %v6246, %v5532
        %v6248 = vmax.f32 %v6247, %v5538
        %v6249 = vmax.f32 %v6248, %v5542
        %v6250 = vmax.f32 %v6249, %v5548
        %v6251 = vmax.f32 %v6250, %v5552
        %v6252 = vmax.f32 %v6251, %v5558
        %v6253 = vmax.f32 %v6252, %v5562
        %v6254 = vmax.f32 %v6253, %v5568
        %v6255 = vmax.f32 %v6254, %v5572
        %v6256 = vmax.f32 %v6255, %v5578
        %v6257 = vmax.f32 %v6256, %v5582
        %v6258 = vmax.f32 %v6257, %v5588
        %v6259 = vmax.f32 %v6258, %v5592
        %v6260 = vmax.f32 %v6259, %v5598
        %v6261 = vmax.f32 %v6260, %v5602
        %v6262 = vmax.f32 %v6261, %v5608
        %v6263 = vmax.f32 %v6262, %v5612
        %v6264 = vmax.f32 %v6263, %v5618
        %v6265 = vmax.f32 %v6264, %v5622
        %v6266 = vmax.f32 %v6265, %v5628
        %v6267 = vmax.f32 %v6266, %v5632
        %v6268 = vmax.f32 %v6267, %v5638
        %v6269 = vmax.f32 %v6268, %v5642
        %v6270 = vmax.f32 %v6269, %v5648
        %v6271 = vmax.f32 %v6270, %v5652
        %v6272 = vmax.f32 %v6271, %v5658
        %v6273 = vmax.f32 %v6272, %v5662
        %v6274 = vmax.f32 %v6273, %v5668
        %v6275 = vmax.f32 %v6274, %v5672
        %v6276 = vmax.f32 %v6275, %v5678
        %v6277 = vmax.f32 %v6276, %v5682
        %v6278 = vmax.f32 %v6277, %v5688
        %v6279 = vmax.f32 %v6278, %v5692
        %v6280 = vmax.f32 %v6279, %v5698
        %v6281 = vmax.f32 %v6280, %v5702
        %v6282 = vmax.f32 %v6281, %v5708
        %v6283 = vmax.f32 %v6282, %v5712
        %v6284 = vmax.f32 %v6283, %v5718
        %v6285 = vmax.f32 %v6284, %v5722
        %v6286 = vmax.f32 %v6285, %v5728
        %v6287 = vmax.f32 %v6286, %v5732
        %v6288 = vmax.f32 %v6287, %v5738
        %v6289 = vmax.f32 %v6288, %v5742
        %v6290 = vrot.slane %v6289, 4
        %v6291 = vmax.f32 %v6289, %v6290
        %v6292 = vrot.slane %v6291, 2
        %v6293 = vmax.f32 %v6291, %v6292
        %v6294 = vrot.slane %v6293, 1
        %v6295 = vmax.f32 %v6293, %v6294
        %p6296 = scmp.eq.s32.totalorder %s34, 0
        // Predicated region
        $region85: #{tpu_custom_call.1} parent=71 // pred_check
          %p6297 = pneg %p6296
        $region86: #{tpu_custom_call.1} parent=71 // pred_check_branch
          %6299 = sbr.rel (%p6297) target = $region88
        $region87: #{tpu_custom_call.1} parent=71 // pred_region
          %6300 = vst [vmem:[#allocation2] sm:$0xff] -inf
        $region88: #{tpu_custom_call.1} parent=71 // pred_fallthru
          _
        %v6301 = vld [vmem:[#allocation2] sm:$0xff]
        %v6310 = vcombine.low %v5812, %v5881
        %v6311 = vcombine.low %v5950, %v6019
        %v6312 = vcombine.low %v6088, %v6157
        %v6313 = vcombine.low %v6226, %v6295
        %v6315 = vunpack.c.l.s4 1966171168
        %v6316 = vunpack.c.0.s8 %v6315
        %v6317 = vlaneseq
        %v6318 = vshrl.u32 %v6317, 7
        %v6319 = vsub.s32 %v6316, %v6318
        %v6320 = vrot.slane %v6310, %v6319
        %v6322 = vunpack.c.l.s4 1966171168
        %v6323 = vunpack.c.0.s8 %v6322
        %v6324 = vlaneseq
        %v6325 = vshrl.u32 %v6324, 7
        %v6326 = vsub.s32 %v6323, %v6325
        %v6327 = vrot.slane %v6311, %v6326
        %v6329 = vunpack.c.l.s4 1966171168
        %v6330 = vunpack.c.0.s8 %v6329
        %v6331 = vlaneseq
        %v6332 = vshrl.u32 %v6331, 7
        %v6333 = vsub.s32 %v6330, %v6332
        %v6334 = vrot.slane %v6312, %v6333
        %v6336 = vunpack.c.l.s4 1966171168
        %v6337 = vunpack.c.0.s8 %v6336
        %v6338 = vlaneseq
        %v6339 = vshrl.u32 %v6338, 7
        %v6340 = vsub.s32 %v6337, %v6339
        %v6341 = vrot.slane %v6313, %v6340
        %v6342 = vcombine.low %v6320, %v6327
        %v6343 = vcombine.low %v6334, %v6341
        %v6345 = vunpack.c.l.s4 1966171168
        %v6346 = vunpack.c.0.s8 %v6345
        %v6347 = vlaneseq
        %v6348 = vshrl.u32 %v6347, 7
        %v6349 = vsub.s32 %v6346, %v6348
        %v6350 = vrot.slane %v6342, %v6349
        %v6352 = vunpack.c.l.s4 1966171168
        %v6353 = vunpack.c.0.s8 %v6352
        %v6354 = vlaneseq
        %v6355 = vshrl.u32 %v6354, 7
        %v6356 = vsub.s32 %v6353, %v6355
        %v6357 = vrot.slane %v6343, %v6356
        %v6358 = vcombine.low %v6350, %v6357
        %v6360 = vmax.f32 %v6301, %v6358
        %6361 = vst [vmem:[#allocation2] sm:$0xff] %v6360
        // Predicated region
        $region89: #{tpu_custom_call.1} parent=71 // pred_check
          %p6362 = pneg %p6296
        $region90: #{tpu_custom_call.1} parent=71 // pred_check_branch
          %6364 = sbr.rel (%p6362) target = $region92
        $region91: #{tpu_custom_call.1} parent=71 // pred_region
          %v6365 = vld [vmem:[#allocation2] sm:$0xff]
          %v6367 = vlaneseq
          %v6368 = vshrl.u32 %v6367, 7
          %v6369 = vsub.s32 0, %v6368
          %v6370 = vrot.slane %v6365, %v6369
          %v6371 = vlaneseq
          %v6372 = vshrl.u32 %v6371, 7
          %v6373 = vsub.s32 1, %v6372
          %v6374 = vrot.slane %v6365, %v6373
          %v6375 = vlaneseq
          %v6376 = vshrl.u32 %v6375, 7
          %v6377 = vsub.s32 2, %v6376
          %v6378 = vrot.slane %v6365, %v6377
          %v6379 = vlaneseq
          %v6380 = vshrl.u32 %v6379, 7
          %v6381 = vsub.s32 3, %v6380
          %v6382 = vrot.slane %v6365, %v6381
          %v6383 = vlaneseq
          %v6384 = vshrl.u32 %v6383, 7
          %v6385 = vsub.s32 4, %v6384
          %v6386 = vrot.slane %v6365, %v6385
          %v6387 = vlaneseq
          %v6388 = vshrl.u32 %v6387, 7
          %v6389 = vsub.s32 5, %v6388
          %v6390 = vrot.slane %v6365, %v6389
          %v6391 = vlaneseq
          %v6392 = vshrl.u32 %v6391, 7
          %v6393 = vsub.s32 6, %v6392
          %v6394 = vrot.slane %v6365, %v6393
          %v6395 = vlaneseq
          %v6396 = vshrl.u32 %v6395, 7
          %v6397 = vsub.s32 7, %v6396
          %v6398 = vrot.slane %v6365, %v6397
          %v6407 = vpack.c.bf16 %v6370, %v6370
          %v6408 = vpack.c.bf16 %v6374, %v6374
          %v6409 = vpack.c.bf16 %v6378, %v6378
          %v6410 = vpack.c.bf16 %v6382, %v6382
          %v6411 = vpack.c.bf16 %v6386, %v6386
          %v6412 = vpack.c.bf16 %v6390, %v6390
          %v6413 = vpack.c.bf16 %v6394, %v6394
          %v6414 = vpack.c.bf16 %v6398, %v6398
          %v6415 = vld [vmem:[#allocation8] sm:$0xff]
          %v6416 = vld [vmem:[#allocation8 + $0x8] sm:$0xff]
          %v6417 = vld [vmem:[#allocation8 + $0x10] sm:$0xff]
          %v6418 = vld [vmem:[#allocation8 + $0x18] sm:$0xff]
          %v6419 = vld [vmem:[#allocation8 + $0x20] sm:$0xff]
          %v6420 = vld [vmem:[#allocation8 + $0x28] sm:$0xff]
          %v6421 = vld [vmem:[#allocation8 + $0x30] sm:$0xff]
          %v6422 = vld [vmem:[#allocation8 + $0x38] sm:$0xff]
          %v6423 = vld [vmem:[#allocation8 + $0x40] sm:$0xff]
          %v6424 = vld [vmem:[#allocation8 + $0x48] sm:$0xff]
          %v6425 = vld [vmem:[#allocation8 + $0x50] sm:$0xff]
          %v6426 = vld [vmem:[#allocation8 + $0x58] sm:$0xff]
          %v6427 = vld [vmem:[#allocation8 + $0x60] sm:$0xff]
          %v6428 = vld [vmem:[#allocation8 + $0x68] sm:$0xff]
          %v6429 = vld [vmem:[#allocation8 + $0x70] sm:$0xff]
          %v6430 = vld [vmem:[#allocation8 + $0x78] sm:$0xff]
          %v6431 = vld [vmem:[#allocation8 + $0x80] sm:$0xff]
          %v6432 = vld [vmem:[#allocation8 + $0x88] sm:$0xff]
          %v6433 = vld [vmem:[#allocation8 + $0x90] sm:$0xff]
          %v6434 = vld [vmem:[#allocation8 + $0x98] sm:$0xff]
          %v6435 = vld [vmem:[#allocation8 + $0xa0] sm:$0xff]
          %v6436 = vld [vmem:[#allocation8 + $0xa8] sm:$0xff]
          %v6437 = vld [vmem:[#allocation8 + $0xb0] sm:$0xff]
          %v6438 = vld [vmem:[#allocation8 + $0xb8] sm:$0xff]
          %v6439 = vld [vmem:[#allocation8 + $0xc0] sm:$0xff]
          %v6440 = vld [vmem:[#allocation8 + $0xc8] sm:$0xff]
          %v6441 = vld [vmem:[#allocation8 + $0xd0] sm:$0xff]
          %v6442 = vld [vmem:[#allocation8 + $0xd8] sm:$0xff]
          %v6443 = vld [vmem:[#allocation8 + $0xe0] sm:$0xff]
          %v6444 = vld [vmem:[#allocation8 + $0xe8] sm:$0xff]
          %v6445 = vld [vmem:[#allocation8 + $0xf0] sm:$0xff]
          %v6446 = vld [vmem:[#allocation8 + $0xf8] sm:$0xff]
          %v6447 = vld [vmem:[#allocation8 + $0x100] sm:$0xff]
          %v6448 = vld [vmem:[#allocation8 + $0x108] sm:$0xff]
          %v6449 = vld [vmem:[#allocation8 + $0x110] sm:$0xff]
          %v6450 = vld [vmem:[#allocation8 + $0x118] sm:$0xff]
          %v6451 = vld [vmem:[#allocation8 + $0x120] sm:$0xff]
          %v6452 = vld [vmem:[#allocation8 + $0x128] sm:$0xff]
          %v6453 = vld [vmem:[#allocation8 + $0x130] sm:$0xff]
          %v6454 = vld [vmem:[#allocation8 + $0x138] sm:$0xff]
          %v6455 = vld [vmem:[#allocation8 + $0x140] sm:$0xff]
          %v6456 = vld [vmem:[#allocation8 + $0x148] sm:$0xff]
          %v6457 = vld [vmem:[#allocation8 + $0x150] sm:$0xff]
          %v6458 = vld [vmem:[#allocation8 + $0x158] sm:$0xff]
          %v6459 = vld [vmem:[#allocation8 + $0x160] sm:$0xff]
          %v6460 = vld [vmem:[#allocation8 + $0x168] sm:$0xff]
          %v6461 = vld [vmem:[#allocation8 + $0x170] sm:$0xff]
          %v6462 = vld [vmem:[#allocation8 + $0x178] sm:$0xff]
          %v6463 = vld [vmem:[#allocation8 + $0x180] sm:$0xff]
          %v6464 = vld [vmem:[#allocation8 + $0x188] sm:$0xff]
          %v6465 = vld [vmem:[#allocation8 + $0x190] sm:$0xff]
          %v6466 = vld [vmem:[#allocation8 + $0x198] sm:$0xff]
          %v6467 = vld [vmem:[#allocation8 + $0x1a0] sm:$0xff]
          %v6468 = vld [vmem:[#allocation8 + $0x1a8] sm:$0xff]
          %v6469 = vld [vmem:[#allocation8 + $0x1b0] sm:$0xff]
          %v6470 = vld [vmem:[#allocation8 + $0x1b8] sm:$0xff]
          %v6471 = vld [vmem:[#allocation8 + $0x1c0] sm:$0xff]
          %v6472 = vld [vmem:[#allocation8 + $0x1c8] sm:$0xff]
          %v6473 = vld [vmem:[#allocation8 + $0x1d0] sm:$0xff]
          %v6474 = vld [vmem:[#allocation8 + $0x1d8] sm:$0xff]
          %v6475 = vld [vmem:[#allocation8 + $0x1e0] sm:$0xff]
          %v6476 = vld [vmem:[#allocation8 + $0x1e8] sm:$0xff]
          %v6477 = vld [vmem:[#allocation8 + $0x1f0] sm:$0xff]
          %v6478 = vld [vmem:[#allocation8 + $0x1f8] sm:$0xff]
          %v6479 = vld [vmem:[#allocation8 + $0x200] sm:$0xff]
          %v6480 = vld [vmem:[#allocation8 + $0x208] sm:$0xff]
          %v6481 = vld [vmem:[#allocation8 + $0x210] sm:$0xff]
          %v6482 = vld [vmem:[#allocation8 + $0x218] sm:$0xff]
          %v6483 = vld [vmem:[#allocation8 + $0x220] sm:$0xff]
          %v6484 = vld [vmem:[#allocation8 + $0x228] sm:$0xff]
          %v6485 = vld [vmem:[#allocation8 + $0x230] sm:$0xff]
          %v6486 = vld [vmem:[#allocation8 + $0x238] sm:$0xff]
          %v6487 = vld [vmem:[#allocation8 + $0x240] sm:$0xff]
          %v6488 = vld [vmem:[#allocation8 + $0x248] sm:$0xff]
          %v6489 = vld [vmem:[#allocation8 + $0x250] sm:$0xff]
          %v6490 = vld [vmem:[#allocation8 + $0x258] sm:$0xff]
          %v6491 = vld [vmem:[#allocation8 + $0x260] sm:$0xff]
          %v6492 = vld [vmem:[#allocation8 + $0x268] sm:$0xff]
          %v6493 = vld [vmem:[#allocation8 + $0x270] sm:$0xff]
          %v6494 = vld [vmem:[#allocation8 + $0x278] sm:$0xff]
          %v6495 = vld [vmem:[#allocation8 + $0x280] sm:$0xff]
          %v6496 = vld [vmem:[#allocation8 + $0x288] sm:$0xff]
          %v6497 = vld [vmem:[#allocation8 + $0x290] sm:$0xff]
          %v6498 = vld [vmem:[#allocation8 + $0x298] sm:$0xff]
          %v6499 = vld [vmem:[#allocation8 + $0x2a0] sm:$0xff]
          %v6500 = vld [vmem:[#allocation8 + $0x2a8] sm:$0xff]
          %v6501 = vld [vmem:[#allocation8 + $0x2b0] sm:$0xff]
          %v6502 = vld [vmem:[#allocation8 + $0x2b8] sm:$0xff]
          %v6503 = vld [vmem:[#allocation8 + $0x2c0] sm:$0xff]
          %v6504 = vld [vmem:[#allocation8 + $0x2c8] sm:$0xff]
          %v6505 = vld [vmem:[#allocation8 + $0x2d0] sm:$0xff]
          %v6506 = vld [vmem:[#allocation8 + $0x2d8] sm:$0xff]
          %v6507 = vld [vmem:[#allocation8 + $0x2e0] sm:$0xff]
          %v6508 = vld [vmem:[#allocation8 + $0x2e8] sm:$0xff]
          %v6509 = vld [vmem:[#allocation8 + $0x2f0] sm:$0xff]
          %v6510 = vld [vmem:[#allocation8 + $0x2f8] sm:$0xff]
          %v6511 = vld [vmem:[#allocation8 + $0x300] sm:$0xff]
          %v6512 = vld [vmem:[#allocation8 + $0x308] sm:$0xff]
          %v6513 = vld [vmem:[#allocation8 + $0x310] sm:$0xff]
          %v6514 = vld [vmem:[#allocation8 + $0x318] sm:$0xff]
          %v6515 = vld [vmem:[#allocation8 + $0x320] sm:$0xff]
          %v6516 = vld [vmem:[#allocation8 + $0x328] sm:$0xff]
          %v6517 = vld [vmem:[#allocation8 + $0x330] sm:$0xff]
          %v6518 = vld [vmem:[#allocation8 + $0x338] sm:$0xff]
          %v6519 = vld [vmem:[#allocation8 + $0x340] sm:$0xff]
          %v6520 = vld [vmem:[#allocation8 + $0x348] sm:$0xff]
          %v6521 = vld [vmem:[#allocation8 + $0x350] sm:$0xff]
          %v6522 = vld [vmem:[#allocation8 + $0x358] sm:$0xff]
          %v6523 = vld [vmem:[#allocation8 + $0x360] sm:$0xff]
          %v6524 = vld [vmem:[#allocation8 + $0x368] sm:$0xff]
          %v6525 = vld [vmem:[#allocation8 + $0x370] sm:$0xff]
          %v6526 = vld [vmem:[#allocation8 + $0x378] sm:$0xff]
          %v6527 = vld [vmem:[#allocation8 + $0x380] sm:$0xff]
          %v6528 = vld [vmem:[#allocation8 + $0x388] sm:$0xff]
          %v6529 = vld [vmem:[#allocation8 + $0x390] sm:$0xff]
          %v6530 = vld [vmem:[#allocation8 + $0x398] sm:$0xff]
          %v6531 = vld [vmem:[#allocation8 + $0x3a0] sm:$0xff]
          %v6532 = vld [vmem:[#allocation8 + $0x3a8] sm:$0xff]
          %v6533 = vld [vmem:[#allocation8 + $0x3b0] sm:$0xff]
          %v6534 = vld [vmem:[#allocation8 + $0x3b8] sm:$0xff]
          %v6535 = vld [vmem:[#allocation8 + $0x3c0] sm:$0xff]
          %v6536 = vld [vmem:[#allocation8 + $0x3c8] sm:$0xff]
          %v6537 = vld [vmem:[#allocation8 + $0x3d0] sm:$0xff]
          %v6538 = vld [vmem:[#allocation8 + $0x3d8] sm:$0xff]
          %v6539 = vld [vmem:[#allocation8 + $0x3e0] sm:$0xff]
          %v6540 = vld [vmem:[#allocation8 + $0x3e8] sm:$0xff]
          %v6541 = vld [vmem:[#allocation8 + $0x3f0] sm:$0xff]
          %v6542 = vld [vmem:[#allocation8 + $0x3f8] sm:$0xff]
          %v6543 = vld [vmem:[#allocation8 + $0x400] sm:$0xff]
          %v6544 = vld [vmem:[#allocation8 + $0x408] sm:$0xff]
          %v6545 = vld [vmem:[#allocation8 + $0x410] sm:$0xff]
          %v6546 = vld [vmem:[#allocation8 + $0x418] sm:$0xff]
          %v6547 = vld [vmem:[#allocation8 + $0x420] sm:$0xff]
          %v6548 = vld [vmem:[#allocation8 + $0x428] sm:$0xff]
          %v6549 = vld [vmem:[#allocation8 + $0x430] sm:$0xff]
          %v6550 = vld [vmem:[#allocation8 + $0x438] sm:$0xff]
          %v6551 = vld [vmem:[#allocation8 + $0x440] sm:$0xff]
          %v6552 = vld [vmem:[#allocation8 + $0x448] sm:$0xff]
          %v6553 = vld [vmem:[#allocation8 + $0x450] sm:$0xff]
          %v6554 = vld [vmem:[#allocation8 + $0x458] sm:$0xff]
          %v6555 = vld [vmem:[#allocation8 + $0x460] sm:$0xff]
          %v6556 = vld [vmem:[#allocation8 + $0x468] sm:$0xff]
          %v6557 = vld [vmem:[#allocation8 + $0x470] sm:$0xff]
          %v6558 = vld [vmem:[#allocation8 + $0x478] sm:$0xff]
          %v6559 = vld [vmem:[#allocation8 + $0x480] sm:$0xff]
          %v6560 = vld [vmem:[#allocation8 + $0x488] sm:$0xff]
          %v6561 = vld [vmem:[#allocation8 + $0x490] sm:$0xff]
          %v6562 = vld [vmem:[#allocation8 + $0x498] sm:$0xff]
          %v6563 = vld [vmem:[#allocation8 + $0x4a0] sm:$0xff]
          %v6564 = vld [vmem:[#allocation8 + $0x4a8] sm:$0xff]
          %v6565 = vld [vmem:[#allocation8 + $0x4b0] sm:$0xff]
          %v6566 = vld [vmem:[#allocation8 + $0x4b8] sm:$0xff]
          %v6567 = vld [vmem:[#allocation8 + $0x4c0] sm:$0xff]
          %v6568 = vld [vmem:[#allocation8 + $0x4c8] sm:$0xff]
          %v6569 = vld [vmem:[#allocation8 + $0x4d0] sm:$0xff]
          %v6570 = vld [vmem:[#allocation8 + $0x4d8] sm:$0xff]
          %v6571 = vld [vmem:[#allocation8 + $0x4e0] sm:$0xff]
          %v6572 = vld [vmem:[#allocation8 + $0x4e8] sm:$0xff]
          %v6573 = vld [vmem:[#allocation8 + $0x4f0] sm:$0xff]
          %v6574 = vld [vmem:[#allocation8 + $0x4f8] sm:$0xff]
          %v6575 = vld [vmem:[#allocation8 + $0x500] sm:$0xff]
          %v6576 = vld [vmem:[#allocation8 + $0x508] sm:$0xff]
          %v6577 = vld [vmem:[#allocation8 + $0x510] sm:$0xff]
          %v6578 = vld [vmem:[#allocation8 + $0x518] sm:$0xff]
          %v6579 = vld [vmem:[#allocation8 + $0x520] sm:$0xff]
          %v6580 = vld [vmem:[#allocation8 + $0x528] sm:$0xff]
          %v6581 = vld [vmem:[#allocation8 + $0x530] sm:$0xff]
          %v6582 = vld [vmem:[#allocation8 + $0x538] sm:$0xff]
          %v6583 = vld [vmem:[#allocation8 + $0x540] sm:$0xff]
          %v6584 = vld [vmem:[#allocation8 + $0x548] sm:$0xff]
          %v6585 = vld [vmem:[#allocation8 + $0x550] sm:$0xff]
          %v6586 = vld [vmem:[#allocation8 + $0x558] sm:$0xff]
          %v6587 = vld [vmem:[#allocation8 + $0x560] sm:$0xff]
          %v6588 = vld [vmem:[#allocation8 + $0x568] sm:$0xff]
          %v6589 = vld [vmem:[#allocation8 + $0x570] sm:$0xff]
          %v6590 = vld [vmem:[#allocation8 + $0x578] sm:$0xff]
          %v6591 = vld [vmem:[#allocation8 + $0x580] sm:$0xff]
          %v6592 = vld [vmem:[#allocation8 + $0x588] sm:$0xff]
          %v6593 = vld [vmem:[#allocation8 + $0x590] sm:$0xff]
          %v6594 = vld [vmem:[#allocation8 + $0x598] sm:$0xff]
          %v6595 = vld [vmem:[#allocation8 + $0x5a0] sm:$0xff]
          %v6596 = vld [vmem:[#allocation8 + $0x5a8] sm:$0xff]
          %v6597 = vld [vmem:[#allocation8 + $0x5b0] sm:$0xff]
          %v6598 = vld [vmem:[#allocation8 + $0x5b8] sm:$0xff]
          %v6599 = vld [vmem:[#allocation8 + $0x5c0] sm:$0xff]
          %v6600 = vld [vmem:[#allocation8 + $0x5c8] sm:$0xff]
          %v6601 = vld [vmem:[#allocation8 + $0x5d0] sm:$0xff]
          %v6602 = vld [vmem:[#allocation8 + $0x5d8] sm:$0xff]
          %v6603 = vld [vmem:[#allocation8 + $0x5e0] sm:$0xff]
          %v6604 = vld [vmem:[#allocation8 + $0x5e8] sm:$0xff]
          %v6605 = vld [vmem:[#allocation8 + $0x5f0] sm:$0xff]
          %v6606 = vld [vmem:[#allocation8 + $0x5f8] sm:$0xff]
          %v6607 = vld [vmem:[#allocation8 + $0x600] sm:$0xff]
          %v6608 = vld [vmem:[#allocation8 + $0x608] sm:$0xff]
          %v6609 = vld [vmem:[#allocation8 + $0x610] sm:$0xff]
          %v6610 = vld [vmem:[#allocation8 + $0x618] sm:$0xff]
          %v6611 = vld [vmem:[#allocation8 + $0x620] sm:$0xff]
          %v6612 = vld [vmem:[#allocation8 + $0x628] sm:$0xff]
          %v6613 = vld [vmem:[#allocation8 + $0x630] sm:$0xff]
          %v6614 = vld [vmem:[#allocation8 + $0x638] sm:$0xff]
          %v6615 = vld [vmem:[#allocation8 + $0x640] sm:$0xff]
          %v6616 = vld [vmem:[#allocation8 + $0x648] sm:$0xff]
          %v6617 = vld [vmem:[#allocation8 + $0x650] sm:$0xff]
          %v6618 = vld [vmem:[#allocation8 + $0x658] sm:$0xff]
          %v6619 = vld [vmem:[#allocation8 + $0x660] sm:$0xff]
          %v6620 = vld [vmem:[#allocation8 + $0x668] sm:$0xff]
          %v6621 = vld [vmem:[#allocation8 + $0x670] sm:$0xff]
          %v6622 = vld [vmem:[#allocation8 + $0x678] sm:$0xff]
          %v6623 = vld [vmem:[#allocation8 + $0x680] sm:$0xff]
          %v6624 = vld [vmem:[#allocation8 + $0x688] sm:$0xff]
          %v6625 = vld [vmem:[#allocation8 + $0x690] sm:$0xff]
          %v6626 = vld [vmem:[#allocation8 + $0x698] sm:$0xff]
          %v6627 = vld [vmem:[#allocation8 + $0x6a0] sm:$0xff]
          %v6628 = vld [vmem:[#allocation8 + $0x6a8] sm:$0xff]
          %v6629 = vld [vmem:[#allocation8 + $0x6b0] sm:$0xff]
          %v6630 = vld [vmem:[#allocation8 + $0x6b8] sm:$0xff]
          %v6631 = vld [vmem:[#allocation8 + $0x6c0] sm:$0xff]
          %v6632 = vld [vmem:[#allocation8 + $0x6c8] sm:$0xff]
          %v6633 = vld [vmem:[#allocation8 + $0x6d0] sm:$0xff]
          %v6634 = vld [vmem:[#allocation8 + $0x6d8] sm:$0xff]
          %v6635 = vld [vmem:[#allocation8 + $0x6e0] sm:$0xff]
          %v6636 = vld [vmem:[#allocation8 + $0x6e8] sm:$0xff]
          %v6637 = vld [vmem:[#allocation8 + $0x6f0] sm:$0xff]
          %v6638 = vld [vmem:[#allocation8 + $0x6f8] sm:$0xff]
          %v6639 = vld [vmem:[#allocation8 + $0x700] sm:$0xff]
          %v6640 = vld [vmem:[#allocation8 + $0x708] sm:$0xff]
          %v6641 = vld [vmem:[#allocation8 + $0x710] sm:$0xff]
          %v6642 = vld [vmem:[#allocation8 + $0x718] sm:$0xff]
          %v6643 = vld [vmem:[#allocation8 + $0x720] sm:$0xff]
          %v6644 = vld [vmem:[#allocation8 + $0x728] sm:$0xff]
          %v6645 = vld [vmem:[#allocation8 + $0x730] sm:$0xff]
          %v6646 = vld [vmem:[#allocation8 + $0x738] sm:$0xff]
          %v6647 = vld [vmem:[#allocation8 + $0x740] sm:$0xff]
          %v6648 = vld [vmem:[#allocation8 + $0x748] sm:$0xff]
          %v6649 = vld [vmem:[#allocation8 + $0x750] sm:$0xff]
          %v6650 = vld [vmem:[#allocation8 + $0x758] sm:$0xff]
          %v6651 = vld [vmem:[#allocation8 + $0x760] sm:$0xff]
          %v6652 = vld [vmem:[#allocation8 + $0x768] sm:$0xff]
          %v6653 = vld [vmem:[#allocation8 + $0x770] sm:$0xff]
          %v6654 = vld [vmem:[#allocation8 + $0x778] sm:$0xff]
          %v6655 = vld [vmem:[#allocation8 + $0x780] sm:$0xff]
          %v6656 = vld [vmem:[#allocation8 + $0x788] sm:$0xff]
          %v6657 = vld [vmem:[#allocation8 + $0x790] sm:$0xff]
          %v6658 = vld [vmem:[#allocation8 + $0x798] sm:$0xff]
          %v6659 = vld [vmem:[#allocation8 + $0x7a0] sm:$0xff]
          %v6660 = vld [vmem:[#allocation8 + $0x7a8] sm:$0xff]
          %v6661 = vld [vmem:[#allocation8 + $0x7b0] sm:$0xff]
          %v6662 = vld [vmem:[#allocation8 + $0x7b8] sm:$0xff]
          %v6663 = vld [vmem:[#allocation8 + $0x7c0] sm:$0xff]
          %v6664 = vld [vmem:[#allocation8 + $0x7c8] sm:$0xff]
          %v6665 = vld [vmem:[#allocation8 + $0x7d0] sm:$0xff]
          %v6666 = vld [vmem:[#allocation8 + $0x7d8] sm:$0xff]
          %v6667 = vld [vmem:[#allocation8 + $0x7e0] sm:$0xff]
          %v6668 = vld [vmem:[#allocation8 + $0x7e8] sm:$0xff]
          %v6669 = vld [vmem:[#allocation8 + $0x7f0] sm:$0xff]
          %v6670 = vld [vmem:[#allocation8 + $0x7f8] sm:$0xff]
          %v6671 = vld [vmem:[%s11] sm:$0xf]
          %v6928 = vunpack.c.l.b16 %v6415
          %v6929 = vunpack.c.h.b16 %v6415
          %v6930 = vunpack.c.l.b16 %v6416
          %v6931 = vunpack.c.h.b16 %v6416
          %v6932 = vunpack.c.l.b16 %v6417
          %v6933 = vunpack.c.h.b16 %v6417
          %v6934 = vunpack.c.l.b16 %v6418
          %v6935 = vunpack.c.h.b16 %v6418
          %v6936 = vunpack.c.l.b16 %v6419
          %v6937 = vunpack.c.h.b16 %v6419
          %v6938 = vunpack.c.l.b16 %v6420
          %v6939 = vunpack.c.h.b16 %v6420
          %v6940 = vunpack.c.l.b16 %v6421
          %v6941 = vunpack.c.h.b16 %v6421
          %v6942 = vunpack.c.l.b16 %v6422
          %v6943 = vunpack.c.h.b16 %v6422
          %v6944 = vunpack.c.l.b16 %v6423
          %v6945 = vunpack.c.h.b16 %v6423
          %v6946 = vunpack.c.l.b16 %v6424
          %v6947 = vunpack.c.h.b16 %v6424
          %v6948 = vunpack.c.l.b16 %v6425
          %v6949 = vunpack.c.h.b16 %v6425
          %v6950 = vunpack.c.l.b16 %v6426
          %v6951 = vunpack.c.h.b16 %v6426
          %v6952 = vunpack.c.l.b16 %v6427
          %v6953 = vunpack.c.h.b16 %v6427
          %v6954 = vunpack.c.l.b16 %v6428
          %v6955 = vunpack.c.h.b16 %v6428
          %v6956 = vunpack.c.l.b16 %v6429
          %v6957 = vunpack.c.h.b16 %v6429
          %v6958 = vunpack.c.l.b16 %v6430
          %v6959 = vunpack.c.h.b16 %v6430
          %v6960 = vunpack.c.l.b16 %v6431
          %v6961 = vunpack.c.h.b16 %v6431
          %v6962 = vunpack.c.l.b16 %v6432
          %v6963 = vunpack.c.h.b16 %v6432
          %v6964 = vunpack.c.l.b16 %v6433
          %v6965 = vunpack.c.h.b16 %v6433
          %v6966 = vunpack.c.l.b16 %v6434
          %v6967 = vunpack.c.h.b16 %v6434
          %v6968 = vunpack.c.l.b16 %v6435
          %v6969 = vunpack.c.h.b16 %v6435
          %v6970 = vunpack.c.l.b16 %v6436
          %v6971 = vunpack.c.h.b16 %v6436
          %v6972 = vunpack.c.l.b16 %v6437
          %v6973 = vunpack.c.h.b16 %v6437
          %v6974 = vunpack.c.l.b16 %v6438
          %v6975 = vunpack.c.h.b16 %v6438
          %v6976 = vunpack.c.l.b16 %v6439
          %v6977 = vunpack.c.h.b16 %v6439
          %v6978 = vunpack.c.l.b16 %v6440
          %v6979 = vunpack.c.h.b16 %v6440
          %v6980 = vunpack.c.l.b16 %v6441
          %v6981 = vunpack.c.h.b16 %v6441
          %v6982 = vunpack.c.l.b16 %v6442
          %v6983 = vunpack.c.h.b16 %v6442
          %v6984 = vunpack.c.l.b16 %v6443
          %v6985 = vunpack.c.h.b16 %v6443
          %v6986 = vunpack.c.l.b16 %v6444
          %v6987 = vunpack.c.h.b16 %v6444
          %v6988 = vunpack.c.l.b16 %v6445
          %v6989 = vunpack.c.h.b16 %v6445
          %v6990 = vunpack.c.l.b16 %v6446
          %v6991 = vunpack.c.h.b16 %v6446
          %v6992 = vunpack.c.l.b16 %v6447
          %v6993 = vunpack.c.h.b16 %v6447
          %v6994 = vunpack.c.l.b16 %v6448
          %v6995 = vunpack.c.h.b16 %v6448
          %v6996 = vunpack.c.l.b16 %v6449
          %v6997 = vunpack.c.h.b16 %v6449
          %v6998 = vunpack.c.l.b16 %v6450
          %v6999 = vunpack.c.h.b16 %v6450
          %v7000 = vunpack.c.l.b16 %v6451
          %v7001 = vunpack.c.h.b16 %v6451
          %v7002 = vunpack.c.l.b16 %v6452
          %v7003 = vunpack.c.h.b16 %v6452
          %v7004 = vunpack.c.l.b16 %v6453
          %v7005 = vunpack.c.h.b16 %v6453
          %v7006 = vunpack.c.l.b16 %v6454
          %v7007 = vunpack.c.h.b16 %v6454
          %v7008 = vunpack.c.l.b16 %v6455
          %v7009 = vunpack.c.h.b16 %v6455
          %v7010 = vunpack.c.l.b16 %v6456
          %v7011 = vunpack.c.h.b16 %v6456
          %v7012 = vunpack.c.l.b16 %v6457
          %v7013 = vunpack.c.h.b16 %v6457
          %v7014 = vunpack.c.l.b16 %v6458
          %v7015 = vunpack.c.h.b16 %v6458
          %v7016 = vunpack.c.l.b16 %v6459
          %v7017 = vunpack.c.h.b16 %v6459
          %v7018 = vunpack.c.l.b16 %v6460
          %v7019 = vunpack.c.h.b16 %v6460
          %v7020 = vunpack.c.l.b16 %v6461
          %v7021 = vunpack.c.h.b16 %v6461
          %v7022 = vunpack.c.l.b16 %v6462
          %v7023 = vunpack.c.h.b16 %v6462
          %v7024 = vunpack.c.l.b16 %v6463
          %v7025 = vunpack.c.h.b16 %v6463
          %v7026 = vunpack.c.l.b16 %v6464
          %v7027 = vunpack.c.h.b16 %v6464
          %v7028 = vunpack.c.l.b16 %v6465
          %v7029 = vunpack.c.h.b16 %v6465
          %v7030 = vunpack.c.l.b16 %v6466
          %v7031 = vunpack.c.h.b16 %v6466
          %v7032 = vunpack.c.l.b16 %v6467
          %v7033 = vunpack.c.h.b16 %v6467
          %v7034 = vunpack.c.l.b16 %v6468
          %v7035 = vunpack.c.h.b16 %v6468
          %v7036 = vunpack.c.l.b16 %v6469
          %v7037 = vunpack.c.h.b16 %v6469
          %v7038 = vunpack.c.l.b16 %v6470
          %v7039 = vunpack.c.h.b16 %v6470
          %v7040 = vunpack.c.l.b16 %v6471
          %v7041 = vunpack.c.h.b16 %v6471
          %v7042 = vunpack.c.l.b16 %v6472
          %v7043 = vunpack.c.h.b16 %v6472
          %v7044 = vunpack.c.l.b16 %v6473
          %v7045 = vunpack.c.h.b16 %v6473
          %v7046 = vunpack.c.l.b16 %v6474
          %v7047 = vunpack.c.h.b16 %v6474
          %v7048 = vunpack.c.l.b16 %v6475
          %v7049 = vunpack.c.h.b16 %v6475
          %v7050 = vunpack.c.l.b16 %v6476
          %v7051 = vunpack.c.h.b16 %v6476
          %v7052 = vunpack.c.l.b16 %v6477
          %v7053 = vunpack.c.h.b16 %v6477
          %v7054 = vunpack.c.l.b16 %v6478
          %v7055 = vunpack.c.h.b16 %v6478
          %v7056 = vunpack.c.l.b16 %v6479
          %v7057 = vunpack.c.h.b16 %v6479
          %v7058 = vunpack.c.l.b16 %v6480
          %v7059 = vunpack.c.h.b16 %v6480
          %v7060 = vunpack.c.l.b16 %v6481
          %v7061 = vunpack.c.h.b16 %v6481
          %v7062 = vunpack.c.l.b16 %v6482
          %v7063 = vunpack.c.h.b16 %v6482
          %v7064 = vunpack.c.l.b16 %v6483
          %v7065 = vunpack.c.h.b16 %v6483
          %v7066 = vunpack.c.l.b16 %v6484
          %v7067 = vunpack.c.h.b16 %v6484
          %v7068 = vunpack.c.l.b16 %v6485
          %v7069 = vunpack.c.h.b16 %v6485
          %v7070 = vunpack.c.l.b16 %v6486
          %v7071 = vunpack.c.h.b16 %v6486
          %v7072 = vunpack.c.l.b16 %v6487
          %v7073 = vunpack.c.h.b16 %v6487
          %v7074 = vunpack.c.l.b16 %v6488
          %v7075 = vunpack.c.h.b16 %v6488
          %v7076 = vunpack.c.l.b16 %v6489
          %v7077 = vunpack.c.h.b16 %v6489
          %v7078 = vunpack.c.l.b16 %v6490
          %v7079 = vunpack.c.h.b16 %v6490
          %v7080 = vunpack.c.l.b16 %v6491
          %v7081 = vunpack.c.h.b16 %v6491
          %v7082 = vunpack.c.l.b16 %v6492
          %v7083 = vunpack.c.h.b16 %v6492
          %v7084 = vunpack.c.l.b16 %v6493
          %v7085 = vunpack.c.h.b16 %v6493
          %v7086 = vunpack.c.l.b16 %v6494
          %v7087 = vunpack.c.h.b16 %v6494
          %v7088 = vunpack.c.l.b16 %v6495
          %v7089 = vunpack.c.h.b16 %v6495
          %v7090 = vunpack.c.l.b16 %v6496
          %v7091 = vunpack.c.h.b16 %v6496
          %v7092 = vunpack.c.l.b16 %v6497
          %v7093 = vunpack.c.h.b16 %v6497
          %v7094 = vunpack.c.l.b16 %v6498
          %v7095 = vunpack.c.h.b16 %v6498
          %v7096 = vunpack.c.l.b16 %v6499
          %v7097 = vunpack.c.h.b16 %v6499
          %v7098 = vunpack.c.l.b16 %v6500
          %v7099 = vunpack.c.h.b16 %v6500
          %v7100 = vunpack.c.l.b16 %v6501
          %v7101 = vunpack.c.h.b16 %v6501
          %v7102 = vunpack.c.l.b16 %v6502
          %v7103 = vunpack.c.h.b16 %v6502
          %v7104 = vunpack.c.l.b16 %v6503
          %v7105 = vunpack.c.h.b16 %v6503
          %v7106 = vunpack.c.l.b16 %v6504
          %v7107 = vunpack.c.h.b16 %v6504
          %v7108 = vunpack.c.l.b16 %v6505
          %v7109 = vunpack.c.h.b16 %v6505
          %v7110 = vunpack.c.l.b16 %v6506
          %v7111 = vunpack.c.h.b16 %v6506
          %v7112 = vunpack.c.l.b16 %v6507
          %v7113 = vunpack.c.h.b16 %v6507
          %v7114 = vunpack.c.l.b16 %v6508
          %v7115 = vunpack.c.h.b16 %v6508
          %v7116 = vunpack.c.l.b16 %v6509
          %v7117 = vunpack.c.h.b16 %v6509
          %v7118 = vunpack.c.l.b16 %v6510
          %v7119 = vunpack.c.h.b16 %v6510
          %v7120 = vunpack.c.l.b16 %v6511
          %v7121 = vunpack.c.h.b16 %v6511
          %v7122 = vunpack.c.l.b16 %v6512
          %v7123 = vunpack.c.h.b16 %v6512
          %v7124 = vunpack.c.l.b16 %v6513
          %v7125 = vunpack.c.h.b16 %v6513
          %v7126 = vunpack.c.l.b16 %v6514
          %v7127 = vunpack.c.h.b16 %v6514
          %v7128 = vunpack.c.l.b16 %v6515
          %v7129 = vunpack.c.h.b16 %v6515
          %v7130 = vunpack.c.l.b16 %v6516
          %v7131 = vunpack.c.h.b16 %v6516
          %v7132 = vunpack.c.l.b16 %v6517
          %v7133 = vunpack.c.h.b16 %v6517
          %v7134 = vunpack.c.l.b16 %v6518
          %v7135 = vunpack.c.h.b16 %v6518
          %v7136 = vunpack.c.l.b16 %v6519
          %v7137 = vunpack.c.h.b16 %v6519
          %v7138 = vunpack.c.l.b16 %v6520
          %v7139 = vunpack.c.h.b16 %v6520
          %v7140 = vunpack.c.l.b16 %v6521
          %v7141 = vunpack.c.h.b16 %v6521
          %v7142 = vunpack.c.l.b16 %v6522
          %v7143 = vunpack.c.h.b16 %v6522
          %v7144 = vunpack.c.l.b16 %v6523
          %v7145 = vunpack.c.h.b16 %v6523
          %v7146 = vunpack.c.l.b16 %v6524
          %v7147 = vunpack.c.h.b16 %v6524
          %v7148 = vunpack.c.l.b16 %v6525
          %v7149 = vunpack.c.h.b16 %v6525
          %v7150 = vunpack.c.l.b16 %v6526
          %v7151 = vunpack.c.h.b16 %v6526
          %v7152 = vunpack.c.l.b16 %v6527
          %v7153 = vunpack.c.h.b16 %v6527
          %v7154 = vunpack.c.l.b16 %v6528
          %v7155 = vunpack.c.h.b16 %v6528
          %v7156 = vunpack.c.l.b16 %v6529
          %v7157 = vunpack.c.h.b16 %v6529
          %v7158 = vunpack.c.l.b16 %v6530
          %v7159 = vunpack.c.h.b16 %v6530
          %v7160 = vunpack.c.l.b16 %v6531
          %v7161 = vunpack.c.h.b16 %v6531
          %v7162 = vunpack.c.l.b16 %v6532
          %v7163 = vunpack.c.h.b16 %v6532
          %v7164 = vunpack.c.l.b16 %v6533
          %v7165 = vunpack.c.h.b16 %v6533
          %v7166 = vunpack.c.l.b16 %v6534
          %v7167 = vunpack.c.h.b16 %v6534
          %v7168 = vunpack.c.l.b16 %v6535
          %v7169 = vunpack.c.h.b16 %v6535
          %v7170 = vunpack.c.l.b16 %v6536
          %v7171 = vunpack.c.h.b16 %v6536
          %v7172 = vunpack.c.l.b16 %v6537
          %v7173 = vunpack.c.h.b16 %v6537
          %v7174 = vunpack.c.l.b16 %v6538
          %v7175 = vunpack.c.h.b16 %v6538
          %v7176 = vunpack.c.l.b16 %v6539
          %v7177 = vunpack.c.h.b16 %v6539
          %v7178 = vunpack.c.l.b16 %v6540
          %v7179 = vunpack.c.h.b16 %v6540
          %v7180 = vunpack.c.l.b16 %v6541
          %v7181 = vunpack.c.h.b16 %v6541
          %v7182 = vunpack.c.l.b16 %v6542
          %v7183 = vunpack.c.h.b16 %v6542
          %v7184 = vunpack.c.l.b16 %v6543
          %v7185 = vunpack.c.h.b16 %v6543
          %v7186 = vunpack.c.l.b16 %v6544
          %v7187 = vunpack.c.h.b16 %v6544
          %v7188 = vunpack.c.l.b16 %v6545
          %v7189 = vunpack.c.h.b16 %v6545
          %v7190 = vunpack.c.l.b16 %v6546
          %v7191 = vunpack.c.h.b16 %v6546
          %v7192 = vunpack.c.l.b16 %v6547
          %v7193 = vunpack.c.h.b16 %v6547
          %v7194 = vunpack.c.l.b16 %v6548
          %v7195 = vunpack.c.h.b16 %v6548
          %v7196 = vunpack.c.l.b16 %v6549
          %v7197 = vunpack.c.h.b16 %v6549
          %v7198 = vunpack.c.l.b16 %v6550
          %v7199 = vunpack.c.h.b16 %v6550
          %v7200 = vunpack.c.l.b16 %v6551
          %v7201 = vunpack.c.h.b16 %v6551
          %v7202 = vunpack.c.l.b16 %v6552
          %v7203 = vunpack.c.h.b16 %v6552
          %v7204 = vunpack.c.l.b16 %v6553
          %v7205 = vunpack.c.h.b16 %v6553
          %v7206 = vunpack.c.l.b16 %v6554
          %v7207 = vunpack.c.h.b16 %v6554
          %v7208 = vunpack.c.l.b16 %v6555
          %v7209 = vunpack.c.h.b16 %v6555
          %v7210 = vunpack.c.l.b16 %v6556
          %v7211 = vunpack.c.h.b16 %v6556
          %v7212 = vunpack.c.l.b16 %v6557
          %v7213 = vunpack.c.h.b16 %v6557
          %v7214 = vunpack.c.l.b16 %v6558
          %v7215 = vunpack.c.h.b16 %v6558
          %v7216 = vunpack.c.l.b16 %v6559
          %v7217 = vunpack.c.h.b16 %v6559
          %v7218 = vunpack.c.l.b16 %v6560
          %v7219 = vunpack.c.h.b16 %v6560
          %v7220 = vunpack.c.l.b16 %v6561
          %v7221 = vunpack.c.h.b16 %v6561
          %v7222 = vunpack.c.l.b16 %v6562
          %v7223 = vunpack.c.h.b16 %v6562
          %v7224 = vunpack.c.l.b16 %v6563
          %v7225 = vunpack.c.h.b16 %v6563
          %v7226 = vunpack.c.l.b16 %v6564
          %v7227 = vunpack.c.h.b16 %v6564
          %v7228 = vunpack.c.l.b16 %v6565
          %v7229 = vunpack.c.h.b16 %v6565
          %v7230 = vunpack.c.l.b16 %v6566
          %v7231 = vunpack.c.h.b16 %v6566
          %v7232 = vunpack.c.l.b16 %v6567
          %v7233 = vunpack.c.h.b16 %v6567
          %v7234 = vunpack.c.l.b16 %v6568
          %v7235 = vunpack.c.h.b16 %v6568
          %v7236 = vunpack.c.l.b16 %v6569
          %v7237 = vunpack.c.h.b16 %v6569
          %v7238 = vunpack.c.l.b16 %v6570
          %v7239 = vunpack.c.h.b16 %v6570
          %v7240 = vunpack.c.l.b16 %v6571
          %v7241 = vunpack.c.h.b16 %v6571
          %v7242 = vunpack.c.l.b16 %v6572
          %v7243 = vunpack.c.h.b16 %v6572
          %v7244 = vunpack.c.l.b16 %v6573
          %v7245 = vunpack.c.h.b16 %v6573
          %v7246 = vunpack.c.l.b16 %v6574
          %v7247 = vunpack.c.h.b16 %v6574
          %v7248 = vunpack.c.l.b16 %v6575
          %v7249 = vunpack.c.h.b16 %v6575
          %v7250 = vunpack.c.l.b16 %v6576
          %v7251 = vunpack.c.h.b16 %v6576
          %v7252 = vunpack.c.l.b16 %v6577
          %v7253 = vunpack.c.h.b16 %v6577
          %v7254 = vunpack.c.l.b16 %v6578
          %v7255 = vunpack.c.h.b16 %v6578
          %v7256 = vunpack.c.l.b16 %v6579
          %v7257 = vunpack.c.h.b16 %v6579
          %v7258 = vunpack.c.l.b16 %v6580
          %v7259 = vunpack.c.h.b16 %v6580
          %v7260 = vunpack.c.l.b16 %v6581
          %v7261 = vunpack.c.h.b16 %v6581
          %v7262 = vunpack.c.l.b16 %v6582
          %v7263 = vunpack.c.h.b16 %v6582
          %v7264 = vunpack.c.l.b16 %v6583
          %v7265 = vunpack.c.h.b16 %v6583
          %v7266 = vunpack.c.l.b16 %v6584
          %v7267 = vunpack.c.h.b16 %v6584
          %v7268 = vunpack.c.l.b16 %v6585
          %v7269 = vunpack.c.h.b16 %v6585
          %v7270 = vunpack.c.l.b16 %v6586
          %v7271 = vunpack.c.h.b16 %v6586
          %v7272 = vunpack.c.l.b16 %v6587
          %v7273 = vunpack.c.h.b16 %v6587
          %v7274 = vunpack.c.l.b16 %v6588
          %v7275 = vunpack.c.h.b16 %v6588
          %v7276 = vunpack.c.l.b16 %v6589
          %v7277 = vunpack.c.h.b16 %v6589
          %v7278 = vunpack.c.l.b16 %v6590
          %v7279 = vunpack.c.h.b16 %v6590
          %v7280 = vunpack.c.l.b16 %v6591
          %v7281 = vunpack.c.h.b16 %v6591
          %v7282 = vunpack.c.l.b16 %v6592
          %v7283 = vunpack.c.h.b16 %v6592
          %v7284 = vunpack.c.l.b16 %v6593
          %v7285 = vunpack.c.h.b16 %v6593
          %v7286 = vunpack.c.l.b16 %v6594
          %v7287 = vunpack.c.h.b16 %v6594
          %v7288 = vunpack.c.l.b16 %v6595
          %v7289 = vunpack.c.h.b16 %v6595
          %v7290 = vunpack.c.l.b16 %v6596
          %v7291 = vunpack.c.h.b16 %v6596
          %v7292 = vunpack.c.l.b16 %v6597
          %v7293 = vunpack.c.h.b16 %v6597
          %v7294 = vunpack.c.l.b16 %v6598
          %v7295 = vunpack.c.h.b16 %v6598
          %v7296 = vunpack.c.l.b16 %v6599
          %v7297 = vunpack.c.h.b16 %v6599
          %v7298 = vunpack.c.l.b16 %v6600
          %v7299 = vunpack.c.h.b16 %v6600
          %v7300 = vunpack.c.l.b16 %v6601
          %v7301 = vunpack.c.h.b16 %v6601
          %v7302 = vunpack.c.l.b16 %v6602
          %v7303 = vunpack.c.h.b16 %v6602
          %v7304 = vunpack.c.l.b16 %v6603
          %v7305 = vunpack.c.h.b16 %v6603
          %v7306 = vunpack.c.l.b16 %v6604
          %v7307 = vunpack.c.h.b16 %v6604
          %v7308 = vunpack.c.l.b16 %v6605
          %v7309 = vunpack.c.h.b16 %v6605
          %v7310 = vunpack.c.l.b16 %v6606
          %v7311 = vunpack.c.h.b16 %v6606
          %v7312 = vunpack.c.l.b16 %v6607
          %v7313 = vunpack.c.h.b16 %v6607
          %v7314 = vunpack.c.l.b16 %v6608
          %v7315 = vunpack.c.h.b16 %v6608
          %v7316 = vunpack.c.l.b16 %v6609
          %v7317 = vunpack.c.h.b16 %v6609
          %v7318 = vunpack.c.l.b16 %v6610
          %v7319 = vunpack.c.h.b16 %v6610
          %v7320 = vunpack.c.l.b16 %v6611
          %v7321 = vunpack.c.h.b16 %v6611
          %v7322 = vunpack.c.l.b16 %v6612
          %v7323 = vunpack.c.h.b16 %v6612
          %v7324 = vunpack.c.l.b16 %v6613
          %v7325 = vunpack.c.h.b16 %v6613
          %v7326 = vunpack.c.l.b16 %v6614
          %v7327 = vunpack.c.h.b16 %v6614
          %v7328 = vunpack.c.l.b16 %v6615
          %v7329 = vunpack.c.h.b16 %v6615
          %v7330 = vunpack.c.l.b16 %v6616
          %v7331 = vunpack.c.h.b16 %v6616
          %v7332 = vunpack.c.l.b16 %v6617
          %v7333 = vunpack.c.h.b16 %v6617
          %v7334 = vunpack.c.l.b16 %v6618
          %v7335 = vunpack.c.h.b16 %v6618
          %v7336 = vunpack.c.l.b16 %v6619
          %v7337 = vunpack.c.h.b16 %v6619
          %v7338 = vunpack.c.l.b16 %v6620
          %v7339 = vunpack.c.h.b16 %v6620
          %v7340 = vunpack.c.l.b16 %v6621
          %v7341 = vunpack.c.h.b16 %v6621
          %v7342 = vunpack.c.l.b16 %v6622
          %v7343 = vunpack.c.h.b16 %v6622
          %v7344 = vunpack.c.l.b16 %v6623
          %v7345 = vunpack.c.h.b16 %v6623
          %v7346 = vunpack.c.l.b16 %v6624
          %v7347 = vunpack.c.h.b16 %v6624
          %v7348 = vunpack.c.l.b16 %v6625
          %v7349 = vunpack.c.h.b16 %v6625
          %v7350 = vunpack.c.l.b16 %v6626
          %v7351 = vunpack.c.h.b16 %v6626
          %v7352 = vunpack.c.l.b16 %v6627
          %v7353 = vunpack.c.h.b16 %v6627
          %v7354 = vunpack.c.l.b16 %v6628
          %v7355 = vunpack.c.h.b16 %v6628
          %v7356 = vunpack.c.l.b16 %v6629
          %v7357 = vunpack.c.h.b16 %v6629
          %v7358 = vunpack.c.l.b16 %v6630
          %v7359 = vunpack.c.h.b16 %v6630
          %v7360 = vunpack.c.l.b16 %v6631
          %v7361 = vunpack.c.h.b16 %v6631
          %v7362 = vunpack.c.l.b16 %v6632
          %v7363 = vunpack.c.h.b16 %v6632
          %v7364 = vunpack.c.l.b16 %v6633
          %v7365 = vunpack.c.h.b16 %v6633
          %v7366 = vunpack.c.l.b16 %v6634
          %v7367 = vunpack.c.h.b16 %v6634
          %v7368 = vunpack.c.l.b16 %v6635
          %v7369 = vunpack.c.h.b16 %v6635
          %v7370 = vunpack.c.l.b16 %v6636
          %v7371 = vunpack.c.h.b16 %v6636
          %v7372 = vunpack.c.l.b16 %v6637
          %v7373 = vunpack.c.h.b16 %v6637
          %v7374 = vunpack.c.l.b16 %v6638
          %v7375 = vunpack.c.h.b16 %v6638
          %v7376 = vunpack.c.l.b16 %v6639
          %v7377 = vunpack.c.h.b16 %v6639
          %v7378 = vunpack.c.l.b16 %v6640
          %v7379 = vunpack.c.h.b16 %v6640
          %v7380 = vunpack.c.l.b16 %v6641
          %v7381 = vunpack.c.h.b16 %v6641
          %v7382 = vunpack.c.l.b16 %v6642
          %v7383 = vunpack.c.h.b16 %v6642
          %v7384 = vunpack.c.l.b16 %v6643
          %v7385 = vunpack.c.h.b16 %v6643
          %v7386 = vunpack.c.l.b16 %v6644
          %v7387 = vunpack.c.h.b16 %v6644
          %v7388 = vunpack.c.l.b16 %v6645
          %v7389 = vunpack.c.h.b16 %v6645
          %v7390 = vunpack.c.l.b16 %v6646
          %v7391 = vunpack.c.h.b16 %v6646
          %v7392 = vunpack.c.l.b16 %v6647
          %v7393 = vunpack.c.h.b16 %v6647
          %v7394 = vunpack.c.l.b16 %v6648
          %v7395 = vunpack.c.h.b16 %v6648
          %v7396 = vunpack.c.l.b16 %v6649
          %v7397 = vunpack.c.h.b16 %v6649
          %v7398 = vunpack.c.l.b16 %v6650
          %v7399 = vunpack.c.h.b16 %v6650
          %v7400 = vunpack.c.l.b16 %v6651
          %v7401 = vunpack.c.h.b16 %v6651
          %v7402 = vunpack.c.l.b16 %v6652
          %v7403 = vunpack.c.h.b16 %v6652
          %v7404 = vunpack.c.l.b16 %v6653
          %v7405 = vunpack.c.h.b16 %v6653
          %v7406 = vunpack.c.l.b16 %v6654
          %v7407 = vunpack.c.h.b16 %v6654
          %v7408 = vunpack.c.l.b16 %v6655
          %v7409 = vunpack.c.h.b16 %v6655
          %v7410 = vunpack.c.l.b16 %v6656
          %v7411 = vunpack.c.h.b16 %v6656
          %v7412 = vunpack.c.l.b16 %v6657
          %v7413 = vunpack.c.h.b16 %v6657
          %v7414 = vunpack.c.l.b16 %v6658
          %v7415 = vunpack.c.h.b16 %v6658
          %v7416 = vunpack.c.l.b16 %v6659
          %v7417 = vunpack.c.h.b16 %v6659
          %v7418 = vunpack.c.l.b16 %v6660
          %v7419 = vunpack.c.h.b16 %v6660
          %v7420 = vunpack.c.l.b16 %v6661
          %v7421 = vunpack.c.h.b16 %v6661
          %v7422 = vunpack.c.l.b16 %v6662
          %v7423 = vunpack.c.h.b16 %v6662
          %v7424 = vunpack.c.l.b16 %v6663
          %v7425 = vunpack.c.h.b16 %v6663
          %v7426 = vunpack.c.l.b16 %v6664
          %v7427 = vunpack.c.h.b16 %v6664
          %v7428 = vunpack.c.l.b16 %v6665
          %v7429 = vunpack.c.h.b16 %v6665
          %v7430 = vunpack.c.l.b16 %v6666
          %v7431 = vunpack.c.h.b16 %v6666
          %v7432 = vunpack.c.l.b16 %v6667
          %v7433 = vunpack.c.h.b16 %v6667
          %v7434 = vunpack.c.l.b16 %v6668
          %v7435 = vunpack.c.h.b16 %v6668
          %v7436 = vunpack.c.l.b16 %v6669
          %v7437 = vunpack.c.h.b16 %v6669
          %v7438 = vunpack.c.l.b16 %v6670
          %v7439 = vunpack.c.h.b16 %v6670
          %v7440 = vpack.c.b16 %v6932, %v6928
          %v7441 = vpack.c.b16 %v6933, %v6929
          %v7442 = vpack.c.b16 %v6934, %v6930
          %v7443 = vpack.c.b16 %v6935, %v6931
          %v7444 = vpack.c.b16 %v6940, %v6936
          %v7445 = vpack.c.b16 %v6941, %v6937
          %v7446 = vpack.c.b16 %v6942, %v6938
          %v7447 = vpack.c.b16 %v6943, %v6939
          %v7448 = vpack.c.b16 %v6948, %v6944
          %v7449 = vpack.c.b16 %v6949, %v6945
          %v7450 = vpack.c.b16 %v6950, %v6946
          %v7451 = vpack.c.b16 %v6951, %v6947
          %v7452 = vpack.c.b16 %v6956, %v6952
          %v7453 = vpack.c.b16 %v6957, %v6953
          %v7454 = vpack.c.b16 %v6958, %v6954
          %v7455 = vpack.c.b16 %v6959, %v6955
          %v7456 = vpack.c.b16 %v6964, %v6960
          %v7457 = vpack.c.b16 %v6965, %v6961
          %v7458 = vpack.c.b16 %v6966, %v6962
          %v7459 = vpack.c.b16 %v6967, %v6963
          %v7460 = vpack.c.b16 %v6972, %v6968
          %v7461 = vpack.c.b16 %v6973, %v6969
          %v7462 = vpack.c.b16 %v6974, %v6970
          %v7463 = vpack.c.b16 %v6975, %v6971
          %v7464 = vpack.c.b16 %v6980, %v6976
          %v7465 = vpack.c.b16 %v6981, %v6977
          %v7466 = vpack.c.b16 %v6982, %v6978
          %v7467 = vpack.c.b16 %v6983, %v6979
          %v7468 = vpack.c.b16 %v6988, %v6984
          %v7469 = vpack.c.b16 %v6989, %v6985
          %v7470 = vpack.c.b16 %v6990, %v6986
          %v7471 = vpack.c.b16 %v6991, %v6987
          %v7472 = vpack.c.b16 %v6996, %v6992
          %v7473 = vpack.c.b16 %v6997, %v6993
          %v7474 = vpack.c.b16 %v6998, %v6994
          %v7475 = vpack.c.b16 %v6999, %v6995
          %v7476 = vpack.c.b16 %v7004, %v7000
          %v7477 = vpack.c.b16 %v7005, %v7001
          %v7478 = vpack.c.b16 %v7006, %v7002
          %v7479 = vpack.c.b16 %v7007, %v7003
          %v7480 = vpack.c.b16 %v7012, %v7008
          %v7481 = vpack.c.b16 %v7013, %v7009
          %v7482 = vpack.c.b16 %v7014, %v7010
          %v7483 = vpack.c.b16 %v7015, %v7011
          %v7484 = vpack.c.b16 %v7020, %v7016
          %v7485 = vpack.c.b16 %v7021, %v7017
          %v7486 = vpack.c.b16 %v7022, %v7018
          %v7487 = vpack.c.b16 %v7023, %v7019
          %v7488 = vpack.c.b16 %v7028, %v7024
          %v7489 = vpack.c.b16 %v7029, %v7025
          %v7490 = vpack.c.b16 %v7030, %v7026
          %v7491 = vpack.c.b16 %v7031, %v7027
          %v7492 = vpack.c.b16 %v7036, %v7032
          %v7493 = vpack.c.b16 %v7037, %v7033
          %v7494 = vpack.c.b16 %v7038, %v7034
          %v7495 = vpack.c.b16 %v7039, %v7035
          %v7496 = vpack.c.b16 %v7044, %v7040
          %v7497 = vpack.c.b16 %v7045, %v7041
          %v7498 = vpack.c.b16 %v7046, %v7042
          %v7499 = vpack.c.b16 %v7047, %v7043
          %v7500 = vpack.c.b16 %v7052, %v7048
          %v7501 = vpack.c.b16 %v7053, %v7049
          %v7502 = vpack.c.b16 %v7054, %v7050
          %v7503 = vpack.c.b16 %v7055, %v7051
          %v7504 = vpack.c.b16 %v7060, %v7056
          %v7505 = vpack.c.b16 %v7061, %v7057
          %v7506 = vpack.c.b16 %v7062, %v7058
          %v7507 = vpack.c.b16 %v7063, %v7059
          %v7508 = vpack.c.b16 %v7068, %v7064
          %v7509 = vpack.c.b16 %v7069, %v7065
          %v7510 = vpack.c.b16 %v7070, %v7066
          %v7511 = vpack.c.b16 %v7071, %v7067
          %v7512 = vpack.c.b16 %v7076, %v7072
          %v7513 = vpack.c.b16 %v7077, %v7073
          %v7514 = vpack.c.b16 %v7078, %v7074
          %v7515 = vpack.c.b16 %v7079, %v7075
          %v7516 = vpack.c.b16 %v7084, %v7080
          %v7517 = vpack.c.b16 %v7085, %v7081
          %v7518 = vpack.c.b16 %v7086, %v7082
          %v7519 = vpack.c.b16 %v7087, %v7083
          %v7520 = vpack.c.b16 %v7092, %v7088
          %v7521 = vpack.c.b16 %v7093, %v7089
          %v7522 = vpack.c.b16 %v7094, %v7090
          %v7523 = vpack.c.b16 %v7095, %v7091
          %v7524 = vpack.c.b16 %v7100, %v7096
          %v7525 = vpack.c.b16 %v7101, %v7097
          %v7526 = vpack.c.b16 %v7102, %v7098
          %v7527 = vpack.c.b16 %v7103, %v7099
          %v7528 = vpack.c.b16 %v7108, %v7104
          %v7529 = vpack.c.b16 %v7109, %v7105
          %v7530 = vpack.c.b16 %v7110, %v7106
          %v7531 = vpack.c.b16 %v7111, %v7107
          %v7532 = vpack.c.b16 %v7116, %v7112
          %v7533 = vpack.c.b16 %v7117, %v7113
          %v7534 = vpack.c.b16 %v7118, %v7114
          %v7535 = vpack.c.b16 %v7119, %v7115
          %v7536 = vpack.c.b16 %v7124, %v7120
          %v7537 = vpack.c.b16 %v7125, %v7121
          %v7538 = vpack.c.b16 %v7126, %v7122
          %v7539 = vpack.c.b16 %v7127, %v7123
          %v7540 = vpack.c.b16 %v7132, %v7128
          %v7541 = vpack.c.b16 %v7133, %v7129
          %v7542 = vpack.c.b16 %v7134, %v7130
          %v7543 = vpack.c.b16 %v7135, %v7131
          %v7544 = vpack.c.b16 %v7140, %v7136
          %v7545 = vpack.c.b16 %v7141, %v7137
          %v7546 = vpack.c.b16 %v7142, %v7138
          %v7547 = vpack.c.b16 %v7143, %v7139
          %v7548 = vpack.c.b16 %v7148, %v7144
          %v7549 = vpack.c.b16 %v7149, %v7145
          %v7550 = vpack.c.b16 %v7150, %v7146
          %v7551 = vpack.c.b16 %v7151, %v7147
          %v7552 = vpack.c.b16 %v7156, %v7152
          %v7553 = vpack.c.b16 %v7157, %v7153
          %v7554 = vpack.c.b16 %v7158, %v7154
          %v7555 = vpack.c.b16 %v7159, %v7155
          %v7556 = vpack.c.b16 %v7164, %v7160
          %v7557 = vpack.c.b16 %v7165, %v7161
          %v7558 = vpack.c.b16 %v7166, %v7162
          %v7559 = vpack.c.b16 %v7167, %v7163
          %v7560 = vpack.c.b16 %v7172, %v7168
          %v7561 = vpack.c.b16 %v7173, %v7169
          %v7562 = vpack.c.b16 %v7174, %v7170
          %v7563 = vpack.c.b16 %v7175, %v7171
          %v7564 = vpack.c.b16 %v7180, %v7176
          %v7565 = vpack.c.b16 %v7181, %v7177
          %v7566 = vpack.c.b16 %v7182, %v7178
          %v7567 = vpack.c.b16 %v7183, %v7179
          %v7568 = vpack.c.b16 %v7188, %v7184
          %v7569 = vpack.c.b16 %v7189, %v7185
          %v7570 = vpack.c.b16 %v7190, %v7186
          %v7571 = vpack.c.b16 %v7191, %v7187
          %v7572 = vpack.c.b16 %v7196, %v7192
          %v7573 = vpack.c.b16 %v7197, %v7193
          %v7574 = vpack.c.b16 %v7198, %v7194
          %v7575 = vpack.c.b16 %v7199, %v7195
          %v7576 = vpack.c.b16 %v7204, %v7200
          %v7577 = vpack.c.b16 %v7205, %v7201
          %v7578 = vpack.c.b16 %v7206, %v7202
          %v7579 = vpack.c.b16 %v7207, %v7203
          %v7580 = vpack.c.b16 %v7212, %v7208
          %v7581 = vpack.c.b16 %v7213, %v7209
          %v7582 = vpack.c.b16 %v7214, %v7210
          %v7583 = vpack.c.b16 %v7215, %v7211
          %v7584 = vpack.c.b16 %v7220, %v7216
          %v7585 = vpack.c.b16 %v7221, %v7217
          %v7586 = vpack.c.b16 %v7222, %v7218
          %v7587 = vpack.c.b16 %v7223, %v7219
          %v7588 = vpack.c.b16 %v7228, %v7224
          %v7589 = vpack.c.b16 %v7229, %v7225
          %v7590 = vpack.c.b16 %v7230, %v7226
          %v7591 = vpack.c.b16 %v7231, %v7227
          %v7592 = vpack.c.b16 %v7236, %v7232
          %v7593 = vpack.c.b16 %v7237, %v7233
          %v7594 = vpack.c.b16 %v7238, %v7234
          %v7595 = vpack.c.b16 %v7239, %v7235
          %v7596 = vpack.c.b16 %v7244, %v7240
          %v7597 = vpack.c.b16 %v7245, %v7241
          %v7598 = vpack.c.b16 %v7246, %v7242
          %v7599 = vpack.c.b16 %v7247, %v7243
          %v7600 = vpack.c.b16 %v7252, %v7248
          %v7601 = vpack.c.b16 %v7253, %v7249
          %v7602 = vpack.c.b16 %v7254, %v7250
          %v7603 = vpack.c.b16 %v7255, %v7251
          %v7604 = vpack.c.b16 %v7260, %v7256
          %v7605 = vpack.c.b16 %v7261, %v7257
          %v7606 = vpack.c.b16 %v7262, %v7258
          %v7607 = vpack.c.b16 %v7263, %v7259
          %v7608 = vpack.c.b16 %v7268, %v7264
          %v7609 = vpack.c.b16 %v7269, %v7265
          %v7610 = vpack.c.b16 %v7270, %v7266
          %v7611 = vpack.c.b16 %v7271, %v7267
          %v7612 = vpack.c.b16 %v7276, %v7272
          %v7613 = vpack.c.b16 %v7277, %v7273
          %v7614 = vpack.c.b16 %v7278, %v7274
          %v7615 = vpack.c.b16 %v7279, %v7275
          %v7616 = vpack.c.b16 %v7284, %v7280
          %v7617 = vpack.c.b16 %v7285, %v7281
          %v7618 = vpack.c.b16 %v7286, %v7282
          %v7619 = vpack.c.b16 %v7287, %v7283
          %v7620 = vpack.c.b16 %v7292, %v7288
          %v7621 = vpack.c.b16 %v7293, %v7289
          %v7622 = vpack.c.b16 %v7294, %v7290
          %v7623 = vpack.c.b16 %v7295, %v7291
          %v7624 = vpack.c.b16 %v7300, %v7296
          %v7625 = vpack.c.b16 %v7301, %v7297
          %v7626 = vpack.c.b16 %v7302, %v7298
          %v7627 = vpack.c.b16 %v7303, %v7299
          %v7628 = vpack.c.b16 %v7308, %v7304
          %v7629 = vpack.c.b16 %v7309, %v7305
          %v7630 = vpack.c.b16 %v7310, %v7306
          %v7631 = vpack.c.b16 %v7311, %v7307
          %v7632 = vpack.c.b16 %v7316, %v7312
          %v7633 = vpack.c.b16 %v7317, %v7313
          %v7634 = vpack.c.b16 %v7318, %v7314
          %v7635 = vpack.c.b16 %v7319, %v7315
          %v7636 = vpack.c.b16 %v7324, %v7320
          %v7637 = vpack.c.b16 %v7325, %v7321
          %v7638 = vpack.c.b16 %v7326, %v7322
          %v7639 = vpack.c.b16 %v7327, %v7323
          %v7640 = vpack.c.b16 %v7332, %v7328
          %v7641 = vpack.c.b16 %v7333, %v7329
          %v7642 = vpack.c.b16 %v7334, %v7330
          %v7643 = vpack.c.b16 %v7335, %v7331
          %v7644 = vpack.c.b16 %v7340, %v7336
          %v7645 = vpack.c.b16 %v7341, %v7337
          %v7646 = vpack.c.b16 %v7342, %v7338
          %v7647 = vpack.c.b16 %v7343, %v7339
          %v7648 = vpack.c.b16 %v7348, %v7344
          %v7649 = vpack.c.b16 %v7349, %v7345
          %v7650 = vpack.c.b16 %v7350, %v7346
          %v7651 = vpack.c.b16 %v7351, %v7347
          %v7652 = vpack.c.b16 %v7356, %v7352
          %v7653 = vpack.c.b16 %v7357, %v7353
          %v7654 = vpack.c.b16 %v7358, %v7354
          %v7655 = vpack.c.b16 %v7359, %v7355
          %v7656 = vpack.c.b16 %v7364, %v7360
          %v7657 = vpack.c.b16 %v7365, %v7361
          %v7658 = vpack.c.b16 %v7366, %v7362
          %v7659 = vpack.c.b16 %v7367, %v7363
          %v7660 = vpack.c.b16 %v7372, %v7368
          %v7661 = vpack.c.b16 %v7373, %v7369
          %v7662 = vpack.c.b16 %v7374, %v7370
          %v7663 = vpack.c.b16 %v7375, %v7371
          %v7664 = vpack.c.b16 %v7380, %v7376
          %v7665 = vpack.c.b16 %v7381, %v7377
          %v7666 = vpack.c.b16 %v7382, %v7378
          %v7667 = vpack.c.b16 %v7383, %v7379
          %v7668 = vpack.c.b16 %v7388, %v7384
          %v7669 = vpack.c.b16 %v7389, %v7385
          %v7670 = vpack.c.b16 %v7390, %v7386
          %v7671 = vpack.c.b16 %v7391, %v7387
          %v7672 = vpack.c.b16 %v7396, %v7392
          %v7673 = vpack.c.b16 %v7397, %v7393
          %v7674 = vpack.c.b16 %v7398, %v7394
          %v7675 = vpack.c.b16 %v7399, %v7395
          %v7676 = vpack.c.b16 %v7404, %v7400
          %v7677 = vpack.c.b16 %v7405, %v7401
          %v7678 = vpack.c.b16 %v7406, %v7402
          %v7679 = vpack.c.b16 %v7407, %v7403
          %v7680 = vpack.c.b16 %v7412, %v7408
          %v7681 = vpack.c.b16 %v7413, %v7409
          %v7682 = vpack.c.b16 %v7414, %v7410
          %v7683 = vpack.c.b16 %v7415, %v7411
          %v7684 = vpack.c.b16 %v7420, %v7416
          %v7685 = vpack.c.b16 %v7421, %v7417
          %v7686 = vpack.c.b16 %v7422, %v7418
          %v7687 = vpack.c.b16 %v7423, %v7419
          %v7688 = vpack.c.b16 %v7428, %v7424
          %v7689 = vpack.c.b16 %v7429, %v7425
          %v7690 = vpack.c.b16 %v7430, %v7426
          %v7691 = vpack.c.b16 %v7431, %v7427
          %v7692 = vpack.c.b16 %v7436, %v7432
          %v7693 = vpack.c.b16 %v7437, %v7433
          %v7694 = vpack.c.b16 %v7438, %v7434
          %v7695 = vpack.c.b16 %v7439, %v7435
          %v7953 = vlaneseq
          %v7954 = vshrl.u32 %v7953, 7
          %v7955 = vsub.s32 0, %v7954
          %v7956 = vrot.slane %v6671, %v7955
          %v7957 = vlaneseq
          %v7958 = vshrl.u32 %v7957, 7
          %v7959 = vsub.s32 1, %v7958
          %v7960 = vrot.slane %v6671, %v7959
          %v7961 = vlaneseq
          %v7962 = vshrl.u32 %v7961, 7
          %v7963 = vsub.s32 2, %v7962
          %v7964 = vrot.slane %v6671, %v7963
          %v7965 = vlaneseq
          %v7966 = vshrl.u32 %v7965, 7
          %v7967 = vsub.s32 3, %v7966
          %v7968 = vrot.slane %v6671, %v7967
          %7973 = vmatprep.subr.bf16.mxu0 %v7441
          %7974 = vmatpush1.bf16.msra.mxu0 %v7440
          %7975 = vmatprep.subr.bf16.mxu0 %v7445
          %7976 = vmatpush1.bf16.msra.mxu0 %v7444
          %7977 = vmatprep.subr.bf16.mxu0 %v7449
          %7978 = vmatpush1.bf16.msra.mxu0 %v7448
          %7979 = vmatprep.subr.bf16.mxu0 %v7453
          %7980 = vmatpush1.bf16.msra.mxu0 %v7452
          %7981 = vmatprep.subr.bf16.mxu0 %v7457
          %7982 = vmatpush1.bf16.msra.mxu0 %v7456
          %7983 = vmatprep.subr.bf16.mxu0 %v7461
          %7984 = vmatpush1.bf16.msra.mxu0 %v7460
          %7985 = vmatprep.subr.bf16.mxu0 %v7465
          %7986 = vmatpush1.bf16.msra.mxu0 %v7464
          %7987 = vmatprep.subr.bf16.mxu0 %v7469
          %7988 = vmatpush1.bf16.msra.mxu0 %v7468
          %7989 = vmatprep.subr.bf16.mxu0 %v7473
          %7990 = vmatpush1.bf16.msra.mxu0 %v7472
          %7991 = vmatprep.subr.bf16.mxu0 %v7477
          %7992 = vmatpush1.bf16.msra.mxu0 %v7476
          %7993 = vmatprep.subr.bf16.mxu0 %v7481
          %7994 = vmatpush1.bf16.msra.mxu0 %v7480
          %7995 = vmatprep.subr.bf16.mxu0 %v7485
          %7996 = vmatpush1.bf16.msra.mxu0 %v7484
          %7997 = vmatprep.subr.bf16.mxu0 %v7489
          %7998 = vmatpush1.bf16.msra.mxu0 %v7488
          %7999 = vmatprep.subr.bf16.mxu0 %v7493
          %8000 = vmatpush1.bf16.msra.mxu0 %v7492
          %8001 = vmatprep.subr.bf16.mxu0 %v7497
          %8002 = vmatpush1.bf16.msra.mxu0 %v7496
          %8003 = vmatprep.subr.bf16.mxu0 %v7501
          %8004 = vmatpush1.bf16.msra.mxu0 %v7500
          %8005 = vmatprep.mubr.bf16.mxu0 %v6408
          %8006 = vmatmul.mubr.bf16.gmra.mrb[0].mxu0 %v6407
          %v8007 = vpop.f32.mrb[0].mxu0
          %v8008 = vadd.f32 %v7956, %v8007
          %v8009 = vpop.f32.mrb[0].mxu0
          %v8010 = vadd.f32 %v7960, %v8009
          %v8011 = vpop.f32.mrb[0].mxu0
          %v8012 = vpop.f32.mrb[0].mxu0
          %8013 = vdwg.mxu0
          %8014 = vmatprep.subr.bf16.mxu0 %v7505
          %8015 = vmatpush1.bf16.msra.mxu0 %v7504
          %8016 = vmatprep.subr.bf16.mxu0 %v7509
          %8017 = vmatpush1.bf16.msra.mxu0 %v7508
          %8018 = vmatprep.subr.bf16.mxu0 %v7513
          %8019 = vmatpush1.bf16.msra.mxu0 %v7512
          %8020 = vmatprep.subr.bf16.mxu0 %v7517
          %8021 = vmatpush1.bf16.msra.mxu0 %v7516
          %8022 = vmatprep.subr.bf16.mxu0 %v7521
          %8023 = vmatpush1.bf16.msra.mxu0 %v7520
          %8024 = vmatprep.subr.bf16.mxu0 %v7525
          %8025 = vmatpush1.bf16.msra.mxu0 %v7524
          %8026 = vmatprep.subr.bf16.mxu0 %v7529
          %8027 = vmatpush1.bf16.msra.mxu0 %v7528
          %8028 = vmatprep.subr.bf16.mxu0 %v7533
          %8029 = vmatpush1.bf16.msra.mxu0 %v7532
          %8030 = vmatprep.subr.bf16.mxu0 %v7537
          %8031 = vmatpush1.bf16.msra.mxu0 %v7536
          %8032 = vmatprep.subr.bf16.mxu0 %v7541
          %8033 = vmatpush1.bf16.msra.mxu0 %v7540
          %8034 = vmatprep.subr.bf16.mxu0 %v7545
          %8035 = vmatpush1.bf16.msra.mxu0 %v7544
          %8036 = vmatprep.subr.bf16.mxu0 %v7549
          %8037 = vmatpush1.bf16.msra.mxu0 %v7548
          %8038 = vmatprep.subr.bf16.mxu0 %v7553
          %8039 = vmatpush1.bf16.msra.mxu0 %v7552
          %8040 = vmatprep.subr.bf16.mxu0 %v7557
          %8041 = vmatpush1.bf16.msra.mxu0 %v7556
          %8042 = vmatprep.subr.bf16.mxu0 %v7561
          %8043 = vmatpush1.bf16.msra.mxu0 %v7560
          %8044 = vmatprep.subr.bf16.mxu0 %v7565
          %8045 = vmatpush1.bf16.msra.mxu0 %v7564
          %8046 = vmatprep.mubr.bf16.mxu0 %v6410
          %8047 = vmatmul.mubr.bf16.gmra.mrb[0].mxu0 %v6409
          %v8048 = vpop.f32.mrb[0].mxu0
          %v8049 = vadd.f32 %v8008, %v8048
          %v8050 = vpop.f32.mrb[0].mxu0
          %v8051 = vadd.f32 %v8010, %v8050
          %v8052 = vpop.f32.mrb[0].mxu0
          %v8053 = vpop.f32.mrb[0].mxu0
          %8054 = vdwg.mxu0
          %8055 = vmatprep.subr.bf16.mxu0 %v7569
          %8056 = vmatpush1.bf16.msra.mxu0 %v7568
          %8057 = vmatprep.subr.bf16.mxu0 %v7573
          %8058 = vmatpush1.bf16.msra.mxu0 %v7572
          %8059 = vmatprep.subr.bf16.mxu0 %v7577
          %8060 = vmatpush1.bf16.msra.mxu0 %v7576
          %8061 = vmatprep.subr.bf16.mxu0 %v7581
          %8062 = vmatpush1.bf16.msra.mxu0 %v7580
          %8063 = vmatprep.subr.bf16.mxu0 %v7585
          %8064 = vmatpush1.bf16.msra.mxu0 %v7584
          %8065 = vmatprep.subr.bf16.mxu0 %v7589
          %8066 = vmatpush1.bf16.msra.mxu0 %v7588
          %8067 = vmatprep.subr.bf16.mxu0 %v7593
          %8068 = vmatpush1.bf16.msra.mxu0 %v7592
          %8069 = vmatprep.subr.bf16.mxu0 %v7597
          %8070 = vmatpush1.bf16.msra.mxu0 %v7596
          %8071 = vmatprep.subr.bf16.mxu0 %v7601
          %8072 = vmatpush1.bf16.msra.mxu0 %v7600
          %8073 = vmatprep.subr.bf16.mxu0 %v7605
          %8074 = vmatpush1.bf16.msra.mxu0 %v7604
          %8075 = vmatprep.subr.bf16.mxu0 %v7609
          %8076 = vmatpush1.bf16.msra.mxu0 %v7608
          %8077 = vmatprep.subr.bf16.mxu0 %v7613
          %8078 = vmatpush1.bf16.msra.mxu0 %v7612
          %8079 = vmatprep.subr.bf16.mxu0 %v7617
          %8080 = vmatpush1.bf16.msra.mxu0 %v7616
          %8081 = vmatprep.subr.bf16.mxu0 %v7621
          %8082 = vmatpush1.bf16.msra.mxu0 %v7620
          %8083 = vmatprep.subr.bf16.mxu0 %v7625
          %8084 = vmatpush1.bf16.msra.mxu0 %v7624
          %8085 = vmatprep.subr.bf16.mxu0 %v7629
          %8086 = vmatpush1.bf16.msra.mxu0 %v7628
          %8087 = vmatprep.mubr.bf16.mxu0 %v6412
          %8088 = vmatmul.mubr.bf16.gmra.mrb[0].mxu0 %v6411
          %v8089 = vpop.f32.mrb[0].mxu0
          %v8090 = vadd.f32 %v8049, %v8089
          %v8091 = vpop.f32.mrb[0].mxu0
          %v8092 = vadd.f32 %v8051, %v8091
          %v8093 = vpop.f32.mrb[0].mxu0
          %v8094 = vpop.f32.mrb[0].mxu0
          %8095 = vdwg.mxu0
          %8096 = vmatprep.subr.bf16.mxu0 %v7633
          %8097 = vmatpush1.bf16.msra.mxu0 %v7632
          %8098 = vmatprep.subr.bf16.mxu0 %v7637
          %8099 = vmatpush1.bf16.msra.mxu0 %v7636
          %8100 = vmatprep.subr.bf16.mxu0 %v7641
          %8101 = vmatpush1.bf16.msra.mxu0 %v7640
          %8102 = vmatprep.subr.bf16.mxu0 %v7645
          %8103 = vmatpush1.bf16.msra.mxu0 %v7644
          %8104 = vmatprep.subr.bf16.mxu0 %v7649
          %8105 = vmatpush1.bf16.msra.mxu0 %v7648
          %8106 = vmatprep.subr.bf16.mxu0 %v7653
          %8107 = vmatpush1.bf16.msra.mxu0 %v7652
          %8108 = vmatprep.subr.bf16.mxu0 %v7657
          %8109 = vmatpush1.bf16.msra.mxu0 %v7656
          %8110 = vmatprep.subr.bf16.mxu0 %v7661
          %8111 = vmatpush1.bf16.msra.mxu0 %v7660
          %8112 = vmatprep.subr.bf16.mxu0 %v7665
          %8113 = vmatpush1.bf16.msra.mxu0 %v7664
          %8114 = vmatprep.subr.bf16.mxu0 %v7669
          %8115 = vmatpush1.bf16.msra.mxu0 %v7668
          %8116 = vmatprep.subr.bf16.mxu0 %v7673
          %8117 = vmatpush1.bf16.msra.mxu0 %v7672
          %8118 = vmatprep.subr.bf16.mxu0 %v7677
          %8119 = vmatpush1.bf16.msra.mxu0 %v7676
          %8120 = vmatprep.subr.bf16.mxu0 %v7681
          %8121 = vmatpush1.bf16.msra.mxu0 %v7680
          %8122 = vmatprep.subr.bf16.mxu0 %v7685
          %8123 = vmatpush1.bf16.msra.mxu0 %v7684
          %8124 = vmatprep.subr.bf16.mxu0 %v7689
          %8125 = vmatpush1.bf16.msra.mxu0 %v7688
          %8126 = vmatprep.subr.bf16.mxu0 %v7693
          %8127 = vmatpush1.bf16.msra.mxu0 %v7692
          %8128 = vmatprep.mubr.bf16.mxu0 %v6414
          %8129 = vmatmul.mubr.bf16.gmra.mrb[0].mxu0 %v6413
          %v8130 = vpop.f32.mrb[0].mxu0
          %v8131 = vadd.f32 %v8090, %v8130
          %v8132 = vpop.f32.mrb[0].mxu0
          %v8133 = vadd.f32 %v8092, %v8132
          %v8134 = vpop.f32.mrb[0].mxu0
          %v8135 = vpop.f32.mrb[0].mxu0
          %8136 = vdwg.mxu0
          %8137 = vmatprep.subr.bf16.mxu0 %v7443
          %8138 = vmatpush1.bf16.msra.mxu0 %v7442
          %8139 = vmatprep.subr.bf16.mxu0 %v7447
          %8140 = vmatpush1.bf16.msra.mxu0 %v7446
          %8141 = vmatprep.subr.bf16.mxu0 %v7451
          %8142 = vmatpush1.bf16.msra.mxu0 %v7450
          %8143 = vmatprep.subr.bf16.mxu0 %v7455
          %8144 = vmatpush1.bf16.msra.mxu0 %v7454
          %8145 = vmatprep.subr.bf16.mxu0 %v7459
          %8146 = vmatpush1.bf16.msra.mxu0 %v7458
          %8147 = vmatprep.subr.bf16.mxu0 %v7463
          %8148 = vmatpush1.bf16.msra.mxu0 %v7462
          %8149 = vmatprep.subr.bf16.mxu0 %v7467
          %8150 = vmatpush1.bf16.msra.mxu0 %v7466
          %8151 = vmatprep.subr.bf16.mxu0 %v7471
          %8152 = vmatpush1.bf16.msra.mxu0 %v7470
          %8153 = vmatprep.subr.bf16.mxu0 %v7475
          %8154 = vmatpush1.bf16.msra.mxu0 %v7474
          %8155 = vmatprep.subr.bf16.mxu0 %v7479
          %8156 = vmatpush1.bf16.msra.mxu0 %v7478
          %8157 = vmatprep.subr.bf16.mxu0 %v7483
          %8158 = vmatpush1.bf16.msra.mxu0 %v7482
          %8159 = vmatprep.subr.bf16.mxu0 %v7487
          %8160 = vmatpush1.bf16.msra.mxu0 %v7486
          %8161 = vmatprep.subr.bf16.mxu0 %v7491
          %8162 = vmatpush1.bf16.msra.mxu0 %v7490
          %8163 = vmatprep.subr.bf16.mxu0 %v7495
          %8164 = vmatpush1.bf16.msra.mxu0 %v7494
          %8165 = vmatprep.subr.bf16.mxu0 %v7499
          %8166 = vmatpush1.bf16.msra.mxu0 %v7498
          %8167 = vmatprep.subr.bf16.mxu0 %v7503
          %8168 = vmatpush1.bf16.msra.mxu0 %v7502
          %8169 = vmatprep.mubr.bf16.mxu0 %v6408
          %8170 = vmatmul.mubr.bf16.gmra.mrb[0].mxu0 %v6407
          %v8171 = vpop.f32.mrb[0].mxu0
          %v8172 = vadd.f32 %v7964, %v8171
          %v8173 = vpop.f32.mrb[0].mxu0
          %v8174 = vadd.f32 %v7968, %v8173
          %v8175 = vpop.f32.mrb[0].mxu0
          %v8176 = vpop.f32.mrb[0].mxu0
          %8177 = vdwg.mxu0
          %8178 = vmatprep.subr.bf16.mxu0 %v7507
          %8179 = vmatpush1.bf16.msra.mxu0 %v7506
          %8180 = vmatprep.subr.bf16.mxu0 %v7511
          %8181 = vmatpush1.bf16.msra.mxu0 %v7510
          %8182 = vmatprep.subr.bf16.mxu0 %v7515
          %8183 = vmatpush1.bf16.msra.mxu0 %v7514
          %8184 = vmatprep.subr.bf16.mxu0 %v7519
          %8185 = vmatpush1.bf16.msra.mxu0 %v7518
          %8186 = vmatprep.subr.bf16.mxu0 %v7523
          %8187 = vmatpush1.bf16.msra.mxu0 %v7522
          %8188 = vmatprep.subr.bf16.mxu0 %v7527
          %8189 = vmatpush1.bf16.msra.mxu0 %v7526
          %8190 = vmatprep.subr.bf16.mxu0 %v7531
          %8191 = vmatpush1.bf16.msra.mxu0 %v7530
          %8192 = vmatprep.subr.bf16.mxu0 %v7535
          %8193 = vmatpush1.bf16.msra.mxu0 %v7534
          %8194 = vmatprep.subr.bf16.mxu0 %v7539
          %8195 = vmatpush1.bf16.msra.mxu0 %v7538
          %8196 = vmatprep.subr.bf16.mxu0 %v7543
          %8197 = vmatpush1.bf16.msra.mxu0 %v7542
          %8198 = vmatprep.subr.bf16.mxu0 %v7547
          %8199 = vmatpush1.bf16.msra.mxu0 %v7546
          %8200 = vmatprep.subr.bf16.mxu0 %v7551
          %8201 = vmatpush1.bf16.msra.mxu0 %v7550
          %8202 = vmatprep.subr.bf16.mxu0 %v7555
          %8203 = vmatpush1.bf16.msra.mxu0 %v7554
          %8204 = vmatprep.subr.bf16.mxu0 %v7559
          %8205 = vmatpush1.bf16.msra.mxu0 %v7558
          %8206 = vmatprep.subr.bf16.mxu0 %v7563
          %8207 = vmatpush1.bf16.msra.mxu0 %v7562
          %8208 = vmatprep.subr.bf16.mxu0 %v7567
          %8209 = vmatpush1.bf16.msra.mxu0 %v7566
          %8210 = vmatprep.mubr.bf16.mxu0 %v6410
          %8211 = vmatmul.mubr.bf16.gmra.mrb[0].mxu0 %v6409
          %v8212 = vpop.f32.mrb[0].mxu0
          %v8213 = vadd.f32 %v8172, %v8212
          %v8214 = vpop.f32.mrb[0].mxu0
          %v8215 = vadd.f32 %v8174, %v8214
          %v8216 = vpop.f32.mrb[0].mxu0
          %v8217 = vpop.f32.mrb[0].mxu0
          %8218 = vdwg.mxu0
          %8219 = vmatprep.subr.bf16.mxu0 %v7571
          %8220 = vmatpush1.bf16.msra.mxu0 %v7570
          %8221 = vmatprep.subr.bf16.mxu0 %v7575
          %8222 = vmatpush1.bf16.msra.mxu0 %v7574
          %8223 = vmatprep.subr.bf16.mxu0 %v7579
          %8224 = vmatpush1.bf16.msra.mxu0 %v7578
          %8225 = vmatprep.subr.bf16.mxu0 %v7583
          %8226 = vmatpush1.bf16.msra.mxu0 %v7582
          %8227 = vmatprep.subr.bf16.mxu0 %v7587
          %8228 = vmatpush1.bf16.msra.mxu0 %v7586
          %8229 = vmatprep.subr.bf16.mxu0 %v7591
          %8230 = vmatpush1.bf16.msra.mxu0 %v7590
          %8231 = vmatprep.subr.bf16.mxu0 %v7595
          %8232 = vmatpush1.bf16.msra.mxu0 %v7594
          %8233 = vmatprep.subr.bf16.mxu0 %v7599
          %8234 = vmatpush1.bf16.msra.mxu0 %v7598
          %8235 = vmatprep.subr.bf16.mxu0 %v7603
          %8236 = vmatpush1.bf16.msra.mxu0 %v7602
          %8237 = vmatprep.subr.bf16.mxu0 %v7607
          %8238 = vmatpush1.bf16.msra.mxu0 %v7606
          %8239 = vmatprep.subr.bf16.mxu0 %v7611
          %8240 = vmatpush1.bf16.msra.mxu0 %v7610
          %8241 = vmatprep.subr.bf16.mxu0 %v7615
          %8242 = vmatpush1.bf16.msra.mxu0 %v7614
          %8243 = vmatprep.subr.bf16.mxu0 %v7619
          %8244 = vmatpush1.bf16.msra.mxu0 %v7618
          %8245 = vmatprep.subr.bf16.mxu0 %v7623
          %8246 = vmatpush1.bf16.msra.mxu0 %v7622
          %8247 = vmatprep.subr.bf16.mxu0 %v7627
          %8248 = vmatpush1.bf16.msra.mxu0 %v7626
          %8249 = vmatprep.subr.bf16.mxu0 %v7631
          %8250 = vmatpush1.bf16.msra.mxu0 %v7630
          %8251 = vmatprep.mubr.bf16.mxu0 %v6412
          %8252 = vmatmul.mubr.bf16.gmra.mrb[0].mxu0 %v6411
          %v8253 = vpop.f32.mrb[0].mxu0
          %v8254 = vadd.f32 %v8213, %v8253
          %v8255 = vpop.f32.mrb[0].mxu0
          %v8256 = vadd.f32 %v8215, %v8255
          %v8257 = vpop.f32.mrb[0].mxu0
          %v8258 = vpop.f32.mrb[0].mxu0
          %8259 = vdwg.mxu0
          %8260 = vmatprep.subr.bf16.mxu0 %v7635
          %8261 = vmatpush1.bf16.msra.mxu0 %v7634
          %8262 = vmatprep.subr.bf16.mxu0 %v7639
          %8263 = vmatpush1.bf16.msra.mxu0 %v7638
          %8264 = vmatprep.subr.bf16.mxu0 %v7643
          %8265 = vmatpush1.bf16.msra.mxu0 %v7642
          %8266 = vmatprep.subr.bf16.mxu0 %v7647
          %8267 = vmatpush1.bf16.msra.mxu0 %v7646
          %8268 = vmatprep.subr.bf16.mxu0 %v7651
          %8269 = vmatpush1.bf16.msra.mxu0 %v7650
          %8270 = vmatprep.subr.bf16.mxu0 %v7655
          %8271 = vmatpush1.bf16.msra.mxu0 %v7654
          %8272 = vmatprep.subr.bf16.mxu0 %v7659
          %8273 = vmatpush1.bf16.msra.mxu0 %v7658
          %8274 = vmatprep.subr.bf16.mxu0 %v7663
          %8275 = vmatpush1.bf16.msra.mxu0 %v7662
          %8276 = vmatprep.subr.bf16.mxu0 %v7667
          %8277 = vmatpush1.bf16.msra.mxu0 %v7666
          %8278 = vmatprep.subr.bf16.mxu0 %v7671
          %8279 = vmatpush1.bf16.msra.mxu0 %v7670
          %8280 = vmatprep.subr.bf16.mxu0 %v7675
          %8281 = vmatpush1.bf16.msra.mxu0 %v7674
          %8282 = vmatprep.subr.bf16.mxu0 %v7679
          %8283 = vmatpush1.bf16.msra.mxu0 %v7678
          %8284 = vmatprep.subr.bf16.mxu0 %v7683
          %8285 = vmatpush1.bf16.msra.mxu0 %v7682
          %8286 = vmatprep.subr.bf16.mxu0 %v7687
          %8287 = vmatpush1.bf16.msra.mxu0 %v7686
          %8288 = vmatprep.subr.bf16.mxu0 %v7691
          %8289 = vmatpush1.bf16.msra.mxu0 %v7690
          %8290 = vmatprep.subr.bf16.mxu0 %v7695
          %8291 = vmatpush1.bf16.msra.mxu0 %v7694
          %8292 = vmatprep.mubr.bf16.mxu0 %v6414
          %8293 = vmatmul.mubr.bf16.gmra.mrb[0].mxu0 %v6413
          %v8294 = vpop.f32.mrb[0].mxu0
          %v8295 = vadd.f32 %v8254, %v8294
          %v8296 = vpop.f32.mrb[0].mxu0
          %v8297 = vadd.f32 %v8256, %v8296
          %v8298 = vpop.f32.mrb[0].mxu0
          %v8299 = vpop.f32.mrb[0].mxu0
          %8300 = vdwg.mxu0
          %v8301 = vmax.f32 %v8131, 0.0
          %v8302 = vmax.f32 %v8133, 0.0
          %v8303 = vmax.f32 %v8295, 0.0
          %v8304 = vmax.f32 %v8297, 0.0
          %v8305 = vpack.c.bf16 %v8301, %v8301
          %v8306 = vpack.c.bf16 %v8302, %v8302
          %v8307 = vpack.c.bf16 %v8303, %v8303
          %v8308 = vpack.c.bf16 %v8304, %v8304
          %v8309 = vld [vmem:[%s12] sm:$0xff]
          %v8310 = vld [vmem:[%s12 + $0x8] sm:$0xff]
          %v8311 = vld [vmem:[%s12 + $0x10] sm:$0xff]
          %v8312 = vld [vmem:[%s12 + $0x18] sm:$0xff]
          %v8313 = vld [vmem:[%s12 + $0x20] sm:$0xff]
          %v8314 = vld [vmem:[%s12 + $0x28] sm:$0xff]
          %v8315 = vld [vmem:[%s12 + $0x30] sm:$0xff]
          %v8316 = vld [vmem:[%s12 + $0x38] sm:$0xff]
          %v8317 = vld [vmem:[%s12 + $0x40] sm:$0xff]
          %v8318 = vld [vmem:[%s12 + $0x48] sm:$0xff]
          %v8319 = vld [vmem:[%s12 + $0x50] sm:$0xff]
          %v8320 = vld [vmem:[%s12 + $0x58] sm:$0xff]
          %v8321 = vld [vmem:[%s12 + $0x60] sm:$0xff]
          %v8322 = vld [vmem:[%s12 + $0x68] sm:$0xff]
          %v8323 = vld [vmem:[%s12 + $0x70] sm:$0xff]
          %v8324 = vld [vmem:[%s12 + $0x78] sm:$0xff]
          %v8325 = vld [vmem:[%s12 + $0x80] sm:$0xff]
          %v8326 = vld [vmem:[%s12 + $0x88] sm:$0xff]
          %v8327 = vld [vmem:[%s12 + $0x90] sm:$0xff]
          %v8328 = vld [vmem:[%s12 + $0x98] sm:$0xff]
          %v8329 = vld [vmem:[%s12 + $0xa0] sm:$0xff]
          %v8330 = vld [vmem:[%s12 + $0xa8] sm:$0xff]
          %v8331 = vld [vmem:[%s12 + $0xb0] sm:$0xff]
          %v8332 = vld [vmem:[%s12 + $0xb8] sm:$0xff]
          %v8333 = vld [vmem:[%s12 + $0xc0] sm:$0xff]
          %v8334 = vld [vmem:[%s12 + $0xc8] sm:$0xff]
          %v8335 = vld [vmem:[%s12 + $0xd0] sm:$0xff]
          %v8336 = vld [vmem:[%s12 + $0xd8] sm:$0xff]
          %v8337 = vld [vmem:[%s12 + $0xe0] sm:$0xff]
          %v8338 = vld [vmem:[%s12 + $0xe8] sm:$0xff]
          %v8339 = vld [vmem:[%s12 + $0xf0] sm:$0xff]
          %v8340 = vld [vmem:[%s12 + $0xf8] sm:$0xff]
          %v8341 = vld [vmem:[%s12 + $0x100] sm:$0xff]
          %v8342 = vld [vmem:[%s12 + $0x108] sm:$0xff]
          %v8343 = vld [vmem:[%s12 + $0x110] sm:$0xff]
          %v8344 = vld [vmem:[%s12 + $0x118] sm:$0xff]
          %v8345 = vld [vmem:[%s12 + $0x120] sm:$0xff]
          %v8346 = vld [vmem:[%s12 + $0x128] sm:$0xff]
          %v8347 = vld [vmem:[%s12 + $0x130] sm:$0xff]
          %v8348 = vld [vmem:[%s12 + $0x138] sm:$0xff]
          %v8349 = vld [vmem:[%s12 + $0x140] sm:$0xff]
          %v8350 = vld [vmem:[%s12 + $0x148] sm:$0xff]
          %v8351 = vld [vmem:[%s12 + $0x150] sm:$0xff]
          %v8352 = vld [vmem:[%s12 + $0x158] sm:$0xff]
          %v8353 = vld [vmem:[%s12 + $0x160] sm:$0xff]
          %v8354 = vld [vmem:[%s12 + $0x168] sm:$0xff]
          %v8355 = vld [vmem:[%s12 + $0x170] sm:$0xff]
          %v8356 = vld [vmem:[%s12 + $0x178] sm:$0xff]
          %v8357 = vld [vmem:[%s12 + $0x180] sm:$0xff]
          %v8358 = vld [vmem:[%s12 + $0x188] sm:$0xff]
          %v8359 = vld [vmem:[%s12 + $0x190] sm:$0xff]
          %v8360 = vld [vmem:[%s12 + $0x198] sm:$0xff]
          %v8361 = vld [vmem:[%s12 + $0x1a0] sm:$0xff]
          %v8362 = vld [vmem:[%s12 + $0x1a8] sm:$0xff]
          %v8363 = vld [vmem:[%s12 + $0x1b0] sm:$0xff]
          %v8364 = vld [vmem:[%s12 + $0x1b8] sm:$0xff]
          %v8365 = vld [vmem:[%s12 + $0x1c0] sm:$0xff]
          %v8366 = vld [vmem:[%s12 + $0x1c8] sm:$0xff]
          %v8367 = vld [vmem:[%s12 + $0x1d0] sm:$0xff]
          %v8368 = vld [vmem:[%s12 + $0x1d8] sm:$0xff]
          %v8369 = vld [vmem:[%s12 + $0x1e0] sm:$0xff]
          %v8370 = vld [vmem:[%s12 + $0x1e8] sm:$0xff]
          %v8371 = vld [vmem:[%s12 + $0x1f0] sm:$0xff]
          %v8372 = vld [vmem:[%s12 + $0x1f8] sm:$0xff]
          %v8437 = vunpack.c.l.b16 %v8309
          %v8438 = vunpack.c.h.b16 %v8309
          %v8439 = vunpack.c.l.b16 %v8310
          %v8440 = vunpack.c.h.b16 %v8310
          %v8441 = vunpack.c.l.b16 %v8311
          %v8442 = vunpack.c.h.b16 %v8311
          %v8443 = vunpack.c.l.b16 %v8312
          %v8444 = vunpack.c.h.b16 %v8312
          %v8445 = vunpack.c.l.b16 %v8313
          %v8446 = vunpack.c.h.b16 %v8313
          %v8447 = vunpack.c.l.b16 %v8314
          %v8448 = vunpack.c.h.b16 %v8314
          %v8449 = vunpack.c.l.b16 %v8315
          %v8450 = vunpack.c.h.b16 %v8315
          %v8451 = vunpack.c.l.b16 %v8316
          %v8452 = vunpack.c.h.b16 %v8316
          %v8453 = vunpack.c.l.b16 %v8317
          %v8454 = vunpack.c.h.b16 %v8317
          %v8455 = vunpack.c.l.b16 %v8318
          %v8456 = vunpack.c.h.b16 %v8318
          %v8457 = vunpack.c.l.b16 %v8319
          %v8458 = vunpack.c.h.b16 %v8319
          %v8459 = vunpack.c.l.b16 %v8320
          %v8460 = vunpack.c.h.b16 %v8320
          %v8461 = vunpack.c.l.b16 %v8321
          %v8462 = vunpack.c.h.b16 %v8321
          %v8463 = vunpack.c.l.b16 %v8322
          %v8464 = vunpack.c.h.b16 %v8322
          %v8465 = vunpack.c.l.b16 %v8323
          %v8466 = vunpack.c.h.b16 %v8323
          %v8467 = vunpack.c.l.b16 %v8324
          %v8468 = vunpack.c.h.b16 %v8324
          %v8469 = vunpack.c.l.b16 %v8325
          %v8470 = vunpack.c.h.b16 %v8325
          %v8471 = vunpack.c.l.b16 %v8326
          %v8472 = vunpack.c.h.b16 %v8326
          %v8473 = vunpack.c.l.b16 %v8327
          %v8474 = vunpack.c.h.b16 %v8327
          %v8475 = vunpack.c.l.b16 %v8328
          %v8476 = vunpack.c.h.b16 %v8328
          %v8477 = vunpack.c.l.b16 %v8329
          %v8478 = vunpack.c.h.b16 %v8329
          %v8479 = vunpack.c.l.b16 %v8330
          %v8480 = vunpack.c.h.b16 %v8330
          %v8481 = vunpack.c.l.b16 %v8331
          %v8482 = vunpack.c.h.b16 %v8331
          %v8483 = vunpack.c.l.b16 %v8332
          %v8484 = vunpack.c.h.b16 %v8332
          %v8485 = vunpack.c.l.b16 %v8333
          %v8486 = vunpack.c.h.b16 %v8333
          %v8487 = vunpack.c.l.b16 %v8334
          %v8488 = vunpack.c.h.b16 %v8334
          %v8489 = vunpack.c.l.b16 %v8335
          %v8490 = vunpack.c.h.b16 %v8335
          %v8491 = vunpack.c.l.b16 %v8336
          %v8492 = vunpack.c.h.b16 %v8336
          %v8493 = vunpack.c.l.b16 %v8337
          %v8494 = vunpack.c.h.b16 %v8337
          %v8495 = vunpack.c.l.b16 %v8338
          %v8496 = vunpack.c.h.b16 %v8338
          %v8497 = vunpack.c.l.b16 %v8339
          %v8498 = vunpack.c.h.b16 %v8339
          %v8499 = vunpack.c.l.b16 %v8340
          %v8500 = vunpack.c.h.b16 %v8340
          %v8501 = vunpack.c.l.b16 %v8341
          %v8502 = vunpack.c.h.b16 %v8341
          %v8503 = vunpack.c.l.b16 %v8342
          %v8504 = vunpack.c.h.b16 %v8342
          %v8505 = vunpack.c.l.b16 %v8343
          %v8506 = vunpack.c.h.b16 %v8343
          %v8507 = vunpack.c.l.b16 %v8344
          %v8508 = vunpack.c.h.b16 %v8344
          %v8509 = vunpack.c.l.b16 %v8345
          %v8510 = vunpack.c.h.b16 %v8345
          %v8511 = vunpack.c.l.b16 %v8346
          %v8512 = vunpack.c.h.b16 %v8346
          %v8513 = vunpack.c.l.b16 %v8347
          %v8514 = vunpack.c.h.b16 %v8347
          %v8515 = vunpack.c.l.b16 %v8348
          %v8516 = vunpack.c.h.b16 %v8348
          %v8517 = vunpack.c.l.b16 %v8349
          %v8518 = vunpack.c.h.b16 %v8349
          %v8519 = vunpack.c.l.b16 %v8350
          %v8520 = vunpack.c.h.b16 %v8350
          %v8521 = vunpack.c.l.b16 %v8351
          %v8522 = vunpack.c.h.b16 %v8351
          %v8523 = vunpack.c.l.b16 %v8352
          %v8524 = vunpack.c.h.b16 %v8352
          %v8525 = vunpack.c.l.b16 %v8353
          %v8526 = vunpack.c.h.b16 %v8353
          %v8527 = vunpack.c.l.b16 %v8354
          %v8528 = vunpack.c.h.b16 %v8354
          %v8529 = vunpack.c.l.b16 %v8355
          %v8530 = vunpack.c.h.b16 %v8355
          %v8531 = vunpack.c.l.b16 %v8356
          %v8532 = vunpack.c.h.b16 %v8356
          %v8533 = vunpack.c.l.b16 %v8357
          %v8534 = vunpack.c.h.b16 %v8357
          %v8535 = vunpack.c.l.b16 %v8358
          %v8536 = vunpack.c.h.b16 %v8358
          %v8537 = vunpack.c.l.b16 %v8359
          %v8538 = vunpack.c.h.b16 %v8359
          %v8539 = vunpack.c.l.b16 %v8360
          %v8540 = vunpack.c.h.b16 %v8360
          %v8541 = vunpack.c.l.b16 %v8361
          %v8542 = vunpack.c.h.b16 %v8361
          %v8543 = vunpack.c.l.b16 %v8362
          %v8544 = vunpack.c.h.b16 %v8362
          %v8545 = vunpack.c.l.b16 %v8363
          %v8546 = vunpack.c.h.b16 %v8363
          %v8547 = vunpack.c.l.b16 %v8364
          %v8548 = vunpack.c.h.b16 %v8364
          %v8549 = vunpack.c.l.b16 %v8365
          %v8550 = vunpack.c.h.b16 %v8365
          %v8551 = vunpack.c.l.b16 %v8366
          %v8552 = vunpack.c.h.b16 %v8366
          %v8553 = vunpack.c.l.b16 %v8367
          %v8554 = vunpack.c.h.b16 %v8367
          %v8555 = vunpack.c.l.b16 %v8368
          %v8556 = vunpack.c.h.b16 %v8368
          %v8557 = vunpack.c.l.b16 %v8369
          %v8558 = vunpack.c.h.b16 %v8369
          %v8559 = vunpack.c.l.b16 %v8370
          %v8560 = vunpack.c.h.b16 %v8370
          %v8561 = vunpack.c.l.b16 %v8371
          %v8562 = vunpack.c.h.b16 %v8371
          %v8563 = vunpack.c.l.b16 %v8372
          %v8564 = vunpack.c.h.b16 %v8372
          %v8565 = vpack.c.b16 %v8439, %v8437
          %v8566 = vpack.c.b16 %v8440, %v8438
          %v8567 = vpack.c.b16 %v8443, %v8441
          %v8568 = vpack.c.b16 %v8444, %v8442
          %v8569 = vpack.c.b16 %v8447, %v8445
          %v8570 = vpack.c.b16 %v8448, %v8446
          %v8571 = vpack.c.b16 %v8451, %v8449
          %v8572 = vpack.c.b16 %v8452, %v8450
          %v8573 = vpack.c.b16 %v8455, %v8453
          %v8574 = vpack.c.b16 %v8456, %v8454
          %v8575 = vpack.c.b16 %v8459, %v8457
          %v8576 = vpack.c.b16 %v8460, %v8458
          %v8577 = vpack.c.b16 %v8463, %v8461
          %v8578 = vpack.c.b16 %v8464, %v8462
          %v8579 = vpack.c.b16 %v8467, %v8465
          %v8580 = vpack.c.b16 %v8468, %v8466
          %v8581 = vpack.c.b16 %v8471, %v8469
          %v8582 = vpack.c.b16 %v8472, %v8470
          %v8583 = vpack.c.b16 %v8475, %v8473
          %v8584 = vpack.c.b16 %v8476, %v8474
          %v8585 = vpack.c.b16 %v8479, %v8477
          %v8586 = vpack.c.b16 %v8480, %v8478
          %v8587 = vpack.c.b16 %v8483, %v8481
          %v8588 = vpack.c.b16 %v8484, %v8482
          %v8589 = vpack.c.b16 %v8487, %v8485
          %v8590 = vpack.c.b16 %v8488, %v8486
          %v8591 = vpack.c.b16 %v8491, %v8489
          %v8592 = vpack.c.b16 %v8492, %v8490
          %v8593 = vpack.c.b16 %v8495, %v8493
          %v8594 = vpack.c.b16 %v8496, %v8494
          %v8595 = vpack.c.b16 %v8499, %v8497
          %v8596 = vpack.c.b16 %v8500, %v8498
          %v8597 = vpack.c.b16 %v8503, %v8501
          %v8598 = vpack.c.b16 %v8504, %v8502
          %v8599 = vpack.c.b16 %v8507, %v8505
          %v8600 = vpack.c.b16 %v8508, %v8506
          %v8601 = vpack.c.b16 %v8511, %v8509
          %v8602 = vpack.c.b16 %v8512, %v8510
          %v8603 = vpack.c.b16 %v8515, %v8513
          %v8604 = vpack.c.b16 %v8516, %v8514
          %v8605 = vpack.c.b16 %v8519, %v8517
          %v8606 = vpack.c.b16 %v8520, %v8518
          %v8607 = vpack.c.b16 %v8523, %v8521
          %v8608 = vpack.c.b16 %v8524, %v8522
          %v8609 = vpack.c.b16 %v8527, %v8525
          %v8610 = vpack.c.b16 %v8528, %v8526
          %v8611 = vpack.c.b16 %v8531, %v8529
          %v8612 = vpack.c.b16 %v8532, %v8530
          %v8613 = vpack.c.b16 %v8535, %v8533
          %v8614 = vpack.c.b16 %v8536, %v8534
          %v8615 = vpack.c.b16 %v8539, %v8537
          %v8616 = vpack.c.b16 %v8540, %v8538
          %v8617 = vpack.c.b16 %v8543, %v8541
          %v8618 = vpack.c.b16 %v8544, %v8542
          %v8619 = vpack.c.b16 %v8547, %v8545
          %v8620 = vpack.c.b16 %v8548, %v8546
          %v8621 = vpack.c.b16 %v8551, %v8549
          %v8622 = vpack.c.b16 %v8552, %v8550
          %v8623 = vpack.c.b16 %v8555, %v8553
          %v8624 = vpack.c.b16 %v8556, %v8554
          %v8625 = vpack.c.b16 %v8559, %v8557
          %v8626 = vpack.c.b16 %v8560, %v8558
          %v8627 = vpack.c.b16 %v8563, %v8561
          %v8628 = vpack.c.b16 %v8564, %v8562
          %8693 = vmatprep.subr.bf16.mxu0 %v8566
          %8694 = vmatpush1.bf16.msra.mxu0 %v8565
          %8695 = vmatprep.subr.bf16.mxu0 %v8568
          %8696 = vmatpush1.bf16.msra.mxu0 %v8567
          %8697 = vmatprep.subr.bf16.mxu0 %v8570
          %8698 = vmatpush1.bf16.msra.mxu0 %v8569
          %8699 = vmatprep.subr.bf16.mxu0 %v8572
          %8700 = vmatpush1.bf16.msra.mxu0 %v8571
          %8701 = vmatprep.subr.bf16.mxu0 %v8574
          %8702 = vmatpush1.bf16.msra.mxu0 %v8573
          %8703 = vmatprep.subr.bf16.mxu0 %v8576
          %8704 = vmatpush1.bf16.msra.mxu0 %v8575
          %8705 = vmatprep.subr.bf16.mxu0 %v8578
          %8706 = vmatpush1.bf16.msra.mxu0 %v8577
          %8707 = vmatprep.subr.bf16.mxu0 %v8580
          %8708 = vmatpush1.bf16.msra.mxu0 %v8579
          %8709 = vmatprep.subr.bf16.mxu0 %v8582
          %8710 = vmatpush1.bf16.msra.mxu0 %v8581
          %8711 = vmatprep.subr.bf16.mxu0 %v8584
          %8712 = vmatpush1.bf16.msra.mxu0 %v8583
          %8713 = vmatprep.subr.bf16.mxu0 %v8586
          %8714 = vmatpush1.bf16.msra.mxu0 %v8585
          %8715 = vmatprep.subr.bf16.mxu0 %v8588
          %8716 = vmatpush1.bf16.msra.mxu0 %v8587
          %8717 = vmatprep.subr.bf16.mxu0 %v8590
          %8718 = vmatpush1.bf16.msra.mxu0 %v8589
          %8719 = vmatprep.subr.bf16.mxu0 %v8592
          %8720 = vmatpush1.bf16.msra.mxu0 %v8591
          %8721 = vmatprep.subr.bf16.mxu0 %v8594
          %8722 = vmatpush1.bf16.msra.mxu0 %v8593
          %8723 = vmatprep.subr.bf16.mxu0 %v8596
          %8724 = vmatpush1.bf16.msra.mxu0 %v8595
          %8725 = vmatprep.mubr.bf16.mxu0 %v8306
          %8726 = vmatmul.mubr.bf16.gmra.mrb[0].mxu0 %v8305
          %v8727 = vpop.f32.mrb[0].mxu0
          %v8728 = vadd.f32 0.0, %v8727
          %v8729 = vpop.f32.mrb[0].mxu0
          %v8730 = vadd.f32 0.0, %v8729
          %v8731 = vpop.f32.mrb[0].mxu0
          %v8732 = vpop.f32.mrb[0].mxu0
          %8733 = vdwg.mxu0
          %8734 = vmatprep.subr.bf16.mxu0 %v8598
          %8735 = vmatpush1.bf16.msra.mxu0 %v8597
          %8736 = vmatprep.subr.bf16.mxu0 %v8600
          %8737 = vmatpush1.bf16.msra.mxu0 %v8599
          %8738 = vmatprep.subr.bf16.mxu0 %v8602
          %8739 = vmatpush1.bf16.msra.mxu0 %v8601
          %8740 = vmatprep.subr.bf16.mxu0 %v8604
          %8741 = vmatpush1.bf16.msra.mxu0 %v8603
          %8742 = vmatprep.subr.bf16.mxu0 %v8606
          %8743 = vmatpush1.bf16.msra.mxu0 %v8605
          %8744 = vmatprep.subr.bf16.mxu0 %v8608
          %8745 = vmatpush1.bf16.msra.mxu0 %v8607
          %8746 = vmatprep.subr.bf16.mxu0 %v8610
          %8747 = vmatpush1.bf16.msra.mxu0 %v8609
          %8748 = vmatprep.subr.bf16.mxu0 %v8612
          %8749 = vmatpush1.bf16.msra.mxu0 %v8611
          %8750 = vmatprep.subr.bf16.mxu0 %v8614
          %8751 = vmatpush1.bf16.msra.mxu0 %v8613
          %8752 = vmatprep.subr.bf16.mxu0 %v8616
          %8753 = vmatpush1.bf16.msra.mxu0 %v8615
          %8754 = vmatprep.subr.bf16.mxu0 %v8618
          %8755 = vmatpush1.bf16.msra.mxu0 %v8617
          %8756 = vmatprep.subr.bf16.mxu0 %v8620
          %8757 = vmatpush1.bf16.msra.mxu0 %v8619
          %8758 = vmatprep.subr.bf16.mxu0 %v8622
          %8759 = vmatpush1.bf16.msra.mxu0 %v8621
          %8760 = vmatprep.subr.bf16.mxu0 %v8624
          %8761 = vmatpush1.bf16.msra.mxu0 %v8623
          %8762 = vmatprep.subr.bf16.mxu0 %v8626
          %8763 = vmatpush1.bf16.msra.mxu0 %v8625
          %8764 = vmatprep.subr.bf16.mxu0 %v8628
          %8765 = vmatpush1.bf16.msra.mxu0 %v8627
          %8766 = vmatprep.mubr.bf16.mxu0 %v8308
          %8767 = vmatmul.mubr.bf16.gmra.mrb[0].mxu0 %v8307
          %v8768 = vpop.f32.mrb[0].mxu0
          %v8769 = vadd.f32 %v8728, %v8768
          %v8770 = vpop.f32.mrb[0].mxu0
          %v8771 = vadd.f32 %v8730, %v8770
          %v8772 = vpop.f32.mrb[0].mxu0
          %v8773 = vpop.f32.mrb[0].mxu0
          %8774 = vdwg.mxu0
          %v8777 = vcombine.low %v8769, %v8771
          %v8779 = vunpack.c.l.s4 1966171168
          %v8780 = vunpack.c.0.s8 %v8779
          %v8781 = vlaneseq
          %v8782 = vshrl.u32 %v8781, 7
          %v8783 = vsub.s32 %v8780, %v8782
          %v8784 = vrot.slane %v8777, %v8783
          %v8786 = vunpack.c.l.s4 1966171168
          %v8787 = vunpack.c.0.s8 %v8786
          %v8788 = vlaneseq
          %v8789 = vshrl.u32 %v8788, 7
          %v8790 = vsub.s32 %v8787, %v8789
          %v8791 = vrot.slane %v8784, %v8790
          %v8793 = vlaneseq
          %vm8794 = vcmp.ge.s32.totalorder %v8793, 0
          %vm8795 = vcmp.lt.s32.totalorder %v8793, 256
          %vm8796 = vmand %vm8794, %vm8795
          %8797 = vst.msk [vmem:[%s500] sm:$0x3] %vm8796, %v8791
        $region92: #{tpu_custom_call.1} parent=71 // pred_fallthru
          _
        %s8798 = sand.u32 %s329, 1
        %s8799 = scalar_lea.sflag [#allocation5], %s8798
        %s8800 = sand.u32 %s329, 1
        %s8801 = smul.addr %s8800, 2
        %s8802 = scalar_lea.vmem [#allocation9], %s8801
        // Predicated region
        $region93: #{tpu_custom_call.1} parent=71 // pred_check
          %p8803 = pneg %p339
        $region94: #{tpu_custom_call.1} parent=71 // pred_check_branch
          %8805 = sbr.rel (%p8803) target = $region96
        $region95: #{tpu_custom_call.1} parent=71 // pred_region
          %s8807 = ssub.s32 32, 32
          %8808 = vsyncadd %s8799, %s8807
          %s8809 = smul.addr %s33, 2
          %s8810 = smul.addr %s8809, 16
          %s8811 = scalar_lea.hbm %s13, %s8810
          %s8813 = sshll.u32 %s8802, 4
          %s8814 = int_to_ptr.vmem [resolvable:$true] %s8813
          %8816 = dma.vmem_to_hbm [thread:$0]  %s8814, 32, %s8811, %s8799
        $region96: #{tpu_custom_call.1} parent=71 // pred_fallthru
          _
      $region72: #{tpu_custom_call.1} parent=5 // pred_fallthru
        _
      %p8817 = scmp.le.s32.totalorder 2, %s24
      // Predicated region
      $region97: #{tpu_custom_call.1} parent=5 // pred_check
        %p8818 = pneg %p8817
      $region98: #{tpu_custom_call.1} parent=5 // pred_check_branch
        %8820 = sbr.rel (%p8818) target = $region100
      $region99: #{tpu_custom_call.1} parent=5 // pred_region
        %s8821 = ssub.s32 %s24, 2
        // Predicated region
        $region101: #{tpu_custom_call.1} parent=99 // pred_check
          %p8822 = pneg %p345
        $region102: #{tpu_custom_call.1} parent=99 // pred_check_branch
          %8824 = sbr.rel (%p8822) target = $region104
        $region103: #{tpu_custom_call.1} parent=99 // pred_region
          %s8825 = sand.u32 %s330, 1
          %s8826 = scalar_lea.sflag [#allocation5], %s8825
          %s8827 = sand.u32 %s330, 1
          %s8828 = smul.addr %s8827, 2
          %s8829 = scalar_lea.vmem [#allocation9], %s8828
          %8830 = dma.done %s8826, 32
        $region104: #{tpu_custom_call.1} parent=99 // pred_fallthru
          _
      $region100: #{tpu_custom_call.1} parent=5 // pred_fallthru
        _
    $region6: #{tpu_custom_call.1} parent=1 // loop_footer
      %s28 = sadd.s32 1, %s24
    $region7: #{tpu_custom_call.1} parent=1 // loop_footer_branch
      %23 = sbr.rel target = $region3
    $region8: #{tpu_custom_call.1} parent=1 // loop_exit
      _
    %8831 = vsyncpa [#allocation4], 1
    %s8832 = scalar_lea.sflag [#allocation4], 1
    %8833 = vsyncpa %s8832, 1
    %8834 = vsyncpa [#allocation7], 1
    %8835 = vsyncpa [#allocation5], 1
    %s8836 = scalar_lea.sflag [#allocation5], 1
    %8837 = vsyncpa %s8836, 1

</llo_original>
